<compile_context>
chip_gen: v7x
topology: tpu7x:2x2x1
jax: 0.10.0
libtpu: 0.0.40
codegen_flags: <defaults>
</compile_context>

<pallas_src>
import jax
import jax.numpy as jnp
from jax.experimental import pallas as pl
from jax.experimental.pallas import tpu as pltpu

# ---------------- small-but-consistent ViT config ----------------
IMG = 16          # img_size
PATCH = 4         # patch_size
IN_CH = 3         # in_channels
EMBED = 128       # embed_dim (divisible by num_heads, lane-aligned)
DEPTH = 2         # depth
HEADS = 8         # num_heads
HEAD_DIM = EMBED // HEADS
MLP_HID = int(EMBED * 4.0)
NUM_CLASSES = 10
NUM_CLASSES_PAD = 128          # lane-dense head output, sliced to 10 outside
N_PATCHES = (IMG // PATCH) ** 2
PATCH_DIM = IN_CH * PATCH * PATCH
SEQ = N_PATCHES + 1            # cls token + patches = 17
LN_EPS = 1e-5
SCALE = HEAD_DIM ** -0.5       # 0.25 (power of two -> exact fold into bf16 weights)

# packed per-block weight blob column offsets: [qkv | proj | fc1]
_QKV0, _QKV1 = 0, 3 * EMBED
_PRJ0, _PRJ1 = 3 * EMBED, 4 * EMBED
_FC10, _FC11 = 4 * EMBED, 4 * EMBED + MLP_HID
# packed per-block vector blob lane offsets (all multiples of 128)
_V_LN1W, _V_LN1B = 0, EMBED
_V_QKVB = 2 * EMBED
_V_PRJB = 2 * EMBED + 3 * EMBED           # 640
_V_LN2W = _V_PRJB + EMBED                 # 768
_V_LN2B = _V_LN2W + EMBED                 # 896
_V_FC1B = _V_LN2B + EMBED                 # 1024
_V_FC2B = _V_FC1B + MLP_HID               # 1536
_V_LEN = _V_FC2B + EMBED                  # 1664
# packed global vector blob lane offsets: [patch_b | norm_w | norm_b | head_b]
_G_PB, _G_NW, _G_NB, _G_HB = 0, EMBED, 2 * EMBED, 3 * EMBED
_G_LEN = 4 * EMBED


# ---------------- in-kernel math helpers ----------------
def _erf(x):
    # Abramowitz & Stegun 7.1.26 rational approximation of erf (~1.5e-7 abs err).
    a1, a2, a3, a4, a5 = 0.254829592, -0.284496736, 1.421413741, -1.453152027, 1.061405429
    p = 0.3275911
    ax = jnp.abs(x)
    t = pl.reciprocal(1.0 + p * ax, approx=True)     # EUP slot instead of VPU divide
    poly = ((((a5 * t + a4) * t + a3) * t + a2) * t + a1) * t
    y = 1.0 - poly * jnp.exp(-ax * ax)
    return jnp.where(x >= 0, y, -y)


def _gelu(x):
    # erf-based GELU, matching torch.nn.GELU()
    return 0.5 * x * (1.0 + _erf(x * (2.0 ** -0.5)))


def _layernorm(x, w, b):
    # PyTorch nn.LayerNorm semantics; var via E[x^2]-mu^2 (single pass over x).
    mu = jnp.mean(x, axis=-1, keepdims=True)
    ms = jnp.mean(x * x, axis=-1, keepdims=True)
    var = ms - mu * mu
    return (x - mu) * jax.lax.rsqrt(var + LN_EPS) * w + b


# ---------------- fully-fused ViT forward kernel ----------------
def make_vit_kernel(bblk):
    mtot = bblk * SEQ

    def vit_kernel(mask_ref, patches_ref, patch_w_ref, pos_ref,
                   w1_ref, w2_ref, vec_ref, head_w_ref, gvec_ref, o_ref):
        mask = mask_ref[...]                                        # (mtot, mtot) additive
        patch_b = gvec_ref[:, _G_PB:_G_PB + EMBED]
        norm_w = gvec_ref[:, _G_NW:_G_NW + EMBED]
        norm_b = gvec_ref[:, _G_NB:_G_NB + EMBED]
        head_b = gvec_ref[:, _G_HB:_G_HB + EMBED]

        # ---- patch embedding: ONE (bblk*N_PATCHES, PATCH_DIM) bf16 matmul ----
        tok = jnp.dot(patches_ref[...].astype(jnp.bfloat16), patch_w_ref[...],
                      preferred_element_type=jnp.float32) + patch_b

        # ---- assemble residual slab (mtot, EMBED): [cls ; patches] per image + pos ----
        # cls_token is pre-folded into pos row 0, so the cls slot starts at zero.
        zero_row = jnp.zeros((1, EMBED), jnp.float32)
        parts = []
        for b in range(bblk):
            parts.append(zero_row)
            parts.append(tok[b * N_PATCHES:(b + 1) * N_PATCHES, :])
        pos_all = jnp.concatenate([pos_ref[...]] * bblk, axis=0)    # (mtot, EMBED)
        x = jnp.concatenate(parts, axis=0) + pos_all                # (mtot, EMBED)

        # ---- transformer blocks (DEPTH unrolled, weights stacked on axis 0) ----
        for d in range(DEPTH):
            # --- attention branch: x + proj(MHA(LN1(x))) ---
            ln1_w = vec_ref[d, :, _V_LN1W:_V_LN1W + EMBED]
            ln1_b = vec_ref[d, :, _V_LN1B:_V_LN1B + EMBED]
            qkv_b = vec_ref[d, :, _V_QKVB:_V_QKVB + 3 * EMBED]
            proj_b = vec_ref[d, :, _V_PRJB:_V_PRJB + EMBED]

            xn = _layernorm(x, ln1_w, ln1_b).astype(jnp.bfloat16)
            # fused full-width QKV matmul; attention scale pre-folded into Q part
            qkv = jnp.dot(xn, w1_ref[d, :, _QKV0:_QKV1],
                          preferred_element_type=jnp.float32) + qkv_b   # (mtot, 3*EMBED)

            heads_out = []
            for h in range(HEADS):
                qs = h * HEAD_DIM
                q = qkv[:, qs:qs + HEAD_DIM].astype(jnp.bfloat16)
                k = qkv[:, EMBED + qs:EMBED + qs + HEAD_DIM].astype(jnp.bfloat16)
                v = qkv[:, 2 * EMBED + qs:2 * EMBED + qs + HEAD_DIM].astype(jnp.bfloat16)
                # scores over the whole slab; block-diagonal mask keeps images separate
                s = jax.lax.dot_general(q, k, (((1,), (1,)), ((), ())),
                                        preferred_element_type=jnp.float32) + mask
                s = s - jnp.max(s, axis=-1, keepdims=True)
                e = jnp.exp(s)
                p = e * pl.reciprocal(jnp.sum(e, axis=-1, keepdims=True), approx=True)
                heads_out.append(jnp.dot(p.astype(jnp.bfloat16), v,
                                         preferred_element_type=jnp.float32))
            # concat heads once, then ONE full-width K=128 projection matmul
            attn = jnp.concatenate(heads_out, axis=-1).astype(jnp.bfloat16)  # (mtot, EMBED)
            x = x + jnp.dot(attn, w1_ref[d, :, _PRJ0:_PRJ1],
                            preferred_element_type=jnp.float32) + proj_b

            # --- MLP branch: x + fc2(GELU(fc1(LN2(x)))) ---
            ln2_w = vec_ref[d, :, _V_LN2W:_V_LN2W + EMBED]
            ln2_b = vec_ref[d, :, _V_LN2B:_V_LN2B + EMBED]
            fc1_b = vec_ref[d, :, _V_FC1B:_V_FC1B + MLP_HID]
            fc2_b = vec_ref[d, :, _V_FC2B:_V_FC2B + EMBED]

            xn2 = _layernorm(x, ln2_w, ln2_b).astype(jnp.bfloat16)
            h1 = jnp.dot(xn2, w1_ref[d, :, _FC10:_FC11],
                         preferred_element_type=jnp.float32) + fc1_b
            h1 = _gelu(h1).astype(jnp.bfloat16)
            x = x + jnp.dot(h1, w2_ref[d],
                            preferred_element_type=jnp.float32) + fc2_b

        # ---- final LayerNorm (cls rows only) + lane-dense classification head ----
        cls_rows = jnp.concatenate([x[b * SEQ:b * SEQ + 1, :] for b in range(bblk)], axis=0)
        cls_n = _layernorm(cls_rows, norm_w, norm_b).astype(jnp.bfloat16)
        o_ref[0] = jnp.dot(cls_n, head_w_ref[...],
                           preferred_element_type=jnp.float32) + head_b   # (bblk, 128)

    return vit_kernel


# ---------------- wrapper ----------------
def patchify(x):
    # NCHW -> (B*n_patches, C*P*P); matches flattening order of
    # Conv2d(kernel=P, stride=P) weight reshaped as (D, C*P*P).
    B, C, H, W = x.shape
    gh, gw = H // PATCH, W // PATCH
    x = x.reshape(B, C, gh, PATCH, gw, PATCH)
    x = x.transpose(0, 2, 4, 1, 3, 5)              # (B, gh, gw, C, ph, pw)
    return x.reshape(B * gh * gw, C * PATCH * PATCH)


def _const_spec(shape):
    nd = len(shape)
    return pl.BlockSpec(shape, lambda i, _nd=nd: (0,) * _nd)


def _block_diag_mask(bblk):
    # additive mask: 0 within an image's SEQ x SEQ block, -1e30 across images
    img = jnp.arange(bblk * SEQ, dtype=jnp.int32) // SEQ
    return jnp.where(img[:, None] == img[None, :], 0.0, -1e30).astype(jnp.float32)


def vit_forward(x, flat_params):
    B = x.shape[0]
    bblk = B if B <= 8 else 8          # images folded into the matmul M dim per grid step
    assert B % bblk == 0, "batch must be divisible by the per-step image block"
    nb = B // bblk
    mtot = bblk * SEQ

    patches = patchify(x)              # (B*N_PATCHES, PATCH_DIM)
    mask = _block_diag_mask(bblk)      # (mtot, mtot)

    in_specs = [
        pl.BlockSpec((mtot, mtot), lambda i: (0, 0)),                      # attention mask
        pl.BlockSpec((bblk * N_PATCHES, PATCH_DIM), lambda i: (i, 0)),     # patch block
    ]
    in_specs += [_const_spec(p.shape) for p in flat_params]                # VMEM-resident weights

    out = pl.pallas_call(
        make_vit_kernel(bblk),
        out_shape=jax.ShapeDtypeStruct((nb, bblk, NUM_CLASSES_PAD), jnp.float32),
        grid=(nb,),
        in_specs=in_specs,
        out_specs=pl.BlockSpec((1, bblk, NUM_CLASSES_PAD), lambda i: (i, 0, 0)),
        compiler_params=pltpu.CompilerParams(dimension_semantics=("parallel",)),
    )(mask, patches, *flat_params)
    return out.reshape(B, NUM_CLASSES_PAD)[:, :NUM_CLASSES]                # (B, NUM_CLASSES)


# ---------------- deterministic parameter init + prep ----------------
def init_params(key):
    def nrm(k, shape, scale=0.02):
        return scale * jax.random.normal(k, shape, dtype=jnp.float32)

    keys = jax.random.split(key, 8 + DEPTH)
    params = {
        'patch_w': nrm(keys[0], (PATCH_DIM, EMBED)),   # conv weight, pre-flattened/transposed
        'patch_b': nrm(keys[1], (1, EMBED)),
        'cls_token': nrm(keys[2], (1, 1, EMBED)),
        'pos_embed': nrm(keys[3], (1, SEQ, EMBED)),
        'norm_w': jnp.ones((1, EMBED), jnp.float32),
        'norm_b': jnp.zeros((1, EMBED), jnp.float32),
        'head_w': nrm(keys[4], (EMBED, NUM_CLASSES)),
        'head_b': nrm(keys[5], (1, NUM_CLASSES)),
        'blocks': [],
    }
    for d in range(DEPTH):
        bk = jax.random.split(keys[8 + d], 8)
        params['blocks'].append((
            jnp.ones((1, EMBED), jnp.float32),    # ln1 weight
            jnp.zeros((1, EMBED), jnp.float32),   # ln1 bias
            nrm(bk[0], (EMBED, 3 * EMBED)),       # qkv weight (in, out)
            nrm(bk[1], (1, 3 * EMBED)),           # qkv bias (qkv_bias=True)
            nrm(bk[2], (EMBED, EMBED)),           # attn proj weight
            nrm(bk[3], (1, EMBED)),               # attn proj bias
            jnp.ones((1, EMBED), jnp.float32),    # ln2 weight
            jnp.zeros((1, EMBED), jnp.float32),   # ln2 bias
            nrm(bk[4], (EMBED, MLP_HID)),         # mlp fc1 weight
            nrm(bk[5], (1, MLP_HID)),             # mlp fc1 bias
            nrm(bk[6], (MLP_HID, EMBED)),         # mlp fc2 weight
            nrm(bk[7], (1, EMBED)),               # mlp fc2 bias
        ))
    return params


def prepare_params(params):
    """Pack per-block weights into few VMEM blobs, fold the attention scale into
    the Q projection, fold cls_token into pos row 0, pre-cast matmul weights to
    bf16, and zero-pad the head to a lane-dense 128-wide output."""
    blocks = params['blocks']
    scale_vec = jnp.concatenate([jnp.full((EMBED,), SCALE, jnp.float32),
                                 jnp.ones((2 * EMBED,), jnp.float32)])

    w1_list, w2_list, vec_list = [], [], []
    for (ln1w, ln1b, qkvw, qkvb, projw, projb, ln2w, ln2b,
         fc1w, fc1b, fc2w, fc2b) in blocks:
        qkvw = qkvw * scale_vec                     # fold q@k^T scale into Q columns (exact)
        qkvb = qkvb * scale_vec
        w1_list.append(jnp.concatenate([qkvw, projw, fc1w], axis=1))     # (EMBED, 1024)
        w2_list.append(fc2w)                                             # (MLP_HID, EMBED)
        vec_list.append(jnp.concatenate(
            [ln1w, ln1b, qkvb, projb, ln2w, ln2b, fc1b, fc2b], axis=1))  # (1, 1664)

    w1 = jnp.stack(w1_list, axis=0).astype(jnp.bfloat16)    # (DEPTH, EMBED, 1024)
    w2 = jnp.stack(w2_list, axis=0).astype(jnp.bfloat16)    # (DEPTH, MLP_HID, EMBED)
    vecs = jnp.stack(vec_list, axis=0)                      # (DEPTH, 1, 1664) f32

    pos = params['pos_embed'].reshape(SEQ, EMBED)
    pos = pos.at[0:1, :].add(params['cls_token'].reshape(1, EMBED))      # fold cls into pos[0]

    head_w = jnp.zeros((EMBED, NUM_CLASSES_PAD), jnp.float32)
    head_w = head_w.at[:, :NUM_CLASSES].set(params['head_w']).astype(jnp.bfloat16)
    head_b = jnp.zeros((1, NUM_CLASSES_PAD), jnp.float32)
    head_b = head_b.at[:, :NUM_CLASSES].set(params['head_b'])

    gvec = jnp.concatenate([params['patch_b'], params['norm_w'],
                            params['norm_b'], head_b], axis=1)           # (1, 512) f32

    return (params['patch_w'].astype(jnp.bfloat16), pos, w1, w2, vecs, head_w, gvec)


if __name__ == "__main__":
    key = jax.random.PRNGKey(0)
    kp, kx = jax.random.split(key)
    params = init_params(kp)
    flat_params = prepare_params(params)
    x = jax.random.normal(kx, (2, IN_CH, IMG, IMG), dtype=jnp.float32)   # NCHW, like PyTorch

    fwd = jax.jit(vit_forward)
    out = fwd(x, flat_params)
    jax.block_until_ready(out)
    assert out.shape == (2, NUM_CLASSES) and out.dtype == jnp.float32
    assert bool(jnp.all(jnp.isfinite(out)))
    print("KERNEL_OK")
</pallas_src>

<mosaic_0001>
module attributes {stable_mosaic.version = 11 : i64} {
  func.func @vit_kernel(%arg0: i32, %arg1: memref<34x34xf32, #tpu.memory_space<vmem>>, %arg2: memref<32x48xf32, #tpu.memory_space<vmem>>, %arg3: memref<48x128xbf16, #tpu.memory_space<vmem>>, %arg4: memref<17x128xf32, #tpu.memory_space<vmem>>, %arg5: memref<2x128x1024xbf16, #tpu.memory_space<vmem>>, %arg6: memref<2x512x128xbf16, #tpu.memory_space<vmem>>, %arg7: memref<2x1x1664xf32, #tpu.memory_space<vmem>>, %arg8: memref<128x128xbf16, #tpu.memory_space<vmem>>, %arg9: memref<1x512xf32, #tpu.memory_space<vmem>>, %arg10: memref<1x2x128xf32, #tpu.memory_space<vmem>>) attributes {dimension_semantics = [#tpu.dimension_semantics<parallel>], iteration_bounds = array<i64: 1>, scalar_prefetch = 0 : i64, scratch_operands = 0 : i64, tpu.core_type = #tpu.core_type<tc>, window_params = [{pipeline_mode = #tpu.pipeline_mode<synchronous>, transform_indices = @transform_0, window_bounds = array<i64: 34, 34>}, {transform_indices = @transform_1, window_bounds = array<i64: 32, 48>}, {pipeline_mode = #tpu.pipeline_mode<synchronous>, transform_indices = @transform_2, window_bounds = array<i64: 48, 128>}, {pipeline_mode = #tpu.pipeline_mode<synchronous>, transform_indices = @transform_3, window_bounds = array<i64: 17, 128>}, {pipeline_mode = #tpu.pipeline_mode<synchronous>, transform_indices = @transform_4, window_bounds = array<i64: 2, 128, 1024>}, {pipeline_mode = #tpu.pipeline_mode<synchronous>, transform_indices = @transform_5, window_bounds = array<i64: 2, 512, 128>}, {pipeline_mode = #tpu.pipeline_mode<synchronous>, transform_indices = @transform_6, window_bounds = array<i64: 2, 1, 1664>}, {pipeline_mode = #tpu.pipeline_mode<synchronous>, transform_indices = @transform_7, window_bounds = array<i64: 128, 128>}, {pipeline_mode = #tpu.pipeline_mode<synchronous>, transform_indices = @transform_8, window_bounds = array<i64: 1, 512>}, {transform_indices = @transform_9, window_bounds = array<i64: 1, 2, 128>}]} {
    %c0 = arith.constant 0 : index
    %c0_0 = arith.constant 0 : index
    %0 = vector.load %arg1[%c0, %c0_0] : memref<34x34xf32, #tpu.memory_space<vmem>>, vector<34x34xf32>
    %c0_1 = arith.constant 0 : index
    %c0_2 = arith.constant 0 : index
    %1 = vector.load %arg9[%c0_1, %c0_2] : memref<1x512xf32, #tpu.memory_space<vmem>>, vector<1x128xf32>
    %c0_3 = arith.constant 0 : index
    %c128 = arith.constant 128 : index
    %2 = vector.load %arg9[%c0_3, %c128] : memref<1x512xf32, #tpu.memory_space<vmem>>, vector<1x128xf32>
    %c0_4 = arith.constant 0 : index
    %c256 = arith.constant 256 : index
    %3 = vector.load %arg9[%c0_4, %c256] : memref<1x512xf32, #tpu.memory_space<vmem>>, vector<1x128xf32>
    %c0_5 = arith.constant 0 : index
    %c384 = arith.constant 384 : index
    %4 = vector.load %arg9[%c0_5, %c384] : memref<1x512xf32, #tpu.memory_space<vmem>>, vector<1x128xf32>
    %c0_6 = arith.constant 0 : index
    %c0_7 = arith.constant 0 : index
    %5 = vector.load %arg2[%c0_6, %c0_7] : memref<32x48xf32, #tpu.memory_space<vmem>>, vector<32x48xf32>
    %6 = arith.truncf %5 : vector<32x48xf32> to vector<32x48xbf16>
    %c0_8 = arith.constant 0 : index
    %c0_9 = arith.constant 0 : index
    %7 = vector.load %arg3[%c0_8, %c0_9] : memref<48x128xbf16, #tpu.memory_space<vmem>>, vector<48x128xbf16>
    %cst = arith.constant dense<0.000000e+00> : vector<32x128xf32>
    %8 = tpu.matmul %6, %7, %cst {dimension_numbers = #tpu.dot_dimension_numbers<[1], [0], [0], [1], [0, 0, 1, 1], [], []>} : vector<32x48xbf16>, vector<48x128xbf16>, vector<32x128xf32> -> vector<32x128xf32>
    %9 = vector.broadcast %1 : vector<1x128xf32> to vector<32x128xf32>
    %10 = arith.addf %8, %9 : vector<32x128xf32>
    %cst_10 = arith.constant 0.000000e+00 : f32
    %11 = vector.broadcast %cst_10 : f32 to vector<1x128xf32>
    %12 = vector.extract_strided_slice %10 {offsets = [0, 0], sizes = [16, 128], strides = [1, 1]} : vector<32x128xf32> to vector<16x128xf32>
    %13 = vector.extract_strided_slice %10 {offsets = [16, 0], sizes = [16, 128], strides = [1, 1]} : vector<32x128xf32> to vector<16x128xf32>
    %c0_11 = arith.constant 0 : index
    %c0_12 = arith.constant 0 : index
    %14 = vector.load %arg4[%c0_11, %c0_12] : memref<17x128xf32, #tpu.memory_space<vmem>>, vector<17x128xf32>
    %15 = tpu.concatenate %14, %14 in 0 : vector<17x128xf32>, vector<17x128xf32> -> vector<34x128xf32>
    %16 = tpu.concatenate %11, %12, %11, %13 in 0 : vector<1x128xf32>, vector<16x128xf32>, vector<1x128xf32>, vector<16x128xf32> -> vector<34x128xf32>
    %17 = arith.addf %16, %15 : vector<34x128xf32>
    %c0_13 = arith.constant 0 : index
    %c0_14 = arith.constant 0 : index
    %c0_15 = arith.constant 0 : index
    %18 = vector.load %arg7[%c0_13, %c0_14, %c0_15] : memref<2x1x1664xf32, #tpu.memory_space<vmem>>, vector<1x1x128xf32>
    %19 = vector.shape_cast %18 : vector<1x1x128xf32> to vector<1x128xf32>
    %c0_16 = arith.constant 0 : index
    %c0_17 = arith.constant 0 : index
    %c128_18 = arith.constant 128 : index
    %20 = vector.load %arg7[%c0_16, %c0_17, %c128_18] : memref<2x1x1664xf32, #tpu.memory_space<vmem>>, vector<1x1x128xf32>
    %21 = vector.shape_cast %20 : vector<1x1x128xf32> to vector<1x128xf32>
    %c0_19 = arith.constant 0 : index
    %c0_20 = arith.constant 0 : index
    %c256_21 = arith.constant 256 : index
    %22 = vector.load %arg7[%c0_19, %c0_20, %c256_21] : memref<2x1x1664xf32, #tpu.memory_space<vmem>>, vector<1x1x384xf32>
    %23 = vector.shape_cast %22 : vector<1x1x384xf32> to vector<1x384xf32>
    %c0_22 = arith.constant 0 : index
    %c0_23 = arith.constant 0 : index
    %c640 = arith.constant 640 : index
    %24 = vector.load %arg7[%c0_22, %c0_23, %c640] : memref<2x1x1664xf32, #tpu.memory_space<vmem>>, vector<1x1x128xf32>
    %25 = vector.shape_cast %24 : vector<1x1x128xf32> to vector<1x128xf32>
    %cst_24 = arith.constant dense<0.000000e+00> : vector<34xf32>
    %26 = vector.multi_reduction <add>, %17, %cst_24 [1] : vector<34x128xf32> to vector<34xf32>
    %27 = vector.shape_cast %26 : vector<34xf32> to vector<34x1xf32>
    %cst_25 = arith.constant 1.280000e+02 : f32
    %28 = vector.broadcast %cst_25 : f32 to vector<34x1xf32>
    %29 = arith.divf %27, %28 : vector<34x1xf32>
    %30 = arith.mulf %17, %17 : vector<34x128xf32>
    %cst_26 = arith.constant dense<0.000000e+00> : vector<34xf32>
    %31 = vector.multi_reduction <add>, %30, %cst_26 [1] : vector<34x128xf32> to vector<34xf32>
    %32 = vector.shape_cast %31 : vector<34xf32> to vector<34x1xf32>
    %cst_27 = arith.constant 1.280000e+02 : f32
    %33 = vector.broadcast %cst_27 : f32 to vector<34x1xf32>
    %34 = arith.divf %32, %33 : vector<34x1xf32>
    %35 = arith.mulf %29, %29 : vector<34x1xf32>
    %36 = arith.subf %34, %35 : vector<34x1xf32>
    %37 = vector.broadcast %29 : vector<34x1xf32> to vector<34x128xf32>
    %38 = arith.subf %17, %37 : vector<34x128xf32>
    %cst_28 = arith.constant 9.99999974E-6 : f32
    %39 = vector.broadcast %cst_28 : f32 to vector<34x1xf32>
    %40 = arith.addf %36, %39 : vector<34x1xf32>
    %41 = math.rsqrt %40 : vector<34x1xf32>
    %42 = vector.broadcast %41 : vector<34x1xf32> to vector<34x128xf32>
    %43 = arith.mulf %38, %42 : vector<34x128xf32>
    %44 = vector.broadcast %19 : vector<1x128xf32> to vector<34x128xf32>
    %45 = arith.mulf %43, %44 : vector<34x128xf32>
    %46 = vector.broadcast %21 : vector<1x128xf32> to vector<34x128xf32>
    %47 = arith.addf %45, %46 : vector<34x128xf32>
    %48 = arith.truncf %47 : vector<34x128xf32> to vector<34x128xbf16>
    %c0_29 = arith.constant 0 : index
    %c0_30 = arith.constant 0 : index
    %c0_31 = arith.constant 0 : index
    %49 = vector.load %arg5[%c0_29, %c0_30, %c0_31] : memref<2x128x1024xbf16, #tpu.memory_space<vmem>>, vector<1x128x384xbf16>
    %50 = vector.shape_cast %49 : vector<1x128x384xbf16> to vector<128x384xbf16>
    %cst_32 = arith.constant dense<0.000000e+00> : vector<34x384xf32>
    %51 = tpu.matmul %48, %50, %cst_32 {dimension_numbers = #tpu.dot_dimension_numbers<[1], [0], [0], [1], [0, 0, 1, 1], [], []>} : vector<34x128xbf16>, vector<128x384xbf16>, vector<34x384xf32> -> vector<34x384xf32>
    %52 = vector.broadcast %23 : vector<1x384xf32> to vector<34x384xf32>
    %53 = arith.addf %51, %52 : vector<34x384xf32>
    %54 = vector.extract_strided_slice %53 {offsets = [0, 0], sizes = [34, 16], strides = [1, 1]} : vector<34x384xf32> to vector<34x16xf32>
    %55 = arith.truncf %54 : vector<34x16xf32> to vector<34x16xbf16>
    %56 = vector.extract_strided_slice %53 {offsets = [0, 128], sizes = [34, 16], strides = [1, 1]} : vector<34x384xf32> to vector<34x16xf32>
    %57 = arith.truncf %56 : vector<34x16xf32> to vector<34x16xbf16>
    %58 = vector.extract_strided_slice %53 {offsets = [0, 256], sizes = [34, 16], strides = [1, 1]} : vector<34x384xf32> to vector<34x16xf32>
    %59 = arith.truncf %58 : vector<34x16xf32> to vector<34x16xbf16>
    %cst_33 = arith.constant dense<0.000000e+00> : vector<34x34xf32>
    %60 = tpu.matmul %55, %57, %cst_33 {dimension_numbers = #tpu.dot_dimension_numbers<[1], [1], [0], [0], [0, 0, 1, 0], [], []>} : vector<34x16xbf16>, vector<34x16xbf16>, vector<34x34xf32> -> vector<34x34xf32>
    %61 = arith.addf %60, %0 : vector<34x34xf32>
    %cst_34 = arith.constant dense<0xFF800000> : vector<34xf32>
    %62 = vector.multi_reduction <maximumf>, %61, %cst_34 [1] : vector<34x34xf32> to vector<34xf32>
    %63 = vector.shape_cast %62 : vector<34xf32> to vector<34x1xf32>
    %64 = vector.broadcast %63 : vector<34x1xf32> to vector<34x34xf32>
    %65 = arith.subf %61, %64 : vector<34x34xf32>
    %66 = math.exp %65 : vector<34x34xf32>
    %cst_35 = arith.constant dense<0.000000e+00> : vector<34xf32>
    %67 = vector.multi_reduction <add>, %66, %cst_35 [1] : vector<34x34xf32> to vector<34xf32>
    %68 = vector.shape_cast %67 : vector<34xf32> to vector<34x1xf32>
    %69 = tpu.reciprocal %68 {approx = true} : vector<34x1xf32> -> vector<34x1xf32>
    %70 = vector.broadcast %69 : vector<34x1xf32> to vector<34x34xf32>
    %71 = arith.mulf %66, %70 : vector<34x34xf32>
    %72 = arith.truncf %71 : vector<34x34xf32> to vector<34x34xbf16>
    %cst_36 = arith.constant dense<0.000000e+00> : vector<34x16xf32>
    %73 = tpu.matmul %72, %59, %cst_36 {dimension_numbers = #tpu.dot_dimension_numbers<[1], [0], [0], [1], [0, 0, 1, 1], [], []>} : vector<34x34xbf16>, vector<34x16xbf16>, vector<34x16xf32> -> vector<34x16xf32>
    %74 = vector.extract_strided_slice %53 {offsets = [0, 16], sizes = [34, 16], strides = [1, 1]} : vector<34x384xf32> to vector<34x16xf32>
    %75 = arith.truncf %74 : vector<34x16xf32> to vector<34x16xbf16>
    %76 = vector.extract_strided_slice %53 {offsets = [0, 144], sizes = [34, 16], strides = [1, 1]} : vector<34x384xf32> to vector<34x16xf32>
    %77 = arith.truncf %76 : vector<34x16xf32> to vector<34x16xbf16>
    %78 = vector.extract_strided_slice %53 {offsets = [0, 272], sizes = [34, 16], strides = [1, 1]} : vector<34x384xf32> to vector<34x16xf32>
    %79 = arith.truncf %78 : vector<34x16xf32> to vector<34x16xbf16>
    %cst_37 = arith.constant dense<0.000000e+00> : vector<34x34xf32>
    %80 = tpu.matmul %75, %77, %cst_37 {dimension_numbers = #tpu.dot_dimension_numbers<[1], [1], [0], [0], [0, 0, 1, 0], [], []>} : vector<34x16xbf16>, vector<34x16xbf16>, vector<34x34xf32> -> vector<34x34xf32>
    %81 = arith.addf %80, %0 : vector<34x34xf32>
    %cst_38 = arith.constant dense<0xFF800000> : vector<34xf32>
    %82 = vector.multi_reduction <maximumf>, %81, %cst_38 [1] : vector<34x34xf32> to vector<34xf32>
    %83 = vector.shape_cast %82 : vector<34xf32> to vector<34x1xf32>
    %84 = vector.broadcast %83 : vector<34x1xf32> to vector<34x34xf32>
    %85 = arith.subf %81, %84 : vector<34x34xf32>
    %86 = math.exp %85 : vector<34x34xf32>
    %cst_39 = arith.constant dense<0.000000e+00> : vector<34xf32>
    %87 = vector.multi_reduction <add>, %86, %cst_39 [1] : vector<34x34xf32> to vector<34xf32>
    %88 = vector.shape_cast %87 : vector<34xf32> to vector<34x1xf32>
    %89 = tpu.reciprocal %88 {approx = true} : vector<34x1xf32> -> vector<34x1xf32>
    %90 = vector.broadcast %89 : vector<34x1xf32> to vector<34x34xf32>
    %91 = arith.mulf %86, %90 : vector<34x34xf32>
    %92 = arith.truncf %91 : vector<34x34xf32> to vector<34x34xbf16>
    %cst_40 = arith.constant dense<0.000000e+00> : vector<34x16xf32>
    %93 = tpu.matmul %92, %79, %cst_40 {dimension_numbers = #tpu.dot_dimension_numbers<[1], [0], [0], [1], [0, 0, 1, 1], [], []>} : vector<34x34xbf16>, vector<34x16xbf16>, vector<34x16xf32> -> vector<34x16xf32>
    %94 = vector.extract_strided_slice %53 {offsets = [0, 32], sizes = [34, 16], strides = [1, 1]} : vector<34x384xf32> to vector<34x16xf32>
    %95 = arith.truncf %94 : vector<34x16xf32> to vector<34x16xbf16>
    %96 = vector.extract_strided_slice %53 {offsets = [0, 160], sizes = [34, 16], strides = [1, 1]} : vector<34x384xf32> to vector<34x16xf32>
    %97 = arith.truncf %96 : vector<34x16xf32> to vector<34x16xbf16>
    %98 = vector.extract_strided_slice %53 {offsets = [0, 288], sizes = [34, 16], strides = [1, 1]} : vector<34x384xf32> to vector<34x16xf32>
    %99 = arith.truncf %98 : vector<34x16xf32> to vector<34x16xbf16>
    %cst_41 = arith.constant dense<0.000000e+00> : vector<34x34xf32>
    %100 = tpu.matmul %95, %97, %cst_41 {dimension_numbers = #tpu.dot_dimension_numbers<[1], [1], [0], [0], [0, 0, 1, 0], [], []>} : vector<34x16xbf16>, vector<34x16xbf16>, vector<34x34xf32> -> vector<34x34xf32>
    %101 = arith.addf %100, %0 : vector<34x34xf32>
    %cst_42 = arith.constant dense<0xFF800000> : vector<34xf32>
    %102 = vector.multi_reduction <maximumf>, %101, %cst_42 [1] : vector<34x34xf32> to vector<34xf32>
    %103 = vector.shape_cast %102 : vector<34xf32> to vector<34x1xf32>
    %104 = vector.broadcast %103 : vector<34x1xf32> to vector<34x34xf32>
    %105 = arith.subf %101, %104 : vector<34x34xf32>
    %106 = math.exp %105 : vector<34x34xf32>
    %cst_43 = arith.constant dense<0.000000e+00> : vector<34xf32>
    %107 = vector.multi_reduction <add>, %106, %cst_43 [1] : vector<34x34xf32> to vector<34xf32>
    %108 = vector.shape_cast %107 : vector<34xf32> to vector<34x1xf32>
    %109 = tpu.reciprocal %108 {approx = true} : vector<34x1xf32> -> vector<34x1xf32>
    %110 = vector.broadcast %109 : vector<34x1xf32> to vector<34x34xf32>
    %111 = arith.mulf %106, %110 : vector<34x34xf32>
    %112 = arith.truncf %111 : vector<34x34xf32> to vector<34x34xbf16>
    %cst_44 = arith.constant dense<0.000000e+00> : vector<34x16xf32>
    %113 = tpu.matmul %112, %99, %cst_44 {dimension_numbers = #tpu.dot_dimension_numbers<[1], [0], [0], [1], [0, 0, 1, 1], [], []>} : vector<34x34xbf16>, vector<34x16xbf16>, vector<34x16xf32> -> vector<34x16xf32>
    %114 = vector.extract_strided_slice %53 {offsets = [0, 48], sizes = [34, 16], strides = [1, 1]} : vector<34x384xf32> to vector<34x16xf32>
    %115 = arith.truncf %114 : vector<34x16xf32> to vector<34x16xbf16>
    %116 = vector.extract_strided_slice %53 {offsets = [0, 176], sizes = [34, 16], strides = [1, 1]} : vector<34x384xf32> to vector<34x16xf32>
    %117 = arith.truncf %116 : vector<34x16xf32> to vector<34x16xbf16>
    %118 = vector.extract_strided_slice %53 {offsets = [0, 304], sizes = [34, 16], strides = [1, 1]} : vector<34x384xf32> to vector<34x16xf32>
    %119 = arith.truncf %118 : vector<34x16xf32> to vector<34x16xbf16>
    %cst_45 = arith.constant dense<0.000000e+00> : vector<34x34xf32>
    %120 = tpu.matmul %115, %117, %cst_45 {dimension_numbers = #tpu.dot_dimension_numbers<[1], [1], [0], [0], [0, 0, 1, 0], [], []>} : vector<34x16xbf16>, vector<34x16xbf16>, vector<34x34xf32> -> vector<34x34xf32>
    %121 = arith.addf %120, %0 : vector<34x34xf32>
    %cst_46 = arith.constant dense<0xFF800000> : vector<34xf32>
    %122 = vector.multi_reduction <maximumf>, %121, %cst_46 [1] : vector<34x34xf32> to vector<34xf32>
    %123 = vector.shape_cast %122 : vector<34xf32> to vector<34x1xf32>
    %124 = vector.broadcast %123 : vector<34x1xf32> to vector<34x34xf32>
    %125 = arith.subf %121, %124 : vector<34x34xf32>
    %126 = math.exp %125 : vector<34x34xf32>
    %cst_47 = arith.constant dense<0.000000e+00> : vector<34xf32>
    %127 = vector.multi_reduction <add>, %126, %cst_47 [1] : vector<34x34xf32> to vector<34xf32>
    %128 = vector.shape_cast %127 : vector<34xf32> to vector<34x1xf32>
    %129 = tpu.reciprocal %128 {approx = true} : vector<34x1xf32> -> vector<34x1xf32>
    %130 = vector.broadcast %129 : vector<34x1xf32> to vector<34x34xf32>
    %131 = arith.mulf %126, %130 : vector<34x34xf32>
    %132 = arith.truncf %131 : vector<34x34xf32> to vector<34x34xbf16>
    %cst_48 = arith.constant dense<0.000000e+00> : vector<34x16xf32>
    %133 = tpu.matmul %132, %119, %cst_48 {dimension_numbers = #tpu.dot_dimension_numbers<[1], [0], [0], [1], [0, 0, 1, 1], [], []>} : vector<34x34xbf16>, vector<34x16xbf16>, vector<34x16xf32> -> vector<34x16xf32>
    %134 = vector.extract_strided_slice %53 {offsets = [0, 64], sizes = [34, 16], strides = [1, 1]} : vector<34x384xf32> to vector<34x16xf32>
    %135 = arith.truncf %134 : vector<34x16xf32> to vector<34x16xbf16>
    %136 = vector.extract_strided_slice %53 {offsets = [0, 192], sizes = [34, 16], strides = [1, 1]} : vector<34x384xf32> to vector<34x16xf32>
    %137 = arith.truncf %136 : vector<34x16xf32> to vector<34x16xbf16>
    %138 = vector.extract_strided_slice %53 {offsets = [0, 320], sizes = [34, 16], strides = [1, 1]} : vector<34x384xf32> to vector<34x16xf32>
    %139 = arith.truncf %138 : vector<34x16xf32> to vector<34x16xbf16>
    %cst_49 = arith.constant dense<0.000000e+00> : vector<34x34xf32>
    %140 = tpu.matmul %135, %137, %cst_49 {dimension_numbers = #tpu.dot_dimension_numbers<[1], [1], [0], [0], [0, 0, 1, 0], [], []>} : vector<34x16xbf16>, vector<34x16xbf16>, vector<34x34xf32> -> vector<34x34xf32>
    %141 = arith.addf %140, %0 : vector<34x34xf32>
    %cst_50 = arith.constant dense<0xFF800000> : vector<34xf32>
    %142 = vector.multi_reduction <maximumf>, %141, %cst_50 [1] : vector<34x34xf32> to vector<34xf32>
    %143 = vector.shape_cast %142 : vector<34xf32> to vector<34x1xf32>
    %144 = vector.broadcast %143 : vector<34x1xf32> to vector<34x34xf32>
    %145 = arith.subf %141, %144 : vector<34x34xf32>
    %146 = math.exp %145 : vector<34x34xf32>
    %cst_51 = arith.constant dense<0.000000e+00> : vector<34xf32>
    %147 = vector.multi_reduction <add>, %146, %cst_51 [1] : vector<34x34xf32> to vector<34xf32>
    %148 = vector.shape_cast %147 : vector<34xf32> to vector<34x1xf32>
    %149 = tpu.reciprocal %148 {approx = true} : vector<34x1xf32> -> vector<34x1xf32>
    %150 = vector.broadcast %149 : vector<34x1xf32> to vector<34x34xf32>
    %151 = arith.mulf %146, %150 : vector<34x34xf32>
    %152 = arith.truncf %151 : vector<34x34xf32> to vector<34x34xbf16>
    %cst_52 = arith.constant dense<0.000000e+00> : vector<34x16xf32>
    %153 = tpu.matmul %152, %139, %cst_52 {dimension_numbers = #tpu.dot_dimension_numbers<[1], [0], [0], [1], [0, 0, 1, 1], [], []>} : vector<34x34xbf16>, vector<34x16xbf16>, vector<34x16xf32> -> vector<34x16xf32>
    %154 = vector.extract_strided_slice %53 {offsets = [0, 80], sizes = [34, 16], strides = [1, 1]} : vector<34x384xf32> to vector<34x16xf32>
    %155 = arith.truncf %154 : vector<34x16xf32> to vector<34x16xbf16>
    %156 = vector.extract_strided_slice %53 {offsets = [0, 208], sizes = [34, 16], strides = [1, 1]} : vector<34x384xf32> to vector<34x16xf32>
    %157 = arith.truncf %156 : vector<34x16xf32> to vector<34x16xbf16>
    %158 = vector.extract_strided_slice %53 {offsets = [0, 336], sizes = [34, 16], strides = [1, 1]} : vector<34x384xf32> to vector<34x16xf32>
    %159 = arith.truncf %158 : vector<34x16xf32> to vector<34x16xbf16>
    %cst_53 = arith.constant dense<0.000000e+00> : vector<34x34xf32>
    %160 = tpu.matmul %155, %157, %cst_53 {dimension_numbers = #tpu.dot_dimension_numbers<[1], [1], [0], [0], [0, 0, 1, 0], [], []>} : vector<34x16xbf16>, vector<34x16xbf16>, vector<34x34xf32> -> vector<34x34xf32>
    %161 = arith.addf %160, %0 : vector<34x34xf32>
    %cst_54 = arith.constant dense<0xFF800000> : vector<34xf32>
    %162 = vector.multi_reduction <maximumf>, %161, %cst_54 [1] : vector<34x34xf32> to vector<34xf32>
    %163 = vector.shape_cast %162 : vector<34xf32> to vector<34x1xf32>
    %164 = vector.broadcast %163 : vector<34x1xf32> to vector<34x34xf32>
    %165 = arith.subf %161, %164 : vector<34x34xf32>
    %166 = math.exp %165 : vector<34x34xf32>
    %cst_55 = arith.constant dense<0.000000e+00> : vector<34xf32>
    %167 = vector.multi_reduction <add>, %166, %cst_55 [1] : vector<34x34xf32> to vector<34xf32>
    %168 = vector.shape_cast %167 : vector<34xf32> to vector<34x1xf32>
    %169 = tpu.reciprocal %168 {approx = true} : vector<34x1xf32> -> vector<34x1xf32>
    %170 = vector.broadcast %169 : vector<34x1xf32> to vector<34x34xf32>
    %171 = arith.mulf %166, %170 : vector<34x34xf32>
    %172 = arith.truncf %171 : vector<34x34xf32> to vector<34x34xbf16>
    %cst_56 = arith.constant dense<0.000000e+00> : vector<34x16xf32>
    %173 = tpu.matmul %172, %159, %cst_56 {dimension_numbers = #tpu.dot_dimension_numbers<[1], [0], [0], [1], [0, 0, 1, 1], [], []>} : vector<34x34xbf16>, vector<34x16xbf16>, vector<34x16xf32> -> vector<34x16xf32>
    %174 = vector.extract_strided_slice %53 {offsets = [0, 96], sizes = [34, 16], strides = [1, 1]} : vector<34x384xf32> to vector<34x16xf32>
    %175 = arith.truncf %174 : vector<34x16xf32> to vector<34x16xbf16>
    %176 = vector.extract_strided_slice %53 {offsets = [0, 224], sizes = [34, 16], strides = [1, 1]} : vector<34x384xf32> to vector<34x16xf32>
    %177 = arith.truncf %176 : vector<34x16xf32> to vector<34x16xbf16>
    %178 = vector.extract_strided_slice %53 {offsets = [0, 352], sizes = [34, 16], strides = [1, 1]} : vector<34x384xf32> to vector<34x16xf32>
    %179 = arith.truncf %178 : vector<34x16xf32> to vector<34x16xbf16>
    %cst_57 = arith.constant dense<0.000000e+00> : vector<34x34xf32>
    %180 = tpu.matmul %175, %177, %cst_57 {dimension_numbers = #tpu.dot_dimension_numbers<[1], [1], [0], [0], [0, 0, 1, 0], [], []>} : vector<34x16xbf16>, vector<34x16xbf16>, vector<34x34xf32> -> vector<34x34xf32>
    %181 = arith.addf %180, %0 : vector<34x34xf32>
    %cst_58 = arith.constant dense<0xFF800000> : vector<34xf32>
    %182 = vector.multi_reduction <maximumf>, %181, %cst_58 [1] : vector<34x34xf32> to vector<34xf32>
    %183 = vector.shape_cast %182 : vector<34xf32> to vector<34x1xf32>
    %184 = vector.broadcast %183 : vector<34x1xf32> to vector<34x34xf32>
    %185 = arith.subf %181, %184 : vector<34x34xf32>
    %186 = math.exp %185 : vector<34x34xf32>
    %cst_59 = arith.constant dense<0.000000e+00> : vector<34xf32>
    %187 = vector.multi_reduction <add>, %186, %cst_59 [1] : vector<34x34xf32> to vector<34xf32>
    %188 = vector.shape_cast %187 : vector<34xf32> to vector<34x1xf32>
    %189 = tpu.reciprocal %188 {approx = true} : vector<34x1xf32> -> vector<34x1xf32>
    %190 = vector.broadcast %189 : vector<34x1xf32> to vector<34x34xf32>
    %191 = arith.mulf %186, %190 : vector<34x34xf32>
    %192 = arith.truncf %191 : vector<34x34xf32> to vector<34x34xbf16>
    %cst_60 = arith.constant dense<0.000000e+00> : vector<34x16xf32>
    %193 = tpu.matmul %192, %179, %cst_60 {dimension_numbers = #tpu.dot_dimension_numbers<[1], [0], [0], [1], [0, 0, 1, 1], [], []>} : vector<34x34xbf16>, vector<34x16xbf16>, vector<34x16xf32> -> vector<34x16xf32>
    %194 = vector.extract_strided_slice %53 {offsets = [0, 112], sizes = [34, 16], strides = [1, 1]} : vector<34x384xf32> to vector<34x16xf32>
    %195 = arith.truncf %194 : vector<34x16xf32> to vector<34x16xbf16>
    %196 = vector.extract_strided_slice %53 {offsets = [0, 240], sizes = [34, 16], strides = [1, 1]} : vector<34x384xf32> to vector<34x16xf32>
    %197 = arith.truncf %196 : vector<34x16xf32> to vector<34x16xbf16>
    %198 = vector.extract_strided_slice %53 {offsets = [0, 368], sizes = [34, 16], strides = [1, 1]} : vector<34x384xf32> to vector<34x16xf32>
    %199 = arith.truncf %198 : vector<34x16xf32> to vector<34x16xbf16>
    %cst_61 = arith.constant dense<0.000000e+00> : vector<34x34xf32>
    %200 = tpu.matmul %195, %197, %cst_61 {dimension_numbers = #tpu.dot_dimension_numbers<[1], [1], [0], [0], [0, 0, 1, 0], [], []>} : vector<34x16xbf16>, vector<34x16xbf16>, vector<34x34xf32> -> vector<34x34xf32>
    %201 = arith.addf %200, %0 : vector<34x34xf32>
    %cst_62 = arith.constant dense<0xFF800000> : vector<34xf32>
    %202 = vector.multi_reduction <maximumf>, %201, %cst_62 [1] : vector<34x34xf32> to vector<34xf32>
    %203 = vector.shape_cast %202 : vector<34xf32> to vector<34x1xf32>
    %204 = vector.broadcast %203 : vector<34x1xf32> to vector<34x34xf32>
    %205 = arith.subf %201, %204 : vector<34x34xf32>
    %206 = math.exp %205 : vector<34x34xf32>
    %cst_63 = arith.constant dense<0.000000e+00> : vector<34xf32>
    %207 = vector.multi_reduction <add>, %206, %cst_63 [1] : vector<34x34xf32> to vector<34xf32>
    %208 = vector.shape_cast %207 : vector<34xf32> to vector<34x1xf32>
    %209 = tpu.reciprocal %208 {approx = true} : vector<34x1xf32> -> vector<34x1xf32>
    %210 = vector.broadcast %209 : vector<34x1xf32> to vector<34x34xf32>
    %211 = arith.mulf %206, %210 : vector<34x34xf32>
    %212 = arith.truncf %211 : vector<34x34xf32> to vector<34x34xbf16>
    %cst_64 = arith.constant dense<0.000000e+00> : vector<34x16xf32>
    %213 = tpu.matmul %212, %199, %cst_64 {dimension_numbers = #tpu.dot_dimension_numbers<[1], [0], [0], [1], [0, 0, 1, 1], [], []>} : vector<34x34xbf16>, vector<34x16xbf16>, vector<34x16xf32> -> vector<34x16xf32>
    %214 = tpu.concatenate %73, %93, %113, %133, %153, %173, %193, %213 in 1 : vector<34x16xf32>, vector<34x16xf32>, vector<34x16xf32>, vector<34x16xf32>, vector<34x16xf32>, vector<34x16xf32>, vector<34x16xf32>, vector<34x16xf32> -> vector<34x128xf32>
    %215 = arith.truncf %214 : vector<34x128xf32> to vector<34x128xbf16>
    %c0_65 = arith.constant 0 : index
    %c0_66 = arith.constant 0 : index
    %c384_67 = arith.constant 384 : index
    %216 = vector.load %arg5[%c0_65, %c0_66, %c384_67] : memref<2x128x1024xbf16, #tpu.memory_space<vmem>>, vector<1x128x128xbf16>
    %217 = vector.shape_cast %216 : vector<1x128x128xbf16> to vector<128x128xbf16>
    %cst_68 = arith.constant dense<0.000000e+00> : vector<34x128xf32>
    %218 = tpu.matmul %215, %217, %cst_68 {dimension_numbers = #tpu.dot_dimension_numbers<[1], [0], [0], [1], [0, 0, 1, 1], [], []>} : vector<34x128xbf16>, vector<128x128xbf16>, vector<34x128xf32> -> vector<34x128xf32>
    %219 = arith.addf %17, %218 : vector<34x128xf32>
    %220 = vector.broadcast %25 : vector<1x128xf32> to vector<34x128xf32>
    %221 = arith.addf %219, %220 : vector<34x128xf32>
    %c0_69 = arith.constant 0 : index
    %c0_70 = arith.constant 0 : index
    %c768 = arith.constant 768 : index
    %222 = vector.load %arg7[%c0_69, %c0_70, %c768] : memref<2x1x1664xf32, #tpu.memory_space<vmem>>, vector<1x1x128xf32>
    %223 = vector.shape_cast %222 : vector<1x1x128xf32> to vector<1x128xf32>
    %c0_71 = arith.constant 0 : index
    %c0_72 = arith.constant 0 : index
    %c896 = arith.constant 896 : index
    %224 = vector.load %arg7[%c0_71, %c0_72, %c896] : memref<2x1x1664xf32, #tpu.memory_space<vmem>>, vector<1x1x128xf32>
    %225 = vector.shape_cast %224 : vector<1x1x128xf32> to vector<1x128xf32>
    %c0_73 = arith.constant 0 : index
    %c0_74 = arith.constant 0 : index
    %c1024 = arith.constant 1024 : index
    %226 = vector.load %arg7[%c0_73, %c0_74, %c1024] : memref<2x1x1664xf32, #tpu.memory_space<vmem>>, vector<1x1x512xf32>
    %227 = vector.shape_cast %226 : vector<1x1x512xf32> to vector<1x512xf32>
    %c0_75 = arith.constant 0 : index
    %c0_76 = arith.constant 0 : index
    %c1536 = arith.constant 1536 : index
    %228 = vector.load %arg7[%c0_75, %c0_76, %c1536] : memref<2x1x1664xf32, #tpu.memory_space<vmem>>, vector<1x1x128xf32>
    %229 = vector.shape_cast %228 : vector<1x1x128xf32> to vector<1x128xf32>
    %cst_77 = arith.constant dense<0.000000e+00> : vector<34xf32>
    %230 = vector.multi_reduction <add>, %221, %cst_77 [1] : vector<34x128xf32> to vector<34xf32>
    %231 = vector.shape_cast %230 : vector<34xf32> to vector<34x1xf32>
    %cst_78 = arith.constant 1.280000e+02 : f32
    %232 = vector.broadcast %cst_78 : f32 to vector<34x1xf32>
    %233 = arith.divf %231, %232 : vector<34x1xf32>
    %234 = arith.mulf %221, %221 : vector<34x128xf32>
    %cst_79 = arith.constant dense<0.000000e+00> : vector<34xf32>
    %235 = vector.multi_reduction <add>, %234, %cst_79 [1] : vector<34x128xf32> to vector<34xf32>
    %236 = vector.shape_cast %235 : vector<34xf32> to vector<34x1xf32>
    %cst_80 = arith.constant 1.280000e+02 : f32
    %237 = vector.broadcast %cst_80 : f32 to vector<34x1xf32>
    %238 = arith.divf %236, %237 : vector<34x1xf32>
    %239 = arith.mulf %233, %233 : vector<34x1xf32>
    %240 = arith.subf %238, %239 : vector<34x1xf32>
    %241 = vector.broadcast %233 : vector<34x1xf32> to vector<34x128xf32>
    %242 = arith.subf %221, %241 : vector<34x128xf32>
    %cst_81 = arith.constant 9.99999974E-6 : f32
    %243 = vector.broadcast %cst_81 : f32 to vector<34x1xf32>
    %244 = arith.addf %240, %243 : vector<34x1xf32>
    %245 = math.rsqrt %244 : vector<34x1xf32>
    %246 = vector.broadcast %245 : vector<34x1xf32> to vector<34x128xf32>
    %247 = arith.mulf %242, %246 : vector<34x128xf32>
    %248 = vector.broadcast %223 : vector<1x128xf32> to vector<34x128xf32>
    %249 = arith.mulf %247, %248 : vector<34x128xf32>
    %250 = vector.broadcast %225 : vector<1x128xf32> to vector<34x128xf32>
    %251 = arith.addf %249, %250 : vector<34x128xf32>
    %252 = arith.truncf %251 : vector<34x128xf32> to vector<34x128xbf16>
    %c0_82 = arith.constant 0 : index
    %c0_83 = arith.constant 0 : index
    %c512 = arith.constant 512 : index
    %253 = vector.load %arg5[%c0_82, %c0_83, %c512] : memref<2x128x1024xbf16, #tpu.memory_space<vmem>>, vector<1x128x512xbf16>
    %254 = vector.shape_cast %253 : vector<1x128x512xbf16> to vector<128x512xbf16>
    %cst_84 = arith.constant dense<0.000000e+00> : vector<34x512xf32>
    %255 = tpu.matmul %252, %254, %cst_84 {dimension_numbers = #tpu.dot_dimension_numbers<[1], [0], [0], [1], [0, 0, 1, 1], [], []>} : vector<34x128xbf16>, vector<128x512xbf16>, vector<34x512xf32> -> vector<34x512xf32>
    %256 = vector.broadcast %227 : vector<1x512xf32> to vector<34x512xf32>
    %257 = arith.addf %255, %256 : vector<34x512xf32>
    %cst_85 = arith.constant 5.000000e-01 : f32
    %258 = vector.broadcast %cst_85 : f32 to vector<34x512xf32>
    %259 = arith.mulf %258, %257 : vector<34x512xf32>
    %cst_86 = arith.constant 0.707106769 : f32
    %260 = vector.broadcast %cst_86 : f32 to vector<34x512xf32>
    %261 = arith.mulf %257, %260 : vector<34x512xf32>
    %262 = math.absf %261 : vector<34x512xf32>
    %cst_87 = arith.constant 0.327591091 : f32
    %263 = vector.broadcast %cst_87 : f32 to vector<34x512xf32>
    %264 = arith.mulf %263, %262 : vector<34x512xf32>
    %cst_88 = arith.constant 1.000000e+00 : f32
    %265 = vector.broadcast %cst_88 : f32 to vector<34x512xf32>
    %266 = arith.addf %265, %264 : vector<34x512xf32>
    %267 = tpu.reciprocal %266 {approx = true} : vector<34x512xf32> -> vector<34x512xf32>
    %cst_89 = arith.constant 1.06140542 : f32
    %268 = vector.broadcast %cst_89 : f32 to vector<34x512xf32>
    %269 = arith.mulf %268, %267 : vector<34x512xf32>
    %cst_90 = arith.constant -1.45315206 : f32
    %270 = vector.broadcast %cst_90 : f32 to vector<34x512xf32>
    %271 = arith.addf %269, %270 : vector<34x512xf32>
    %272 = arith.mulf %271, %267 : vector<34x512xf32>
    %cst_91 = arith.constant 1.42141378 : f32
    %273 = vector.broadcast %cst_91 : f32 to vector<34x512xf32>
    %274 = arith.addf %272, %273 : vector<34x512xf32>
    %275 = arith.mulf %274, %267 : vector<34x512xf32>
    %cst_92 = arith.constant -0.284496725 : f32
    %276 = vector.broadcast %cst_92 : f32 to vector<34x512xf32>
    %277 = arith.addf %275, %276 : vector<34x512xf32>
    %278 = arith.mulf %277, %267 : vector<34x512xf32>
    %cst_93 = arith.constant 0.254829586 : f32
    %279 = vector.broadcast %cst_93 : f32 to vector<34x512xf32>
    %280 = arith.addf %278, %279 : vector<34x512xf32>
    %281 = arith.mulf %280, %267 : vector<34x512xf32>
    %cst_94 = arith.constant 0.000000e+00 : f32
    %282 = vector.broadcast %cst_94 : f32 to vector<34x512xf32>
    %283 = arith.subf %282, %262 : vector<34x512xf32>
    %284 = arith.mulf %283, %262 : vector<34x512xf32>
    %285 = math.exp %284 : vector<34x512xf32>
    %286 = arith.mulf %281, %285 : vector<34x512xf32>
    %cst_95 = arith.constant 1.000000e+00 : f32
    %287 = vector.broadcast %cst_95 : f32 to vector<34x512xf32>
    %288 = arith.subf %287, %286 : vector<34x512xf32>
    %cst_96 = arith.constant 0.000000e+00 : f32
    %289 = vector.broadcast %cst_96 : f32 to vector<34x512xf32>
    %290 = arith.cmpf oge, %261, %289 : vector<34x512xf32>
    %cst_97 = arith.constant 0.000000e+00 : f32
    %291 = vector.broadcast %cst_97 : f32 to vector<34x512xf32>
    %292 = arith.subf %291, %288 : vector<34x512xf32>
    %293 = arith.select %290, %288, %292 : vector<34x512xi1>, vector<34x512xf32>
    %cst_98 = arith.constant 1.000000e+00 : f32
    %294 = vector.broadcast %cst_98 : f32 to vector<34x512xf32>
    %295 = arith.addf %294, %293 : vector<34x512xf32>
    %296 = arith.mulf %259, %295 : vector<34x512xf32>
    %297 = arith.truncf %296 : vector<34x512xf32> to vector<34x512xbf16>
    %c0_99 = arith.constant 0 : index
    %c0_100 = arith.constant 0 : index
    %c0_101 = arith.constant 0 : index
    %298 = vector.load %arg6[%c0_99, %c0_100, %c0_101] : memref<2x512x128xbf16, #tpu.memory_space<vmem>>, vector<1x512x128xbf16>
    %299 = vector.shape_cast %298 : vector<1x512x128xbf16> to vector<512x128xbf16>
    %cst_102 = arith.constant dense<0.000000e+00> : vector<34x128xf32>
    %300 = tpu.matmul %297, %299, %cst_102 {dimension_numbers = #tpu.dot_dimension_numbers<[1], [0], [0], [1], [0, 0, 1, 1], [], []>} : vector<34x512xbf16>, vector<512x128xbf16>, vector<34x128xf32> -> vector<34x128xf32>
    %301 = arith.addf %221, %300 : vector<34x128xf32>
    %302 = vector.broadcast %229 : vector<1x128xf32> to vector<34x128xf32>
    %303 = arith.addf %301, %302 : vector<34x128xf32>
    %c1 = arith.constant 1 : index
    %c0_103 = arith.constant 0 : index
    %c0_104 = arith.constant 0 : index
    %304 = vector.load %arg7[%c1, %c0_103, %c0_104] : memref<2x1x1664xf32, #tpu.memory_space<vmem>>, vector<1x1x128xf32>
    %305 = vector.shape_cast %304 : vector<1x1x128xf32> to vector<1x128xf32>
    %c1_105 = arith.constant 1 : index
    %c0_106 = arith.constant 0 : index
    %c128_107 = arith.constant 128 : index
    %306 = vector.load %arg7[%c1_105, %c0_106, %c128_107] : memref<2x1x1664xf32, #tpu.memory_space<vmem>>, vector<1x1x128xf32>
    %307 = vector.shape_cast %306 : vector<1x1x128xf32> to vector<1x128xf32>
    %c1_108 = arith.constant 1 : index
    %c0_109 = arith.constant 0 : index
    %c256_110 = arith.constant 256 : index
    %308 = vector.load %arg7[%c1_108, %c0_109, %c256_110] : memref<2x1x1664xf32, #tpu.memory_space<vmem>>, vector<1x1x384xf32>
    %309 = vector.shape_cast %308 : vector<1x1x384xf32> to vector<1x384xf32>
    %c1_111 = arith.constant 1 : index
    %c0_112 = arith.constant 0 : index
    %c640_113 = arith.constant 640 : index
    %310 = vector.load %arg7[%c1_111, %c0_112, %c640_113] : memref<2x1x1664xf32, #tpu.memory_space<vmem>>, vector<1x1x128xf32>
    %311 = vector.shape_cast %310 : vector<1x1x128xf32> to vector<1x128xf32>
    %cst_114 = arith.constant dense<0.000000e+00> : vector<34xf32>
    %312 = vector.multi_reduction <add>, %303, %cst_114 [1] : vector<34x128xf32> to vector<34xf32>
    %313 = vector.shape_cast %312 : vector<34xf32> to vector<34x1xf32>
    %cst_115 = arith.constant 1.280000e+02 : f32
    %314 = vector.broadcast %cst_115 : f32 to vector<34x1xf32>
    %315 = arith.divf %313, %314 : vector<34x1xf32>
    %316 = arith.mulf %303, %303 : vector<34x128xf32>
    %cst_116 = arith.constant dense<0.000000e+00> : vector<34xf32>
    %317 = vector.multi_reduction <add>, %316, %cst_116 [1] : vector<34x128xf32> to vector<34xf32>
    %318 = vector.shape_cast %317 : vector<34xf32> to vector<34x1xf32>
    %cst_117 = arith.constant 1.280000e+02 : f32
    %319 = vector.broadcast %cst_117 : f32 to vector<34x1xf32>
    %320 = arith.divf %318, %319 : vector<34x1xf32>
    %321 = arith.mulf %315, %315 : vector<34x1xf32>
    %322 = arith.subf %320, %321 : vector<34x1xf32>
    %323 = vector.broadcast %315 : vector<34x1xf32> to vector<34x128xf32>
    %324 = arith.subf %303, %323 : vector<34x128xf32>
    %cst_118 = arith.constant 9.99999974E-6 : f32
    %325 = vector.broadcast %cst_118 : f32 to vector<34x1xf32>
    %326 = arith.addf %322, %325 : vector<34x1xf32>
    %327 = math.rsqrt %326 : vector<34x1xf32>
    %328 = vector.broadcast %327 : vector<34x1xf32> to vector<34x128xf32>
    %329 = arith.mulf %324, %328 : vector<34x128xf32>
    %330 = vector.broadcast %305 : vector<1x128xf32> to vector<34x128xf32>
    %331 = arith.mulf %329, %330 : vector<34x128xf32>
    %332 = vector.broadcast %307 : vector<1x128xf32> to vector<34x128xf32>
    %333 = arith.addf %331, %332 : vector<34x128xf32>
    %334 = arith.truncf %333 : vector<34x128xf32> to vector<34x128xbf16>
    %c1_119 = arith.constant 1 : index
    %c0_120 = arith.constant 0 : index
    %c0_121 = arith.constant 0 : index
    %335 = vector.load %arg5[%c1_119, %c0_120, %c0_121] : memref<2x128x1024xbf16, #tpu.memory_space<vmem>>, vector<1x128x384xbf16>
    %336 = vector.shape_cast %335 : vector<1x128x384xbf16> to vector<128x384xbf16>
    %cst_122 = arith.constant dense<0.000000e+00> : vector<34x384xf32>
    %337 = tpu.matmul %334, %336, %cst_122 {dimension_numbers = #tpu.dot_dimension_numbers<[1], [0], [0], [1], [0, 0, 1, 1], [], []>} : vector<34x128xbf16>, vector<128x384xbf16>, vector<34x384xf32> -> vector<34x384xf32>
    %338 = vector.broadcast %309 : vector<1x384xf32> to vector<34x384xf32>
    %339 = arith.addf %337, %338 : vector<34x384xf32>
    %340 = vector.extract_strided_slice %339 {offsets = [0, 0], sizes = [34, 16], strides = [1, 1]} : vector<34x384xf32> to vector<34x16xf32>
    %341 = arith.truncf %340 : vector<34x16xf32> to vector<34x16xbf16>
    %342 = vector.extract_strided_slice %339 {offsets = [0, 128], sizes = [34, 16], strides = [1, 1]} : vector<34x384xf32> to vector<34x16xf32>
    %343 = arith.truncf %342 : vector<34x16xf32> to vector<34x16xbf16>
    %344 = vector.extract_strided_slice %339 {offsets = [0, 256], sizes = [34, 16], strides = [1, 1]} : vector<34x384xf32> to vector<34x16xf32>
    %345 = arith.truncf %344 : vector<34x16xf32> to vector<34x16xbf16>
    %cst_123 = arith.constant dense<0.000000e+00> : vector<34x34xf32>
    %346 = tpu.matmul %341, %343, %cst_123 {dimension_numbers = #tpu.dot_dimension_numbers<[1], [1], [0], [0], [0, 0, 1, 0], [], []>} : vector<34x16xbf16>, vector<34x16xbf16>, vector<34x34xf32> -> vector<34x34xf32>
    %347 = arith.addf %346, %0 : vector<34x34xf32>
    %cst_124 = arith.constant dense<0xFF800000> : vector<34xf32>
    %348 = vector.multi_reduction <maximumf>, %347, %cst_124 [1] : vector<34x34xf32> to vector<34xf32>
    %349 = vector.shape_cast %348 : vector<34xf32> to vector<34x1xf32>
    %350 = vector.broadcast %349 : vector<34x1xf32> to vector<34x34xf32>
    %351 = arith.subf %347, %350 : vector<34x34xf32>
    %352 = math.exp %351 : vector<34x34xf32>
    %cst_125 = arith.constant dense<0.000000e+00> : vector<34xf32>
    %353 = vector.multi_reduction <add>, %352, %cst_125 [1] : vector<34x34xf32> to vector<34xf32>
    %354 = vector.shape_cast %353 : vector<34xf32> to vector<34x1xf32>
    %355 = tpu.reciprocal %354 {approx = true} : vector<34x1xf32> -> vector<34x1xf32>
    %356 = vector.broadcast %355 : vector<34x1xf32> to vector<34x34xf32>
    %357 = arith.mulf %352, %356 : vector<34x34xf32>
    %358 = arith.truncf %357 : vector<34x34xf32> to vector<34x34xbf16>
    %cst_126 = arith.constant dense<0.000000e+00> : vector<34x16xf32>
    %359 = tpu.matmul %358, %345, %cst_126 {dimension_numbers = #tpu.dot_dimension_numbers<[1], [0], [0], [1], [0, 0, 1, 1], [], []>} : vector<34x34xbf16>, vector<34x16xbf16>, vector<34x16xf32> -> vector<34x16xf32>
    %360 = vector.extract_strided_slice %339 {offsets = [0, 16], sizes = [34, 16], strides = [1, 1]} : vector<34x384xf32> to vector<34x16xf32>
    %361 = arith.truncf %360 : vector<34x16xf32> to vector<34x16xbf16>
    %362 = vector.extract_strided_slice %339 {offsets = [0, 144], sizes = [34, 16], strides = [1, 1]} : vector<34x384xf32> to vector<34x16xf32>
    %363 = arith.truncf %362 : vector<34x16xf32> to vector<34x16xbf16>
    %364 = vector.extract_strided_slice %339 {offsets = [0, 272], sizes = [34, 16], strides = [1, 1]} : vector<34x384xf32> to vector<34x16xf32>
    %365 = arith.truncf %364 : vector<34x16xf32> to vector<34x16xbf16>
    %cst_127 = arith.constant dense<0.000000e+00> : vector<34x34xf32>
    %366 = tpu.matmul %361, %363, %cst_127 {dimension_numbers = #tpu.dot_dimension_numbers<[1], [1], [0], [0], [0, 0, 1, 0], [], []>} : vector<34x16xbf16>, vector<34x16xbf16>, vector<34x34xf32> -> vector<34x34xf32>
    %367 = arith.addf %366, %0 : vector<34x34xf32>
    %cst_128 = arith.constant dense<0xFF800000> : vector<34xf32>
    %368 = vector.multi_reduction <maximumf>, %367, %cst_128 [1] : vector<34x34xf32> to vector<34xf32>
    %369 = vector.shape_cast %368 : vector<34xf32> to vector<34x1xf32>
    %370 = vector.broadcast %369 : vector<34x1xf32> to vector<34x34xf32>
    %371 = arith.subf %367, %370 : vector<34x34xf32>
    %372 = math.exp %371 : vector<34x34xf32>
    %cst_129 = arith.constant dense<0.000000e+00> : vector<34xf32>
    %373 = vector.multi_reduction <add>, %372, %cst_129 [1] : vector<34x34xf32> to vector<34xf32>
    %374 = vector.shape_cast %373 : vector<34xf32> to vector<34x1xf32>
    %375 = tpu.reciprocal %374 {approx = true} : vector<34x1xf32> -> vector<34x1xf32>
    %376 = vector.broadcast %375 : vector<34x1xf32> to vector<34x34xf32>
    %377 = arith.mulf %372, %376 : vector<34x34xf32>
    %378 = arith.truncf %377 : vector<34x34xf32> to vector<34x34xbf16>
    %cst_130 = arith.constant dense<0.000000e+00> : vector<34x16xf32>
    %379 = tpu.matmul %378, %365, %cst_130 {dimension_numbers = #tpu.dot_dimension_numbers<[1], [0], [0], [1], [0, 0, 1, 1], [], []>} : vector<34x34xbf16>, vector<34x16xbf16>, vector<34x16xf32> -> vector<34x16xf32>
    %380 = vector.extract_strided_slice %339 {offsets = [0, 32], sizes = [34, 16], strides = [1, 1]} : vector<34x384xf32> to vector<34x16xf32>
    %381 = arith.truncf %380 : vector<34x16xf32> to vector<34x16xbf16>
    %382 = vector.extract_strided_slice %339 {offsets = [0, 160], sizes = [34, 16], strides = [1, 1]} : vector<34x384xf32> to vector<34x16xf32>
    %383 = arith.truncf %382 : vector<34x16xf32> to vector<34x16xbf16>
    %384 = vector.extract_strided_slice %339 {offsets = [0, 288], sizes = [34, 16], strides = [1, 1]} : vector<34x384xf32> to vector<34x16xf32>
    %385 = arith.truncf %384 : vector<34x16xf32> to vector<34x16xbf16>
    %cst_131 = arith.constant dense<0.000000e+00> : vector<34x34xf32>
    %386 = tpu.matmul %381, %383, %cst_131 {dimension_numbers = #tpu.dot_dimension_numbers<[1], [1], [0], [0], [0, 0, 1, 0], [], []>} : vector<34x16xbf16>, vector<34x16xbf16>, vector<34x34xf32> -> vector<34x34xf32>
    %387 = arith.addf %386, %0 : vector<34x34xf32>
    %cst_132 = arith.constant dense<0xFF800000> : vector<34xf32>
    %388 = vector.multi_reduction <maximumf>, %387, %cst_132 [1] : vector<34x34xf32> to vector<34xf32>
    %389 = vector.shape_cast %388 : vector<34xf32> to vector<34x1xf32>
    %390 = vector.broadcast %389 : vector<34x1xf32> to vector<34x34xf32>
    %391 = arith.subf %387, %390 : vector<34x34xf32>
    %392 = math.exp %391 : vector<34x34xf32>
    %cst_133 = arith.constant dense<0.000000e+00> : vector<34xf32>
    %393 = vector.multi_reduction <add>, %392, %cst_133 [1] : vector<34x34xf32> to vector<34xf32>
    %394 = vector.shape_cast %393 : vector<34xf32> to vector<34x1xf32>
    %395 = tpu.reciprocal %394 {approx = true} : vector<34x1xf32> -> vector<34x1xf32>
    %396 = vector.broadcast %395 : vector<34x1xf32> to vector<34x34xf32>
    %397 = arith.mulf %392, %396 : vector<34x34xf32>
    %398 = arith.truncf %397 : vector<34x34xf32> to vector<34x34xbf16>
    %cst_134 = arith.constant dense<0.000000e+00> : vector<34x16xf32>
    %399 = tpu.matmul %398, %385, %cst_134 {dimension_numbers = #tpu.dot_dimension_numbers<[1], [0], [0], [1], [0, 0, 1, 1], [], []>} : vector<34x34xbf16>, vector<34x16xbf16>, vector<34x16xf32> -> vector<34x16xf32>
    %400 = vector.extract_strided_slice %339 {offsets = [0, 48], sizes = [34, 16], strides = [1, 1]} : vector<34x384xf32> to vector<34x16xf32>
    %401 = arith.truncf %400 : vector<34x16xf32> to vector<34x16xbf16>
    %402 = vector.extract_strided_slice %339 {offsets = [0, 176], sizes = [34, 16], strides = [1, 1]} : vector<34x384xf32> to vector<34x16xf32>
    %403 = arith.truncf %402 : vector<34x16xf32> to vector<34x16xbf16>
    %404 = vector.extract_strided_slice %339 {offsets = [0, 304], sizes = [34, 16], strides = [1, 1]} : vector<34x384xf32> to vector<34x16xf32>
    %405 = arith.truncf %404 : vector<34x16xf32> to vector<34x16xbf16>
    %cst_135 = arith.constant dense<0.000000e+00> : vector<34x34xf32>
    %406 = tpu.matmul %401, %403, %cst_135 {dimension_numbers = #tpu.dot_dimension_numbers<[1], [1], [0], [0], [0, 0, 1, 0], [], []>} : vector<34x16xbf16>, vector<34x16xbf16>, vector<34x34xf32> -> vector<34x34xf32>
    %407 = arith.addf %406, %0 : vector<34x34xf32>
    %cst_136 = arith.constant dense<0xFF800000> : vector<34xf32>
    %408 = vector.multi_reduction <maximumf>, %407, %cst_136 [1] : vector<34x34xf32> to vector<34xf32>
    %409 = vector.shape_cast %408 : vector<34xf32> to vector<34x1xf32>
    %410 = vector.broadcast %409 : vector<34x1xf32> to vector<34x34xf32>
    %411 = arith.subf %407, %410 : vector<34x34xf32>
    %412 = math.exp %411 : vector<34x34xf32>
    %cst_137 = arith.constant dense<0.000000e+00> : vector<34xf32>
    %413 = vector.multi_reduction <add>, %412, %cst_137 [1] : vector<34x34xf32> to vector<34xf32>
    %414 = vector.shape_cast %413 : vector<34xf32> to vector<34x1xf32>
    %415 = tpu.reciprocal %414 {approx = true} : vector<34x1xf32> -> vector<34x1xf32>
    %416 = vector.broadcast %415 : vector<34x1xf32> to vector<34x34xf32>
    %417 = arith.mulf %412, %416 : vector<34x34xf32>
    %418 = arith.truncf %417 : vector<34x34xf32> to vector<34x34xbf16>
    %cst_138 = arith.constant dense<0.000000e+00> : vector<34x16xf32>
    %419 = tpu.matmul %418, %405, %cst_138 {dimension_numbers = #tpu.dot_dimension_numbers<[1], [0], [0], [1], [0, 0, 1, 1], [], []>} : vector<34x34xbf16>, vector<34x16xbf16>, vector<34x16xf32> -> vector<34x16xf32>
    %420 = vector.extract_strided_slice %339 {offsets = [0, 64], sizes = [34, 16], strides = [1, 1]} : vector<34x384xf32> to vector<34x16xf32>
    %421 = arith.truncf %420 : vector<34x16xf32> to vector<34x16xbf16>
    %422 = vector.extract_strided_slice %339 {offsets = [0, 192], sizes = [34, 16], strides = [1, 1]} : vector<34x384xf32> to vector<34x16xf32>
    %423 = arith.truncf %422 : vector<34x16xf32> to vector<34x16xbf16>
    %424 = vector.extract_strided_slice %339 {offsets = [0, 320], sizes = [34, 16], strides = [1, 1]} : vector<34x384xf32> to vector<34x16xf32>
    %425 = arith.truncf %424 : vector<34x16xf32> to vector<34x16xbf16>
    %cst_139 = arith.constant dense<0.000000e+00> : vector<34x34xf32>
    %426 = tpu.matmul %421, %423, %cst_139 {dimension_numbers = #tpu.dot_dimension_numbers<[1], [1], [0], [0], [0, 0, 1, 0], [], []>} : vector<34x16xbf16>, vector<34x16xbf16>, vector<34x34xf32> -> vector<34x34xf32>
    %427 = arith.addf %426, %0 : vector<34x34xf32>
    %cst_140 = arith.constant dense<0xFF800000> : vector<34xf32>
    %428 = vector.multi_reduction <maximumf>, %427, %cst_140 [1] : vector<34x34xf32> to vector<34xf32>
    %429 = vector.shape_cast %428 : vector<34xf32> to vector<34x1xf32>
    %430 = vector.broadcast %429 : vector<34x1xf32> to vector<34x34xf32>
    %431 = arith.subf %427, %430 : vector<34x34xf32>
    %432 = math.exp %431 : vector<34x34xf32>
    %cst_141 = arith.constant dense<0.000000e+00> : vector<34xf32>
    %433 = vector.multi_reduction <add>, %432, %cst_141 [1] : vector<34x34xf32> to vector<34xf32>
    %434 = vector.shape_cast %433 : vector<34xf32> to vector<34x1xf32>
    %435 = tpu.reciprocal %434 {approx = true} : vector<34x1xf32> -> vector<34x1xf32>
    %436 = vector.broadcast %435 : vector<34x1xf32> to vector<34x34xf32>
    %437 = arith.mulf %432, %436 : vector<34x34xf32>
    %438 = arith.truncf %437 : vector<34x34xf32> to vector<34x34xbf16>
    %cst_142 = arith.constant dense<0.000000e+00> : vector<34x16xf32>
    %439 = tpu.matmul %438, %425, %cst_142 {dimension_numbers = #tpu.dot_dimension_numbers<[1], [0], [0], [1], [0, 0, 1, 1], [], []>} : vector<34x34xbf16>, vector<34x16xbf16>, vector<34x16xf32> -> vector<34x16xf32>
    %440 = vector.extract_strided_slice %339 {offsets = [0, 80], sizes = [34, 16], strides = [1, 1]} : vector<34x384xf32> to vector<34x16xf32>
    %441 = arith.truncf %440 : vector<34x16xf32> to vector<34x16xbf16>
    %442 = vector.extract_strided_slice %339 {offsets = [0, 208], sizes = [34, 16], strides = [1, 1]} : vector<34x384xf32> to vector<34x16xf32>
    %443 = arith.truncf %442 : vector<34x16xf32> to vector<34x16xbf16>
    %444 = vector.extract_strided_slice %339 {offsets = [0, 336], sizes = [34, 16], strides = [1, 1]} : vector<34x384xf32> to vector<34x16xf32>
    %445 = arith.truncf %444 : vector<34x16xf32> to vector<34x16xbf16>
    %cst_143 = arith.constant dense<0.000000e+00> : vector<34x34xf32>
    %446 = tpu.matmul %441, %443, %cst_143 {dimension_numbers = #tpu.dot_dimension_numbers<[1], [1], [0], [0], [0, 0, 1, 0], [], []>} : vector<34x16xbf16>, vector<34x16xbf16>, vector<34x34xf32> -> vector<34x34xf32>
    %447 = arith.addf %446, %0 : vector<34x34xf32>
    %cst_144 = arith.constant dense<0xFF800000> : vector<34xf32>
    %448 = vector.multi_reduction <maximumf>, %447, %cst_144 [1] : vector<34x34xf32> to vector<34xf32>
    %449 = vector.shape_cast %448 : vector<34xf32> to vector<34x1xf32>
    %450 = vector.broadcast %449 : vector<34x1xf32> to vector<34x34xf32>
    %451 = arith.subf %447, %450 : vector<34x34xf32>
    %452 = math.exp %451 : vector<34x34xf32>
    %cst_145 = arith.constant dense<0.000000e+00> : vector<34xf32>
    %453 = vector.multi_reduction <add>, %452, %cst_145 [1] : vector<34x34xf32> to vector<34xf32>
    %454 = vector.shape_cast %453 : vector<34xf32> to vector<34x1xf32>
    %455 = tpu.reciprocal %454 {approx = true} : vector<34x1xf32> -> vector<34x1xf32>
    %456 = vector.broadcast %455 : vector<34x1xf32> to vector<34x34xf32>
    %457 = arith.mulf %452, %456 : vector<34x34xf32>
    %458 = arith.truncf %457 : vector<34x34xf32> to vector<34x34xbf16>
    %cst_146 = arith.constant dense<0.000000e+00> : vector<34x16xf32>
    %459 = tpu.matmul %458, %445, %cst_146 {dimension_numbers = #tpu.dot_dimension_numbers<[1], [0], [0], [1], [0, 0, 1, 1], [], []>} : vector<34x34xbf16>, vector<34x16xbf16>, vector<34x16xf32> -> vector<34x16xf32>
    %460 = vector.extract_strided_slice %339 {offsets = [0, 96], sizes = [34, 16], strides = [1, 1]} : vector<34x384xf32> to vector<34x16xf32>
    %461 = arith.truncf %460 : vector<34x16xf32> to vector<34x16xbf16>
    %462 = vector.extract_strided_slice %339 {offsets = [0, 224], sizes = [34, 16], strides = [1, 1]} : vector<34x384xf32> to vector<34x16xf32>
    %463 = arith.truncf %462 : vector<34x16xf32> to vector<34x16xbf16>
    %464 = vector.extract_strided_slice %339 {offsets = [0, 352], sizes = [34, 16], strides = [1, 1]} : vector<34x384xf32> to vector<34x16xf32>
    %465 = arith.truncf %464 : vector<34x16xf32> to vector<34x16xbf16>
    %cst_147 = arith.constant dense<0.000000e+00> : vector<34x34xf32>
    %466 = tpu.matmul %461, %463, %cst_147 {dimension_numbers = #tpu.dot_dimension_numbers<[1], [1], [0], [0], [0, 0, 1, 0], [], []>} : vector<34x16xbf16>, vector<34x16xbf16>, vector<34x34xf32> -> vector<34x34xf32>
    %467 = arith.addf %466, %0 : vector<34x34xf32>
    %cst_148 = arith.constant dense<0xFF800000> : vector<34xf32>
    %468 = vector.multi_reduction <maximumf>, %467, %cst_148 [1] : vector<34x34xf32> to vector<34xf32>
    %469 = vector.shape_cast %468 : vector<34xf32> to vector<34x1xf32>
    %470 = vector.broadcast %469 : vector<34x1xf32> to vector<34x34xf32>
    %471 = arith.subf %467, %470 : vector<34x34xf32>
    %472 = math.exp %471 : vector<34x34xf32>
    %cst_149 = arith.constant dense<0.000000e+00> : vector<34xf32>
    %473 = vector.multi_reduction <add>, %472, %cst_149 [1] : vector<34x34xf32> to vector<34xf32>
    %474 = vector.shape_cast %473 : vector<34xf32> to vector<34x1xf32>
    %475 = tpu.reciprocal %474 {approx = true} : vector<34x1xf32> -> vector<34x1xf32>
    %476 = vector.broadcast %475 : vector<34x1xf32> to vector<34x34xf32>
    %477 = arith.mulf %472, %476 : vector<34x34xf32>
    %478 = arith.truncf %477 : vector<34x34xf32> to vector<34x34xbf16>
    %cst_150 = arith.constant dense<0.000000e+00> : vector<34x16xf32>
    %479 = tpu.matmul %478, %465, %cst_150 {dimension_numbers = #tpu.dot_dimension_numbers<[1], [0], [0], [1], [0, 0, 1, 1], [], []>} : vector<34x34xbf16>, vector<34x16xbf16>, vector<34x16xf32> -> vector<34x16xf32>
    %480 = vector.extract_strided_slice %339 {offsets = [0, 112], sizes = [34, 16], strides = [1, 1]} : vector<34x384xf32> to vector<34x16xf32>
    %481 = arith.truncf %480 : vector<34x16xf32> to vector<34x16xbf16>
    %482 = vector.extract_strided_slice %339 {offsets = [0, 240], sizes = [34, 16], strides = [1, 1]} : vector<34x384xf32> to vector<34x16xf32>
    %483 = arith.truncf %482 : vector<34x16xf32> to vector<34x16xbf16>
    %484 = vector.extract_strided_slice %339 {offsets = [0, 368], sizes = [34, 16], strides = [1, 1]} : vector<34x384xf32> to vector<34x16xf32>
    %485 = arith.truncf %484 : vector<34x16xf32> to vector<34x16xbf16>
    %cst_151 = arith.constant dense<0.000000e+00> : vector<34x34xf32>
    %486 = tpu.matmul %481, %483, %cst_151 {dimension_numbers = #tpu.dot_dimension_numbers<[1], [1], [0], [0], [0, 0, 1, 0], [], []>} : vector<34x16xbf16>, vector<34x16xbf16>, vector<34x34xf32> -> vector<34x34xf32>
    %487 = arith.addf %486, %0 : vector<34x34xf32>
    %cst_152 = arith.constant dense<0xFF800000> : vector<34xf32>
    %488 = vector.multi_reduction <maximumf>, %487, %cst_152 [1] : vector<34x34xf32> to vector<34xf32>
    %489 = vector.shape_cast %488 : vector<34xf32> to vector<34x1xf32>
    %490 = vector.broadcast %489 : vector<34x1xf32> to vector<34x34xf32>
    %491 = arith.subf %487, %490 : vector<34x34xf32>
    %492 = math.exp %491 : vector<34x34xf32>
    %cst_153 = arith.constant dense<0.000000e+00> : vector<34xf32>
    %493 = vector.multi_reduction <add>, %492, %cst_153 [1] : vector<34x34xf32> to vector<34xf32>
    %494 = vector.shape_cast %493 : vector<34xf32> to vector<34x1xf32>
    %495 = tpu.reciprocal %494 {approx = true} : vector<34x1xf32> -> vector<34x1xf32>
    %496 = vector.broadcast %495 : vector<34x1xf32> to vector<34x34xf32>
    %497 = arith.mulf %492, %496 : vector<34x34xf32>
    %498 = arith.truncf %497 : vector<34x34xf32> to vector<34x34xbf16>
    %cst_154 = arith.constant dense<0.000000e+00> : vector<34x16xf32>
    %499 = tpu.matmul %498, %485, %cst_154 {dimension_numbers = #tpu.dot_dimension_numbers<[1], [0], [0], [1], [0, 0, 1, 1], [], []>} : vector<34x34xbf16>, vector<34x16xbf16>, vector<34x16xf32> -> vector<34x16xf32>
    %500 = tpu.concatenate %359, %379, %399, %419, %439, %459, %479, %499 in 1 : vector<34x16xf32>, vector<34x16xf32>, vector<34x16xf32>, vector<34x16xf32>, vector<34x16xf32>, vector<34x16xf32>, vector<34x16xf32>, vector<34x16xf32> -> vector<34x128xf32>
    %501 = arith.truncf %500 : vector<34x128xf32> to vector<34x128xbf16>
    %c1_155 = arith.constant 1 : index
    %c0_156 = arith.constant 0 : index
    %c384_157 = arith.constant 384 : index
    %502 = vector.load %arg5[%c1_155, %c0_156, %c384_157] : memref<2x128x1024xbf16, #tpu.memory_space<vmem>>, vector<1x128x128xbf16>
    %503 = vector.shape_cast %502 : vector<1x128x128xbf16> to vector<128x128xbf16>
    %cst_158 = arith.constant dense<0.000000e+00> : vector<34x128xf32>
    %504 = tpu.matmul %501, %503, %cst_158 {dimension_numbers = #tpu.dot_dimension_numbers<[1], [0], [0], [1], [0, 0, 1, 1], [], []>} : vector<34x128xbf16>, vector<128x128xbf16>, vector<34x128xf32> -> vector<34x128xf32>
    %505 = arith.addf %303, %504 : vector<34x128xf32>
    %506 = vector.broadcast %311 : vector<1x128xf32> to vector<34x128xf32>
    %507 = arith.addf %505, %506 : vector<34x128xf32>
    %c1_159 = arith.constant 1 : index
    %c0_160 = arith.constant 0 : index
    %c768_161 = arith.constant 768 : index
    %508 = vector.load %arg7[%c1_159, %c0_160, %c768_161] : memref<2x1x1664xf32, #tpu.memory_space<vmem>>, vector<1x1x128xf32>
    %509 = vector.shape_cast %508 : vector<1x1x128xf32> to vector<1x128xf32>
    %c1_162 = arith.constant 1 : index
    %c0_163 = arith.constant 0 : index
    %c896_164 = arith.constant 896 : index
    %510 = vector.load %arg7[%c1_162, %c0_163, %c896_164] : memref<2x1x1664xf32, #tpu.memory_space<vmem>>, vector<1x1x128xf32>
    %511 = vector.shape_cast %510 : vector<1x1x128xf32> to vector<1x128xf32>
    %c1_165 = arith.constant 1 : index
    %c0_166 = arith.constant 0 : index
    %c1024_167 = arith.constant 1024 : index
    %512 = vector.load %arg7[%c1_165, %c0_166, %c1024_167] : memref<2x1x1664xf32, #tpu.memory_space<vmem>>, vector<1x1x512xf32>
    %513 = vector.shape_cast %512 : vector<1x1x512xf32> to vector<1x512xf32>
    %c1_168 = arith.constant 1 : index
    %c0_169 = arith.constant 0 : index
    %c1536_170 = arith.constant 1536 : index
    %514 = vector.load %arg7[%c1_168, %c0_169, %c1536_170] : memref<2x1x1664xf32, #tpu.memory_space<vmem>>, vector<1x1x128xf32>
    %515 = vector.shape_cast %514 : vector<1x1x128xf32> to vector<1x128xf32>
    %cst_171 = arith.constant dense<0.000000e+00> : vector<34xf32>
    %516 = vector.multi_reduction <add>, %507, %cst_171 [1] : vector<34x128xf32> to vector<34xf32>
    %517 = vector.shape_cast %516 : vector<34xf32> to vector<34x1xf32>
    %cst_172 = arith.constant 1.280000e+02 : f32
    %518 = vector.broadcast %cst_172 : f32 to vector<34x1xf32>
    %519 = arith.divf %517, %518 : vector<34x1xf32>
    %520 = arith.mulf %507, %507 : vector<34x128xf32>
    %cst_173 = arith.constant dense<0.000000e+00> : vector<34xf32>
    %521 = vector.multi_reduction <add>, %520, %cst_173 [1] : vector<34x128xf32> to vector<34xf32>
    %522 = vector.shape_cast %521 : vector<34xf32> to vector<34x1xf32>
    %cst_174 = arith.constant 1.280000e+02 : f32
    %523 = vector.broadcast %cst_174 : f32 to vector<34x1xf32>
    %524 = arith.divf %522, %523 : vector<34x1xf32>
    %525 = arith.mulf %519, %519 : vector<34x1xf32>
    %526 = arith.subf %524, %525 : vector<34x1xf32>
    %527 = vector.broadcast %519 : vector<34x1xf32> to vector<34x128xf32>
    %528 = arith.subf %507, %527 : vector<34x128xf32>
    %cst_175 = arith.constant 9.99999974E-6 : f32
    %529 = vector.broadcast %cst_175 : f32 to vector<34x1xf32>
    %530 = arith.addf %526, %529 : vector<34x1xf32>
    %531 = math.rsqrt %530 : vector<34x1xf32>
    %532 = vector.broadcast %531 : vector<34x1xf32> to vector<34x128xf32>
    %533 = arith.mulf %528, %532 : vector<34x128xf32>
    %534 = vector.broadcast %509 : vector<1x128xf32> to vector<34x128xf32>
    %535 = arith.mulf %533, %534 : vector<34x128xf32>
    %536 = vector.broadcast %511 : vector<1x128xf32> to vector<34x128xf32>
    %537 = arith.addf %535, %536 : vector<34x128xf32>
    %538 = arith.truncf %537 : vector<34x128xf32> to vector<34x128xbf16>
    %c1_176 = arith.constant 1 : index
    %c0_177 = arith.constant 0 : index
    %c512_178 = arith.constant 512 : index
    %539 = vector.load %arg5[%c1_176, %c0_177, %c512_178] : memref<2x128x1024xbf16, #tpu.memory_space<vmem>>, vector<1x128x512xbf16>
    %540 = vector.shape_cast %539 : vector<1x128x512xbf16> to vector<128x512xbf16>
    %cst_179 = arith.constant dense<0.000000e+00> : vector<34x512xf32>
    %541 = tpu.matmul %538, %540, %cst_179 {dimension_numbers = #tpu.dot_dimension_numbers<[1], [0], [0], [1], [0, 0, 1, 1], [], []>} : vector<34x128xbf16>, vector<128x512xbf16>, vector<34x512xf32> -> vector<34x512xf32>
    %542 = vector.broadcast %513 : vector<1x512xf32> to vector<34x512xf32>
    %543 = arith.addf %541, %542 : vector<34x512xf32>
    %cst_180 = arith.constant 5.000000e-01 : f32
    %544 = vector.broadcast %cst_180 : f32 to vector<34x512xf32>
    %545 = arith.mulf %544, %543 : vector<34x512xf32>
    %cst_181 = arith.constant 0.707106769 : f32
    %546 = vector.broadcast %cst_181 : f32 to vector<34x512xf32>
    %547 = arith.mulf %543, %546 : vector<34x512xf32>
    %548 = math.absf %547 : vector<34x512xf32>
    %cst_182 = arith.constant 0.327591091 : f32
    %549 = vector.broadcast %cst_182 : f32 to vector<34x512xf32>
    %550 = arith.mulf %549, %548 : vector<34x512xf32>
    %cst_183 = arith.constant 1.000000e+00 : f32
    %551 = vector.broadcast %cst_183 : f32 to vector<34x512xf32>
    %552 = arith.addf %551, %550 : vector<34x512xf32>
    %553 = tpu.reciprocal %552 {approx = true} : vector<34x512xf32> -> vector<34x512xf32>
    %cst_184 = arith.constant 1.06140542 : f32
    %554 = vector.broadcast %cst_184 : f32 to vector<34x512xf32>
    %555 = arith.mulf %554, %553 : vector<34x512xf32>
    %cst_185 = arith.constant -1.45315206 : f32
    %556 = vector.broadcast %cst_185 : f32 to vector<34x512xf32>
    %557 = arith.addf %555, %556 : vector<34x512xf32>
    %558 = arith.mulf %557, %553 : vector<34x512xf32>
    %cst_186 = arith.constant 1.42141378 : f32
    %559 = vector.broadcast %cst_186 : f32 to vector<34x512xf32>
    %560 = arith.addf %558, %559 : vector<34x512xf32>
    %561 = arith.mulf %560, %553 : vector<34x512xf32>
    %cst_187 = arith.constant -0.284496725 : f32
    %562 = vector.broadcast %cst_187 : f32 to vector<34x512xf32>
    %563 = arith.addf %561, %562 : vector<34x512xf32>
    %564 = arith.mulf %563, %553 : vector<34x512xf32>
    %cst_188 = arith.constant 0.254829586 : f32
    %565 = vector.broadcast %cst_188 : f32 to vector<34x512xf32>
    %566 = arith.addf %564, %565 : vector<34x512xf32>
    %567 = arith.mulf %566, %553 : vector<34x512xf32>
    %cst_189 = arith.constant 0.000000e+00 : f32
    %568 = vector.broadcast %cst_189 : f32 to vector<34x512xf32>
    %569 = arith.subf %568, %548 : vector<34x512xf32>
    %570 = arith.mulf %569, %548 : vector<34x512xf32>
    %571 = math.exp %570 : vector<34x512xf32>
    %572 = arith.mulf %567, %571 : vector<34x512xf32>
    %cst_190 = arith.constant 1.000000e+00 : f32
    %573 = vector.broadcast %cst_190 : f32 to vector<34x512xf32>
    %574 = arith.subf %573, %572 : vector<34x512xf32>
    %cst_191 = arith.constant 0.000000e+00 : f32
    %575 = vector.broadcast %cst_191 : f32 to vector<34x512xf32>
    %576 = arith.cmpf oge, %547, %575 : vector<34x512xf32>
    %cst_192 = arith.constant 0.000000e+00 : f32
    %577 = vector.broadcast %cst_192 : f32 to vector<34x512xf32>
    %578 = arith.subf %577, %574 : vector<34x512xf32>
    %579 = arith.select %576, %574, %578 : vector<34x512xi1>, vector<34x512xf32>
    %cst_193 = arith.constant 1.000000e+00 : f32
    %580 = vector.broadcast %cst_193 : f32 to vector<34x512xf32>
    %581 = arith.addf %580, %579 : vector<34x512xf32>
    %582 = arith.mulf %545, %581 : vector<34x512xf32>
    %583 = arith.truncf %582 : vector<34x512xf32> to vector<34x512xbf16>
    %c1_194 = arith.constant 1 : index
    %c0_195 = arith.constant 0 : index
    %c0_196 = arith.constant 0 : index
    %584 = vector.load %arg6[%c1_194, %c0_195, %c0_196] : memref<2x512x128xbf16, #tpu.memory_space<vmem>>, vector<1x512x128xbf16>
    %585 = vector.shape_cast %584 : vector<1x512x128xbf16> to vector<512x128xbf16>
    %cst_197 = arith.constant dense<0.000000e+00> : vector<34x128xf32>
    %586 = tpu.matmul %583, %585, %cst_197 {dimension_numbers = #tpu.dot_dimension_numbers<[1], [0], [0], [1], [0, 0, 1, 1], [], []>} : vector<34x512xbf16>, vector<512x128xbf16>, vector<34x128xf32> -> vector<34x128xf32>
    %587 = arith.addf %507, %586 : vector<34x128xf32>
    %588 = vector.broadcast %515 : vector<1x128xf32> to vector<34x128xf32>
    %589 = arith.addf %587, %588 : vector<34x128xf32>
    %590 = vector.extract_strided_slice %589 {offsets = [0, 0], sizes = [1, 128], strides = [1, 1]} : vector<34x128xf32> to vector<1x128xf32>
    %591 = vector.extract_strided_slice %589 {offsets = [17, 0], sizes = [1, 128], strides = [1, 1]} : vector<34x128xf32> to vector<1x128xf32>
    %592 = tpu.concatenate %590, %591 in 0 : vector<1x128xf32>, vector<1x128xf32> -> vector<2x128xf32>
    %cst_198 = arith.constant dense<0.000000e+00> : vector<2xf32>
    %593 = vector.multi_reduction <add>, %592, %cst_198 [1] : vector<2x128xf32> to vector<2xf32>
    %594 = vector.shape_cast %593 : vector<2xf32> to vector<2x1xf32>
    %cst_199 = arith.constant 1.280000e+02 : f32
    %595 = vector.broadcast %cst_199 : f32 to vector<2x1xf32>
    %596 = arith.divf %594, %595 : vector<2x1xf32>
    %597 = arith.mulf %592, %592 : vector<2x128xf32>
    %cst_200 = arith.constant dense<0.000000e+00> : vector<2xf32>
    %598 = vector.multi_reduction <add>, %597, %cst_200 [1] : vector<2x128xf32> to vector<2xf32>
    %599 = vector.shape_cast %598 : vector<2xf32> to vector<2x1xf32>
    %cst_201 = arith.constant 1.280000e+02 : f32
    %600 = vector.broadcast %cst_201 : f32 to vector<2x1xf32>
    %601 = arith.divf %599, %600 : vector<2x1xf32>
    %602 = arith.mulf %596, %596 : vector<2x1xf32>
    %603 = arith.subf %601, %602 : vector<2x1xf32>
    %604 = vector.broadcast %596 : vector<2x1xf32> to vector<2x128xf32>
    %605 = arith.subf %592, %604 : vector<2x128xf32>
    %cst_202 = arith.constant 9.99999974E-6 : f32
    %606 = vector.broadcast %cst_202 : f32 to vector<2x1xf32>
    %607 = arith.addf %603, %606 : vector<2x1xf32>
    %608 = math.rsqrt %607 : vector<2x1xf32>
    %609 = vector.broadcast %608 : vector<2x1xf32> to vector<2x128xf32>
    %610 = arith.mulf %605, %609 : vector<2x128xf32>
    %611 = vector.broadcast %2 : vector<1x128xf32> to vector<2x128xf32>
    %612 = arith.mulf %610, %611 : vector<2x128xf32>
    %613 = vector.broadcast %3 : vector<1x128xf32> to vector<2x128xf32>
    %614 = arith.addf %612, %613 : vector<2x128xf32>
    %615 = arith.truncf %614 : vector<2x128xf32> to vector<2x128xbf16>
    %c0_203 = arith.constant 0 : index
    %c0_204 = arith.constant 0 : index
    %616 = vector.load %arg8[%c0_203, %c0_204] : memref<128x128xbf16, #tpu.memory_space<vmem>>, vector<128x128xbf16>
    %cst_205 = arith.constant dense<0.000000e+00> : vector<2x128xf32>
    %617 = tpu.matmul %615, %616, %cst_205 {dimension_numbers = #tpu.dot_dimension_numbers<[1], [0], [0], [1], [0, 0, 1, 1], [], []>} : vector<2x128xbf16>, vector<128x128xbf16>, vector<2x128xf32> -> vector<2x128xf32>
    %618 = vector.broadcast %4 : vector<1x128xf32> to vector<2x128xf32>
    %619 = arith.addf %617, %618 : vector<2x128xf32>
    %c0_206 = arith.constant 0 : index
    %c0_207 = arith.constant 0 : index
    %c0_208 = arith.constant 0 : index
    %620 = vector.load %arg10[%c0_206, %c0_207, %c0_208] : memref<1x2x128xf32, #tpu.memory_space<vmem>>, vector<1x2x128xf32>
    %621 = vector.shape_cast %620 : vector<1x2x128xf32> to vector<2x128xf32>
    %622 = vector.shape_cast %619 : vector<2x128xf32> to vector<1x2x128xf32>
    tpu.vector_store %arg10[%c0_206, %c0_207, %c0_208], %622 {strides = array<i32>} : memref<1x2x128xf32, #tpu.memory_space<vmem>>, vector<1x2x128xf32>,
    return
  }
  func.func @transform_0(%arg0: i32) -> (i32, i32) {
    %c0_i32 = arith.constant 0 : i32
    %c0_i32_0 = arith.constant 0 : i32
    %c0_i32_1 = arith.constant 0 : i32
    return %c0_i32, %c0_i32_0 : i32, i32
  }
  func.func @transform_1(%arg0: i32) -> (i32, i32) {
    %c0_i32 = arith.constant 0 : i32
    %c0_i32_0 = arith.constant 0 : i32
    return %arg0, %c0_i32 : i32, i32
  }
  func.func @transform_2(%arg0: i32) -> (i32, i32) {
    %c0_i32 = arith.constant 0 : i32
    %c0_i32_0 = arith.constant 0 : i32
    %c0_i32_1 = arith.constant 0 : i32
    return %c0_i32, %c0_i32_0 : i32, i32
  }
  func.func @transform_3(%arg0: i32) -> (i32, i32) {
    %c0_i32 = arith.constant 0 : i32
    %c0_i32_0 = arith.constant 0 : i32
    %c0_i32_1 = arith.constant 0 : i32
    return %c0_i32, %c0_i32_0 : i32, i32
  }
  func.func @transform_4(%arg0: i32) -> (i32, i32, i32) {
    %c0_i32 = arith.constant 0 : i32
    %c0_i32_0 = arith.constant 0 : i32
    %c0_i32_1 = arith.constant 0 : i32
    %c0_i32_2 = arith.constant 0 : i32
    return %c0_i32, %c0_i32_0, %c0_i32_1 : i32, i32, i32
  }
  func.func @transform_5(%arg0: i32) -> (i32, i32, i32) {
    %c0_i32 = arith.constant 0 : i32
    %c0_i32_0 = arith.constant 0 : i32
    %c0_i32_1 = arith.constant 0 : i32
    %c0_i32_2 = arith.constant 0 : i32
    return %c0_i32, %c0_i32_0, %c0_i32_1 : i32, i32, i32
  }
  func.func @transform_6(%arg0: i32) -> (i32, i32, i32) {
    %c0_i32 = arith.constant 0 : i32
    %c0_i32_0 = arith.constant 0 : i32
    %c0_i32_1 = arith.constant 0 : i32
    %c0_i32_2 = arith.constant 0 : i32
    return %c0_i32, %c0_i32_0, %c0_i32_1 : i32, i32, i32
  }
  func.func @transform_7(%arg0: i32) -> (i32, i32) {
    %c0_i32 = arith.constant 0 : i32
    %c0_i32_0 = arith.constant 0 : i32
    %c0_i32_1 = arith.constant 0 : i32
    return %c0_i32, %c0_i32_0 : i32, i32
  }
  func.func @transform_8(%arg0: i32) -> (i32, i32) {
    %c0_i32 = arith.constant 0 : i32
    %c0_i32_0 = arith.constant 0 : i32
    %c0_i32_1 = arith.constant 0 : i32
    return %c0_i32, %c0_i32_0 : i32, i32
  }
  func.func @transform_9(%arg0: i32) -> (i32, i32, i32) {
    %c0_i32 = arith.constant 0 : i32
    %c0_i32_0 = arith.constant 0 : i32
    %c0_i32_1 = arith.constant 0 : i32
    return %arg0, %c0_i32, %c0_i32_0 : i32, i32, i32
  }
}

</mosaic_0001>

<llo_original>
// kernel: vit_forward.1
$region0: #{vit_forward.1}
  #allocation0 [shape = 'u32[]', space=smem, size = 0x4, offset = 0x4, fixed_abs, tag = 'smem constant byte address 0x4 - core index']
  #allocation1 [shape = 'u32[144,128]{1,0:T(1,128)}', space=vmem, size = 0x12000, scoped, tag = 'internal scratch']
  %s0 = inlined_call_operand.vmem [shape: f32[34,34], index: 0, kind: input, shape index: {}]
  %s1 = inlined_call_operand.vmem [shape: f32[32,48], index: 1, kind: input, shape index: {}]
  %s2 = inlined_call_operand.vmem [shape: bf16[48,128], index: 2, kind: input, shape index: {}]
  %s3 = inlined_call_operand.vmem [shape: f32[17,128], index: 3, kind: input, shape index: {}]
  %s4 = inlined_call_operand.vmem [shape: bf16[2,128,1024], index: 4, kind: input, shape index: {}]
  %s5 = inlined_call_operand.vmem [shape: bf16[2,512,128], index: 5, kind: input, shape index: {}]
  %s6 = inlined_call_operand.vmem [shape: f32[2,1,1664], index: 6, kind: input, shape index: {}]
  %s7 = inlined_call_operand.vmem [shape: bf16[128,128], index: 7, kind: input, shape index: {}]
  %s8 = inlined_call_operand.vmem [shape: f32[1,512], index: 8, kind: input, shape index: {}]
  %s9 = inlined_call_operand.hbm [shape: f32[1,2,128], index: 9, kind: output, shape index: {}]
  %s10 = sld [smem:[#allocation0]]
  $region46: #{vit_forward.1} parent=0
    _
  %s12 = ssub.s32 1, %s10
  %s13 = scalar_select 0, %s12, %s10
  $region1: #{vit_forward.1} parent=0
    #allocation2 [shape = 'u8[1024]{0}', space=vmem, size = 0x400, scoped, tag = 'output window, operand 0, single buffered']
    #allocation3 [shape = 's32[1]{0}', space=sflag, size = 0x4, scoped, tag = 'scoped memory for vit_forward.1']
    %14 = vsyncpa [#allocation3], 0
    // Predicated region
    $region2: #{vit_forward.1} parent=1 // pred_check
      _
    $region3: #{vit_forward.1} parent=1 // pred_check_branch
      %16 = sbr.rel (0) target = $region5
    $region4: #{vit_forward.1} parent=1 // pred_region
      _
    $region5: #{vit_forward.1} parent=1 // pred_fallthru
      _
    // Predicated region
    $region6: #{vit_forward.1} parent=1 // pred_check
      _
    $region7: #{vit_forward.1} parent=1 // pred_check_branch
      %18 = sbr.rel (0) target = $region9
    $region8: #{vit_forward.1} parent=1 // pred_region
      _
    $region9: #{vit_forward.1} parent=1 // pred_fallthru
      _
    // Predicated region
    $region10: #{vit_forward.1} parent=1 // pred_check
      _
    $region11: #{vit_forward.1} parent=1 // pred_check_branch
      %20 = sbr.rel (0) target = $region13
    $region12: #{vit_forward.1} parent=1 // pred_region
      _
    $region13: #{vit_forward.1} parent=1 // pred_fallthru
      _
    // Predicated region
    $region14: #{vit_forward.1} parent=1 // pred_check
      _
    $region15: #{vit_forward.1} parent=1 // pred_check_branch
      %22 = sbr.rel (0) target = $region17
    $region16: #{vit_forward.1} parent=1 // pred_region
      _
    $region17: #{vit_forward.1} parent=1 // pred_fallthru
      _
    // Predicated region
    $region18: #{vit_forward.1} parent=1 // pred_check
      _
    $region19: #{vit_forward.1} parent=1 // pred_check_branch
      %24 = sbr.rel (0) target = $region21
    $region20: #{vit_forward.1} parent=1 // pred_region
      _
    $region21: #{vit_forward.1} parent=1 // pred_fallthru
      _
    // Predicated region
    $region22: #{vit_forward.1} parent=1 // pred_check
      _
    $region23: #{vit_forward.1} parent=1 // pred_check_branch
      %26 = sbr.rel (0) target = $region25
    $region24: #{vit_forward.1} parent=1 // pred_region
      _
    $region25: #{vit_forward.1} parent=1 // pred_fallthru
      _
    // Predicated region
    $region26: #{vit_forward.1} parent=1 // pred_check
      _
    $region27: #{vit_forward.1} parent=1 // pred_check_branch
      %28 = sbr.rel (0) target = $region29
    $region28: #{vit_forward.1} parent=1 // pred_region
      _
    $region29: #{vit_forward.1} parent=1 // pred_fallthru
      _
    // Predicated region
    $region30: #{vit_forward.1} parent=1 // pred_check
      _
    $region31: #{vit_forward.1} parent=1 // pred_check_branch
      %30 = sbr.rel (0) target = $region33
    $region32: #{vit_forward.1} parent=1 // pred_region
      _
    $region33: #{vit_forward.1} parent=1 // pred_fallthru
      _
    // Predicated region
    $region34: #{vit_forward.1} parent=1 // pred_check
      _
    $region35: #{vit_forward.1} parent=1 // pred_check_branch
      %32 = sbr.rel (0) target = $region37
    $region36: #{vit_forward.1} parent=1 // pred_region
      _
    $region37: #{vit_forward.1} parent=1 // pred_fallthru
      _
    %v34 = vld [vmem:[%s0] sm:$0xff]
    %v35 = vld [vmem:[%s0 + $0x8] sm:$0xff]
    %v36 = vld [vmem:[%s0 + $0x10] sm:$0xff]
    %v37 = vld [vmem:[%s0 + $0x18] sm:$0xff]
    %v38 = vld [vmem:[%s0 + $0x20] sm:$0x3]
    %v39 = vld [vmem:[%s8] sm:$0x1]
    %v40 = vld [vmem:[%s8 + $0x1] sm:$0x1]
    %v41 = vld [vmem:[%s8 + $0x2] sm:$0x1]
    %v42 = vld [vmem:[%s8 + $0x3] sm:$0x1]
    %v43 = vld [vmem:[%s1] sm:$0xff]
    %v44 = vld [vmem:[%s1 + $0x8] sm:$0xff]
    %v45 = vld [vmem:[%s1 + $0x10] sm:$0xff]
    %v46 = vld [vmem:[%s1 + $0x18] sm:$0xff]
    %v47 = vpack.c.bf16 %v44, %v43
    %v48 = vpack.c.bf16 %v46, %v45
    %v49 = vld [vmem:[%s2] sm:$0xf]
    %v50 = vld [vmem:[%s2 + $0x4] sm:$0xf]
    %v51 = vld [vmem:[%s2 + $0x8] sm:$0xf]
    %v52 = vld [vmem:[%s2 + $0xc] sm:$0xf]
    %v53 = vld [vmem:[%s2 + $0x10] sm:$0xf]
    %v54 = vld [vmem:[%s2 + $0x14] sm:$0xf]
    %v56 = vlaneseq
    %v57 = vshrl.u32 %v56, 7
    %v58 = vsub.s32 0, %v57
    %v59 = vrot.slane %v39, %v58
    %v67 = vunpack.c.l.b16 %v49
    %v68 = vunpack.c.l.b16 %v50
    %v69 = vunpack.c.l.b16 %v51
    %v70 = vunpack.c.l.b16 %v52
    %v71 = vunpack.c.l.b16 %v53
    %v72 = vunpack.c.l.b16 %v54
    %v73 = vpack.c.b16 %v68, %v67
    %v74 = vpack.c.b16 %v70, %v69
    %v75 = vpack.c.b16 %v72, %v71
    %vm79 = vcmask 392192
    %v81 = vsel %vm79, %v47, 0
    %v84 = vsel %vm79, %v48, 0
    %86 = vmatprep.subr.bf16.mxu0 0
    %87 = vmatpush1.bf16.msra.mxu0 %v73
    %88 = vmatprep.subr.bf16.mxu0 0
    %89 = vmatpush1.bf16.msra.mxu0 %v74
    %90 = vmatprep.subr.bf16.mxu0 0
    %91 = vmatpush1.bf16.msra.mxu0 %v75
    %92 = vmatprep.subr.bf16.mxu0 0
    %93 = vmatpush1.bf16.msra.mxu0 0
    %94 = vmatprep.subr.bf16.mxu0 0
    %95 = vmatpush1.bf16.msra.mxu0 0
    %96 = vmatprep.subr.bf16.mxu0 0
    %97 = vmatpush1.bf16.msra.mxu0 0
    %98 = vmatprep.subr.bf16.mxu0 0
    %99 = vmatpush1.bf16.msra.mxu0 0
    %100 = vmatprep.subr.bf16.mxu0 0
    %101 = vmatpush1.bf16.msra.mxu0 0
    %102 = vmatprep.subr.bf16.mxu0 0
    %103 = vmatpush1.bf16.msra.mxu0 0
    %104 = vmatprep.subr.bf16.mxu0 0
    %105 = vmatpush1.bf16.msra.mxu0 0
    %106 = vmatprep.subr.bf16.mxu0 0
    %107 = vmatpush1.bf16.msra.mxu0 0
    %108 = vmatprep.subr.bf16.mxu0 0
    %109 = vmatpush1.bf16.msra.mxu0 0
    %110 = vmatprep.subr.bf16.mxu0 0
    %111 = vmatpush1.bf16.msra.mxu0 0
    %112 = vmatprep.subr.bf16.mxu0 0
    %113 = vmatpush1.bf16.msra.mxu0 0
    %114 = vmatprep.subr.bf16.mxu0 0
    %115 = vmatpush1.bf16.msra.mxu0 0
    %116 = vmatprep.subr.bf16.mxu0 0
    %117 = vmatpush1.bf16.msra.mxu0 0
    %118 = vmatprep.mubr.bf16.mxu0 0
    %119 = vmatmul.mubr.bf16.gmra.mrb[0].mxu0 %v81
    %v120 = vpop.f32.mrb[0].mxu0
    %v121 = vadd.f32 %v59, %v120
    %v122 = vpop.f32.mrb[0].mxu0
    %v123 = vpop.f32.mrb[0].mxu0
    %v124 = vadd.f32 %v59, %v123
    %v125 = vpop.f32.mrb[0].mxu0
    %126 = vmatprep.mubr.bf16.mxu0 0
    %127 = vmatmul.mubr.bf16.gmra.mrb[0].mxu0 %v84
    %v128 = vpop.f32.mrb[0].mxu0
    %v129 = vadd.f32 %v59, %v128
    %v130 = vpop.f32.mrb[0].mxu0
    %v131 = vpop.f32.mrb[0].mxu0
    %v132 = vadd.f32 %v59, %v131
    %v133 = vpop.f32.mrb[0].mxu0
    %134 = vdwg.mxu0
    %v135 = vld [vmem:[%s3] sm:$0xff]
    %v136 = vld [vmem:[%s3 + $0x8] sm:$0xff]
    %v137 = vld [vmem:[%s3 + $0x10] sm:$0x1]
    %vm141 = vcmask 1040384
    %v142 = vrot.slane %v135, 7
    %v143 = vrot.slane %v136, 7
    %v144 = vsel %vm141, %v142, %v143
    %v145 = vrot.slane %v137, 7
    %v146 = vsel %vm141, %v143, %v145
    %v150 = vsel %vm141, %v137, %v142
    %v153 = vrot.slane %v121, 7
    %v154 = vrot.slane %v124, 7
    %v155 = vsel %vm141, %v153, %v154
    %vm161 = vcmask 1041408
    %v162 = vrot.slane %v129, 6
    %v163 = vrot.slane %v132, 6
    %v164 = vsel %vm161, %v162, %v163
    %v168 = vsel %vm141, 0.0, %v153
    %v169 = vsel %vm141, %v154, 0.0
    %v170 = vsel %vm161, %v169, %v162
    %v171 = vadd.f32 %v168, %v135
    %v172 = vadd.f32 %v155, %v136
    %v173 = vadd.f32 %v170, %v150
    %v174 = vadd.f32 %v164, %v144
    %v175 = vadd.f32 %v163, %v146
    %v176 = vld [vmem:[%s6] sm:$0x1]
    %v177 = vld [vmem:[%s6 + $0x1] sm:$0x1]
    %v178 = vld [vmem:[%s6 + $0x2] sm:$0x7]
    %v179 = vld [vmem:[%s6 + $0x5] sm:$0x1]
    %180 = vadd.xlane.f32.xlu0 %v171
    %v181 = vpop.xlane.xlu0 %180
    %182 = vadd.xlane.f32.xlu0 %v172
    %v183 = vpop.xlane.xlu0 %182
    %184 = vadd.xlane.f32.xlu0 %v173
    %v185 = vpop.xlane.xlu0 %184
    %186 = vadd.xlane.f32.xlu0 %v174
    %v187 = vpop.xlane.xlu0 %186
    %v188 = vsel %vm161, %v175, 0.0
    %189 = vadd.xlane.f32.xlu0 %v188
    %v190 = vpop.xlane.xlu0 %189
    %v191 = vrcp.pop 128.0
    %v192 = vmul.f32 %v181, %v191
    %v193 = vmul.f32 %v183, %v191
    %v194 = vmul.f32 %v185, %v191
    %v195 = vmul.f32 %v187, %v191
    %v196 = vmul.f32 %v190, %v191
    %v197 = vmul.f32 %v171, %v171
    %v198 = vmul.f32 %v172, %v172
    %v199 = vmul.f32 %v173, %v173
    %v200 = vmul.f32 %v174, %v174
    %v201 = vmul.f32 %v175, %v175
    %202 = vadd.xlane.f32.xlu0 %v197
    %v203 = vpop.xlane.xlu0 %202
    %204 = vadd.xlane.f32.xlu0 %v198
    %v205 = vpop.xlane.xlu0 %204
    %206 = vadd.xlane.f32.xlu0 %v199
    %v207 = vpop.xlane.xlu0 %206
    %208 = vadd.xlane.f32.xlu0 %v200
    %v209 = vpop.xlane.xlu0 %208
    %v210 = vsel %vm161, %v201, 0.0
    %211 = vadd.xlane.f32.xlu0 %v210
    %v212 = vpop.xlane.xlu0 %211
    %v213 = vmul.f32 %v203, %v191
    %v214 = vmul.f32 %v205, %v191
    %v215 = vmul.f32 %v207, %v191
    %v216 = vmul.f32 %v209, %v191
    %v217 = vmul.f32 %v212, %v191
    %v218 = vmul.f32 %v192, %v192
    %v219 = vmul.f32 %v193, %v193
    %v220 = vmul.f32 %v194, %v194
    %v221 = vmul.f32 %v195, %v195
    %v222 = vmul.f32 %v196, %v196
    %v223 = vsub.f32 %v213, %v218
    %v224 = vsub.f32 %v214, %v219
    %v225 = vsub.f32 %v215, %v220
    %v226 = vsub.f32 %v216, %v221
    %v227 = vsub.f32 %v217, %v222
    %v228 = vsub.f32 %v171, %v192
    %v229 = vsub.f32 %v172, %v193
    %v230 = vsub.f32 %v173, %v194
    %v231 = vsub.f32 %v174, %v195
    %v232 = vsub.f32 %v175, %v196
    %v233 = vadd.f32 %v223, 1e-05
    %v234 = vadd.f32 %v224, 1e-05
    %v235 = vadd.f32 %v225, 1e-05
    %v236 = vadd.f32 %v226, 1e-05
    %v237 = vadd.f32 %v227, 1e-05
    %v238 = vrsqrt.pop %v233
    %v239 = vrsqrt.pop %v234
    %v240 = vrsqrt.pop %v235
    %v241 = vrsqrt.pop %v236
    %v242 = vrsqrt.pop %v237
    %v243 = vmul.f32 %v228, %v238
    %v244 = vmul.f32 %v229, %v239
    %v245 = vmul.f32 %v230, %v240
    %v246 = vmul.f32 %v231, %v241
    %v247 = vmul.f32 %v232, %v242
    %v249 = vlaneseq
    %v250 = vshrl.u32 %v249, 7
    %v251 = vsub.s32 0, %v250
    %v252 = vrot.slane %v176, %v251
    %v254 = vmul.f32 %v243, %v252
    %v255 = vmul.f32 %v244, %v252
    %v256 = vmul.f32 %v245, %v252
    %v257 = vmul.f32 %v246, %v252
    %v258 = vmul.f32 %v247, %v252
    %v260 = vlaneseq
    %v261 = vshrl.u32 %v260, 7
    %v262 = vsub.s32 0, %v261
    %v263 = vrot.slane %v177, %v262
    %v265 = vadd.f32 %v254, %v263
    %v266 = vadd.f32 %v255, %v263
    %v267 = vadd.f32 %v256, %v263
    %v268 = vadd.f32 %v257, %v263
    %v269 = vadd.f32 %v258, %v263
    %v270 = vpack.c.bf16 %v266, %v265
    %v271 = vpack.c.bf16 %v268, %v267
    %v272 = vpack.c.bf16 %v269, %v269
    %v273 = vld [vmem:[%s4] sm:$0xff]
    %v274 = vld [vmem:[%s4 + $0x8] sm:$0xf]
    %v275 = vld [vmem:[%s4 + $0x20] sm:$0xff]
    %v276 = vld [vmem:[%s4 + $0x28] sm:$0xf]
    %v277 = vld [vmem:[%s4 + $0x40] sm:$0xff]
    %v278 = vld [vmem:[%s4 + $0x48] sm:$0xf]
    %v279 = vld [vmem:[%s4 + $0x60] sm:$0xff]
    %v280 = vld [vmem:[%s4 + $0x68] sm:$0xf]
    %v281 = vld [vmem:[%s4 + $0x80] sm:$0xff]
    %v282 = vld [vmem:[%s4 + $0x88] sm:$0xf]
    %v283 = vld [vmem:[%s4 + $0xa0] sm:$0xff]
    %v284 = vld [vmem:[%s4 + $0xa8] sm:$0xf]
    %v285 = vld [vmem:[%s4 + $0xc0] sm:$0xff]
    %v286 = vld [vmem:[%s4 + $0xc8] sm:$0xf]
    %v287 = vld [vmem:[%s4 + $0xe0] sm:$0xff]
    %v288 = vld [vmem:[%s4 + $0xe8] sm:$0xf]
    %v289 = vld [vmem:[%s4 + $0x100] sm:$0xff]
    %v290 = vld [vmem:[%s4 + $0x108] sm:$0xf]
    %v291 = vld [vmem:[%s4 + $0x120] sm:$0xff]
    %v292 = vld [vmem:[%s4 + $0x128] sm:$0xf]
    %v293 = vld [vmem:[%s4 + $0x140] sm:$0xff]
    %v294 = vld [vmem:[%s4 + $0x148] sm:$0xf]
    %v295 = vld [vmem:[%s4 + $0x160] sm:$0xff]
    %v296 = vld [vmem:[%s4 + $0x168] sm:$0xf]
    %v297 = vld [vmem:[%s4 + $0x180] sm:$0xff]
    %v298 = vld [vmem:[%s4 + $0x188] sm:$0xf]
    %v299 = vld [vmem:[%s4 + $0x1a0] sm:$0xff]
    %v300 = vld [vmem:[%s4 + $0x1a8] sm:$0xf]
    %v301 = vld [vmem:[%s4 + $0x1c0] sm:$0xff]
    %v302 = vld [vmem:[%s4 + $0x1c8] sm:$0xf]
    %v303 = vld [vmem:[%s4 + $0x1e0] sm:$0xff]
    %v304 = vld [vmem:[%s4 + $0x1e8] sm:$0xf]
    %v306 = vlaneseq
    %v307 = vshrl.u32 %v306, 7
    %v308 = vsub.s32 0, %v307
    %v309 = vrot.slane %v178, %v308
    %v310 = vlaneseq
    %v311 = vshrl.u32 %v310, 7
    %v312 = vsub.s32 1, %v311
    %v313 = vrot.slane %v178, %v312
    %v314 = vlaneseq
    %v315 = vshrl.u32 %v314, 7
    %v316 = vsub.s32 2, %v315
    %v317 = vrot.slane %v178, %v316
    %v353 = vunpack.c.l.b16 %v273
    %v354 = vunpack.c.h.b16 %v273
    %v355 = vunpack.c.l.b16 %v274
    %v356 = vunpack.c.l.b16 %v275
    %v357 = vunpack.c.h.b16 %v275
    %v358 = vunpack.c.l.b16 %v276
    %v359 = vunpack.c.l.b16 %v277
    %v360 = vunpack.c.h.b16 %v277
    %v361 = vunpack.c.l.b16 %v278
    %v362 = vunpack.c.l.b16 %v279
    %v363 = vunpack.c.h.b16 %v279
    %v364 = vunpack.c.l.b16 %v280
    %v365 = vunpack.c.l.b16 %v281
    %v366 = vunpack.c.h.b16 %v281
    %v367 = vunpack.c.l.b16 %v282
    %v368 = vunpack.c.l.b16 %v283
    %v369 = vunpack.c.h.b16 %v283
    %v370 = vunpack.c.l.b16 %v284
    %v371 = vunpack.c.l.b16 %v285
    %v372 = vunpack.c.h.b16 %v285
    %v373 = vunpack.c.l.b16 %v286
    %v374 = vunpack.c.l.b16 %v287
    %v375 = vunpack.c.h.b16 %v287
    %v376 = vunpack.c.l.b16 %v288
    %v377 = vunpack.c.l.b16 %v289
    %v378 = vunpack.c.h.b16 %v289
    %v379 = vunpack.c.l.b16 %v290
    %v380 = vunpack.c.l.b16 %v291
    %v381 = vunpack.c.h.b16 %v291
    %v382 = vunpack.c.l.b16 %v292
    %v383 = vunpack.c.l.b16 %v293
    %v384 = vunpack.c.h.b16 %v293
    %v385 = vunpack.c.l.b16 %v294
    %v386 = vunpack.c.l.b16 %v295
    %v387 = vunpack.c.h.b16 %v295
    %v388 = vunpack.c.l.b16 %v296
    %v389 = vunpack.c.l.b16 %v297
    %v390 = vunpack.c.h.b16 %v297
    %v391 = vunpack.c.l.b16 %v298
    %v392 = vunpack.c.l.b16 %v299
    %v393 = vunpack.c.h.b16 %v299
    %v394 = vunpack.c.l.b16 %v300
    %v395 = vunpack.c.l.b16 %v301
    %v396 = vunpack.c.h.b16 %v301
    %v397 = vunpack.c.l.b16 %v302
    %v398 = vunpack.c.l.b16 %v303
    %v399 = vunpack.c.h.b16 %v303
    %v400 = vunpack.c.l.b16 %v304
    %v401 = vpack.c.b16 %v356, %v353
    %v402 = vpack.c.b16 %v357, %v354
    %v403 = vpack.c.b16 %v358, %v355
    %v404 = vpack.c.b16 %v362, %v359
    %v405 = vpack.c.b16 %v363, %v360
    %v406 = vpack.c.b16 %v364, %v361
    %v407 = vpack.c.b16 %v368, %v365
    %v408 = vpack.c.b16 %v369, %v366
    %v409 = vpack.c.b16 %v370, %v367
    %v410 = vpack.c.b16 %v374, %v371
    %v411 = vpack.c.b16 %v375, %v372
    %v412 = vpack.c.b16 %v376, %v373
    %v413 = vpack.c.b16 %v380, %v377
    %v414 = vpack.c.b16 %v381, %v378
    %v415 = vpack.c.b16 %v382, %v379
    %v416 = vpack.c.b16 %v386, %v383
    %v417 = vpack.c.b16 %v387, %v384
    %v418 = vpack.c.b16 %v388, %v385
    %v419 = vpack.c.b16 %v392, %v389
    %v420 = vpack.c.b16 %v393, %v390
    %v421 = vpack.c.b16 %v394, %v391
    %v422 = vpack.c.b16 %v398, %v395
    %v423 = vpack.c.b16 %v399, %v396
    %v424 = vpack.c.b16 %v400, %v397
    %449 = vmatprep.subr.bf16.mxu0 %v402
    %450 = vmatpush1.bf16.msra.mxu0 %v401
    %451 = vmatprep.subr.bf16.mxu0 %v405
    %452 = vmatpush1.bf16.msra.mxu0 %v404
    %453 = vmatprep.subr.bf16.mxu0 %v408
    %454 = vmatpush1.bf16.msra.mxu0 %v407
    %455 = vmatprep.subr.bf16.mxu0 %v411
    %456 = vmatpush1.bf16.msra.mxu0 %v410
    %457 = vmatprep.subr.bf16.mxu0 %v414
    %458 = vmatpush1.bf16.msra.mxu0 %v413
    %459 = vmatprep.subr.bf16.mxu0 %v417
    %460 = vmatpush1.bf16.msra.mxu0 %v416
    %461 = vmatprep.subr.bf16.mxu0 %v420
    %462 = vmatpush1.bf16.msra.mxu0 %v419
    %463 = vmatprep.subr.bf16.mxu0 %v423
    %464 = vmatpush1.bf16.msra.mxu0 %v422
    %465 = vmatprep.subr.bf16.mxu0 0
    %466 = vmatpush1.bf16.msra.mxu0 0
    %467 = vmatprep.subr.bf16.mxu0 0
    %468 = vmatpush1.bf16.msra.mxu0 0
    %469 = vmatprep.subr.bf16.mxu0 0
    %470 = vmatpush1.bf16.msra.mxu0 0
    %471 = vmatprep.subr.bf16.mxu0 0
    %472 = vmatpush1.bf16.msra.mxu0 0
    %473 = vmatprep.subr.bf16.mxu0 0
    %474 = vmatpush1.bf16.msra.mxu0 0
    %475 = vmatprep.subr.bf16.mxu0 0
    %476 = vmatpush1.bf16.msra.mxu0 0
    %477 = vmatprep.subr.bf16.mxu0 0
    %478 = vmatpush1.bf16.msra.mxu0 0
    %479 = vmatprep.subr.bf16.mxu0 0
    %480 = vmatpush1.bf16.msra.mxu0 0
    %481 = vmatprep.mubr.bf16.mxu0 0
    %482 = vmatmul.mubr.bf16.gmra.mrb[0].mxu0 %v270
    %v483 = vpop.f32.mrb[0].mxu0
    %v484 = vadd.f32 %v309, %v483
    %v485 = vpop.f32.mrb[0].mxu0
    %v486 = vadd.f32 %v313, %v485
    %v487 = vpop.f32.mrb[0].mxu0
    %v488 = vadd.f32 %v309, %v487
    %v489 = vpop.f32.mrb[0].mxu0
    %v490 = vadd.f32 %v313, %v489
    %491 = vmatprep.mubr.bf16.mxu0 0
    %492 = vmatmul.mubr.bf16.gmra.mrb[0].mxu0 %v271
    %v493 = vpop.f32.mrb[0].mxu0
    %v494 = vadd.f32 %v309, %v493
    %v495 = vpop.f32.mrb[0].mxu0
    %v496 = vadd.f32 %v313, %v495
    %v497 = vpop.f32.mrb[0].mxu0
    %v498 = vadd.f32 %v309, %v497
    %v499 = vpop.f32.mrb[0].mxu0
    %v500 = vadd.f32 %v313, %v499
    %501 = vmatprep.mubr.bf16.mxu0 0
    %502 = vmatmul.mubr.bf16.gmra.mrb[0].mxu0 %v272
    %v503 = vpop.f32.mrb[0].mxu0
    %v504 = vadd.f32 %v309, %v503
    %v505 = vpop.f32.mrb[0].mxu0
    %v506 = vadd.f32 %v313, %v505
    %v507 = vpop.f32.mrb[0].mxu0
    %v508 = vpop.f32.mrb[0].mxu0
    %509 = vdwg.mxu0
    %510 = vmatprep.subr.bf16.mxu0 0
    %511 = vmatpush1.bf16.msra.mxu0 %v403
    %512 = vmatprep.subr.bf16.mxu0 0
    %513 = vmatpush1.bf16.msra.mxu0 %v406
    %514 = vmatprep.subr.bf16.mxu0 0
    %515 = vmatpush1.bf16.msra.mxu0 %v409
    %516 = vmatprep.subr.bf16.mxu0 0
    %517 = vmatpush1.bf16.msra.mxu0 %v412
    %518 = vmatprep.subr.bf16.mxu0 0
    %519 = vmatpush1.bf16.msra.mxu0 %v415
    %520 = vmatprep.subr.bf16.mxu0 0
    %521 = vmatpush1.bf16.msra.mxu0 %v418
    %522 = vmatprep.subr.bf16.mxu0 0
    %523 = vmatpush1.bf16.msra.mxu0 %v421
    %524 = vmatprep.subr.bf16.mxu0 0
    %525 = vmatpush1.bf16.msra.mxu0 %v424
    %526 = vmatprep.subr.bf16.mxu0 0
    %527 = vmatpush1.bf16.msra.mxu0 0
    %528 = vmatprep.subr.bf16.mxu0 0
    %529 = vmatpush1.bf16.msra.mxu0 0
    %530 = vmatprep.subr.bf16.mxu0 0
    %531 = vmatpush1.bf16.msra.mxu0 0
    %532 = vmatprep.subr.bf16.mxu0 0
    %533 = vmatpush1.bf16.msra.mxu0 0
    %534 = vmatprep.subr.bf16.mxu0 0
    %535 = vmatpush1.bf16.msra.mxu0 0
    %536 = vmatprep.subr.bf16.mxu0 0
    %537 = vmatpush1.bf16.msra.mxu0 0
    %538 = vmatprep.subr.bf16.mxu0 0
    %539 = vmatpush1.bf16.msra.mxu0 0
    %540 = vmatprep.subr.bf16.mxu0 0
    %541 = vmatpush1.bf16.msra.mxu0 0
    %542 = vmatprep.mubr.bf16.mxu0 0
    %543 = vmatmul.mubr.bf16.gmra.mrb[0].mxu0 %v270
    %v544 = vpop.f32.mrb[0].mxu0
    %v545 = vadd.f32 %v317, %v544
    %v546 = vpop.f32.mrb[0].mxu0
    %v547 = vpop.f32.mrb[0].mxu0
    %v548 = vadd.f32 %v317, %v547
    %v549 = vpop.f32.mrb[0].mxu0
    %550 = vmatprep.mubr.bf16.mxu0 0
    %551 = vmatmul.mubr.bf16.gmra.mrb[0].mxu0 %v271
    %v552 = vpop.f32.mrb[0].mxu0
    %v553 = vadd.f32 %v317, %v552
    %v554 = vpop.f32.mrb[0].mxu0
    %v555 = vpop.f32.mrb[0].mxu0
    %v556 = vadd.f32 %v317, %v555
    %v557 = vpop.f32.mrb[0].mxu0
    %558 = vmatprep.mubr.bf16.mxu0 0
    %559 = vmatmul.mubr.bf16.gmra.mrb[0].mxu0 %v272
    %v560 = vpop.f32.mrb[0].mxu0
    %v561 = vadd.f32 %v317, %v560
    %v562 = vpop.f32.mrb[0].mxu0
    %v563 = vpop.f32.mrb[0].mxu0
    %v564 = vpop.f32.mrb[0].mxu0
    %565 = vdwg.mxu0
    %v566 = vpack.c.bf16 %v488, %v484
    %v567 = vpack.c.bf16 %v498, %v494
    %v568 = vpack.c.bf16 %v504, %v504
    %v569 = vpack.c.bf16 %v490, %v486
    %v570 = vpack.c.bf16 %v500, %v496
    %v571 = vpack.c.bf16 %v506, %v506
    %v572 = vpack.c.bf16 %v548, %v545
    %v573 = vpack.c.bf16 %v556, %v553
    %v574 = vpack.c.bf16 %v561, %v561
    %vm575 = vcmask 130048
    %v577 = vsel %vm575, %v566, 0
    %v580 = vsel %vm575, %v567, 0
    %v583 = vsel %vm575, %v568, 0
    %v586 = vsel %vm575, %v569, 0
    %v589 = vsel %vm575, %v570, 0
    %v592 = vsel %vm575, %v571, 0
    %594 = vmatprep.subr.bf16.mxu0 0
    %595 = vmatpush1.bf16.xpose.msra.mxu0 %v586
    %596 = vmatprep.subr.bf16.mxu0 0
    %597 = vmatpush1.bf16.xpose.msra.mxu0 %v589
    %598 = vmatprep.subr.bf16.mxu0 0
    %599 = vmatpush1.bf16.xpose.msra.mxu0 %v592
    %600 = vmatprep.subr.bf16.mxu0 0
    %601 = vmatpush1.bf16.xpose.msra.mxu0 0
    %602 = vmatprep.subr.bf16.mxu0 0
    %603 = vmatpush1.bf16.xpose.msra.mxu0 0
    %604 = vmatprep.subr.bf16.mxu0 0
    %605 = vmatpush1.bf16.xpose.msra.mxu0 0
    %606 = vmatprep.subr.bf16.mxu0 0
    %607 = vmatpush1.bf16.xpose.msra.mxu0 0
    %608 = vmatprep.subr.bf16.mxu0 0
    %609 = vmatpush1.bf16.xpose.msra.mxu0 0
    %610 = vmatprep.subr.bf16.mxu0 0
    %611 = vmatpush1.bf16.xpose.msra.mxu0 0
    %612 = vmatprep.subr.bf16.mxu0 0
    %613 = vmatpush1.bf16.xpose.msra.mxu0 0
    %614 = vmatprep.subr.bf16.mxu0 0
    %615 = vmatpush1.bf16.xpose.msra.mxu0 0
    %616 = vmatprep.subr.bf16.mxu0 0
    %617 = vmatpush1.bf16.xpose.msra.mxu0 0
    %618 = vmatprep.subr.bf16.mxu0 0
    %619 = vmatpush1.bf16.xpose.msra.mxu0 0
    %620 = vmatprep.subr.bf16.mxu0 0
    %621 = vmatpush1.bf16.xpose.msra.mxu0 0
    %622 = vmatprep.subr.bf16.mxu0 0
    %623 = vmatpush1.bf16.xpose.msra.mxu0 0
    %624 = vmatprep.subr.bf16.mxu0 0
    %625 = vmatpush1.bf16.xpose.msra.mxu0 0
    %626 = vmatprep.mubr.bf16.mxu0 0
    %627 = vmatmul.mubr.bf16.gmra.mrb[0].mxu0 %v577
    %v628 = vpop.f32.mrb[0].mxu0
    %v629 = vadd.f32 %v34, %v628
    %v630 = vpop.f32.mrb[0].mxu0
    %v631 = vpop.f32.mrb[0].mxu0
    %v632 = vadd.f32 %v35, %v631
    %v633 = vpop.f32.mrb[0].mxu0
    %634 = vmatprep.mubr.bf16.mxu0 0
    %635 = vmatmul.mubr.bf16.gmra.mrb[0].mxu0 %v580
    %v636 = vpop.f32.mrb[0].mxu0
    %v637 = vadd.f32 %v36, %v636
    %v638 = vpop.f32.mrb[0].mxu0
    %v639 = vpop.f32.mrb[0].mxu0
    %v640 = vadd.f32 %v37, %v639
    %v641 = vpop.f32.mrb[0].mxu0
    %642 = vmatprep.mubr.bf16.mxu0 0
    %643 = vmatmul.mubr.bf16.gmra.mrb[0].mxu0 %v583
    %v644 = vpop.f32.mrb[0].mxu0
    %v645 = vadd.f32 %v38, %v644
    %v646 = vpop.f32.mrb[0].mxu0
    %v647 = vpop.f32.mrb[0].mxu0
    %v648 = vpop.f32.mrb[0].mxu0
    %649 = vdwg.mxu0
    %vm650 = vcmask 277504
    %v651 = vsel %vm650, %v629, -inf
    %652 = vmax.xlane.f32.xlu0 %v651
    %v653 = vpop.xlane.xlu0 %652
    %v654 = vsel %vm650, %v632, -inf
    %655 = vmax.xlane.f32.xlu0 %v654
    %v656 = vpop.xlane.xlu0 %655
    %v657 = vsel %vm650, %v637, -inf
    %658 = vmax.xlane.f32.xlu0 %v657
    %v659 = vpop.xlane.xlu0 %658
    %v660 = vsel %vm650, %v640, -inf
    %661 = vmax.xlane.f32.xlu0 %v660
    %v662 = vpop.xlane.xlu0 %661
    %vm663 = vcmask 271360
    %v664 = vsel %vm663, %v645, -inf
    %665 = vmax.xlane.f32.xlu0 %v664
    %v666 = vpop.xlane.xlu0 %665
    %v667 = vsub.f32 %v629, %v653
    %v668 = vsub.f32 %v632, %v656
    %v669 = vsub.f32 %v637, %v659
    %v670 = vsub.f32 %v640, %v662
    %v671 = vsub.f32 %v645, %v666
    %v672 = vmul.f32 %v667, 1.442695
    %v673 = vpow.pop %v672
    %v674 = vmul.f32 %v668, 1.442695
    %v675 = vpow.pop %v674
    %v676 = vmul.f32 %v669, 1.442695
    %v677 = vpow.pop %v676
    %v678 = vmul.f32 %v670, 1.442695
    %v679 = vpow.pop %v678
    %v680 = vmul.f32 %v671, 1.442695
    %v681 = vpow.pop %v680
    %v682 = vsel %vm650, %v673, 0.0
    %683 = vadd.xlane.f32.xlu0 %v682
    %v684 = vpop.xlane.xlu0 %683
    %v685 = vsel %vm650, %v675, 0.0
    %686 = vadd.xlane.f32.xlu0 %v685
    %v687 = vpop.xlane.xlu0 %686
    %v688 = vsel %vm650, %v677, 0.0
    %689 = vadd.xlane.f32.xlu0 %v688
    %v690 = vpop.xlane.xlu0 %689
    %v691 = vsel %vm650, %v679, 0.0
    %692 = vadd.xlane.f32.xlu0 %v691
    %v693 = vpop.xlane.xlu0 %692
    %v694 = vsel %vm663, %v681, 0.0
    %695 = vadd.xlane.f32.xlu0 %v694
    %v696 = vpop.xlane.xlu0 %695
    %v697 = vrcp.pop %v684
    %v698 = vrcp.pop %v687
    %v699 = vrcp.pop %v690
    %v700 = vrcp.pop %v693
    %v701 = vrcp.pop %v696
    %v702 = vmul.f32 %v673, %v697
    %v703 = vmul.f32 %v675, %v698
    %v704 = vmul.f32 %v677, %v699
    %v705 = vmul.f32 %v679, %v700
    %v706 = vmul.f32 %v681, %v701
    %v707 = vpack.c.bf16 %v703, %v702
    %v708 = vpack.c.bf16 %v705, %v704
    %v709 = vpack.c.bf16 %v706, %v706
    %v711 = vsel %vm650, %v707, 0
    %v714 = vsel %vm650, %v708, 0
    %v717 = vsel %vm650, %v709, 0
    %v720 = vsel %vm141, %v574, 0
    %722 = vmatprep.subr.bf16.mxu0 0
    %723 = vmatpush1.bf16.msra.mxu0 %v572
    %724 = vmatprep.subr.bf16.mxu0 0
    %725 = vmatpush1.bf16.msra.mxu0 %v573
    %726 = vmatprep.subr.bf16.mxu0 0
    %727 = vmatpush1.bf16.msra.mxu0 %v720
    %728 = vmatprep.subr.bf16.mxu0 0
    %729 = vmatpush1.bf16.msra.mxu0 0
    %730 = vmatprep.subr.bf16.mxu0 0
    %731 = vmatpush1.bf16.msra.mxu0 0
    %732 = vmatprep.subr.bf16.mxu0 0
    %733 = vmatpush1.bf16.msra.mxu0 0
    %734 = vmatprep.subr.bf16.mxu0 0
    %735 = vmatpush1.bf16.msra.mxu0 0
    %736 = vmatprep.subr.bf16.mxu0 0
    %737 = vmatpush1.bf16.msra.mxu0 0
    %738 = vmatprep.subr.bf16.mxu0 0
    %739 = vmatpush1.bf16.msra.mxu0 0
    %740 = vmatprep.subr.bf16.mxu0 0
    %741 = vmatpush1.bf16.msra.mxu0 0
    %742 = vmatprep.subr.bf16.mxu0 0
    %743 = vmatpush1.bf16.msra.mxu0 0
    %744 = vmatprep.subr.bf16.mxu0 0
    %745 = vmatpush1.bf16.msra.mxu0 0
    %746 = vmatprep.subr.bf16.mxu0 0
    %747 = vmatpush1.bf16.msra.mxu0 0
    %748 = vmatprep.subr.bf16.mxu0 0
    %749 = vmatpush1.bf16.msra.mxu0 0
    %750 = vmatprep.subr.bf16.mxu0 0
    %751 = vmatpush1.bf16.msra.mxu0 0
    %752 = vmatprep.subr.bf16.mxu0 0
    %753 = vmatpush1.bf16.msra.mxu0 0
    %754 = vmatprep.mubr.bf16.mxu0 0
    %755 = vmatmul.mubr.bf16.gmra.mrb[0].mxu0 %v711
    %v756 = vpop.f32.mrb[0].mxu0
    %v757 = vadd.f32 0.0, %v756
    %v758 = vpop.f32.mrb[0].mxu0
    %v759 = vpop.f32.mrb[0].mxu0
    %v760 = vadd.f32 0.0, %v759
    %v761 = vpop.f32.mrb[0].mxu0
    %762 = vmatprep.mubr.bf16.mxu0 0
    %763 = vmatmul.mubr.bf16.gmra.mrb[0].mxu0 %v714
    %v764 = vpop.f32.mrb[0].mxu0
    %v765 = vadd.f32 0.0, %v764
    %v766 = vpop.f32.mrb[0].mxu0
    %v767 = vpop.f32.mrb[0].mxu0
    %v768 = vadd.f32 0.0, %v767
    %v769 = vpop.f32.mrb[0].mxu0
    %770 = vmatprep.mubr.bf16.mxu0 0
    %771 = vmatmul.mubr.bf16.gmra.mrb[0].mxu0 %v717
    %v772 = vpop.f32.mrb[0].mxu0
    %v773 = vadd.f32 0.0, %v772
    %v774 = vpop.f32.mrb[0].mxu0
    %v775 = vpop.f32.mrb[0].mxu0
    %v776 = vpop.f32.mrb[0].mxu0
    %777 = vdwg.mxu0
    %781 = vrot.lane.b32.xlu0 %v566, 112
    %v782 = vpop.permute.xlu0 %781
    %783 = vrot.lane.b32.xlu0 %v567, 112
    %v784 = vpop.permute.xlu0 %783
    %785 = vrot.lane.b32.xlu0 %v568, 112
    %v786 = vpop.permute.xlu0 %785
    %790 = vrot.lane.b32.xlu0 %v569, 112
    %v791 = vpop.permute.xlu0 %790
    %792 = vrot.lane.b32.xlu0 %v570, 112
    %v793 = vpop.permute.xlu0 %792
    %794 = vrot.lane.b32.xlu0 %v571, 112
    %v795 = vpop.permute.xlu0 %794
    %v797 = vsel %vm575, %v782, 0
    %v800 = vsel %vm575, %v784, 0
    %v803 = vsel %vm575, %v786, 0
    %v806 = vsel %vm575, %v791, 0
    %v809 = vsel %vm575, %v793, 0
    %v812 = vsel %vm575, %v795, 0
    %814 = vmatprep.subr.bf16.mxu0 0
    %815 = vmatpush1.bf16.xpose.msra.mxu0 %v806
    %816 = vmatprep.subr.bf16.mxu0 0
    %817 = vmatpush1.bf16.xpose.msra.mxu0 %v809
    %818 = vmatprep.subr.bf16.mxu0 0
    %819 = vmatpush1.bf16.xpose.msra.mxu0 %v812
    %820 = vmatprep.subr.bf16.mxu0 0
    %821 = vmatpush1.bf16.xpose.msra.mxu0 0
    %822 = vmatprep.subr.bf16.mxu0 0
    %823 = vmatpush1.bf16.xpose.msra.mxu0 0
    %824 = vmatprep.subr.bf16.mxu0 0
    %825 = vmatpush1.bf16.xpose.msra.mxu0 0
    %826 = vmatprep.subr.bf16.mxu0 0
    %827 = vmatpush1.bf16.xpose.msra.mxu0 0
    %828 = vmatprep.subr.bf16.mxu0 0
    %829 = vmatpush1.bf16.xpose.msra.mxu0 0
    %830 = vmatprep.subr.bf16.mxu0 0
    %831 = vmatpush1.bf16.xpose.msra.mxu0 0
    %832 = vmatprep.subr.bf16.mxu0 0
    %833 = vmatpush1.bf16.xpose.msra.mxu0 0
    %834 = vmatprep.subr.bf16.mxu0 0
    %835 = vmatpush1.bf16.xpose.msra.mxu0 0
    %836 = vmatprep.subr.bf16.mxu0 0
    %837 = vmatpush1.bf16.xpose.msra.mxu0 0
    %838 = vmatprep.subr.bf16.mxu0 0
    %839 = vmatpush1.bf16.xpose.msra.mxu0 0
    %840 = vmatprep.subr.bf16.mxu0 0
    %841 = vmatpush1.bf16.xpose.msra.mxu0 0
    %842 = vmatprep.subr.bf16.mxu0 0
    %843 = vmatpush1.bf16.xpose.msra.mxu0 0
    %844 = vmatprep.subr.bf16.mxu0 0
    %845 = vmatpush1.bf16.xpose.msra.mxu0 0
    %846 = vmatprep.mubr.bf16.mxu0 0
    %847 = vmatmul.mubr.bf16.gmra.mrb[0].mxu0 %v797
    %v848 = vpop.f32.mrb[0].mxu0
    %v849 = vadd.f32 %v34, %v848
    %v850 = vpop.f32.mrb[0].mxu0
    %v851 = vpop.f32.mrb[0].mxu0
    %v852 = vadd.f32 %v35, %v851
    %v853 = vpop.f32.mrb[0].mxu0
    %854 = vmatprep.mubr.bf16.mxu0 0
    %855 = vmatmul.mubr.bf16.gmra.mrb[0].mxu0 %v800
    %v856 = vpop.f32.mrb[0].mxu0
    %v857 = vadd.f32 %v36, %v856
    %v858 = vpop.f32.mrb[0].mxu0
    %v859 = vpop.f32.mrb[0].mxu0
    %v860 = vadd.f32 %v37, %v859
    %v861 = vpop.f32.mrb[0].mxu0
    %862 = vmatprep.mubr.bf16.mxu0 0
    %863 = vmatmul.mubr.bf16.gmra.mrb[0].mxu0 %v803
    %v864 = vpop.f32.mrb[0].mxu0
    %v865 = vadd.f32 %v38, %v864
    %v866 = vpop.f32.mrb[0].mxu0
    %v867 = vpop.f32.mrb[0].mxu0
    %v868 = vpop.f32.mrb[0].mxu0
    %869 = vdwg.mxu0
    %v870 = vsel %vm650, %v849, -inf
    %871 = vmax.xlane.f32.xlu0 %v870
    %v872 = vpop.xlane.xlu0 %871
    %v873 = vsel %vm650, %v852, -inf
    %874 = vmax.xlane.f32.xlu0 %v873
    %v875 = vpop.xlane.xlu0 %874
    %v876 = vsel %vm650, %v857, -inf
    %877 = vmax.xlane.f32.xlu0 %v876
    %v878 = vpop.xlane.xlu0 %877
    %v879 = vsel %vm650, %v860, -inf
    %880 = vmax.xlane.f32.xlu0 %v879
    %v881 = vpop.xlane.xlu0 %880
    %v882 = vsel %vm663, %v865, -inf
    %883 = vmax.xlane.f32.xlu0 %v882
    %v884 = vpop.xlane.xlu0 %883
    %v885 = vsub.f32 %v849, %v872
    %v886 = vsub.f32 %v852, %v875
    %v887 = vsub.f32 %v857, %v878
    %v888 = vsub.f32 %v860, %v881
    %v889 = vsub.f32 %v865, %v884
    %v890 = vmul.f32 %v885, 1.442695
    %v891 = vpow.pop %v890
    %v892 = vmul.f32 %v886, 1.442695
    %v893 = vpow.pop %v892
    %v894 = vmul.f32 %v887, 1.442695
    %v895 = vpow.pop %v894
    %v896 = vmul.f32 %v888, 1.442695
    %v897 = vpow.pop %v896
    %v898 = vmul.f32 %v889, 1.442695
    %v899 = vpow.pop %v898
    %v900 = vsel %vm650, %v891, 0.0
    %901 = vadd.xlane.f32.xlu0 %v900
    %v902 = vpop.xlane.xlu0 %901
    %v903 = vsel %vm650, %v893, 0.0
    %904 = vadd.xlane.f32.xlu0 %v903
    %v905 = vpop.xlane.xlu0 %904
    %v906 = vsel %vm650, %v895, 0.0
    %907 = vadd.xlane.f32.xlu0 %v906
    %v908 = vpop.xlane.xlu0 %907
    %v909 = vsel %vm650, %v897, 0.0
    %910 = vadd.xlane.f32.xlu0 %v909
    %v911 = vpop.xlane.xlu0 %910
    %v912 = vsel %vm663, %v899, 0.0
    %913 = vadd.xlane.f32.xlu0 %v912
    %v914 = vpop.xlane.xlu0 %913
    %v915 = vrcp.pop %v902
    %v916 = vrcp.pop %v905
    %v917 = vrcp.pop %v908
    %v918 = vrcp.pop %v911
    %v919 = vrcp.pop %v914
    %v920 = vmul.f32 %v891, %v915
    %v921 = vmul.f32 %v893, %v916
    %v922 = vmul.f32 %v895, %v917
    %v923 = vmul.f32 %v897, %v918
    %v924 = vmul.f32 %v899, %v919
    %v925 = vpack.c.bf16 %v921, %v920
    %v926 = vpack.c.bf16 %v923, %v922
    %v927 = vpack.c.bf16 %v924, %v924
    %931 = vrot.lane.b32.xlu0 %v572, 112
    %v932 = vpop.permute.xlu0 %931
    %933 = vrot.lane.b32.xlu0 %v573, 112
    %v934 = vpop.permute.xlu0 %933
    %935 = vrot.lane.b32.xlu0 %v574, 112
    %v936 = vpop.permute.xlu0 %935
    %v940 = vsel %vm650, %v925, 0
    %v943 = vsel %vm650, %v926, 0
    %v946 = vsel %vm650, %v927, 0
    %v949 = vsel %vm141, %v936, 0
    %951 = vmatprep.subr.bf16.mxu0 0
    %952 = vmatpush1.bf16.msra.mxu0 %v932
    %953 = vmatprep.subr.bf16.mxu0 0
    %954 = vmatpush1.bf16.msra.mxu0 %v934
    %955 = vmatprep.subr.bf16.mxu0 0
    %956 = vmatpush1.bf16.msra.mxu0 %v949
    %957 = vmatprep.subr.bf16.mxu0 0
    %958 = vmatpush1.bf16.msra.mxu0 0
    %959 = vmatprep.subr.bf16.mxu0 0
    %960 = vmatpush1.bf16.msra.mxu0 0
    %961 = vmatprep.subr.bf16.mxu0 0
    %962 = vmatpush1.bf16.msra.mxu0 0
    %963 = vmatprep.subr.bf16.mxu0 0
    %964 = vmatpush1.bf16.msra.mxu0 0
    %965 = vmatprep.subr.bf16.mxu0 0
    %966 = vmatpush1.bf16.msra.mxu0 0
    %967 = vmatprep.subr.bf16.mxu0 0
    %968 = vmatpush1.bf16.msra.mxu0 0
    %969 = vmatprep.subr.bf16.mxu0 0
    %970 = vmatpush1.bf16.msra.mxu0 0
    %971 = vmatprep.subr.bf16.mxu0 0
    %972 = vmatpush1.bf16.msra.mxu0 0
    %973 = vmatprep.subr.bf16.mxu0 0
    %974 = vmatpush1.bf16.msra.mxu0 0
    %975 = vmatprep.subr.bf16.mxu0 0
    %976 = vmatpush1.bf16.msra.mxu0 0
    %977 = vmatprep.subr.bf16.mxu0 0
    %978 = vmatpush1.bf16.msra.mxu0 0
    %979 = vmatprep.subr.bf16.mxu0 0
    %980 = vmatpush1.bf16.msra.mxu0 0
    %981 = vmatprep.subr.bf16.mxu0 0
    %982 = vmatpush1.bf16.msra.mxu0 0
    %983 = vmatprep.mubr.bf16.mxu0 0
    %984 = vmatmul.mubr.bf16.gmra.mrb[0].mxu0 %v940
    %v985 = vpop.f32.mrb[0].mxu0
    %v986 = vadd.f32 0.0, %v985
    %v987 = vpop.f32.mrb[0].mxu0
    %v988 = vpop.f32.mrb[0].mxu0
    %v989 = vadd.f32 0.0, %v988
    %v990 = vpop.f32.mrb[0].mxu0
    %991 = vmatprep.mubr.bf16.mxu0 0
    %992 = vmatmul.mubr.bf16.gmra.mrb[0].mxu0 %v943
    %v993 = vpop.f32.mrb[0].mxu0
    %v994 = vadd.f32 0.0, %v993
    %v995 = vpop.f32.mrb[0].mxu0
    %v996 = vpop.f32.mrb[0].mxu0
    %v997 = vadd.f32 0.0, %v996
    %v998 = vpop.f32.mrb[0].mxu0
    %999 = vmatprep.mubr.bf16.mxu0 0
    %1000 = vmatmul.mubr.bf16.gmra.mrb[0].mxu0 %v946
    %v1001 = vpop.f32.mrb[0].mxu0
    %v1002 = vadd.f32 0.0, %v1001
    %v1003 = vpop.f32.mrb[0].mxu0
    %v1004 = vpop.f32.mrb[0].mxu0
    %v1005 = vpop.f32.mrb[0].mxu0
    %1006 = vdwg.mxu0
    %1007 = vrot.lane.b32.xlu0 %v566, 96
    %v1008 = vpop.permute.xlu0 %1007
    %1009 = vrot.lane.b32.xlu0 %v567, 96
    %v1010 = vpop.permute.xlu0 %1009
    %1011 = vrot.lane.b32.xlu0 %v568, 96
    %v1012 = vpop.permute.xlu0 %1011
    %1013 = vrot.lane.b32.xlu0 %v569, 96
    %v1014 = vpop.permute.xlu0 %1013
    %1015 = vrot.lane.b32.xlu0 %v570, 96
    %v1016 = vpop.permute.xlu0 %1015
    %1017 = vrot.lane.b32.xlu0 %v571, 96
    %v1018 = vpop.permute.xlu0 %1017
    %v1020 = vsel %vm575, %v1008, 0
    %v1023 = vsel %vm575, %v1010, 0
    %v1026 = vsel %vm575, %v1012, 0
    %v1029 = vsel %vm575, %v1014, 0
    %v1032 = vsel %vm575, %v1016, 0
    %v1035 = vsel %vm575, %v1018, 0
    %1037 = vmatprep.subr.bf16.mxu0 0
    %1038 = vmatpush1.bf16.xpose.msra.mxu0 %v1029
    %1039 = vmatprep.subr.bf16.mxu0 0
    %1040 = vmatpush1.bf16.xpose.msra.mxu0 %v1032
    %1041 = vmatprep.subr.bf16.mxu0 0
    %1042 = vmatpush1.bf16.xpose.msra.mxu0 %v1035
    %1043 = vmatprep.subr.bf16.mxu0 0
    %1044 = vmatpush1.bf16.xpose.msra.mxu0 0
    %1045 = vmatprep.subr.bf16.mxu0 0
    %1046 = vmatpush1.bf16.xpose.msra.mxu0 0
    %1047 = vmatprep.subr.bf16.mxu0 0
    %1048 = vmatpush1.bf16.xpose.msra.mxu0 0
    %1049 = vmatprep.subr.bf16.mxu0 0
    %1050 = vmatpush1.bf16.xpose.msra.mxu0 0
    %1051 = vmatprep.subr.bf16.mxu0 0
    %1052 = vmatpush1.bf16.xpose.msra.mxu0 0
    %1053 = vmatprep.subr.bf16.mxu0 0
    %1054 = vmatpush1.bf16.xpose.msra.mxu0 0
    %1055 = vmatprep.subr.bf16.mxu0 0
    %1056 = vmatpush1.bf16.xpose.msra.mxu0 0
    %1057 = vmatprep.subr.bf16.mxu0 0
    %1058 = vmatpush1.bf16.xpose.msra.mxu0 0
    %1059 = vmatprep.subr.bf16.mxu0 0
    %1060 = vmatpush1.bf16.xpose.msra.mxu0 0
    %1061 = vmatprep.subr.bf16.mxu0 0
    %1062 = vmatpush1.bf16.xpose.msra.mxu0 0
    %1063 = vmatprep.subr.bf16.mxu0 0
    %1064 = vmatpush1.bf16.xpose.msra.mxu0 0
    %1065 = vmatprep.subr.bf16.mxu0 0
    %1066 = vmatpush1.bf16.xpose.msra.mxu0 0
    %1067 = vmatprep.subr.bf16.mxu0 0
    %1068 = vmatpush1.bf16.xpose.msra.mxu0 0
    %1069 = vmatprep.mubr.bf16.mxu0 0
    %1070 = vmatmul.mubr.bf16.gmra.mrb[0].mxu0 %v1020
    %v1071 = vpop.f32.mrb[0].mxu0
    %v1072 = vadd.f32 %v34, %v1071
    %v1073 = vpop.f32.mrb[0].mxu0
    %v1074 = vpop.f32.mrb[0].mxu0
    %v1075 = vadd.f32 %v35, %v1074
    %v1076 = vpop.f32.mrb[0].mxu0
    %1077 = vmatprep.mubr.bf16.mxu0 0
    %1078 = vmatmul.mubr.bf16.gmra.mrb[0].mxu0 %v1023
    %v1079 = vpop.f32.mrb[0].mxu0
    %v1080 = vadd.f32 %v36, %v1079
    %v1081 = vpop.f32.mrb[0].mxu0
    %v1082 = vpop.f32.mrb[0].mxu0
    %v1083 = vadd.f32 %v37, %v1082
    %v1084 = vpop.f32.mrb[0].mxu0
    %1085 = vmatprep.mubr.bf16.mxu0 0
    %1086 = vmatmul.mubr.bf16.gmra.mrb[0].mxu0 %v1026
    %v1087 = vpop.f32.mrb[0].mxu0
    %v1088 = vadd.f32 %v38, %v1087
    %v1089 = vpop.f32.mrb[0].mxu0
    %v1090 = vpop.f32.mrb[0].mxu0
    %v1091 = vpop.f32.mrb[0].mxu0
    %1092 = vdwg.mxu0
    %v1093 = vsel %vm650, %v1072, -inf
    %1094 = vmax.xlane.f32.xlu0 %v1093
    %v1095 = vpop.xlane.xlu0 %1094
    %v1096 = vsel %vm650, %v1075, -inf
    %1097 = vmax.xlane.f32.xlu0 %v1096
    %v1098 = vpop.xlane.xlu0 %1097
    %v1099 = vsel %vm650, %v1080, -inf
    %1100 = vmax.xlane.f32.xlu0 %v1099
    %v1101 = vpop.xlane.xlu0 %1100
    %v1102 = vsel %vm650, %v1083, -inf
    %1103 = vmax.xlane.f32.xlu0 %v1102
    %v1104 = vpop.xlane.xlu0 %1103
    %v1105 = vsel %vm663, %v1088, -inf
    %1106 = vmax.xlane.f32.xlu0 %v1105
    %v1107 = vpop.xlane.xlu0 %1106
    %v1108 = vsub.f32 %v1072, %v1095
    %v1109 = vsub.f32 %v1075, %v1098
    %v1110 = vsub.f32 %v1080, %v1101
    %v1111 = vsub.f32 %v1083, %v1104
    %v1112 = vsub.f32 %v1088, %v1107
    %v1113 = vmul.f32 %v1108, 1.442695
    %v1114 = vpow.pop %v1113
    %v1115 = vmul.f32 %v1109, 1.442695
    %v1116 = vpow.pop %v1115
    %v1117 = vmul.f32 %v1110, 1.442695
    %v1118 = vpow.pop %v1117
    %v1119 = vmul.f32 %v1111, 1.442695
    %v1120 = vpow.pop %v1119
    %v1121 = vmul.f32 %v1112, 1.442695
    %v1122 = vpow.pop %v1121
    %v1123 = vsel %vm650, %v1114, 0.0
    %1124 = vadd.xlane.f32.xlu0 %v1123
    %v1125 = vpop.xlane.xlu0 %1124
    %v1126 = vsel %vm650, %v1116, 0.0
    %1127 = vadd.xlane.f32.xlu0 %v1126
    %v1128 = vpop.xlane.xlu0 %1127
    %v1129 = vsel %vm650, %v1118, 0.0
    %1130 = vadd.xlane.f32.xlu0 %v1129
    %v1131 = vpop.xlane.xlu0 %1130
    %v1132 = vsel %vm650, %v1120, 0.0
    %1133 = vadd.xlane.f32.xlu0 %v1132
    %v1134 = vpop.xlane.xlu0 %1133
    %v1135 = vsel %vm663, %v1122, 0.0
    %1136 = vadd.xlane.f32.xlu0 %v1135
    %v1137 = vpop.xlane.xlu0 %1136
    %v1138 = vrcp.pop %v1125
    %v1139 = vrcp.pop %v1128
    %v1140 = vrcp.pop %v1131
    %v1141 = vrcp.pop %v1134
    %v1142 = vrcp.pop %v1137
    %v1143 = vmul.f32 %v1114, %v1138
    %v1144 = vmul.f32 %v1116, %v1139
    %v1145 = vmul.f32 %v1118, %v1140
    %v1146 = vmul.f32 %v1120, %v1141
    %v1147 = vmul.f32 %v1122, %v1142
    %v1148 = vpack.c.bf16 %v1144, %v1143
    %v1149 = vpack.c.bf16 %v1146, %v1145
    %v1150 = vpack.c.bf16 %v1147, %v1147
    %1151 = vrot.lane.b32.xlu0 %v572, 96
    %v1152 = vpop.permute.xlu0 %1151
    %1153 = vrot.lane.b32.xlu0 %v573, 96
    %v1154 = vpop.permute.xlu0 %1153
    %1155 = vrot.lane.b32.xlu0 %v574, 96
    %v1156 = vpop.permute.xlu0 %1155
    %v1160 = vsel %vm650, %v1148, 0
    %v1163 = vsel %vm650, %v1149, 0
    %v1166 = vsel %vm650, %v1150, 0
    %v1169 = vsel %vm141, %v1156, 0
    %1171 = vmatprep.subr.bf16.mxu0 0
    %1172 = vmatpush1.bf16.msra.mxu0 %v1152
    %1173 = vmatprep.subr.bf16.mxu0 0
    %1174 = vmatpush1.bf16.msra.mxu0 %v1154
    %1175 = vmatprep.subr.bf16.mxu0 0
    %1176 = vmatpush1.bf16.msra.mxu0 %v1169
    %1177 = vmatprep.subr.bf16.mxu0 0
    %1178 = vmatpush1.bf16.msra.mxu0 0
    %1179 = vmatprep.subr.bf16.mxu0 0
    %1180 = vmatpush1.bf16.msra.mxu0 0
    %1181 = vmatprep.subr.bf16.mxu0 0
    %1182 = vmatpush1.bf16.msra.mxu0 0
    %1183 = vmatprep.subr.bf16.mxu0 0
    %1184 = vmatpush1.bf16.msra.mxu0 0
    %1185 = vmatprep.subr.bf16.mxu0 0
    %1186 = vmatpush1.bf16.msra.mxu0 0
    %1187 = vmatprep.subr.bf16.mxu0 0
    %1188 = vmatpush1.bf16.msra.mxu0 0
    %1189 = vmatprep.subr.bf16.mxu0 0
    %1190 = vmatpush1.bf16.msra.mxu0 0
    %1191 = vmatprep.subr.bf16.mxu0 0
    %1192 = vmatpush1.bf16.msra.mxu0 0
    %1193 = vmatprep.subr.bf16.mxu0 0
    %1194 = vmatpush1.bf16.msra.mxu0 0
    %1195 = vmatprep.subr.bf16.mxu0 0
    %1196 = vmatpush1.bf16.msra.mxu0 0
    %1197 = vmatprep.subr.bf16.mxu0 0
    %1198 = vmatpush1.bf16.msra.mxu0 0
    %1199 = vmatprep.subr.bf16.mxu0 0
    %1200 = vmatpush1.bf16.msra.mxu0 0
    %1201 = vmatprep.subr.bf16.mxu0 0
    %1202 = vmatpush1.bf16.msra.mxu0 0
    %1203 = vmatprep.mubr.bf16.mxu0 0
    %1204 = vmatmul.mubr.bf16.gmra.mrb[0].mxu0 %v1160
    %v1205 = vpop.f32.mrb[0].mxu0
    %v1206 = vadd.f32 0.0, %v1205
    %v1207 = vpop.f32.mrb[0].mxu0
    %v1208 = vpop.f32.mrb[0].mxu0
    %v1209 = vadd.f32 0.0, %v1208
    %v1210 = vpop.f32.mrb[0].mxu0
    %1211 = vmatprep.mubr.bf16.mxu0 0
    %1212 = vmatmul.mubr.bf16.gmra.mrb[0].mxu0 %v1163
    %v1213 = vpop.f32.mrb[0].mxu0
    %v1214 = vadd.f32 0.0, %v1213
    %v1215 = vpop.f32.mrb[0].mxu0
    %v1216 = vpop.f32.mrb[0].mxu0
    %v1217 = vadd.f32 0.0, %v1216
    %v1218 = vpop.f32.mrb[0].mxu0
    %1219 = vmatprep.mubr.bf16.mxu0 0
    %1220 = vmatmul.mubr.bf16.gmra.mrb[0].mxu0 %v1166
    %v1221 = vpop.f32.mrb[0].mxu0
    %v1222 = vadd.f32 0.0, %v1221
    %v1223 = vpop.f32.mrb[0].mxu0
    %v1224 = vpop.f32.mrb[0].mxu0
    %v1225 = vpop.f32.mrb[0].mxu0
    %1226 = vdwg.mxu0
    %1227 = vrot.lane.b32.xlu0 %v566, 80
    %v1228 = vpop.permute.xlu0 %1227
    %1229 = vrot.lane.b32.xlu0 %v567, 80
    %v1230 = vpop.permute.xlu0 %1229
    %1231 = vrot.lane.b32.xlu0 %v568, 80
    %v1232 = vpop.permute.xlu0 %1231
    %1233 = vrot.lane.b32.xlu0 %v569, 80
    %v1234 = vpop.permute.xlu0 %1233
    %1235 = vrot.lane.b32.xlu0 %v570, 80
    %v1236 = vpop.permute.xlu0 %1235
    %1237 = vrot.lane.b32.xlu0 %v571, 80
    %v1238 = vpop.permute.xlu0 %1237
    %v1240 = vsel %vm575, %v1228, 0
    %v1243 = vsel %vm575, %v1230, 0
    %v1246 = vsel %vm575, %v1232, 0
    %v1249 = vsel %vm575, %v1234, 0
    %v1252 = vsel %vm575, %v1236, 0
    %v1255 = vsel %vm575, %v1238, 0
    %1257 = vmatprep.subr.bf16.mxu0 0
    %1258 = vmatpush1.bf16.xpose.msra.mxu0 %v1249
    %1259 = vmatprep.subr.bf16.mxu0 0
    %1260 = vmatpush1.bf16.xpose.msra.mxu0 %v1252
    %1261 = vmatprep.subr.bf16.mxu0 0
    %1262 = vmatpush1.bf16.xpose.msra.mxu0 %v1255
    %1263 = vmatprep.subr.bf16.mxu0 0
    %1264 = vmatpush1.bf16.xpose.msra.mxu0 0
    %1265 = vmatprep.subr.bf16.mxu0 0
    %1266 = vmatpush1.bf16.xpose.msra.mxu0 0
    %1267 = vmatprep.subr.bf16.mxu0 0
    %1268 = vmatpush1.bf16.xpose.msra.mxu0 0
    %1269 = vmatprep.subr.bf16.mxu0 0
    %1270 = vmatpush1.bf16.xpose.msra.mxu0 0
    %1271 = vmatprep.subr.bf16.mxu0 0
    %1272 = vmatpush1.bf16.xpose.msra.mxu0 0
    %1273 = vmatprep.subr.bf16.mxu0 0
    %1274 = vmatpush1.bf16.xpose.msra.mxu0 0
    %1275 = vmatprep.subr.bf16.mxu0 0
    %1276 = vmatpush1.bf16.xpose.msra.mxu0 0
    %1277 = vmatprep.subr.bf16.mxu0 0
    %1278 = vmatpush1.bf16.xpose.msra.mxu0 0
    %1279 = vmatprep.subr.bf16.mxu0 0
    %1280 = vmatpush1.bf16.xpose.msra.mxu0 0
    %1281 = vmatprep.subr.bf16.mxu0 0
    %1282 = vmatpush1.bf16.xpose.msra.mxu0 0
    %1283 = vmatprep.subr.bf16.mxu0 0
    %1284 = vmatpush1.bf16.xpose.msra.mxu0 0
    %1285 = vmatprep.subr.bf16.mxu0 0
    %1286 = vmatpush1.bf16.xpose.msra.mxu0 0
    %1287 = vmatprep.subr.bf16.mxu0 0
    %1288 = vmatpush1.bf16.xpose.msra.mxu0 0
    %1289 = vmatprep.mubr.bf16.mxu0 0
    %1290 = vmatmul.mubr.bf16.gmra.mrb[0].mxu0 %v1240
    %v1291 = vpop.f32.mrb[0].mxu0
    %v1292 = vadd.f32 %v34, %v1291
    %v1293 = vpop.f32.mrb[0].mxu0
    %v1294 = vpop.f32.mrb[0].mxu0
    %v1295 = vadd.f32 %v35, %v1294
    %v1296 = vpop.f32.mrb[0].mxu0
    %1297 = vmatprep.mubr.bf16.mxu0 0
    %1298 = vmatmul.mubr.bf16.gmra.mrb[0].mxu0 %v1243
    %v1299 = vpop.f32.mrb[0].mxu0
    %v1300 = vadd.f32 %v36, %v1299
    %v1301 = vpop.f32.mrb[0].mxu0
    %v1302 = vpop.f32.mrb[0].mxu0
    %v1303 = vadd.f32 %v37, %v1302
    %v1304 = vpop.f32.mrb[0].mxu0
    %1305 = vmatprep.mubr.bf16.mxu0 0
    %1306 = vmatmul.mubr.bf16.gmra.mrb[0].mxu0 %v1246
    %v1307 = vpop.f32.mrb[0].mxu0
    %v1308 = vadd.f32 %v38, %v1307
    %v1309 = vpop.f32.mrb[0].mxu0
    %v1310 = vpop.f32.mrb[0].mxu0
    %v1311 = vpop.f32.mrb[0].mxu0
    %1312 = vdwg.mxu0
    %v1313 = vsel %vm650, %v1292, -inf
    %1314 = vmax.xlane.f32.xlu0 %v1313
    %v1315 = vpop.xlane.xlu0 %1314
    %v1316 = vsel %vm650, %v1295, -inf
    %1317 = vmax.xlane.f32.xlu0 %v1316
    %v1318 = vpop.xlane.xlu0 %1317
    %v1319 = vsel %vm650, %v1300, -inf
    %1320 = vmax.xlane.f32.xlu0 %v1319
    %v1321 = vpop.xlane.xlu0 %1320
    %v1322 = vsel %vm650, %v1303, -inf
    %1323 = vmax.xlane.f32.xlu0 %v1322
    %v1324 = vpop.xlane.xlu0 %1323
    %v1325 = vsel %vm663, %v1308, -inf
    %1326 = vmax.xlane.f32.xlu0 %v1325
    %v1327 = vpop.xlane.xlu0 %1326
    %v1328 = vsub.f32 %v1292, %v1315
    %v1329 = vsub.f32 %v1295, %v1318
    %v1330 = vsub.f32 %v1300, %v1321
    %v1331 = vsub.f32 %v1303, %v1324
    %v1332 = vsub.f32 %v1308, %v1327
    %v1333 = vmul.f32 %v1328, 1.442695
    %v1334 = vpow.pop %v1333
    %v1335 = vmul.f32 %v1329, 1.442695
    %v1336 = vpow.pop %v1335
    %v1337 = vmul.f32 %v1330, 1.442695
    %v1338 = vpow.pop %v1337
    %v1339 = vmul.f32 %v1331, 1.442695
    %v1340 = vpow.pop %v1339
    %v1341 = vmul.f32 %v1332, 1.442695
    %v1342 = vpow.pop %v1341
    %v1343 = vsel %vm650, %v1334, 0.0
    %1344 = vadd.xlane.f32.xlu0 %v1343
    %v1345 = vpop.xlane.xlu0 %1344
    %v1346 = vsel %vm650, %v1336, 0.0
    %1347 = vadd.xlane.f32.xlu0 %v1346
    %v1348 = vpop.xlane.xlu0 %1347
    %v1349 = vsel %vm650, %v1338, 0.0
    %1350 = vadd.xlane.f32.xlu0 %v1349
    %v1351 = vpop.xlane.xlu0 %1350
    %v1352 = vsel %vm650, %v1340, 0.0
    %1353 = vadd.xlane.f32.xlu0 %v1352
    %v1354 = vpop.xlane.xlu0 %1353
    %v1355 = vsel %vm663, %v1342, 0.0
    %1356 = vadd.xlane.f32.xlu0 %v1355
    %v1357 = vpop.xlane.xlu0 %1356
    %v1358 = vrcp.pop %v1345
    %v1359 = vrcp.pop %v1348
    %v1360 = vrcp.pop %v1351
    %v1361 = vrcp.pop %v1354
    %v1362 = vrcp.pop %v1357
    %v1363 = vmul.f32 %v1334, %v1358
    %v1364 = vmul.f32 %v1336, %v1359
    %v1365 = vmul.f32 %v1338, %v1360
    %v1366 = vmul.f32 %v1340, %v1361
    %v1367 = vmul.f32 %v1342, %v1362
    %v1368 = vpack.c.bf16 %v1364, %v1363
    %v1369 = vpack.c.bf16 %v1366, %v1365
    %v1370 = vpack.c.bf16 %v1367, %v1367
    %1371 = vrot.lane.b32.xlu0 %v572, 80
    %v1372 = vpop.permute.xlu0 %1371
    %1373 = vrot.lane.b32.xlu0 %v573, 80
    %v1374 = vpop.permute.xlu0 %1373
    %1375 = vrot.lane.b32.xlu0 %v574, 80
    %v1376 = vpop.permute.xlu0 %1375
    %v1380 = vsel %vm650, %v1368, 0
    %v1383 = vsel %vm650, %v1369, 0
    %v1386 = vsel %vm650, %v1370, 0
    %v1389 = vsel %vm141, %v1376, 0
    %1391 = vmatprep.subr.bf16.mxu0 0
    %1392 = vmatpush1.bf16.msra.mxu0 %v1372
    %1393 = vmatprep.subr.bf16.mxu0 0
    %1394 = vmatpush1.bf16.msra.mxu0 %v1374
    %1395 = vmatprep.subr.bf16.mxu0 0
    %1396 = vmatpush1.bf16.msra.mxu0 %v1389
    %1397 = vmatprep.subr.bf16.mxu0 0
    %1398 = vmatpush1.bf16.msra.mxu0 0
    %1399 = vmatprep.subr.bf16.mxu0 0
    %1400 = vmatpush1.bf16.msra.mxu0 0
    %1401 = vmatprep.subr.bf16.mxu0 0
    %1402 = vmatpush1.bf16.msra.mxu0 0
    %1403 = vmatprep.subr.bf16.mxu0 0
    %1404 = vmatpush1.bf16.msra.mxu0 0
    %1405 = vmatprep.subr.bf16.mxu0 0
    %1406 = vmatpush1.bf16.msra.mxu0 0
    %1407 = vmatprep.subr.bf16.mxu0 0
    %1408 = vmatpush1.bf16.msra.mxu0 0
    %1409 = vmatprep.subr.bf16.mxu0 0
    %1410 = vmatpush1.bf16.msra.mxu0 0
    %1411 = vmatprep.subr.bf16.mxu0 0
    %1412 = vmatpush1.bf16.msra.mxu0 0
    %1413 = vmatprep.subr.bf16.mxu0 0
    %1414 = vmatpush1.bf16.msra.mxu0 0
    %1415 = vmatprep.subr.bf16.mxu0 0
    %1416 = vmatpush1.bf16.msra.mxu0 0
    %1417 = vmatprep.subr.bf16.mxu0 0
    %1418 = vmatpush1.bf16.msra.mxu0 0
    %1419 = vmatprep.subr.bf16.mxu0 0
    %1420 = vmatpush1.bf16.msra.mxu0 0
    %1421 = vmatprep.subr.bf16.mxu0 0
    %1422 = vmatpush1.bf16.msra.mxu0 0
    %1423 = vmatprep.mubr.bf16.mxu0 0
    %1424 = vmatmul.mubr.bf16.gmra.mrb[0].mxu0 %v1380
    %v1425 = vpop.f32.mrb[0].mxu0
    %v1426 = vadd.f32 0.0, %v1425
    %v1427 = vpop.f32.mrb[0].mxu0
    %v1428 = vpop.f32.mrb[0].mxu0
    %v1429 = vadd.f32 0.0, %v1428
    %v1430 = vpop.f32.mrb[0].mxu0
    %1431 = vmatprep.mubr.bf16.mxu0 0
    %1432 = vmatmul.mubr.bf16.gmra.mrb[0].mxu0 %v1383
    %v1433 = vpop.f32.mrb[0].mxu0
    %v1434 = vadd.f32 0.0, %v1433
    %v1435 = vpop.f32.mrb[0].mxu0
    %v1436 = vpop.f32.mrb[0].mxu0
    %v1437 = vadd.f32 0.0, %v1436
    %v1438 = vpop.f32.mrb[0].mxu0
    %1439 = vmatprep.mubr.bf16.mxu0 0
    %1440 = vmatmul.mubr.bf16.gmra.mrb[0].mxu0 %v1386
    %v1441 = vpop.f32.mrb[0].mxu0
    %v1442 = vadd.f32 0.0, %v1441
    %v1443 = vpop.f32.mrb[0].mxu0
    %v1444 = vpop.f32.mrb[0].mxu0
    %v1445 = vpop.f32.mrb[0].mxu0
    %1446 = vdwg.mxu0
    %1447 = vrot.lane.b32.xlu0 %v566, 64
    %v1448 = vpop.permute.xlu0 %1447
    %1449 = vrot.lane.b32.xlu0 %v567, 64
    %v1450 = vpop.permute.xlu0 %1449
    %1451 = vrot.lane.b32.xlu0 %v568, 64
    %v1452 = vpop.permute.xlu0 %1451
    %1453 = vrot.lane.b32.xlu0 %v569, 64
    %v1454 = vpop.permute.xlu0 %1453
    %1455 = vrot.lane.b32.xlu0 %v570, 64
    %v1456 = vpop.permute.xlu0 %1455
    %1457 = vrot.lane.b32.xlu0 %v571, 64
    %v1458 = vpop.permute.xlu0 %1457
    %v1460 = vsel %vm575, %v1448, 0
    %v1463 = vsel %vm575, %v1450, 0
    %v1466 = vsel %vm575, %v1452, 0
    %v1469 = vsel %vm575, %v1454, 0
    %v1472 = vsel %vm575, %v1456, 0
    %v1475 = vsel %vm575, %v1458, 0
    %1477 = vmatprep.subr.bf16.mxu0 0
    %1478 = vmatpush1.bf16.xpose.msra.mxu0 %v1469
    %1479 = vmatprep.subr.bf16.mxu0 0
    %1480 = vmatpush1.bf16.xpose.msra.mxu0 %v1472
    %1481 = vmatprep.subr.bf16.mxu0 0
    %1482 = vmatpush1.bf16.xpose.msra.mxu0 %v1475
    %1483 = vmatprep.subr.bf16.mxu0 0
    %1484 = vmatpush1.bf16.xpose.msra.mxu0 0
    %1485 = vmatprep.subr.bf16.mxu0 0
    %1486 = vmatpush1.bf16.xpose.msra.mxu0 0
    %1487 = vmatprep.subr.bf16.mxu0 0
    %1488 = vmatpush1.bf16.xpose.msra.mxu0 0
    %1489 = vmatprep.subr.bf16.mxu0 0
    %1490 = vmatpush1.bf16.xpose.msra.mxu0 0
    %1491 = vmatprep.subr.bf16.mxu0 0
    %1492 = vmatpush1.bf16.xpose.msra.mxu0 0
    %1493 = vmatprep.subr.bf16.mxu0 0
    %1494 = vmatpush1.bf16.xpose.msra.mxu0 0
    %1495 = vmatprep.subr.bf16.mxu0 0
    %1496 = vmatpush1.bf16.xpose.msra.mxu0 0
    %1497 = vmatprep.subr.bf16.mxu0 0
    %1498 = vmatpush1.bf16.xpose.msra.mxu0 0
    %1499 = vmatprep.subr.bf16.mxu0 0
    %1500 = vmatpush1.bf16.xpose.msra.mxu0 0
    %1501 = vmatprep.subr.bf16.mxu0 0
    %1502 = vmatpush1.bf16.xpose.msra.mxu0 0
    %1503 = vmatprep.subr.bf16.mxu0 0
    %1504 = vmatpush1.bf16.xpose.msra.mxu0 0
    %1505 = vmatprep.subr.bf16.mxu0 0
    %1506 = vmatpush1.bf16.xpose.msra.mxu0 0
    %1507 = vmatprep.subr.bf16.mxu0 0
    %1508 = vmatpush1.bf16.xpose.msra.mxu0 0
    %1509 = vmatprep.mubr.bf16.mxu0 0
    %1510 = vmatmul.mubr.bf16.gmra.mrb[0].mxu0 %v1460
    %v1511 = vpop.f32.mrb[0].mxu0
    %v1512 = vadd.f32 %v34, %v1511
    %v1513 = vpop.f32.mrb[0].mxu0
    %v1514 = vpop.f32.mrb[0].mxu0
    %v1515 = vadd.f32 %v35, %v1514
    %v1516 = vpop.f32.mrb[0].mxu0
    %1517 = vmatprep.mubr.bf16.mxu0 0
    %1518 = vmatmul.mubr.bf16.gmra.mrb[0].mxu0 %v1463
    %v1519 = vpop.f32.mrb[0].mxu0
    %v1520 = vadd.f32 %v36, %v1519
    %v1521 = vpop.f32.mrb[0].mxu0
    %v1522 = vpop.f32.mrb[0].mxu0
    %v1523 = vadd.f32 %v37, %v1522
    %v1524 = vpop.f32.mrb[0].mxu0
    %1525 = vmatprep.mubr.bf16.mxu0 0
    %1526 = vmatmul.mubr.bf16.gmra.mrb[0].mxu0 %v1466
    %v1527 = vpop.f32.mrb[0].mxu0
    %v1528 = vadd.f32 %v38, %v1527
    %v1529 = vpop.f32.mrb[0].mxu0
    %v1530 = vpop.f32.mrb[0].mxu0
    %v1531 = vpop.f32.mrb[0].mxu0
    %1532 = vdwg.mxu0
    %v1533 = vsel %vm650, %v1512, -inf
    %1534 = vmax.xlane.f32.xlu0 %v1533
    %v1535 = vpop.xlane.xlu0 %1534
    %v1536 = vsel %vm650, %v1515, -inf
    %1537 = vmax.xlane.f32.xlu0 %v1536
    %v1538 = vpop.xlane.xlu0 %1537
    %v1539 = vsel %vm650, %v1520, -inf
    %1540 = vmax.xlane.f32.xlu0 %v1539
    %v1541 = vpop.xlane.xlu0 %1540
    %v1542 = vsel %vm650, %v1523, -inf
    %1543 = vmax.xlane.f32.xlu0 %v1542
    %v1544 = vpop.xlane.xlu0 %1543
    %v1545 = vsel %vm663, %v1528, -inf
    %1546 = vmax.xlane.f32.xlu0 %v1545
    %v1547 = vpop.xlane.xlu0 %1546
    %v1548 = vsub.f32 %v1512, %v1535
    %v1549 = vsub.f32 %v1515, %v1538
    %v1550 = vsub.f32 %v1520, %v1541
    %v1551 = vsub.f32 %v1523, %v1544
    %v1552 = vsub.f32 %v1528, %v1547
    %v1553 = vmul.f32 %v1548, 1.442695
    %v1554 = vpow.pop %v1553
    %v1555 = vmul.f32 %v1549, 1.442695
    %v1556 = vpow.pop %v1555
    %v1557 = vmul.f32 %v1550, 1.442695
    %v1558 = vpow.pop %v1557
    %v1559 = vmul.f32 %v1551, 1.442695
    %v1560 = vpow.pop %v1559
    %v1561 = vmul.f32 %v1552, 1.442695
    %v1562 = vpow.pop %v1561
    %v1563 = vsel %vm650, %v1554, 0.0
    %1564 = vadd.xlane.f32.xlu0 %v1563
    %v1565 = vpop.xlane.xlu0 %1564
    %v1566 = vsel %vm650, %v1556, 0.0
    %1567 = vadd.xlane.f32.xlu0 %v1566
    %v1568 = vpop.xlane.xlu0 %1567
    %v1569 = vsel %vm650, %v1558, 0.0
    %1570 = vadd.xlane.f32.xlu0 %v1569
    %v1571 = vpop.xlane.xlu0 %1570
    %v1572 = vsel %vm650, %v1560, 0.0
    %1573 = vadd.xlane.f32.xlu0 %v1572
    %v1574 = vpop.xlane.xlu0 %1573
    %v1575 = vsel %vm663, %v1562, 0.0
    %1576 = vadd.xlane.f32.xlu0 %v1575
    %v1577 = vpop.xlane.xlu0 %1576
    %v1578 = vrcp.pop %v1565
    %v1579 = vrcp.pop %v1568
    %v1580 = vrcp.pop %v1571
    %v1581 = vrcp.pop %v1574
    %v1582 = vrcp.pop %v1577
    %v1583 = vmul.f32 %v1554, %v1578
    %v1584 = vmul.f32 %v1556, %v1579
    %v1585 = vmul.f32 %v1558, %v1580
    %v1586 = vmul.f32 %v1560, %v1581
    %v1587 = vmul.f32 %v1562, %v1582
    %v1588 = vpack.c.bf16 %v1584, %v1583
    %v1589 = vpack.c.bf16 %v1586, %v1585
    %v1590 = vpack.c.bf16 %v1587, %v1587
    %1591 = vrot.lane.b32.xlu0 %v572, 64
    %v1592 = vpop.permute.xlu0 %1591
    %1593 = vrot.lane.b32.xlu0 %v573, 64
    %v1594 = vpop.permute.xlu0 %1593
    %1595 = vrot.lane.b32.xlu0 %v574, 64
    %v1596 = vpop.permute.xlu0 %1595
    %v1600 = vsel %vm650, %v1588, 0
    %v1603 = vsel %vm650, %v1589, 0
    %v1606 = vsel %vm650, %v1590, 0
    %v1609 = vsel %vm141, %v1596, 0
    %1611 = vmatprep.subr.bf16.mxu0 0
    %1612 = vmatpush1.bf16.msra.mxu0 %v1592
    %1613 = vmatprep.subr.bf16.mxu0 0
    %1614 = vmatpush1.bf16.msra.mxu0 %v1594
    %1615 = vmatprep.subr.bf16.mxu0 0
    %1616 = vmatpush1.bf16.msra.mxu0 %v1609
    %1617 = vmatprep.subr.bf16.mxu0 0
    %1618 = vmatpush1.bf16.msra.mxu0 0
    %1619 = vmatprep.subr.bf16.mxu0 0
    %1620 = vmatpush1.bf16.msra.mxu0 0
    %1621 = vmatprep.subr.bf16.mxu0 0
    %1622 = vmatpush1.bf16.msra.mxu0 0
    %1623 = vmatprep.subr.bf16.mxu0 0
    %1624 = vmatpush1.bf16.msra.mxu0 0
    %1625 = vmatprep.subr.bf16.mxu0 0
    %1626 = vmatpush1.bf16.msra.mxu0 0
    %1627 = vmatprep.subr.bf16.mxu0 0
    %1628 = vmatpush1.bf16.msra.mxu0 0
    %1629 = vmatprep.subr.bf16.mxu0 0
    %1630 = vmatpush1.bf16.msra.mxu0 0
    %1631 = vmatprep.subr.bf16.mxu0 0
    %1632 = vmatpush1.bf16.msra.mxu0 0
    %1633 = vmatprep.subr.bf16.mxu0 0
    %1634 = vmatpush1.bf16.msra.mxu0 0
    %1635 = vmatprep.subr.bf16.mxu0 0
    %1636 = vmatpush1.bf16.msra.mxu0 0
    %1637 = vmatprep.subr.bf16.mxu0 0
    %1638 = vmatpush1.bf16.msra.mxu0 0
    %1639 = vmatprep.subr.bf16.mxu0 0
    %1640 = vmatpush1.bf16.msra.mxu0 0
    %1641 = vmatprep.subr.bf16.mxu0 0
    %1642 = vmatpush1.bf16.msra.mxu0 0
    %1643 = vmatprep.mubr.bf16.mxu0 0
    %1644 = vmatmul.mubr.bf16.gmra.mrb[0].mxu0 %v1600
    %v1645 = vpop.f32.mrb[0].mxu0
    %v1646 = vadd.f32 0.0, %v1645
    %v1647 = vpop.f32.mrb[0].mxu0
    %v1648 = vpop.f32.mrb[0].mxu0
    %v1649 = vadd.f32 0.0, %v1648
    %v1650 = vpop.f32.mrb[0].mxu0
    %1651 = vmatprep.mubr.bf16.mxu0 0
    %1652 = vmatmul.mubr.bf16.gmra.mrb[0].mxu0 %v1603
    %v1653 = vpop.f32.mrb[0].mxu0
    %v1654 = vadd.f32 0.0, %v1653
    %v1655 = vpop.f32.mrb[0].mxu0
    %v1656 = vpop.f32.mrb[0].mxu0
    %v1657 = vadd.f32 0.0, %v1656
    %v1658 = vpop.f32.mrb[0].mxu0
    %1659 = vmatprep.mubr.bf16.mxu0 0
    %1660 = vmatmul.mubr.bf16.gmra.mrb[0].mxu0 %v1606
    %v1661 = vpop.f32.mrb[0].mxu0
    %v1662 = vadd.f32 0.0, %v1661
    %v1663 = vpop.f32.mrb[0].mxu0
    %v1664 = vpop.f32.mrb[0].mxu0
    %v1665 = vpop.f32.mrb[0].mxu0
    %1666 = vdwg.mxu0
    %1667 = vrot.lane.b32.xlu0 %v566, 48
    %v1668 = vpop.permute.xlu0 %1667
    %1669 = vrot.lane.b32.xlu0 %v567, 48
    %v1670 = vpop.permute.xlu0 %1669
    %1671 = vrot.lane.b32.xlu0 %v568, 48
    %v1672 = vpop.permute.xlu0 %1671
    %1673 = vrot.lane.b32.xlu0 %v569, 48
    %v1674 = vpop.permute.xlu0 %1673
    %1675 = vrot.lane.b32.xlu0 %v570, 48
    %v1676 = vpop.permute.xlu0 %1675
    %1677 = vrot.lane.b32.xlu0 %v571, 48
    %v1678 = vpop.permute.xlu0 %1677
    %v1680 = vsel %vm575, %v1668, 0
    %v1683 = vsel %vm575, %v1670, 0
    %v1686 = vsel %vm575, %v1672, 0
    %v1689 = vsel %vm575, %v1674, 0
    %v1692 = vsel %vm575, %v1676, 0
    %v1695 = vsel %vm575, %v1678, 0
    %1697 = vmatprep.subr.bf16.mxu0 0
    %1698 = vmatpush1.bf16.xpose.msra.mxu0 %v1689
    %1699 = vmatprep.subr.bf16.mxu0 0
    %1700 = vmatpush1.bf16.xpose.msra.mxu0 %v1692
    %1701 = vmatprep.subr.bf16.mxu0 0
    %1702 = vmatpush1.bf16.xpose.msra.mxu0 %v1695
    %1703 = vmatprep.subr.bf16.mxu0 0
    %1704 = vmatpush1.bf16.xpose.msra.mxu0 0
    %1705 = vmatprep.subr.bf16.mxu0 0
    %1706 = vmatpush1.bf16.xpose.msra.mxu0 0
    %1707 = vmatprep.subr.bf16.mxu0 0
    %1708 = vmatpush1.bf16.xpose.msra.mxu0 0
    %1709 = vmatprep.subr.bf16.mxu0 0
    %1710 = vmatpush1.bf16.xpose.msra.mxu0 0
    %1711 = vmatprep.subr.bf16.mxu0 0
    %1712 = vmatpush1.bf16.xpose.msra.mxu0 0
    %1713 = vmatprep.subr.bf16.mxu0 0
    %1714 = vmatpush1.bf16.xpose.msra.mxu0 0
    %1715 = vmatprep.subr.bf16.mxu0 0
    %1716 = vmatpush1.bf16.xpose.msra.mxu0 0
    %1717 = vmatprep.subr.bf16.mxu0 0
    %1718 = vmatpush1.bf16.xpose.msra.mxu0 0
    %1719 = vmatprep.subr.bf16.mxu0 0
    %1720 = vmatpush1.bf16.xpose.msra.mxu0 0
    %1721 = vmatprep.subr.bf16.mxu0 0
    %1722 = vmatpush1.bf16.xpose.msra.mxu0 0
    %1723 = vmatprep.subr.bf16.mxu0 0
    %1724 = vmatpush1.bf16.xpose.msra.mxu0 0
    %1725 = vmatprep.subr.bf16.mxu0 0
    %1726 = vmatpush1.bf16.xpose.msra.mxu0 0
    %1727 = vmatprep.subr.bf16.mxu0 0
    %1728 = vmatpush1.bf16.xpose.msra.mxu0 0
    %1729 = vmatprep.mubr.bf16.mxu0 0
    %1730 = vmatmul.mubr.bf16.gmra.mrb[0].mxu0 %v1680
    %v1731 = vpop.f32.mrb[0].mxu0
    %v1732 = vadd.f32 %v34, %v1731
    %v1733 = vpop.f32.mrb[0].mxu0
    %v1734 = vpop.f32.mrb[0].mxu0
    %v1735 = vadd.f32 %v35, %v1734
    %v1736 = vpop.f32.mrb[0].mxu0
    %1737 = vmatprep.mubr.bf16.mxu0 0
    %1738 = vmatmul.mubr.bf16.gmra.mrb[0].mxu0 %v1683
    %v1739 = vpop.f32.mrb[0].mxu0
    %v1740 = vadd.f32 %v36, %v1739
    %v1741 = vpop.f32.mrb[0].mxu0
    %v1742 = vpop.f32.mrb[0].mxu0
    %v1743 = vadd.f32 %v37, %v1742
    %v1744 = vpop.f32.mrb[0].mxu0
    %1745 = vmatprep.mubr.bf16.mxu0 0
    %1746 = vmatmul.mubr.bf16.gmra.mrb[0].mxu0 %v1686
    %v1747 = vpop.f32.mrb[0].mxu0
    %v1748 = vadd.f32 %v38, %v1747
    %v1749 = vpop.f32.mrb[0].mxu0
    %v1750 = vpop.f32.mrb[0].mxu0
    %v1751 = vpop.f32.mrb[0].mxu0
    %1752 = vdwg.mxu0
    %v1753 = vsel %vm650, %v1732, -inf
    %1754 = vmax.xlane.f32.xlu0 %v1753
    %v1755 = vpop.xlane.xlu0 %1754
    %v1756 = vsel %vm650, %v1735, -inf
    %1757 = vmax.xlane.f32.xlu0 %v1756
    %v1758 = vpop.xlane.xlu0 %1757
    %v1759 = vsel %vm650, %v1740, -inf
    %1760 = vmax.xlane.f32.xlu0 %v1759
    %v1761 = vpop.xlane.xlu0 %1760
    %v1762 = vsel %vm650, %v1743, -inf
    %1763 = vmax.xlane.f32.xlu0 %v1762
    %v1764 = vpop.xlane.xlu0 %1763
    %v1765 = vsel %vm663, %v1748, -inf
    %1766 = vmax.xlane.f32.xlu0 %v1765
    %v1767 = vpop.xlane.xlu0 %1766
    %v1768 = vsub.f32 %v1732, %v1755
    %v1769 = vsub.f32 %v1735, %v1758
    %v1770 = vsub.f32 %v1740, %v1761
    %v1771 = vsub.f32 %v1743, %v1764
    %v1772 = vsub.f32 %v1748, %v1767
    %v1773 = vmul.f32 %v1768, 1.442695
    %v1774 = vpow.pop %v1773
    %v1775 = vmul.f32 %v1769, 1.442695
    %v1776 = vpow.pop %v1775
    %v1777 = vmul.f32 %v1770, 1.442695
    %v1778 = vpow.pop %v1777
    %v1779 = vmul.f32 %v1771, 1.442695
    %v1780 = vpow.pop %v1779
    %v1781 = vmul.f32 %v1772, 1.442695
    %v1782 = vpow.pop %v1781
    %v1783 = vsel %vm650, %v1774, 0.0
    %1784 = vadd.xlane.f32.xlu0 %v1783
    %v1785 = vpop.xlane.xlu0 %1784
    %v1786 = vsel %vm650, %v1776, 0.0
    %1787 = vadd.xlane.f32.xlu0 %v1786
    %v1788 = vpop.xlane.xlu0 %1787
    %v1789 = vsel %vm650, %v1778, 0.0
    %1790 = vadd.xlane.f32.xlu0 %v1789
    %v1791 = vpop.xlane.xlu0 %1790
    %v1792 = vsel %vm650, %v1780, 0.0
    %1793 = vadd.xlane.f32.xlu0 %v1792
    %v1794 = vpop.xlane.xlu0 %1793
    %v1795 = vsel %vm663, %v1782, 0.0
    %1796 = vadd.xlane.f32.xlu0 %v1795
    %v1797 = vpop.xlane.xlu0 %1796
    %v1798 = vrcp.pop %v1785
    %v1799 = vrcp.pop %v1788
    %v1800 = vrcp.pop %v1791
    %v1801 = vrcp.pop %v1794
    %v1802 = vrcp.pop %v1797
    %v1803 = vmul.f32 %v1774, %v1798
    %v1804 = vmul.f32 %v1776, %v1799
    %v1805 = vmul.f32 %v1778, %v1800
    %v1806 = vmul.f32 %v1780, %v1801
    %v1807 = vmul.f32 %v1782, %v1802
    %v1808 = vpack.c.bf16 %v1804, %v1803
    %v1809 = vpack.c.bf16 %v1806, %v1805
    %v1810 = vpack.c.bf16 %v1807, %v1807
    %1811 = vrot.lane.b32.xlu0 %v572, 48
    %v1812 = vpop.permute.xlu0 %1811
    %1813 = vrot.lane.b32.xlu0 %v573, 48
    %v1814 = vpop.permute.xlu0 %1813
    %1815 = vrot.lane.b32.xlu0 %v574, 48
    %v1816 = vpop.permute.xlu0 %1815
    %v1820 = vsel %vm650, %v1808, 0
    %v1823 = vsel %vm650, %v1809, 0
    %v1826 = vsel %vm650, %v1810, 0
    %v1829 = vsel %vm141, %v1816, 0
    %1831 = vmatprep.subr.bf16.mxu0 0
    %1832 = vmatpush1.bf16.msra.mxu0 %v1812
    %1833 = vmatprep.subr.bf16.mxu0 0
    %1834 = vmatpush1.bf16.msra.mxu0 %v1814
    %1835 = vmatprep.subr.bf16.mxu0 0
    %1836 = vmatpush1.bf16.msra.mxu0 %v1829
    %1837 = vmatprep.subr.bf16.mxu0 0
    %1838 = vmatpush1.bf16.msra.mxu0 0
    %1839 = vmatprep.subr.bf16.mxu0 0
    %1840 = vmatpush1.bf16.msra.mxu0 0
    %1841 = vmatprep.subr.bf16.mxu0 0
    %1842 = vmatpush1.bf16.msra.mxu0 0
    %1843 = vmatprep.subr.bf16.mxu0 0
    %1844 = vmatpush1.bf16.msra.mxu0 0
    %1845 = vmatprep.subr.bf16.mxu0 0
    %1846 = vmatpush1.bf16.msra.mxu0 0
    %1847 = vmatprep.subr.bf16.mxu0 0
    %1848 = vmatpush1.bf16.msra.mxu0 0
    %1849 = vmatprep.subr.bf16.mxu0 0
    %1850 = vmatpush1.bf16.msra.mxu0 0
    %1851 = vmatprep.subr.bf16.mxu0 0
    %1852 = vmatpush1.bf16.msra.mxu0 0
    %1853 = vmatprep.subr.bf16.mxu0 0
    %1854 = vmatpush1.bf16.msra.mxu0 0
    %1855 = vmatprep.subr.bf16.mxu0 0
    %1856 = vmatpush1.bf16.msra.mxu0 0
    %1857 = vmatprep.subr.bf16.mxu0 0
    %1858 = vmatpush1.bf16.msra.mxu0 0
    %1859 = vmatprep.subr.bf16.mxu0 0
    %1860 = vmatpush1.bf16.msra.mxu0 0
    %1861 = vmatprep.subr.bf16.mxu0 0
    %1862 = vmatpush1.bf16.msra.mxu0 0
    %1863 = vmatprep.mubr.bf16.mxu0 0
    %1864 = vmatmul.mubr.bf16.gmra.mrb[0].mxu0 %v1820
    %v1865 = vpop.f32.mrb[0].mxu0
    %v1866 = vadd.f32 0.0, %v1865
    %v1867 = vpop.f32.mrb[0].mxu0
    %v1868 = vpop.f32.mrb[0].mxu0
    %v1869 = vadd.f32 0.0, %v1868
    %v1870 = vpop.f32.mrb[0].mxu0
    %1871 = vmatprep.mubr.bf16.mxu0 0
    %1872 = vmatmul.mubr.bf16.gmra.mrb[0].mxu0 %v1823
    %v1873 = vpop.f32.mrb[0].mxu0
    %v1874 = vadd.f32 0.0, %v1873
    %v1875 = vpop.f32.mrb[0].mxu0
    %v1876 = vpop.f32.mrb[0].mxu0
    %v1877 = vadd.f32 0.0, %v1876
    %v1878 = vpop.f32.mrb[0].mxu0
    %1879 = vmatprep.mubr.bf16.mxu0 0
    %1880 = vmatmul.mubr.bf16.gmra.mrb[0].mxu0 %v1826
    %v1881 = vpop.f32.mrb[0].mxu0
    %v1882 = vadd.f32 0.0, %v1881
    %v1883 = vpop.f32.mrb[0].mxu0
    %v1884 = vpop.f32.mrb[0].mxu0
    %v1885 = vpop.f32.mrb[0].mxu0
    %1886 = vdwg.mxu0
    %1887 = vrot.lane.b32.xlu0 %v566, 32
    %v1888 = vpop.permute.xlu0 %1887
    %1889 = vrot.lane.b32.xlu0 %v567, 32
    %v1890 = vpop.permute.xlu0 %1889
    %1891 = vrot.lane.b32.xlu0 %v568, 32
    %v1892 = vpop.permute.xlu0 %1891
    %1893 = vrot.lane.b32.xlu0 %v569, 32
    %v1894 = vpop.permute.xlu0 %1893
    %1895 = vrot.lane.b32.xlu0 %v570, 32
    %v1896 = vpop.permute.xlu0 %1895
    %1897 = vrot.lane.b32.xlu0 %v571, 32
    %v1898 = vpop.permute.xlu0 %1897
    %v1900 = vsel %vm575, %v1888, 0
    %v1903 = vsel %vm575, %v1890, 0
    %v1906 = vsel %vm575, %v1892, 0
    %v1909 = vsel %vm575, %v1894, 0
    %v1912 = vsel %vm575, %v1896, 0
    %v1915 = vsel %vm575, %v1898, 0
    %1917 = vmatprep.subr.bf16.mxu0 0
    %1918 = vmatpush1.bf16.xpose.msra.mxu0 %v1909
    %1919 = vmatprep.subr.bf16.mxu0 0
    %1920 = vmatpush1.bf16.xpose.msra.mxu0 %v1912
    %1921 = vmatprep.subr.bf16.mxu0 0
    %1922 = vmatpush1.bf16.xpose.msra.mxu0 %v1915
    %1923 = vmatprep.subr.bf16.mxu0 0
    %1924 = vmatpush1.bf16.xpose.msra.mxu0 0
    %1925 = vmatprep.subr.bf16.mxu0 0
    %1926 = vmatpush1.bf16.xpose.msra.mxu0 0
    %1927 = vmatprep.subr.bf16.mxu0 0
    %1928 = vmatpush1.bf16.xpose.msra.mxu0 0
    %1929 = vmatprep.subr.bf16.mxu0 0
    %1930 = vmatpush1.bf16.xpose.msra.mxu0 0
    %1931 = vmatprep.subr.bf16.mxu0 0
    %1932 = vmatpush1.bf16.xpose.msra.mxu0 0
    %1933 = vmatprep.subr.bf16.mxu0 0
    %1934 = vmatpush1.bf16.xpose.msra.mxu0 0
    %1935 = vmatprep.subr.bf16.mxu0 0
    %1936 = vmatpush1.bf16.xpose.msra.mxu0 0
    %1937 = vmatprep.subr.bf16.mxu0 0
    %1938 = vmatpush1.bf16.xpose.msra.mxu0 0
    %1939 = vmatprep.subr.bf16.mxu0 0
    %1940 = vmatpush1.bf16.xpose.msra.mxu0 0
    %1941 = vmatprep.subr.bf16.mxu0 0
    %1942 = vmatpush1.bf16.xpose.msra.mxu0 0
    %1943 = vmatprep.subr.bf16.mxu0 0
    %1944 = vmatpush1.bf16.xpose.msra.mxu0 0
    %1945 = vmatprep.subr.bf16.mxu0 0
    %1946 = vmatpush1.bf16.xpose.msra.mxu0 0
    %1947 = vmatprep.subr.bf16.mxu0 0
    %1948 = vmatpush1.bf16.xpose.msra.mxu0 0
    %1949 = vmatprep.mubr.bf16.mxu0 0
    %1950 = vmatmul.mubr.bf16.gmra.mrb[0].mxu0 %v1900
    %v1951 = vpop.f32.mrb[0].mxu0
    %v1952 = vadd.f32 %v34, %v1951
    %v1953 = vpop.f32.mrb[0].mxu0
    %v1954 = vpop.f32.mrb[0].mxu0
    %v1955 = vadd.f32 %v35, %v1954
    %v1956 = vpop.f32.mrb[0].mxu0
    %1957 = vmatprep.mubr.bf16.mxu0 0
    %1958 = vmatmul.mubr.bf16.gmra.mrb[0].mxu0 %v1903
    %v1959 = vpop.f32.mrb[0].mxu0
    %v1960 = vadd.f32 %v36, %v1959
    %v1961 = vpop.f32.mrb[0].mxu0
    %v1962 = vpop.f32.mrb[0].mxu0
    %v1963 = vadd.f32 %v37, %v1962
    %v1964 = vpop.f32.mrb[0].mxu0
    %1965 = vmatprep.mubr.bf16.mxu0 0
    %1966 = vmatmul.mubr.bf16.gmra.mrb[0].mxu0 %v1906
    %v1967 = vpop.f32.mrb[0].mxu0
    %v1968 = vadd.f32 %v38, %v1967
    %v1969 = vpop.f32.mrb[0].mxu0
    %v1970 = vpop.f32.mrb[0].mxu0
    %v1971 = vpop.f32.mrb[0].mxu0
    %1972 = vdwg.mxu0
    %v1973 = vsel %vm650, %v1952, -inf
    %1974 = vmax.xlane.f32.xlu0 %v1973
    %v1975 = vpop.xlane.xlu0 %1974
    %v1976 = vsel %vm650, %v1955, -inf
    %1977 = vmax.xlane.f32.xlu0 %v1976
    %v1978 = vpop.xlane.xlu0 %1977
    %v1979 = vsel %vm650, %v1960, -inf
    %1980 = vmax.xlane.f32.xlu0 %v1979
    %v1981 = vpop.xlane.xlu0 %1980
    %v1982 = vsel %vm650, %v1963, -inf
    %1983 = vmax.xlane.f32.xlu0 %v1982
    %v1984 = vpop.xlane.xlu0 %1983
    %v1985 = vsel %vm663, %v1968, -inf
    %1986 = vmax.xlane.f32.xlu0 %v1985
    %v1987 = vpop.xlane.xlu0 %1986
    %v1988 = vsub.f32 %v1952, %v1975
    %v1989 = vsub.f32 %v1955, %v1978
    %v1990 = vsub.f32 %v1960, %v1981
    %v1991 = vsub.f32 %v1963, %v1984
    %v1992 = vsub.f32 %v1968, %v1987
    %v1993 = vmul.f32 %v1988, 1.442695
    %v1994 = vpow.pop %v1993
    %v1995 = vmul.f32 %v1989, 1.442695
    %v1996 = vpow.pop %v1995
    %v1997 = vmul.f32 %v1990, 1.442695
    %v1998 = vpow.pop %v1997
    %v1999 = vmul.f32 %v1991, 1.442695
    %v2000 = vpow.pop %v1999
    %v2001 = vmul.f32 %v1992, 1.442695
    %v2002 = vpow.pop %v2001
    %v2003 = vsel %vm650, %v1994, 0.0
    %2004 = vadd.xlane.f32.xlu0 %v2003
    %v2005 = vpop.xlane.xlu0 %2004
    %v2006 = vsel %vm650, %v1996, 0.0
    %2007 = vadd.xlane.f32.xlu0 %v2006
    %v2008 = vpop.xlane.xlu0 %2007
    %v2009 = vsel %vm650, %v1998, 0.0
    %2010 = vadd.xlane.f32.xlu0 %v2009
    %v2011 = vpop.xlane.xlu0 %2010
    %v2012 = vsel %vm650, %v2000, 0.0
    %2013 = vadd.xlane.f32.xlu0 %v2012
    %v2014 = vpop.xlane.xlu0 %2013
    %v2015 = vsel %vm663, %v2002, 0.0
    %2016 = vadd.xlane.f32.xlu0 %v2015
    %v2017 = vpop.xlane.xlu0 %2016
    %v2018 = vrcp.pop %v2005
    %v2019 = vrcp.pop %v2008
    %v2020 = vrcp.pop %v2011
    %v2021 = vrcp.pop %v2014
    %v2022 = vrcp.pop %v2017
    %v2023 = vmul.f32 %v1994, %v2018
    %v2024 = vmul.f32 %v1996, %v2019
    %v2025 = vmul.f32 %v1998, %v2020
    %v2026 = vmul.f32 %v2000, %v2021
    %v2027 = vmul.f32 %v2002, %v2022
    %v2028 = vpack.c.bf16 %v2024, %v2023
    %v2029 = vpack.c.bf16 %v2026, %v2025
    %v2030 = vpack.c.bf16 %v2027, %v2027
    %2031 = vrot.lane.b32.xlu0 %v572, 32
    %v2032 = vpop.permute.xlu0 %2031
    %2033 = vrot.lane.b32.xlu0 %v573, 32
    %v2034 = vpop.permute.xlu0 %2033
    %2035 = vrot.lane.b32.xlu0 %v574, 32
    %v2036 = vpop.permute.xlu0 %2035
    %v2040 = vsel %vm650, %v2028, 0
    %v2043 = vsel %vm650, %v2029, 0
    %v2046 = vsel %vm650, %v2030, 0
    %v2049 = vsel %vm141, %v2036, 0
    %2051 = vmatprep.subr.bf16.mxu0 0
    %2052 = vmatpush1.bf16.msra.mxu0 %v2032
    %2053 = vmatprep.subr.bf16.mxu0 0
    %2054 = vmatpush1.bf16.msra.mxu0 %v2034
    %2055 = vmatprep.subr.bf16.mxu0 0
    %2056 = vmatpush1.bf16.msra.mxu0 %v2049
    %2057 = vmatprep.subr.bf16.mxu0 0
    %2058 = vmatpush1.bf16.msra.mxu0 0
    %2059 = vmatprep.subr.bf16.mxu0 0
    %2060 = vmatpush1.bf16.msra.mxu0 0
    %2061 = vmatprep.subr.bf16.mxu0 0
    %2062 = vmatpush1.bf16.msra.mxu0 0
    %2063 = vmatprep.subr.bf16.mxu0 0
    %2064 = vmatpush1.bf16.msra.mxu0 0
    %2065 = vmatprep.subr.bf16.mxu0 0
    %2066 = vmatpush1.bf16.msra.mxu0 0
    %2067 = vmatprep.subr.bf16.mxu0 0
    %2068 = vmatpush1.bf16.msra.mxu0 0
    %2069 = vmatprep.subr.bf16.mxu0 0
    %2070 = vmatpush1.bf16.msra.mxu0 0
    %2071 = vmatprep.subr.bf16.mxu0 0
    %2072 = vmatpush1.bf16.msra.mxu0 0
    %2073 = vmatprep.subr.bf16.mxu0 0
    %2074 = vmatpush1.bf16.msra.mxu0 0
    %2075 = vmatprep.subr.bf16.mxu0 0
    %2076 = vmatpush1.bf16.msra.mxu0 0
    %2077 = vmatprep.subr.bf16.mxu0 0
    %2078 = vmatpush1.bf16.msra.mxu0 0
    %2079 = vmatprep.subr.bf16.mxu0 0
    %2080 = vmatpush1.bf16.msra.mxu0 0
    %2081 = vmatprep.subr.bf16.mxu0 0
    %2082 = vmatpush1.bf16.msra.mxu0 0
    %2083 = vmatprep.mubr.bf16.mxu0 0
    %2084 = vmatmul.mubr.bf16.gmra.mrb[0].mxu0 %v2040
    %v2085 = vpop.f32.mrb[0].mxu0
    %v2086 = vadd.f32 0.0, %v2085
    %v2087 = vpop.f32.mrb[0].mxu0
    %v2088 = vpop.f32.mrb[0].mxu0
    %v2089 = vadd.f32 0.0, %v2088
    %v2090 = vpop.f32.mrb[0].mxu0
    %2091 = vmatprep.mubr.bf16.mxu0 0
    %2092 = vmatmul.mubr.bf16.gmra.mrb[0].mxu0 %v2043
    %v2093 = vpop.f32.mrb[0].mxu0
    %v2094 = vadd.f32 0.0, %v2093
    %v2095 = vpop.f32.mrb[0].mxu0
    %v2096 = vpop.f32.mrb[0].mxu0
    %v2097 = vadd.f32 0.0, %v2096
    %v2098 = vpop.f32.mrb[0].mxu0
    %2099 = vmatprep.mubr.bf16.mxu0 0
    %2100 = vmatmul.mubr.bf16.gmra.mrb[0].mxu0 %v2046
    %v2101 = vpop.f32.mrb[0].mxu0
    %v2102 = vadd.f32 0.0, %v2101
    %v2103 = vpop.f32.mrb[0].mxu0
    %v2104 = vpop.f32.mrb[0].mxu0
    %v2105 = vpop.f32.mrb[0].mxu0
    %2106 = vdwg.mxu0
    %2107 = vrot.lane.b32.xlu0 %v566, 16
    %v2108 = vpop.permute.xlu0 %2107
    %2109 = vrot.lane.b32.xlu0 %v567, 16
    %v2110 = vpop.permute.xlu0 %2109
    %2111 = vrot.lane.b32.xlu0 %v568, 16
    %v2112 = vpop.permute.xlu0 %2111
    %2113 = vrot.lane.b32.xlu0 %v569, 16
    %v2114 = vpop.permute.xlu0 %2113
    %2115 = vrot.lane.b32.xlu0 %v570, 16
    %v2116 = vpop.permute.xlu0 %2115
    %2117 = vrot.lane.b32.xlu0 %v571, 16
    %v2118 = vpop.permute.xlu0 %2117
    %v2120 = vsel %vm575, %v2108, 0
    %v2123 = vsel %vm575, %v2110, 0
    %v2126 = vsel %vm575, %v2112, 0
    %v2129 = vsel %vm575, %v2114, 0
    %v2132 = vsel %vm575, %v2116, 0
    %v2135 = vsel %vm575, %v2118, 0
    %2137 = vmatprep.subr.bf16.mxu0 0
    %2138 = vmatpush1.bf16.xpose.msra.mxu0 %v2129
    %2139 = vmatprep.subr.bf16.mxu0 0
    %2140 = vmatpush1.bf16.xpose.msra.mxu0 %v2132
    %2141 = vmatprep.subr.bf16.mxu0 0
    %2142 = vmatpush1.bf16.xpose.msra.mxu0 %v2135
    %2143 = vmatprep.subr.bf16.mxu0 0
    %2144 = vmatpush1.bf16.xpose.msra.mxu0 0
    %2145 = vmatprep.subr.bf16.mxu0 0
    %2146 = vmatpush1.bf16.xpose.msra.mxu0 0
    %2147 = vmatprep.subr.bf16.mxu0 0
    %2148 = vmatpush1.bf16.xpose.msra.mxu0 0
    %2149 = vmatprep.subr.bf16.mxu0 0
    %2150 = vmatpush1.bf16.xpose.msra.mxu0 0
    %2151 = vmatprep.subr.bf16.mxu0 0
    %2152 = vmatpush1.bf16.xpose.msra.mxu0 0
    %2153 = vmatprep.subr.bf16.mxu0 0
    %2154 = vmatpush1.bf16.xpose.msra.mxu0 0
    %2155 = vmatprep.subr.bf16.mxu0 0
    %2156 = vmatpush1.bf16.xpose.msra.mxu0 0
    %2157 = vmatprep.subr.bf16.mxu0 0
    %2158 = vmatpush1.bf16.xpose.msra.mxu0 0
    %2159 = vmatprep.subr.bf16.mxu0 0
    %2160 = vmatpush1.bf16.xpose.msra.mxu0 0
    %2161 = vmatprep.subr.bf16.mxu0 0
    %2162 = vmatpush1.bf16.xpose.msra.mxu0 0
    %2163 = vmatprep.subr.bf16.mxu0 0
    %2164 = vmatpush1.bf16.xpose.msra.mxu0 0
    %2165 = vmatprep.subr.bf16.mxu0 0
    %2166 = vmatpush1.bf16.xpose.msra.mxu0 0
    %2167 = vmatprep.subr.bf16.mxu0 0
    %2168 = vmatpush1.bf16.xpose.msra.mxu0 0
    %2169 = vmatprep.mubr.bf16.mxu0 0
    %2170 = vmatmul.mubr.bf16.gmra.mrb[0].mxu0 %v2120
    %v2171 = vpop.f32.mrb[0].mxu0
    %v2172 = vadd.f32 %v34, %v2171
    %v2173 = vpop.f32.mrb[0].mxu0
    %v2174 = vpop.f32.mrb[0].mxu0
    %v2175 = vadd.f32 %v35, %v2174
    %v2176 = vpop.f32.mrb[0].mxu0
    %2177 = vmatprep.mubr.bf16.mxu0 0
    %2178 = vmatmul.mubr.bf16.gmra.mrb[0].mxu0 %v2123
    %v2179 = vpop.f32.mrb[0].mxu0
    %v2180 = vadd.f32 %v36, %v2179
    %v2181 = vpop.f32.mrb[0].mxu0
    %v2182 = vpop.f32.mrb[0].mxu0
    %v2183 = vadd.f32 %v37, %v2182
    %v2184 = vpop.f32.mrb[0].mxu0
    %2185 = vmatprep.mubr.bf16.mxu0 0
    %2186 = vmatmul.mubr.bf16.gmra.mrb[0].mxu0 %v2126
    %v2187 = vpop.f32.mrb[0].mxu0
    %v2188 = vadd.f32 %v38, %v2187
    %v2189 = vpop.f32.mrb[0].mxu0
    %v2190 = vpop.f32.mrb[0].mxu0
    %v2191 = vpop.f32.mrb[0].mxu0
    %2192 = vdwg.mxu0
    %v2193 = vsel %vm650, %v2172, -inf
    %2194 = vmax.xlane.f32.xlu0 %v2193
    %v2195 = vpop.xlane.xlu0 %2194
    %v2196 = vsel %vm650, %v2175, -inf
    %2197 = vmax.xlane.f32.xlu0 %v2196
    %v2198 = vpop.xlane.xlu0 %2197
    %v2199 = vsel %vm650, %v2180, -inf
    %2200 = vmax.xlane.f32.xlu0 %v2199
    %v2201 = vpop.xlane.xlu0 %2200
    %v2202 = vsel %vm650, %v2183, -inf
    %2203 = vmax.xlane.f32.xlu0 %v2202
    %v2204 = vpop.xlane.xlu0 %2203
    %v2205 = vsel %vm663, %v2188, -inf
    %2206 = vmax.xlane.f32.xlu0 %v2205
    %v2207 = vpop.xlane.xlu0 %2206
    %v2208 = vsub.f32 %v2172, %v2195
    %v2209 = vsub.f32 %v2175, %v2198
    %v2210 = vsub.f32 %v2180, %v2201
    %v2211 = vsub.f32 %v2183, %v2204
    %v2212 = vsub.f32 %v2188, %v2207
    %v2213 = vmul.f32 %v2208, 1.442695
    %v2214 = vpow.pop %v2213
    %v2215 = vmul.f32 %v2209, 1.442695
    %v2216 = vpow.pop %v2215
    %v2217 = vmul.f32 %v2210, 1.442695
    %v2218 = vpow.pop %v2217
    %v2219 = vmul.f32 %v2211, 1.442695
    %v2220 = vpow.pop %v2219
    %v2221 = vmul.f32 %v2212, 1.442695
    %v2222 = vpow.pop %v2221
    %v2223 = vsel %vm650, %v2214, 0.0
    %2224 = vadd.xlane.f32.xlu0 %v2223
    %v2225 = vpop.xlane.xlu0 %2224
    %v2226 = vsel %vm650, %v2216, 0.0
    %2227 = vadd.xlane.f32.xlu0 %v2226
    %v2228 = vpop.xlane.xlu0 %2227
    %v2229 = vsel %vm650, %v2218, 0.0
    %2230 = vadd.xlane.f32.xlu0 %v2229
    %v2231 = vpop.xlane.xlu0 %2230
    %v2232 = vsel %vm650, %v2220, 0.0
    %2233 = vadd.xlane.f32.xlu0 %v2232
    %v2234 = vpop.xlane.xlu0 %2233
    %v2235 = vsel %vm663, %v2222, 0.0
    %2236 = vadd.xlane.f32.xlu0 %v2235
    %v2237 = vpop.xlane.xlu0 %2236
    %v2238 = vrcp.pop %v2225
    %v2239 = vrcp.pop %v2228
    %v2240 = vrcp.pop %v2231
    %v2241 = vrcp.pop %v2234
    %v2242 = vrcp.pop %v2237
    %v2243 = vmul.f32 %v2214, %v2238
    %v2244 = vmul.f32 %v2216, %v2239
    %v2245 = vmul.f32 %v2218, %v2240
    %v2246 = vmul.f32 %v2220, %v2241
    %v2247 = vmul.f32 %v2222, %v2242
    %v2248 = vpack.c.bf16 %v2244, %v2243
    %v2249 = vpack.c.bf16 %v2246, %v2245
    %v2250 = vpack.c.bf16 %v2247, %v2247
    %2251 = vrot.lane.b32.xlu0 %v572, 16
    %v2252 = vpop.permute.xlu0 %2251
    %2253 = vrot.lane.b32.xlu0 %v573, 16
    %v2254 = vpop.permute.xlu0 %2253
    %2255 = vrot.lane.b32.xlu0 %v574, 16
    %v2256 = vpop.permute.xlu0 %2255
    %v2260 = vsel %vm650, %v2248, 0
    %v2263 = vsel %vm650, %v2249, 0
    %v2266 = vsel %vm650, %v2250, 0
    %v2269 = vsel %vm141, %v2256, 0
    %2271 = vmatprep.subr.bf16.mxu0 0
    %2272 = vmatpush1.bf16.msra.mxu0 %v2252
    %2273 = vmatprep.subr.bf16.mxu0 0
    %2274 = vmatpush1.bf16.msra.mxu0 %v2254
    %2275 = vmatprep.subr.bf16.mxu0 0
    %2276 = vmatpush1.bf16.msra.mxu0 %v2269
    %2277 = vmatprep.subr.bf16.mxu0 0
    %2278 = vmatpush1.bf16.msra.mxu0 0
    %2279 = vmatprep.subr.bf16.mxu0 0
    %2280 = vmatpush1.bf16.msra.mxu0 0
    %2281 = vmatprep.subr.bf16.mxu0 0
    %2282 = vmatpush1.bf16.msra.mxu0 0
    %2283 = vmatprep.subr.bf16.mxu0 0
    %2284 = vmatpush1.bf16.msra.mxu0 0
    %2285 = vmatprep.subr.bf16.mxu0 0
    %2286 = vmatpush1.bf16.msra.mxu0 0
    %2287 = vmatprep.subr.bf16.mxu0 0
    %2288 = vmatpush1.bf16.msra.mxu0 0
    %2289 = vmatprep.subr.bf16.mxu0 0
    %2290 = vmatpush1.bf16.msra.mxu0 0
    %2291 = vmatprep.subr.bf16.mxu0 0
    %2292 = vmatpush1.bf16.msra.mxu0 0
    %2293 = vmatprep.subr.bf16.mxu0 0
    %2294 = vmatpush1.bf16.msra.mxu0 0
    %2295 = vmatprep.subr.bf16.mxu0 0
    %2296 = vmatpush1.bf16.msra.mxu0 0
    %2297 = vmatprep.subr.bf16.mxu0 0
    %2298 = vmatpush1.bf16.msra.mxu0 0
    %2299 = vmatprep.subr.bf16.mxu0 0
    %2300 = vmatpush1.bf16.msra.mxu0 0
    %2301 = vmatprep.subr.bf16.mxu0 0
    %2302 = vmatpush1.bf16.msra.mxu0 0
    %2303 = vmatprep.mubr.bf16.mxu0 0
    %2304 = vmatmul.mubr.bf16.gmra.mrb[0].mxu0 %v2260
    %v2305 = vpop.f32.mrb[0].mxu0
    %v2306 = vadd.f32 0.0, %v2305
    %v2307 = vpop.f32.mrb[0].mxu0
    %v2308 = vpop.f32.mrb[0].mxu0
    %v2309 = vadd.f32 0.0, %v2308
    %v2310 = vpop.f32.mrb[0].mxu0
    %2311 = vmatprep.mubr.bf16.mxu0 0
    %2312 = vmatmul.mubr.bf16.gmra.mrb[0].mxu0 %v2263
    %v2313 = vpop.f32.mrb[0].mxu0
    %v2314 = vadd.f32 0.0, %v2313
    %v2315 = vpop.f32.mrb[0].mxu0
    %v2316 = vpop.f32.mrb[0].mxu0
    %v2317 = vadd.f32 0.0, %v2316
    %v2318 = vpop.f32.mrb[0].mxu0
    %2319 = vmatprep.mubr.bf16.mxu0 0
    %2320 = vmatmul.mubr.bf16.gmra.mrb[0].mxu0 %v2266
    %v2321 = vpop.f32.mrb[0].mxu0
    %v2322 = vadd.f32 0.0, %v2321
    %v2323 = vpop.f32.mrb[0].mxu0
    %v2324 = vpop.f32.mrb[0].mxu0
    %v2325 = vpop.f32.mrb[0].mxu0
    %2326 = vdwg.mxu0
    %2332 = vrot.lane.b32.xlu0 %v986, 16
    %v2333 = vpop.permute.xlu0 %2332
    %2334 = vrot.lane.b32.xlu0 %v989, 16
    %v2335 = vpop.permute.xlu0 %2334
    %2336 = vrot.lane.b32.xlu0 %v994, 16
    %v2337 = vpop.permute.xlu0 %2336
    %2338 = vrot.lane.b32.xlu0 %v997, 16
    %v2339 = vpop.permute.xlu0 %2338
    %2340 = vrot.lane.b32.xlu0 %v1002, 16
    %v2341 = vpop.permute.xlu0 %2340
    %2352 = vrot.lane.b32.xlu0 %v1206, 32
    %v2353 = vpop.permute.xlu0 %2352
    %2354 = vrot.lane.b32.xlu0 %v1209, 32
    %v2355 = vpop.permute.xlu0 %2354
    %2356 = vrot.lane.b32.xlu0 %v1214, 32
    %v2357 = vpop.permute.xlu0 %2356
    %2358 = vrot.lane.b32.xlu0 %v1217, 32
    %v2359 = vpop.permute.xlu0 %2358
    %2360 = vrot.lane.b32.xlu0 %v1222, 32
    %v2361 = vpop.permute.xlu0 %2360
    %2372 = vrot.lane.b32.xlu0 %v1426, 48
    %v2373 = vpop.permute.xlu0 %2372
    %2374 = vrot.lane.b32.xlu0 %v1429, 48
    %v2375 = vpop.permute.xlu0 %2374
    %2376 = vrot.lane.b32.xlu0 %v1434, 48
    %v2377 = vpop.permute.xlu0 %2376
    %2378 = vrot.lane.b32.xlu0 %v1437, 48
    %v2379 = vpop.permute.xlu0 %2378
    %2380 = vrot.lane.b32.xlu0 %v1442, 48
    %v2381 = vpop.permute.xlu0 %2380
    %2392 = vrot.lane.b32.xlu0 %v1646, 64
    %v2393 = vpop.permute.xlu0 %2392
    %2394 = vrot.lane.b32.xlu0 %v1649, 64
    %v2395 = vpop.permute.xlu0 %2394
    %2396 = vrot.lane.b32.xlu0 %v1654, 64
    %v2397 = vpop.permute.xlu0 %2396
    %2398 = vrot.lane.b32.xlu0 %v1657, 64
    %v2399 = vpop.permute.xlu0 %2398
    %2400 = vrot.lane.b32.xlu0 %v1662, 64
    %v2401 = vpop.permute.xlu0 %2400
    %2412 = vrot.lane.b32.xlu0 %v1866, 80
    %v2413 = vpop.permute.xlu0 %2412
    %2414 = vrot.lane.b32.xlu0 %v1869, 80
    %v2415 = vpop.permute.xlu0 %2414
    %2416 = vrot.lane.b32.xlu0 %v1874, 80
    %v2417 = vpop.permute.xlu0 %2416
    %2418 = vrot.lane.b32.xlu0 %v1877, 80
    %v2419 = vpop.permute.xlu0 %2418
    %2420 = vrot.lane.b32.xlu0 %v1882, 80
    %v2421 = vpop.permute.xlu0 %2420
    %2432 = vrot.lane.b32.xlu0 %v2086, 96
    %v2433 = vpop.permute.xlu0 %2432
    %2434 = vrot.lane.b32.xlu0 %v2089, 96
    %v2435 = vpop.permute.xlu0 %2434
    %2436 = vrot.lane.b32.xlu0 %v2094, 96
    %v2437 = vpop.permute.xlu0 %2436
    %2438 = vrot.lane.b32.xlu0 %v2097, 96
    %v2439 = vpop.permute.xlu0 %2438
    %2440 = vrot.lane.b32.xlu0 %v2102, 96
    %v2441 = vpop.permute.xlu0 %2440
    %2452 = vrot.lane.b32.xlu0 %v2306, 112
    %v2453 = vpop.permute.xlu0 %2452
    %2454 = vrot.lane.b32.xlu0 %v2309, 112
    %v2455 = vpop.permute.xlu0 %2454
    %2456 = vrot.lane.b32.xlu0 %v2314, 112
    %v2457 = vpop.permute.xlu0 %2456
    %2458 = vrot.lane.b32.xlu0 %v2317, 112
    %v2459 = vpop.permute.xlu0 %2458
    %2460 = vrot.lane.b32.xlu0 %v2322, 112
    %v2461 = vpop.permute.xlu0 %2460
    %v2467 = vsel %vm575, %v757, %v2333
    %v2468 = vsel %vm575, %v760, %v2335
    %v2469 = vsel %vm575, %v765, %v2337
    %v2470 = vsel %vm575, %v768, %v2339
    %v2471 = vsel %vm575, %v773, %v2341
    %vm2472 = vcmask 261120
    %v2473 = vsel %vm2472, %v2467, %v2353
    %v2474 = vsel %vm2472, %v2468, %v2355
    %v2475 = vsel %vm2472, %v2469, %v2357
    %v2476 = vsel %vm2472, %v2470, %v2359
    %v2477 = vsel %vm2472, %v2471, %v2361
    %v2478 = vsel %vm79, %v2473, %v2373
    %v2479 = vsel %vm79, %v2474, %v2375
    %v2480 = vsel %vm79, %v2475, %v2377
    %v2481 = vsel %vm79, %v2476, %v2379
    %v2482 = vsel %vm79, %v2477, %v2381
    %vm2483 = vcmask 523264
    %v2484 = vsel %vm2483, %v2478, %v2393
    %v2485 = vsel %vm2483, %v2479, %v2395
    %v2486 = vsel %vm2483, %v2480, %v2397
    %v2487 = vsel %vm2483, %v2481, %v2399
    %v2488 = vsel %vm2483, %v2482, %v2401
    %vm2489 = vcmask 654336
    %v2490 = vsel %vm2489, %v2484, %v2413
    %v2491 = vsel %vm2489, %v2485, %v2415
    %v2492 = vsel %vm2489, %v2486, %v2417
    %v2493 = vsel %vm2489, %v2487, %v2419
    %v2494 = vsel %vm2489, %v2488, %v2421
    %vm2495 = vcmask 785408
    %v2496 = vsel %vm2495, %v2490, %v2433
    %v2497 = vsel %vm2495, %v2491, %v2435
    %v2498 = vsel %vm2495, %v2492, %v2437
    %v2499 = vsel %vm2495, %v2493, %v2439
    %v2500 = vsel %vm2495, %v2494, %v2441
    %vm2501 = vcmask 916480
    %v2502 = vsel %vm2501, %v2496, %v2453
    %v2503 = vsel %vm2501, %v2497, %v2455
    %v2504 = vsel %vm2501, %v2498, %v2457
    %v2505 = vsel %vm2501, %v2499, %v2459
    %v2506 = vsel %vm2501, %v2500, %v2461
    %v2507 = vpack.c.bf16 %v2503, %v2502
    %v2508 = vpack.c.bf16 %v2505, %v2504
    %v2509 = vpack.c.bf16 %v2506, %v2506
    %v2510 = vld [vmem:[%s4 + $0xc] sm:$0xf]
    %v2511 = vld [vmem:[%s4 + $0x2c] sm:$0xf]
    %v2512 = vld [vmem:[%s4 + $0x4c] sm:$0xf]
    %v2513 = vld [vmem:[%s4 + $0x6c] sm:$0xf]
    %v2514 = vld [vmem:[%s4 + $0x8c] sm:$0xf]
    %v2515 = vld [vmem:[%s4 + $0xac] sm:$0xf]
    %v2516 = vld [vmem:[%s4 + $0xcc] sm:$0xf]
    %v2517 = vld [vmem:[%s4 + $0xec] sm:$0xf]
    %v2518 = vld [vmem:[%s4 + $0x10c] sm:$0xf]
    %v2519 = vld [vmem:[%s4 + $0x12c] sm:$0xf]
    %v2520 = vld [vmem:[%s4 + $0x14c] sm:$0xf]
    %v2521 = vld [vmem:[%s4 + $0x16c] sm:$0xf]
    %v2522 = vld [vmem:[%s4 + $0x18c] sm:$0xf]
    %v2523 = vld [vmem:[%s4 + $0x1ac] sm:$0xf]
    %v2524 = vld [vmem:[%s4 + $0x1cc] sm:$0xf]
    %v2525 = vld [vmem:[%s4 + $0x1ec] sm:$0xf]
    %v2542 = vunpack.c.l.b16 %v2510
    %v2543 = vunpack.c.l.b16 %v2511
    %v2544 = vunpack.c.l.b16 %v2512
    %v2545 = vunpack.c.l.b16 %v2513
    %v2546 = vunpack.c.l.b16 %v2514
    %v2547 = vunpack.c.l.b16 %v2515
    %v2548 = vunpack.c.l.b16 %v2516
    %v2549 = vunpack.c.l.b16 %v2517
    %v2550 = vunpack.c.l.b16 %v2518
    %v2551 = vunpack.c.l.b16 %v2519
    %v2552 = vunpack.c.l.b16 %v2520
    %v2553 = vunpack.c.l.b16 %v2521
    %v2554 = vunpack.c.l.b16 %v2522
    %v2555 = vunpack.c.l.b16 %v2523
    %v2556 = vunpack.c.l.b16 %v2524
    %v2557 = vunpack.c.l.b16 %v2525
    %v2558 = vpack.c.b16 %v2543, %v2542
    %v2559 = vpack.c.b16 %v2545, %v2544
    %v2560 = vpack.c.b16 %v2547, %v2546
    %v2561 = vpack.c.b16 %v2549, %v2548
    %v2562 = vpack.c.b16 %v2551, %v2550
    %v2563 = vpack.c.b16 %v2553, %v2552
    %v2564 = vpack.c.b16 %v2555, %v2554
    %v2565 = vpack.c.b16 %v2557, %v2556
    %2574 = vmatprep.subr.bf16.mxu0 0
    %2575 = vmatpush1.bf16.msra.mxu0 %v2558
    %2576 = vmatprep.subr.bf16.mxu0 0
    %2577 = vmatpush1.bf16.msra.mxu0 %v2559
    %2578 = vmatprep.subr.bf16.mxu0 0
    %2579 = vmatpush1.bf16.msra.mxu0 %v2560
    %2580 = vmatprep.subr.bf16.mxu0 0
    %2581 = vmatpush1.bf16.msra.mxu0 %v2561
    %2582 = vmatprep.subr.bf16.mxu0 0
    %2583 = vmatpush1.bf16.msra.mxu0 %v2562
    %2584 = vmatprep.subr.bf16.mxu0 0
    %2585 = vmatpush1.bf16.msra.mxu0 %v2563
    %2586 = vmatprep.subr.bf16.mxu0 0
    %2587 = vmatpush1.bf16.msra.mxu0 %v2564
    %2588 = vmatprep.subr.bf16.mxu0 0
    %2589 = vmatpush1.bf16.msra.mxu0 %v2565
    %2590 = vmatprep.subr.bf16.mxu0 0
    %2591 = vmatpush1.bf16.msra.mxu0 0
    %2592 = vmatprep.subr.bf16.mxu0 0
    %2593 = vmatpush1.bf16.msra.mxu0 0
    %2594 = vmatprep.subr.bf16.mxu0 0
    %2595 = vmatpush1.bf16.msra.mxu0 0
    %2596 = vmatprep.subr.bf16.mxu0 0
    %2597 = vmatpush1.bf16.msra.mxu0 0
    %2598 = vmatprep.subr.bf16.mxu0 0
    %2599 = vmatpush1.bf16.msra.mxu0 0
    %2600 = vmatprep.subr.bf16.mxu0 0
    %2601 = vmatpush1.bf16.msra.mxu0 0
    %2602 = vmatprep.subr.bf16.mxu0 0
    %2603 = vmatpush1.bf16.msra.mxu0 0
    %2604 = vmatprep.subr.bf16.mxu0 0
    %2605 = vmatpush1.bf16.msra.mxu0 0
    %2606 = vmatprep.mubr.bf16.mxu0 0
    %2607 = vmatmul.mubr.bf16.gmra.mrb[0].mxu0 %v2507
    %v2608 = vpop.f32.mrb[0].mxu0
    %v2609 = vadd.f32 0.0, %v2608
    %v2610 = vpop.f32.mrb[0].mxu0
    %v2611 = vpop.f32.mrb[0].mxu0
    %v2612 = vadd.f32 0.0, %v2611
    %v2613 = vpop.f32.mrb[0].mxu0
    %2614 = vmatprep.mubr.bf16.mxu0 0
    %2615 = vmatmul.mubr.bf16.gmra.mrb[0].mxu0 %v2508
    %v2616 = vpop.f32.mrb[0].mxu0
    %v2617 = vadd.f32 0.0, %v2616
    %v2618 = vpop.f32.mrb[0].mxu0
    %v2619 = vpop.f32.mrb[0].mxu0
    %v2620 = vadd.f32 0.0, %v2619
    %v2621 = vpop.f32.mrb[0].mxu0
    %2622 = vmatprep.mubr.bf16.mxu0 0
    %2623 = vmatmul.mubr.bf16.gmra.mrb[0].mxu0 %v2509
    %v2624 = vpop.f32.mrb[0].mxu0
    %v2625 = vadd.f32 0.0, %v2624
    %v2626 = vpop.f32.mrb[0].mxu0
    %v2627 = vpop.f32.mrb[0].mxu0
    %v2628 = vpop.f32.mrb[0].mxu0
    %2629 = vdwg.mxu0
    %v2630 = vadd.f32 %v171, %v2609
    %v2631 = vadd.f32 %v172, %v2612
    %v2632 = vadd.f32 %v173, %v2617
    %v2633 = vadd.f32 %v174, %v2620
    %v2634 = vadd.f32 %v175, %v2625
    %v2636 = vlaneseq
    %v2637 = vshrl.u32 %v2636, 7
    %v2638 = vsub.s32 0, %v2637
    %v2639 = vrot.slane %v179, %v2638
    %v2641 = vadd.f32 %v2630, %v2639
    %v2642 = vadd.f32 %v2631, %v2639
    %v2643 = vadd.f32 %v2632, %v2639
    %v2644 = vadd.f32 %v2633, %v2639
    %v2645 = vadd.f32 %v2634, %v2639
    %v2646 = vld [vmem:[%s6 + $0x6] sm:$0x1]
    %v2647 = vld [vmem:[%s6 + $0x7] sm:$0x1]
    %v2648 = vld [vmem:[%s6 + $0x8] sm:$0xf]
    %v2649 = vld [vmem:[%s6 + $0xc] sm:$0x1]
    %2650 = vadd.xlane.f32.xlu0 %v2641
    %v2651 = vpop.xlane.xlu0 %2650
    %2652 = vadd.xlane.f32.xlu0 %v2642
    %v2653 = vpop.xlane.xlu0 %2652
    %2654 = vadd.xlane.f32.xlu0 %v2643
    %v2655 = vpop.xlane.xlu0 %2654
    %2656 = vadd.xlane.f32.xlu0 %v2644
    %v2657 = vpop.xlane.xlu0 %2656
    %v2658 = vsel %vm161, %v2645, 0.0
    %2659 = vadd.xlane.f32.xlu0 %v2658
    %v2660 = vpop.xlane.xlu0 %2659
    %v2661 = vmul.f32 %v2651, %v191
    %v2662 = vmul.f32 %v2653, %v191
    %v2663 = vmul.f32 %v2655, %v191
    %v2664 = vmul.f32 %v2657, %v191
    %v2665 = vmul.f32 %v2660, %v191
    %v2666 = vmul.f32 %v2641, %v2641
    %v2667 = vmul.f32 %v2642, %v2642
    %v2668 = vmul.f32 %v2643, %v2643
    %v2669 = vmul.f32 %v2644, %v2644
    %v2670 = vmul.f32 %v2645, %v2645
    %2671 = vadd.xlane.f32.xlu0 %v2666
    %v2672 = vpop.xlane.xlu0 %2671
    %2673 = vadd.xlane.f32.xlu0 %v2667
    %v2674 = vpop.xlane.xlu0 %2673
    %2675 = vadd.xlane.f32.xlu0 %v2668
    %v2676 = vpop.xlane.xlu0 %2675
    %2677 = vadd.xlane.f32.xlu0 %v2669
    %v2678 = vpop.xlane.xlu0 %2677
    %v2679 = vsel %vm161, %v2670, 0.0
    %2680 = vadd.xlane.f32.xlu0 %v2679
    %v2681 = vpop.xlane.xlu0 %2680
    %v2682 = vmul.f32 %v2672, %v191
    %v2683 = vmul.f32 %v2674, %v191
    %v2684 = vmul.f32 %v2676, %v191
    %v2685 = vmul.f32 %v2678, %v191
    %v2686 = vmul.f32 %v2681, %v191
    %v2687 = vmul.f32 %v2661, %v2661
    %v2688 = vmul.f32 %v2662, %v2662
    %v2689 = vmul.f32 %v2663, %v2663
    %v2690 = vmul.f32 %v2664, %v2664
    %v2691 = vmul.f32 %v2665, %v2665
    %v2692 = vsub.f32 %v2682, %v2687
    %v2693 = vsub.f32 %v2683, %v2688
    %v2694 = vsub.f32 %v2684, %v2689
    %v2695 = vsub.f32 %v2685, %v2690
    %v2696 = vsub.f32 %v2686, %v2691
    %v2697 = vsub.f32 %v2641, %v2661
    %v2698 = vsub.f32 %v2642, %v2662
    %v2699 = vsub.f32 %v2643, %v2663
    %v2700 = vsub.f32 %v2644, %v2664
    %v2701 = vsub.f32 %v2645, %v2665
    %v2702 = vadd.f32 %v2692, 1e-05
    %v2703 = vadd.f32 %v2693, 1e-05
    %v2704 = vadd.f32 %v2694, 1e-05
    %v2705 = vadd.f32 %v2695, 1e-05
    %v2706 = vadd.f32 %v2696, 1e-05
    %v2707 = vrsqrt.pop %v2702
    %v2708 = vrsqrt.pop %v2703
    %v2709 = vrsqrt.pop %v2704
    %v2710 = vrsqrt.pop %v2705
    %v2711 = vrsqrt.pop %v2706
    %v2712 = vmul.f32 %v2697, %v2707
    %v2713 = vmul.f32 %v2698, %v2708
    %v2714 = vmul.f32 %v2699, %v2709
    %v2715 = vmul.f32 %v2700, %v2710
    %v2716 = vmul.f32 %v2701, %v2711
    %v2718 = vlaneseq
    %v2719 = vshrl.u32 %v2718, 7
    %v2720 = vsub.s32 0, %v2719
    %v2721 = vrot.slane %v2646, %v2720
    %v2723 = vmul.f32 %v2712, %v2721
    %v2724 = vmul.f32 %v2713, %v2721
    %v2725 = vmul.f32 %v2714, %v2721
    %v2726 = vmul.f32 %v2715, %v2721
    %v2727 = vmul.f32 %v2716, %v2721
    %v2729 = vlaneseq
    %v2730 = vshrl.u32 %v2729, 7
    %v2731 = vsub.s32 0, %v2730
    %v2732 = vrot.slane %v2647, %v2731
    %v2734 = vadd.f32 %v2723, %v2732
    %v2735 = vadd.f32 %v2724, %v2732
    %v2736 = vadd.f32 %v2725, %v2732
    %v2737 = vadd.f32 %v2726, %v2732
    %v2738 = vadd.f32 %v2727, %v2732
    %v2739 = vpack.c.bf16 %v2735, %v2734
    %v2740 = vpack.c.bf16 %v2737, %v2736
    %v2741 = vpack.c.bf16 %v2738, %v2738
    %v2742 = vld [vmem:[%s4 + $0x10] sm:$0xff]
    %v2743 = vld [vmem:[%s4 + $0x18] sm:$0xff]
    %v2744 = vld [vmem:[%s4 + $0x30] sm:$0xff]
    %v2745 = vld [vmem:[%s4 + $0x38] sm:$0xff]
    %v2746 = vld [vmem:[%s4 + $0x50] sm:$0xff]
    %v2747 = vld [vmem:[%s4 + $0x58] sm:$0xff]
    %v2748 = vld [vmem:[%s4 + $0x70] sm:$0xff]
    %v2749 = vld [vmem:[%s4 + $0x78] sm:$0xff]
    %v2750 = vld [vmem:[%s4 + $0x90] sm:$0xff]
    %v2751 = vld [vmem:[%s4 + $0x98] sm:$0xff]
    %v2752 = vld [vmem:[%s4 + $0xb0] sm:$0xff]
    %v2753 = vld [vmem:[%s4 + $0xb8] sm:$0xff]
    %v2754 = vld [vmem:[%s4 + $0xd0] sm:$0xff]
    %v2755 = vld [vmem:[%s4 + $0xd8] sm:$0xff]
    %v2756 = vld [vmem:[%s4 + $0xf0] sm:$0xff]
    %v2757 = vld [vmem:[%s4 + $0xf8] sm:$0xff]
    %v2758 = vld [vmem:[%s4 + $0x110] sm:$0xff]
    %v2759 = vld [vmem:[%s4 + $0x118] sm:$0xff]
    %v2760 = vld [vmem:[%s4 + $0x130] sm:$0xff]
    %v2761 = vld [vmem:[%s4 + $0x138] sm:$0xff]
    %v2762 = vld [vmem:[%s4 + $0x150] sm:$0xff]
    %v2763 = vld [vmem:[%s4 + $0x158] sm:$0xff]
    %v2764 = vld [vmem:[%s4 + $0x170] sm:$0xff]
    %v2765 = vld [vmem:[%s4 + $0x178] sm:$0xff]
    %v2766 = vld [vmem:[%s4 + $0x190] sm:$0xff]
    %v2767 = vld [vmem:[%s4 + $0x198] sm:$0xff]
    %v2768 = vld [vmem:[%s4 + $0x1b0] sm:$0xff]
    %v2769 = vld [vmem:[%s4 + $0x1b8] sm:$0xff]
    %v2770 = vld [vmem:[%s4 + $0x1d0] sm:$0xff]
    %v2771 = vld [vmem:[%s4 + $0x1d8] sm:$0xff]
    %v2772 = vld [vmem:[%s4 + $0x1f0] sm:$0xff]
    %v2773 = vld [vmem:[%s4 + $0x1f8] sm:$0xff]
    %v2775 = vlaneseq
    %v2776 = vshrl.u32 %v2775, 7
    %v2777 = vsub.s32 0, %v2776
    %v2778 = vrot.slane %v2648, %v2777
    %v2779 = vlaneseq
    %v2780 = vshrl.u32 %v2779, 7
    %v2781 = vsub.s32 1, %v2780
    %v2782 = vrot.slane %v2648, %v2781
    %v2783 = vlaneseq
    %v2784 = vshrl.u32 %v2783, 7
    %v2785 = vsub.s32 2, %v2784
    %v2786 = vrot.slane %v2648, %v2785
    %v2787 = vlaneseq
    %v2788 = vshrl.u32 %v2787, 7
    %v2789 = vsub.s32 3, %v2788
    %v2790 = vrot.slane %v2648, %v2789
    %v2827 = vunpack.c.l.b16 %v2742
    %v2828 = vunpack.c.h.b16 %v2742
    %v2829 = vunpack.c.l.b16 %v2743
    %v2830 = vunpack.c.h.b16 %v2743
    %v2831 = vunpack.c.l.b16 %v2744
    %v2832 = vunpack.c.h.b16 %v2744
    %v2833 = vunpack.c.l.b16 %v2745
    %v2834 = vunpack.c.h.b16 %v2745
    %v2835 = vunpack.c.l.b16 %v2746
    %v2836 = vunpack.c.h.b16 %v2746
    %v2837 = vunpack.c.l.b16 %v2747
    %v2838 = vunpack.c.h.b16 %v2747
    %v2839 = vunpack.c.l.b16 %v2748
    %v2840 = vunpack.c.h.b16 %v2748
    %v2841 = vunpack.c.l.b16 %v2749
    %v2842 = vunpack.c.h.b16 %v2749
    %v2843 = vunpack.c.l.b16 %v2750
    %v2844 = vunpack.c.h.b16 %v2750
    %v2845 = vunpack.c.l.b16 %v2751
    %v2846 = vunpack.c.h.b16 %v2751
    %v2847 = vunpack.c.l.b16 %v2752
    %v2848 = vunpack.c.h.b16 %v2752
    %v2849 = vunpack.c.l.b16 %v2753
    %v2850 = vunpack.c.h.b16 %v2753
    %v2851 = vunpack.c.l.b16 %v2754
    %v2852 = vunpack.c.h.b16 %v2754
    %v2853 = vunpack.c.l.b16 %v2755
    %v2854 = vunpack.c.h.b16 %v2755
    %v2855 = vunpack.c.l.b16 %v2756
    %v2856 = vunpack.c.h.b16 %v2756
    %v2857 = vunpack.c.l.b16 %v2757
    %v2858 = vunpack.c.h.b16 %v2757
    %v2859 = vunpack.c.l.b16 %v2758
    %v2860 = vunpack.c.h.b16 %v2758
    %v2861 = vunpack.c.l.b16 %v2759
    %v2862 = vunpack.c.h.b16 %v2759
    %v2863 = vunpack.c.l.b16 %v2760
    %v2864 = vunpack.c.h.b16 %v2760
    %v2865 = vunpack.c.l.b16 %v2761
    %v2866 = vunpack.c.h.b16 %v2761
    %v2867 = vunpack.c.l.b16 %v2762
    %v2868 = vunpack.c.h.b16 %v2762
    %v2869 = vunpack.c.l.b16 %v2763
    %v2870 = vunpack.c.h.b16 %v2763
    %v2871 = vunpack.c.l.b16 %v2764
    %v2872 = vunpack.c.h.b16 %v2764
    %v2873 = vunpack.c.l.b16 %v2765
    %v2874 = vunpack.c.h.b16 %v2765
    %v2875 = vunpack.c.l.b16 %v2766
    %v2876 = vunpack.c.h.b16 %v2766
    %v2877 = vunpack.c.l.b16 %v2767
    %v2878 = vunpack.c.h.b16 %v2767
    %v2879 = vunpack.c.l.b16 %v2768
    %v2880 = vunpack.c.h.b16 %v2768
    %v2881 = vunpack.c.l.b16 %v2769
    %v2882 = vunpack.c.h.b16 %v2769
    %v2883 = vunpack.c.l.b16 %v2770
    %v2884 = vunpack.c.h.b16 %v2770
    %v2885 = vunpack.c.l.b16 %v2771
    %v2886 = vunpack.c.h.b16 %v2771
    %v2887 = vunpack.c.l.b16 %v2772
    %v2888 = vunpack.c.h.b16 %v2772
    %v2889 = vunpack.c.l.b16 %v2773
    %v2890 = vunpack.c.h.b16 %v2773
    %v2891 = vpack.c.b16 %v2831, %v2827
    %v2892 = vpack.c.b16 %v2832, %v2828
    %v2893 = vpack.c.b16 %v2833, %v2829
    %v2894 = vpack.c.b16 %v2834, %v2830
    %v2895 = vpack.c.b16 %v2839, %v2835
    %v2896 = vpack.c.b16 %v2840, %v2836
    %v2897 = vpack.c.b16 %v2841, %v2837
    %v2898 = vpack.c.b16 %v2842, %v2838
    %v2899 = vpack.c.b16 %v2847, %v2843
    %v2900 = vpack.c.b16 %v2848, %v2844
    %v2901 = vpack.c.b16 %v2849, %v2845
    %v2902 = vpack.c.b16 %v2850, %v2846
    %v2903 = vpack.c.b16 %v2855, %v2851
    %v2904 = vpack.c.b16 %v2856, %v2852
    %v2905 = vpack.c.b16 %v2857, %v2853
    %v2906 = vpack.c.b16 %v2858, %v2854
    %v2907 = vpack.c.b16 %v2863, %v2859
    %v2908 = vpack.c.b16 %v2864, %v2860
    %v2909 = vpack.c.b16 %v2865, %v2861
    %v2910 = vpack.c.b16 %v2866, %v2862
    %v2911 = vpack.c.b16 %v2871, %v2867
    %v2912 = vpack.c.b16 %v2872, %v2868
    %v2913 = vpack.c.b16 %v2873, %v2869
    %v2914 = vpack.c.b16 %v2874, %v2870
    %v2915 = vpack.c.b16 %v2879, %v2875
    %v2916 = vpack.c.b16 %v2880, %v2876
    %v2917 = vpack.c.b16 %v2881, %v2877
    %v2918 = vpack.c.b16 %v2882, %v2878
    %v2919 = vpack.c.b16 %v2887, %v2883
    %v2920 = vpack.c.b16 %v2888, %v2884
    %v2921 = vpack.c.b16 %v2889, %v2885
    %v2922 = vpack.c.b16 %v2890, %v2886
    %2955 = vmatprep.subr.bf16.mxu0 %v2892
    %2956 = vmatpush1.bf16.msra.mxu0 %v2891
    %2957 = vmatprep.subr.bf16.mxu0 %v2896
    %2958 = vmatpush1.bf16.msra.mxu0 %v2895
    %2959 = vmatprep.subr.bf16.mxu0 %v2900
    %2960 = vmatpush1.bf16.msra.mxu0 %v2899
    %2961 = vmatprep.subr.bf16.mxu0 %v2904
    %2962 = vmatpush1.bf16.msra.mxu0 %v2903
    %2963 = vmatprep.subr.bf16.mxu0 %v2908
    %2964 = vmatpush1.bf16.msra.mxu0 %v2907
    %2965 = vmatprep.subr.bf16.mxu0 %v2912
    %2966 = vmatpush1.bf16.msra.mxu0 %v2911
    %2967 = vmatprep.subr.bf16.mxu0 %v2916
    %2968 = vmatpush1.bf16.msra.mxu0 %v2915
    %2969 = vmatprep.subr.bf16.mxu0 %v2920
    %2970 = vmatpush1.bf16.msra.mxu0 %v2919
    %2971 = vmatprep.subr.bf16.mxu0 0
    %2972 = vmatpush1.bf16.msra.mxu0 0
    %2973 = vmatprep.subr.bf16.mxu0 0
    %2974 = vmatpush1.bf16.msra.mxu0 0
    %2975 = vmatprep.subr.bf16.mxu0 0
    %2976 = vmatpush1.bf16.msra.mxu0 0
    %2977 = vmatprep.subr.bf16.mxu0 0
    %2978 = vmatpush1.bf16.msra.mxu0 0
    %2979 = vmatprep.subr.bf16.mxu0 0
    %2980 = vmatpush1.bf16.msra.mxu0 0
    %2981 = vmatprep.subr.bf16.mxu0 0
    %2982 = vmatpush1.bf16.msra.mxu0 0
    %2983 = vmatprep.subr.bf16.mxu0 0
    %2984 = vmatpush1.bf16.msra.mxu0 0
    %2985 = vmatprep.subr.bf16.mxu0 0
    %2986 = vmatpush1.bf16.msra.mxu0 0
    %2987 = vmatprep.mubr.bf16.mxu0 0
    %2988 = vmatmul.mubr.bf16.gmra.mrb[0].mxu0 %v2739
    %v2989 = vpop.f32.mrb[0].mxu0
    %v2990 = vadd.f32 %v2778, %v2989
    %v2991 = vpop.f32.mrb[0].mxu0
    %v2992 = vadd.f32 %v2782, %v2991
    %v2993 = vpop.f32.mrb[0].mxu0
    %v2994 = vadd.f32 %v2778, %v2993
    %v2995 = vpop.f32.mrb[0].mxu0
    %v2996 = vadd.f32 %v2782, %v2995
    %2997 = vmatprep.mubr.bf16.mxu0 0
    %2998 = vmatmul.mubr.bf16.gmra.mrb[0].mxu0 %v2740
    %v2999 = vpop.f32.mrb[0].mxu0
    %v3000 = vadd.f32 %v2778, %v2999
    %v3001 = vpop.f32.mrb[0].mxu0
    %v3002 = vadd.f32 %v2782, %v3001
    %v3003 = vpop.f32.mrb[0].mxu0
    %v3004 = vadd.f32 %v2778, %v3003
    %v3005 = vpop.f32.mrb[0].mxu0
    %v3006 = vadd.f32 %v2782, %v3005
    %3007 = vmatprep.mubr.bf16.mxu0 0
    %3008 = vmatmul.mubr.bf16.gmra.mrb[0].mxu0 %v2741
    %v3009 = vpop.f32.mrb[0].mxu0
    %v3010 = vadd.f32 %v2778, %v3009
    %v3011 = vpop.f32.mrb[0].mxu0
    %v3012 = vadd.f32 %v2782, %v3011
    %v3013 = vpop.f32.mrb[0].mxu0
    %v3014 = vpop.f32.mrb[0].mxu0
    %3015 = vdwg.mxu0
    %3016 = vmatprep.subr.bf16.mxu0 %v2894
    %3017 = vmatpush1.bf16.msra.mxu0 %v2893
    %3018 = vmatprep.subr.bf16.mxu0 %v2898
    %3019 = vmatpush1.bf16.msra.mxu0 %v2897
    %3020 = vmatprep.subr.bf16.mxu0 %v2902
    %3021 = vmatpush1.bf16.msra.mxu0 %v2901
    %3022 = vmatprep.subr.bf16.mxu0 %v2906
    %3023 = vmatpush1.bf16.msra.mxu0 %v2905
    %3024 = vmatprep.subr.bf16.mxu0 %v2910
    %3025 = vmatpush1.bf16.msra.mxu0 %v2909
    %3026 = vmatprep.subr.bf16.mxu0 %v2914
    %3027 = vmatpush1.bf16.msra.mxu0 %v2913
    %3028 = vmatprep.subr.bf16.mxu0 %v2918
    %3029 = vmatpush1.bf16.msra.mxu0 %v2917
    %3030 = vmatprep.subr.bf16.mxu0 %v2922
    %3031 = vmatpush1.bf16.msra.mxu0 %v2921
    %3032 = vmatprep.subr.bf16.mxu0 0
    %3033 = vmatpush1.bf16.msra.mxu0 0
    %3034 = vmatprep.subr.bf16.mxu0 0
    %3035 = vmatpush1.bf16.msra.mxu0 0
    %3036 = vmatprep.subr.bf16.mxu0 0
    %3037 = vmatpush1.bf16.msra.mxu0 0
    %3038 = vmatprep.subr.bf16.mxu0 0
    %3039 = vmatpush1.bf16.msra.mxu0 0
    %3040 = vmatprep.subr.bf16.mxu0 0
    %3041 = vmatpush1.bf16.msra.mxu0 0
    %3042 = vmatprep.subr.bf16.mxu0 0
    %3043 = vmatpush1.bf16.msra.mxu0 0
    %3044 = vmatprep.subr.bf16.mxu0 0
    %3045 = vmatpush1.bf16.msra.mxu0 0
    %3046 = vmatprep.subr.bf16.mxu0 0
    %3047 = vmatpush1.bf16.msra.mxu0 0
    %3048 = vmatprep.mubr.bf16.mxu0 0
    %3049 = vmatmul.mubr.bf16.gmra.mrb[0].mxu0 %v2739
    %v3050 = vpop.f32.mrb[0].mxu0
    %v3051 = vadd.f32 %v2786, %v3050
    %v3052 = vpop.f32.mrb[0].mxu0
    %v3053 = vadd.f32 %v2790, %v3052
    %v3054 = vpop.f32.mrb[0].mxu0
    %v3055 = vadd.f32 %v2786, %v3054
    %v3056 = vpop.f32.mrb[0].mxu0
    %v3057 = vadd.f32 %v2790, %v3056
    %3058 = vmatprep.mubr.bf16.mxu0 0
    %3059 = vmatmul.mubr.bf16.gmra.mrb[0].mxu0 %v2740
    %v3060 = vpop.f32.mrb[0].mxu0
    %v3061 = vadd.f32 %v2786, %v3060
    %v3062 = vpop.f32.mrb[0].mxu0
    %v3063 = vadd.f32 %v2790, %v3062
    %v3064 = vpop.f32.mrb[0].mxu0
    %v3065 = vadd.f32 %v2786, %v3064
    %v3066 = vpop.f32.mrb[0].mxu0
    %v3067 = vadd.f32 %v2790, %v3066
    %3068 = vmatprep.mubr.bf16.mxu0 0
    %3069 = vmatmul.mubr.bf16.gmra.mrb[0].mxu0 %v2741
    %v3070 = vpop.f32.mrb[0].mxu0
    %v3071 = vadd.f32 %v2786, %v3070
    %v3072 = vpop.f32.mrb[0].mxu0
    %v3073 = vadd.f32 %v2790, %v3072
    %v3074 = vpop.f32.mrb[0].mxu0
    %v3075 = vpop.f32.mrb[0].mxu0
    %3076 = vdwg.mxu0
    %v3077 = vmul.f32 %v2990, 0.5
    %v3078 = vmul.f32 %v2992, 0.5
    %v3079 = vmul.f32 %v3051, 0.5
    %v3080 = vmul.f32 %v3053, 0.5
    %v3081 = vmul.f32 %v2994, 0.5
    %v3082 = vmul.f32 %v2996, 0.5
    %v3083 = vmul.f32 %v3055, 0.5
    %v3084 = vmul.f32 %v3057, 0.5
    %v3085 = vmul.f32 %v3000, 0.5
    %v3086 = vmul.f32 %v3002, 0.5
    %v3087 = vmul.f32 %v3061, 0.5
    %v3088 = vmul.f32 %v3063, 0.5
    %v3089 = vmul.f32 %v3004, 0.5
    %v3090 = vmul.f32 %v3006, 0.5
    %v3091 = vmul.f32 %v3065, 0.5
    %v3092 = vmul.f32 %v3067, 0.5
    %v3093 = vmul.f32 %v3010, 0.5
    %v3094 = vmul.f32 %v3012, 0.5
    %v3095 = vmul.f32 %v3071, 0.5
    %v3096 = vmul.f32 %v3073, 0.5
    %v3097 = vmul.f32 %v2990, 0.70710677
    %v3098 = vmul.f32 %v2992, 0.70710677
    %v3099 = vmul.f32 %v3051, 0.70710677
    %v3100 = vmul.f32 %v3053, 0.70710677
    %v3101 = vmul.f32 %v2994, 0.70710677
    %v3102 = vmul.f32 %v2996, 0.70710677
    %v3103 = vmul.f32 %v3055, 0.70710677
    %v3104 = vmul.f32 %v3057, 0.70710677
    %v3105 = vmul.f32 %v3000, 0.70710677
    %v3106 = vmul.f32 %v3002, 0.70710677
    %v3107 = vmul.f32 %v3061, 0.70710677
    %v3108 = vmul.f32 %v3063, 0.70710677
    %v3109 = vmul.f32 %v3004, 0.70710677
    %v3110 = vmul.f32 %v3006, 0.70710677
    %v3111 = vmul.f32 %v3065, 0.70710677
    %v3112 = vmul.f32 %v3067, 0.70710677
    %v3113 = vmul.f32 %v3010, 0.70710677
    %v3114 = vmul.f32 %v3012, 0.70710677
    %v3115 = vmul.f32 %v3071, 0.70710677
    %v3116 = vmul.f32 %v3073, 0.70710677
    %v3117 = vand.u32 2147483647, %v3097
    %v3118 = vand.u32 2147483647, %v3098
    %v3119 = vand.u32 2147483647, %v3099
    %v3120 = vand.u32 2147483647, %v3100
    %v3121 = vand.u32 2147483647, %v3101
    %v3122 = vand.u32 2147483647, %v3102
    %v3123 = vand.u32 2147483647, %v3103
    %v3124 = vand.u32 2147483647, %v3104
    %v3125 = vand.u32 2147483647, %v3105
    %v3126 = vand.u32 2147483647, %v3106
    %v3127 = vand.u32 2147483647, %v3107
    %v3128 = vand.u32 2147483647, %v3108
    %v3129 = vand.u32 2147483647, %v3109
    %v3130 = vand.u32 2147483647, %v3110
    %v3131 = vand.u32 2147483647, %v3111
    %v3132 = vand.u32 2147483647, %v3112
    %v3133 = vand.u32 2147483647, %v3113
    %v3134 = vand.u32 2147483647, %v3114
    %v3135 = vand.u32 2147483647, %v3115
    %v3136 = vand.u32 2147483647, %v3116
    %v3137 = vmul.f32 %v3117, 0.3275911
    %v3138 = vmul.f32 %v3118, 0.3275911
    %v3139 = vmul.f32 %v3119, 0.3275911
    %v3140 = vmul.f32 %v3120, 0.3275911
    %v3141 = vmul.f32 %v3121, 0.3275911
    %v3142 = vmul.f32 %v3122, 0.3275911
    %v3143 = vmul.f32 %v3123, 0.3275911
    %v3144 = vmul.f32 %v3124, 0.3275911
    %v3145 = vmul.f32 %v3125, 0.3275911
    %v3146 = vmul.f32 %v3126, 0.3275911
    %v3147 = vmul.f32 %v3127, 0.3275911
    %v3148 = vmul.f32 %v3128, 0.3275911
    %v3149 = vmul.f32 %v3129, 0.3275911
    %v3150 = vmul.f32 %v3130, 0.3275911
    %v3151 = vmul.f32 %v3131, 0.3275911
    %v3152 = vmul.f32 %v3132, 0.3275911
    %v3153 = vmul.f32 %v3133, 0.3275911
    %v3154 = vmul.f32 %v3134, 0.3275911
    %v3155 = vmul.f32 %v3135, 0.3275911
    %v3156 = vmul.f32 %v3136, 0.3275911
    %v3157 = vadd.f32 %v3137, 1.0
    %v3158 = vadd.f32 %v3138, 1.0
    %v3159 = vadd.f32 %v3139, 1.0
    %v3160 = vadd.f32 %v3140, 1.0
    %v3161 = vadd.f32 %v3141, 1.0
    %v3162 = vadd.f32 %v3142, 1.0
    %v3163 = vadd.f32 %v3143, 1.0
    %v3164 = vadd.f32 %v3144, 1.0
    %v3165 = vadd.f32 %v3145, 1.0
    %v3166 = vadd.f32 %v3146, 1.0
    %v3167 = vadd.f32 %v3147, 1.0
    %v3168 = vadd.f32 %v3148, 1.0
    %v3169 = vadd.f32 %v3149, 1.0
    %v3170 = vadd.f32 %v3150, 1.0
    %v3171 = vadd.f32 %v3151, 1.0
    %v3172 = vadd.f32 %v3152, 1.0
    %v3173 = vadd.f32 %v3153, 1.0
    %v3174 = vadd.f32 %v3154, 1.0
    %v3175 = vadd.f32 %v3155, 1.0
    %v3176 = vadd.f32 %v3156, 1.0
    %v3177 = vrcp.pop %v3157
    %v3178 = vrcp.pop %v3158
    %v3179 = vrcp.pop %v3159
    %v3180 = vrcp.pop %v3160
    %v3181 = vrcp.pop %v3161
    %v3182 = vrcp.pop %v3162
    %v3183 = vrcp.pop %v3163
    %v3184 = vrcp.pop %v3164
    %v3185 = vrcp.pop %v3165
    %v3186 = vrcp.pop %v3166
    %v3187 = vrcp.pop %v3167
    %v3188 = vrcp.pop %v3168
    %v3189 = vrcp.pop %v3169
    %v3190 = vrcp.pop %v3170
    %v3191 = vrcp.pop %v3171
    %v3192 = vrcp.pop %v3172
    %v3193 = vrcp.pop %v3173
    %v3194 = vrcp.pop %v3174
    %v3195 = vrcp.pop %v3175
    %v3196 = vrcp.pop %v3176
    %v3197 = vmul.f32 %v3177, 1.0614054
    %v3198 = vmul.f32 %v3178, 1.0614054
    %v3199 = vmul.f32 %v3179, 1.0614054
    %v3200 = vmul.f32 %v3180, 1.0614054
    %v3201 = vmul.f32 %v3181, 1.0614054
    %v3202 = vmul.f32 %v3182, 1.0614054
    %v3203 = vmul.f32 %v3183, 1.0614054
    %v3204 = vmul.f32 %v3184, 1.0614054
    %v3205 = vmul.f32 %v3185, 1.0614054
    %v3206 = vmul.f32 %v3186, 1.0614054
    %v3207 = vmul.f32 %v3187, 1.0614054
    %v3208 = vmul.f32 %v3188, 1.0614054
    %v3209 = vmul.f32 %v3189, 1.0614054
    %v3210 = vmul.f32 %v3190, 1.0614054
    %v3211 = vmul.f32 %v3191, 1.0614054
    %v3212 = vmul.f32 %v3192, 1.0614054
    %v3213 = vmul.f32 %v3193, 1.0614054
    %v3214 = vmul.f32 %v3194, 1.0614054
    %v3215 = vmul.f32 %v3195, 1.0614054
    %v3216 = vmul.f32 %v3196, 1.0614054
    %v3217 = vadd.f32 %v3197, -1.4531521
    %v3218 = vadd.f32 %v3198, -1.4531521
    %v3219 = vadd.f32 %v3199, -1.4531521
    %v3220 = vadd.f32 %v3200, -1.4531521
    %v3221 = vadd.f32 %v3201, -1.4531521
    %v3222 = vadd.f32 %v3202, -1.4531521
    %v3223 = vadd.f32 %v3203, -1.4531521
    %v3224 = vadd.f32 %v3204, -1.4531521
    %v3225 = vadd.f32 %v3205, -1.4531521
    %v3226 = vadd.f32 %v3206, -1.4531521
    %v3227 = vadd.f32 %v3207, -1.4531521
    %v3228 = vadd.f32 %v3208, -1.4531521
    %v3229 = vadd.f32 %v3209, -1.4531521
    %v3230 = vadd.f32 %v3210, -1.4531521
    %v3231 = vadd.f32 %v3211, -1.4531521
    %v3232 = vadd.f32 %v3212, -1.4531521
    %v3233 = vadd.f32 %v3213, -1.4531521
    %v3234 = vadd.f32 %v3214, -1.4531521
    %v3235 = vadd.f32 %v3215, -1.4531521
    %v3236 = vadd.f32 %v3216, -1.4531521
    %v3237 = vmul.f32 %v3217, %v3177
    %v3238 = vmul.f32 %v3218, %v3178
    %v3239 = vmul.f32 %v3219, %v3179
    %v3240 = vmul.f32 %v3220, %v3180
    %v3241 = vmul.f32 %v3221, %v3181
    %v3242 = vmul.f32 %v3222, %v3182
    %v3243 = vmul.f32 %v3223, %v3183
    %v3244 = vmul.f32 %v3224, %v3184
    %v3245 = vmul.f32 %v3225, %v3185
    %v3246 = vmul.f32 %v3226, %v3186
    %v3247 = vmul.f32 %v3227, %v3187
    %v3248 = vmul.f32 %v3228, %v3188
    %v3249 = vmul.f32 %v3229, %v3189
    %v3250 = vmul.f32 %v3230, %v3190
    %v3251 = vmul.f32 %v3231, %v3191
    %v3252 = vmul.f32 %v3232, %v3192
    %v3253 = vmul.f32 %v3233, %v3193
    %v3254 = vmul.f32 %v3234, %v3194
    %v3255 = vmul.f32 %v3235, %v3195
    %v3256 = vmul.f32 %v3236, %v3196
    %v3257 = vadd.f32 %v3237, 1.4214138
    %v3258 = vadd.f32 %v3238, 1.4214138
    %v3259 = vadd.f32 %v3239, 1.4214138
    %v3260 = vadd.f32 %v3240, 1.4214138
    %v3261 = vadd.f32 %v3241, 1.4214138
    %v3262 = vadd.f32 %v3242, 1.4214138
    %v3263 = vadd.f32 %v3243, 1.4214138
    %v3264 = vadd.f32 %v3244, 1.4214138
    %v3265 = vadd.f32 %v3245, 1.4214138
    %v3266 = vadd.f32 %v3246, 1.4214138
    %v3267 = vadd.f32 %v3247, 1.4214138
    %v3268 = vadd.f32 %v3248, 1.4214138
    %v3269 = vadd.f32 %v3249, 1.4214138
    %v3270 = vadd.f32 %v3250, 1.4214138
    %v3271 = vadd.f32 %v3251, 1.4214138
    %v3272 = vadd.f32 %v3252, 1.4214138
    %v3273 = vadd.f32 %v3253, 1.4214138
    %v3274 = vadd.f32 %v3254, 1.4214138
    %v3275 = vadd.f32 %v3255, 1.4214138
    %v3276 = vadd.f32 %v3256, 1.4214138
    %v3277 = vmul.f32 %v3257, %v3177
    %v3278 = vmul.f32 %v3258, %v3178
    %v3279 = vmul.f32 %v3259, %v3179
    %v3280 = vmul.f32 %v3260, %v3180
    %v3281 = vmul.f32 %v3261, %v3181
    %v3282 = vmul.f32 %v3262, %v3182
    %v3283 = vmul.f32 %v3263, %v3183
    %v3284 = vmul.f32 %v3264, %v3184
    %v3285 = vmul.f32 %v3265, %v3185
    %v3286 = vmul.f32 %v3266, %v3186
    %v3287 = vmul.f32 %v3267, %v3187
    %v3288 = vmul.f32 %v3268, %v3188
    %v3289 = vmul.f32 %v3269, %v3189
    %v3290 = vmul.f32 %v3270, %v3190
    %v3291 = vmul.f32 %v3271, %v3191
    %v3292 = vmul.f32 %v3272, %v3192
    %v3293 = vmul.f32 %v3273, %v3193
    %v3294 = vmul.f32 %v3274, %v3194
    %v3295 = vmul.f32 %v3275, %v3195
    %v3296 = vmul.f32 %v3276, %v3196
    %v3297 = vadd.f32 %v3277, -0.28449672
    %v3298 = vadd.f32 %v3278, -0.28449672
    %v3299 = vadd.f32 %v3279, -0.28449672
    %v3300 = vadd.f32 %v3280, -0.28449672
    %v3301 = vadd.f32 %v3281, -0.28449672
    %v3302 = vadd.f32 %v3282, -0.28449672
    %v3303 = vadd.f32 %v3283, -0.28449672
    %v3304 = vadd.f32 %v3284, -0.28449672
    %v3305 = vadd.f32 %v3285, -0.28449672
    %v3306 = vadd.f32 %v3286, -0.28449672
    %v3307 = vadd.f32 %v3287, -0.28449672
    %v3308 = vadd.f32 %v3288, -0.28449672
    %v3309 = vadd.f32 %v3289, -0.28449672
    %v3310 = vadd.f32 %v3290, -0.28449672
    %v3311 = vadd.f32 %v3291, -0.28449672
    %v3312 = vadd.f32 %v3292, -0.28449672
    %v3313 = vadd.f32 %v3293, -0.28449672
    %v3314 = vadd.f32 %v3294, -0.28449672
    %v3315 = vadd.f32 %v3295, -0.28449672
    %v3316 = vadd.f32 %v3296, -0.28449672
    %v3317 = vmul.f32 %v3297, %v3177
    %v3318 = vmul.f32 %v3298, %v3178
    %v3319 = vmul.f32 %v3299, %v3179
    %v3320 = vmul.f32 %v3300, %v3180
    %v3321 = vmul.f32 %v3301, %v3181
    %v3322 = vmul.f32 %v3302, %v3182
    %v3323 = vmul.f32 %v3303, %v3183
    %v3324 = vmul.f32 %v3304, %v3184
    %v3325 = vmul.f32 %v3305, %v3185
    %v3326 = vmul.f32 %v3306, %v3186
    %v3327 = vmul.f32 %v3307, %v3187
    %v3328 = vmul.f32 %v3308, %v3188
    %v3329 = vmul.f32 %v3309, %v3189
    %v3330 = vmul.f32 %v3310, %v3190
    %v3331 = vmul.f32 %v3311, %v3191
    %v3332 = vmul.f32 %v3312, %v3192
    %v3333 = vmul.f32 %v3313, %v3193
    %v3334 = vmul.f32 %v3314, %v3194
    %v3335 = vmul.f32 %v3315, %v3195
    %v3336 = vmul.f32 %v3316, %v3196
    %v3337 = vadd.f32 %v3317, 0.2548296
    %v3338 = vadd.f32 %v3318, 0.2548296
    %v3339 = vadd.f32 %v3319, 0.2548296
    %v3340 = vadd.f32 %v3320, 0.2548296
    %v3341 = vadd.f32 %v3321, 0.2548296
    %v3342 = vadd.f32 %v3322, 0.2548296
    %v3343 = vadd.f32 %v3323, 0.2548296
    %v3344 = vadd.f32 %v3324, 0.2548296
    %v3345 = vadd.f32 %v3325, 0.2548296
    %v3346 = vadd.f32 %v3326, 0.2548296
    %v3347 = vadd.f32 %v3327, 0.2548296
    %v3348 = vadd.f32 %v3328, 0.2548296
    %v3349 = vadd.f32 %v3329, 0.2548296
    %v3350 = vadd.f32 %v3330, 0.2548296
    %v3351 = vadd.f32 %v3331, 0.2548296
    %v3352 = vadd.f32 %v3332, 0.2548296
    %v3353 = vadd.f32 %v3333, 0.2548296
    %v3354 = vadd.f32 %v3334, 0.2548296
    %v3355 = vadd.f32 %v3335, 0.2548296
    %v3356 = vadd.f32 %v3336, 0.2548296
    %v3357 = vmul.f32 %v3337, %v3177
    %v3358 = vmul.f32 %v3338, %v3178
    %v3359 = vmul.f32 %v3339, %v3179
    %v3360 = vmul.f32 %v3340, %v3180
    %v3361 = vmul.f32 %v3341, %v3181
    %v3362 = vmul.f32 %v3342, %v3182
    %v3363 = vmul.f32 %v3343, %v3183
    %v3364 = vmul.f32 %v3344, %v3184
    %v3365 = vmul.f32 %v3345, %v3185
    %v3366 = vmul.f32 %v3346, %v3186
    %v3367 = vmul.f32 %v3347, %v3187
    %v3368 = vmul.f32 %v3348, %v3188
    %v3369 = vmul.f32 %v3349, %v3189
    %v3370 = vmul.f32 %v3350, %v3190
    %v3371 = vmul.f32 %v3351, %v3191
    %v3372 = vmul.f32 %v3352, %v3192
    %v3373 = vmul.f32 %v3353, %v3193
    %v3374 = vmul.f32 %v3354, %v3194
    %v3375 = vmul.f32 %v3355, %v3195
    %v3376 = vmul.f32 %v3356, %v3196
    %v3377 = vsub.f32 0.0, %v3117
    %v3378 = vsub.f32 0.0, %v3118
    %v3379 = vsub.f32 0.0, %v3119
    %v3380 = vsub.f32 0.0, %v3120
    %v3381 = vsub.f32 0.0, %v3121
    %v3382 = vsub.f32 0.0, %v3122
    %v3383 = vsub.f32 0.0, %v3123
    %v3384 = vsub.f32 0.0, %v3124
    %v3385 = vsub.f32 0.0, %v3125
    %v3386 = vsub.f32 0.0, %v3126
    %v3387 = vsub.f32 0.0, %v3127
    %v3388 = vsub.f32 0.0, %v3128
    %v3389 = vsub.f32 0.0, %v3129
    %v3390 = vsub.f32 0.0, %v3130
    %v3391 = vsub.f32 0.0, %v3131
    %v3392 = vsub.f32 0.0, %v3132
    %v3393 = vsub.f32 0.0, %v3133
    %v3394 = vsub.f32 0.0, %v3134
    %v3395 = vsub.f32 0.0, %v3135
    %v3396 = vsub.f32 0.0, %v3136
    %v3397 = vmul.f32 %v3377, %v3117
    %v3398 = vmul.f32 %v3378, %v3118
    %v3399 = vmul.f32 %v3379, %v3119
    %v3400 = vmul.f32 %v3380, %v3120
    %v3401 = vmul.f32 %v3381, %v3121
    %v3402 = vmul.f32 %v3382, %v3122
    %v3403 = vmul.f32 %v3383, %v3123
    %v3404 = vmul.f32 %v3384, %v3124
    %v3405 = vmul.f32 %v3385, %v3125
    %v3406 = vmul.f32 %v3386, %v3126
    %v3407 = vmul.f32 %v3387, %v3127
    %v3408 = vmul.f32 %v3388, %v3128
    %v3409 = vmul.f32 %v3389, %v3129
    %v3410 = vmul.f32 %v3390, %v3130
    %v3411 = vmul.f32 %v3391, %v3131
    %v3412 = vmul.f32 %v3392, %v3132
    %v3413 = vmul.f32 %v3393, %v3133
    %v3414 = vmul.f32 %v3394, %v3134
    %v3415 = vmul.f32 %v3395, %v3135
    %v3416 = vmul.f32 %v3396, %v3136
    %v3417 = vmul.f32 %v3397, 1.442695
    %v3418 = vpow.pop %v3417
    %v3419 = vmul.f32 %v3398, 1.442695
    %v3420 = vpow.pop %v3419
    %v3421 = vmul.f32 %v3399, 1.442695
    %v3422 = vpow.pop %v3421
    %v3423 = vmul.f32 %v3400, 1.442695
    %v3424 = vpow.pop %v3423
    %v3425 = vmul.f32 %v3401, 1.442695
    %v3426 = vpow.pop %v3425
    %v3427 = vmul.f32 %v3402, 1.442695
    %v3428 = vpow.pop %v3427
    %v3429 = vmul.f32 %v3403, 1.442695
    %v3430 = vpow.pop %v3429
    %v3431 = vmul.f32 %v3404, 1.442695
    %v3432 = vpow.pop %v3431
    %v3433 = vmul.f32 %v3405, 1.442695
    %v3434 = vpow.pop %v3433
    %v3435 = vmul.f32 %v3406, 1.442695
    %v3436 = vpow.pop %v3435
    %v3437 = vmul.f32 %v3407, 1.442695
    %v3438 = vpow.pop %v3437
    %v3439 = vmul.f32 %v3408, 1.442695
    %v3440 = vpow.pop %v3439
    %v3441 = vmul.f32 %v3409, 1.442695
    %v3442 = vpow.pop %v3441
    %v3443 = vmul.f32 %v3410, 1.442695
    %v3444 = vpow.pop %v3443
    %v3445 = vmul.f32 %v3411, 1.442695
    %v3446 = vpow.pop %v3445
    %v3447 = vmul.f32 %v3412, 1.442695
    %v3448 = vpow.pop %v3447
    %v3449 = vmul.f32 %v3413, 1.442695
    %v3450 = vpow.pop %v3449
    %v3451 = vmul.f32 %v3414, 1.442695
    %v3452 = vpow.pop %v3451
    %v3453 = vmul.f32 %v3415, 1.442695
    %v3454 = vpow.pop %v3453
    %v3455 = vmul.f32 %v3416, 1.442695
    %v3456 = vpow.pop %v3455
    %v3457 = vmul.f32 %v3357, %v3418
    %v3458 = vmul.f32 %v3358, %v3420
    %v3459 = vmul.f32 %v3359, %v3422
    %v3460 = vmul.f32 %v3360, %v3424
    %v3461 = vmul.f32 %v3361, %v3426
    %v3462 = vmul.f32 %v3362, %v3428
    %v3463 = vmul.f32 %v3363, %v3430
    %v3464 = vmul.f32 %v3364, %v3432
    %v3465 = vmul.f32 %v3365, %v3434
    %v3466 = vmul.f32 %v3366, %v3436
    %v3467 = vmul.f32 %v3367, %v3438
    %v3468 = vmul.f32 %v3368, %v3440
    %v3469 = vmul.f32 %v3369, %v3442
    %v3470 = vmul.f32 %v3370, %v3444
    %v3471 = vmul.f32 %v3371, %v3446
    %v3472 = vmul.f32 %v3372, %v3448
    %v3473 = vmul.f32 %v3373, %v3450
    %v3474 = vmul.f32 %v3374, %v3452
    %v3475 = vmul.f32 %v3375, %v3454
    %v3476 = vmul.f32 %v3376, %v3456
    %v3477 = vsub.f32 1.0, %v3457
    %v3478 = vsub.f32 1.0, %v3458
    %v3479 = vsub.f32 1.0, %v3459
    %v3480 = vsub.f32 1.0, %v3460
    %v3481 = vsub.f32 1.0, %v3461
    %v3482 = vsub.f32 1.0, %v3462
    %v3483 = vsub.f32 1.0, %v3463
    %v3484 = vsub.f32 1.0, %v3464
    %v3485 = vsub.f32 1.0, %v3465
    %v3486 = vsub.f32 1.0, %v3466
    %v3487 = vsub.f32 1.0, %v3467
    %v3488 = vsub.f32 1.0, %v3468
    %v3489 = vsub.f32 1.0, %v3469
    %v3490 = vsub.f32 1.0, %v3470
    %v3491 = vsub.f32 1.0, %v3471
    %v3492 = vsub.f32 1.0, %v3472
    %v3493 = vsub.f32 1.0, %v3473
    %v3494 = vsub.f32 1.0, %v3474
    %v3495 = vsub.f32 1.0, %v3475
    %v3496 = vsub.f32 1.0, %v3476
    %vm3497 = vcmp.ge.f32.partialorder %v3097, 0.0
    %vm3498 = vcmp.ge.f32.partialorder %v3098, 0.0
    %vm3499 = vcmp.ge.f32.partialorder %v3099, 0.0
    %vm3500 = vcmp.ge.f32.partialorder %v3100, 0.0
    %vm3501 = vcmp.ge.f32.partialorder %v3101, 0.0
    %vm3502 = vcmp.ge.f32.partialorder %v3102, 0.0
    %vm3503 = vcmp.ge.f32.partialorder %v3103, 0.0
    %vm3504 = vcmp.ge.f32.partialorder %v3104, 0.0
    %vm3505 = vcmp.ge.f32.partialorder %v3105, 0.0
    %vm3506 = vcmp.ge.f32.partialorder %v3106, 0.0
    %vm3507 = vcmp.ge.f32.partialorder %v3107, 0.0
    %vm3508 = vcmp.ge.f32.partialorder %v3108, 0.0
    %vm3509 = vcmp.ge.f32.partialorder %v3109, 0.0
    %vm3510 = vcmp.ge.f32.partialorder %v3110, 0.0
    %vm3511 = vcmp.ge.f32.partialorder %v3111, 0.0
    %vm3512 = vcmp.ge.f32.partialorder %v3112, 0.0
    %vm3513 = vcmp.ge.f32.partialorder %v3113, 0.0
    %vm3514 = vcmp.ge.f32.partialorder %v3114, 0.0
    %vm3515 = vcmp.ge.f32.partialorder %v3115, 0.0
    %vm3516 = vcmp.ge.f32.partialorder %v3116, 0.0
    %v3517 = vsub.f32 0.0, %v3477
    %v3518 = vsub.f32 0.0, %v3478
    %v3519 = vsub.f32 0.0, %v3479
    %v3520 = vsub.f32 0.0, %v3480
    %v3521 = vsub.f32 0.0, %v3481
    %v3522 = vsub.f32 0.0, %v3482
    %v3523 = vsub.f32 0.0, %v3483
    %v3524 = vsub.f32 0.0, %v3484
    %v3525 = vsub.f32 0.0, %v3485
    %v3526 = vsub.f32 0.0, %v3486
    %v3527 = vsub.f32 0.0, %v3487
    %v3528 = vsub.f32 0.0, %v3488
    %v3529 = vsub.f32 0.0, %v3489
    %v3530 = vsub.f32 0.0, %v3490
    %v3531 = vsub.f32 0.0, %v3491
    %v3532 = vsub.f32 0.0, %v3492
    %v3533 = vsub.f32 0.0, %v3493
    %v3534 = vsub.f32 0.0, %v3494
    %v3535 = vsub.f32 0.0, %v3495
    %v3536 = vsub.f32 0.0, %v3496
    %v3537 = vsel %vm3497, %v3477, %v3517
    %v3538 = vsel %vm3498, %v3478, %v3518
    %v3539 = vsel %vm3499, %v3479, %v3519
    %v3540 = vsel %vm3500, %v3480, %v3520
    %v3541 = vsel %vm3501, %v3481, %v3521
    %v3542 = vsel %vm3502, %v3482, %v3522
    %v3543 = vsel %vm3503, %v3483, %v3523
    %v3544 = vsel %vm3504, %v3484, %v3524
    %v3545 = vsel %vm3505, %v3485, %v3525
    %v3546 = vsel %vm3506, %v3486, %v3526
    %v3547 = vsel %vm3507, %v3487, %v3527
    %v3548 = vsel %vm3508, %v3488, %v3528
    %v3549 = vsel %vm3509, %v3489, %v3529
    %v3550 = vsel %vm3510, %v3490, %v3530
    %v3551 = vsel %vm3511, %v3491, %v3531
    %v3552 = vsel %vm3512, %v3492, %v3532
    %v3553 = vsel %vm3513, %v3493, %v3533
    %v3554 = vsel %vm3514, %v3494, %v3534
    %v3555 = vsel %vm3515, %v3495, %v3535
    %v3556 = vsel %vm3516, %v3496, %v3536
    %v3557 = vadd.f32 %v3537, 1.0
    %v3558 = vadd.f32 %v3538, 1.0
    %v3559 = vadd.f32 %v3539, 1.0
    %v3560 = vadd.f32 %v3540, 1.0
    %v3561 = vadd.f32 %v3541, 1.0
    %v3562 = vadd.f32 %v3542, 1.0
    %v3563 = vadd.f32 %v3543, 1.0
    %v3564 = vadd.f32 %v3544, 1.0
    %v3565 = vadd.f32 %v3545, 1.0
    %v3566 = vadd.f32 %v3546, 1.0
    %v3567 = vadd.f32 %v3547, 1.0
    %v3568 = vadd.f32 %v3548, 1.0
    %v3569 = vadd.f32 %v3549, 1.0
    %v3570 = vadd.f32 %v3550, 1.0
    %v3571 = vadd.f32 %v3551, 1.0
    %v3572 = vadd.f32 %v3552, 1.0
    %v3573 = vadd.f32 %v3553, 1.0
    %v3574 = vadd.f32 %v3554, 1.0
    %v3575 = vadd.f32 %v3555, 1.0
    %v3576 = vadd.f32 %v3556, 1.0
    %v3577 = vmul.f32 %v3077, %v3557
    %v3578 = vmul.f32 %v3078, %v3558
    %v3579 = vmul.f32 %v3079, %v3559
    %v3580 = vmul.f32 %v3080, %v3560
    %v3581 = vmul.f32 %v3081, %v3561
    %v3582 = vmul.f32 %v3082, %v3562
    %v3583 = vmul.f32 %v3083, %v3563
    %v3584 = vmul.f32 %v3084, %v3564
    %v3585 = vmul.f32 %v3085, %v3565
    %v3586 = vmul.f32 %v3086, %v3566
    %v3587 = vmul.f32 %v3087, %v3567
    %v3588 = vmul.f32 %v3088, %v3568
    %v3589 = vmul.f32 %v3089, %v3569
    %v3590 = vmul.f32 %v3090, %v3570
    %v3591 = vmul.f32 %v3091, %v3571
    %v3592 = vmul.f32 %v3092, %v3572
    %v3593 = vmul.f32 %v3093, %v3573
    %v3594 = vmul.f32 %v3094, %v3574
    %v3595 = vmul.f32 %v3095, %v3575
    %v3596 = vmul.f32 %v3096, %v3576
    %v3597 = vpack.c.bf16 %v3581, %v3577
    %v3598 = vpack.c.bf16 %v3582, %v3578
    %v3599 = vpack.c.bf16 %v3583, %v3579
    %v3600 = vpack.c.bf16 %v3584, %v3580
    %v3601 = vpack.c.bf16 %v3589, %v3585
    %v3602 = vpack.c.bf16 %v3590, %v3586
    %v3603 = vpack.c.bf16 %v3591, %v3587
    %v3604 = vpack.c.bf16 %v3592, %v3588
    %v3605 = vpack.c.bf16 %v3593, %v3593
    %v3606 = vpack.c.bf16 %v3594, %v3594
    %v3607 = vpack.c.bf16 %v3595, %v3595
    %v3608 = vpack.c.bf16 %v3596, %v3596
    %v3609 = vld [vmem:[%s5] sm:$0xf]
    %v3610 = vld [vmem:[%s5 + $0x4] sm:$0xf]
    %v3611 = vld [vmem:[%s5 + $0x8] sm:$0xf]
    %v3612 = vld [vmem:[%s5 + $0xc] sm:$0xf]
    %v3613 = vld [vmem:[%s5 + $0x10] sm:$0xf]
    %v3614 = vld [vmem:[%s5 + $0x14] sm:$0xf]
    %v3615 = vld [vmem:[%s5 + $0x18] sm:$0xf]
    %v3616 = vld [vmem:[%s5 + $0x1c] sm:$0xf]
    %v3617 = vld [vmem:[%s5 + $0x20] sm:$0xf]
    %v3618 = vld [vmem:[%s5 + $0x24] sm:$0xf]
    %v3619 = vld [vmem:[%s5 + $0x28] sm:$0xf]
    %v3620 = vld [vmem:[%s5 + $0x2c] sm:$0xf]
    %v3621 = vld [vmem:[%s5 + $0x30] sm:$0xf]
    %v3622 = vld [vmem:[%s5 + $0x34] sm:$0xf]
    %v3623 = vld [vmem:[%s5 + $0x38] sm:$0xf]
    %v3624 = vld [vmem:[%s5 + $0x3c] sm:$0xf]
    %v3625 = vld [vmem:[%s5 + $0x40] sm:$0xf]
    %v3626 = vld [vmem:[%s5 + $0x44] sm:$0xf]
    %v3627 = vld [vmem:[%s5 + $0x48] sm:$0xf]
    %v3628 = vld [vmem:[%s5 + $0x4c] sm:$0xf]
    %v3629 = vld [vmem:[%s5 + $0x50] sm:$0xf]
    %v3630 = vld [vmem:[%s5 + $0x54] sm:$0xf]
    %v3631 = vld [vmem:[%s5 + $0x58] sm:$0xf]
    %v3632 = vld [vmem:[%s5 + $0x5c] sm:$0xf]
    %v3633 = vld [vmem:[%s5 + $0x60] sm:$0xf]
    %v3634 = vld [vmem:[%s5 + $0x64] sm:$0xf]
    %v3635 = vld [vmem:[%s5 + $0x68] sm:$0xf]
    %v3636 = vld [vmem:[%s5 + $0x6c] sm:$0xf]
    %v3637 = vld [vmem:[%s5 + $0x70] sm:$0xf]
    %v3638 = vld [vmem:[%s5 + $0x74] sm:$0xf]
    %v3639 = vld [vmem:[%s5 + $0x78] sm:$0xf]
    %v3640 = vld [vmem:[%s5 + $0x7c] sm:$0xf]
    %v3641 = vld [vmem:[%s5 + $0x80] sm:$0xf]
    %v3642 = vld [vmem:[%s5 + $0x84] sm:$0xf]
    %v3643 = vld [vmem:[%s5 + $0x88] sm:$0xf]
    %v3644 = vld [vmem:[%s5 + $0x8c] sm:$0xf]
    %v3645 = vld [vmem:[%s5 + $0x90] sm:$0xf]
    %v3646 = vld [vmem:[%s5 + $0x94] sm:$0xf]
    %v3647 = vld [vmem:[%s5 + $0x98] sm:$0xf]
    %v3648 = vld [vmem:[%s5 + $0x9c] sm:$0xf]
    %v3649 = vld [vmem:[%s5 + $0xa0] sm:$0xf]
    %v3650 = vld [vmem:[%s5 + $0xa4] sm:$0xf]
    %v3651 = vld [vmem:[%s5 + $0xa8] sm:$0xf]
    %v3652 = vld [vmem:[%s5 + $0xac] sm:$0xf]
    %v3653 = vld [vmem:[%s5 + $0xb0] sm:$0xf]
    %v3654 = vld [vmem:[%s5 + $0xb4] sm:$0xf]
    %v3655 = vld [vmem:[%s5 + $0xb8] sm:$0xf]
    %v3656 = vld [vmem:[%s5 + $0xbc] sm:$0xf]
    %v3657 = vld [vmem:[%s5 + $0xc0] sm:$0xf]
    %v3658 = vld [vmem:[%s5 + $0xc4] sm:$0xf]
    %v3659 = vld [vmem:[%s5 + $0xc8] sm:$0xf]
    %v3660 = vld [vmem:[%s5 + $0xcc] sm:$0xf]
    %v3661 = vld [vmem:[%s5 + $0xd0] sm:$0xf]
    %v3662 = vld [vmem:[%s5 + $0xd4] sm:$0xf]
    %v3663 = vld [vmem:[%s5 + $0xd8] sm:$0xf]
    %v3664 = vld [vmem:[%s5 + $0xdc] sm:$0xf]
    %v3665 = vld [vmem:[%s5 + $0xe0] sm:$0xf]
    %v3666 = vld [vmem:[%s5 + $0xe4] sm:$0xf]
    %v3667 = vld [vmem:[%s5 + $0xe8] sm:$0xf]
    %v3668 = vld [vmem:[%s5 + $0xec] sm:$0xf]
    %v3669 = vld [vmem:[%s5 + $0xf0] sm:$0xf]
    %v3670 = vld [vmem:[%s5 + $0xf4] sm:$0xf]
    %v3671 = vld [vmem:[%s5 + $0xf8] sm:$0xf]
    %v3672 = vld [vmem:[%s5 + $0xfc] sm:$0xf]
    %v3737 = vunpack.c.l.b16 %v3609
    %v3738 = vunpack.c.l.b16 %v3610
    %v3739 = vunpack.c.l.b16 %v3611
    %v3740 = vunpack.c.l.b16 %v3612
    %v3741 = vunpack.c.l.b16 %v3613
    %v3742 = vunpack.c.l.b16 %v3614
    %v3743 = vunpack.c.l.b16 %v3615
    %v3744 = vunpack.c.l.b16 %v3616
    %v3745 = vunpack.c.l.b16 %v3617
    %v3746 = vunpack.c.l.b16 %v3618
    %v3747 = vunpack.c.l.b16 %v3619
    %v3748 = vunpack.c.l.b16 %v3620
    %v3749 = vunpack.c.l.b16 %v3621
    %v3750 = vunpack.c.l.b16 %v3622
    %v3751 = vunpack.c.l.b16 %v3623
    %v3752 = vunpack.c.l.b16 %v3624
    %v3753 = vunpack.c.l.b16 %v3625
    %v3754 = vunpack.c.l.b16 %v3626
    %v3755 = vunpack.c.l.b16 %v3627
    %v3756 = vunpack.c.l.b16 %v3628
    %v3757 = vunpack.c.l.b16 %v3629
    %v3758 = vunpack.c.l.b16 %v3630
    %v3759 = vunpack.c.l.b16 %v3631
    %v3760 = vunpack.c.l.b16 %v3632
    %v3761 = vunpack.c.l.b16 %v3633
    %v3762 = vunpack.c.l.b16 %v3634
    %v3763 = vunpack.c.l.b16 %v3635
    %v3764 = vunpack.c.l.b16 %v3636
    %v3765 = vunpack.c.l.b16 %v3637
    %v3766 = vunpack.c.l.b16 %v3638
    %v3767 = vunpack.c.l.b16 %v3639
    %v3768 = vunpack.c.l.b16 %v3640
    %v3769 = vunpack.c.l.b16 %v3641
    %v3770 = vunpack.c.l.b16 %v3642
    %v3771 = vunpack.c.l.b16 %v3643
    %v3772 = vunpack.c.l.b16 %v3644
    %v3773 = vunpack.c.l.b16 %v3645
    %v3774 = vunpack.c.l.b16 %v3646
    %v3775 = vunpack.c.l.b16 %v3647
    %v3776 = vunpack.c.l.b16 %v3648
    %v3777 = vunpack.c.l.b16 %v3649
    %v3778 = vunpack.c.l.b16 %v3650
    %v3779 = vunpack.c.l.b16 %v3651
    %v3780 = vunpack.c.l.b16 %v3652
    %v3781 = vunpack.c.l.b16 %v3653
    %v3782 = vunpack.c.l.b16 %v3654
    %v3783 = vunpack.c.l.b16 %v3655
    %v3784 = vunpack.c.l.b16 %v3656
    %v3785 = vunpack.c.l.b16 %v3657
    %v3786 = vunpack.c.l.b16 %v3658
    %v3787 = vunpack.c.l.b16 %v3659
    %v3788 = vunpack.c.l.b16 %v3660
    %v3789 = vunpack.c.l.b16 %v3661
    %v3790 = vunpack.c.l.b16 %v3662
    %v3791 = vunpack.c.l.b16 %v3663
    %v3792 = vunpack.c.l.b16 %v3664
    %v3793 = vunpack.c.l.b16 %v3665
    %v3794 = vunpack.c.l.b16 %v3666
    %v3795 = vunpack.c.l.b16 %v3667
    %v3796 = vunpack.c.l.b16 %v3668
    %v3797 = vunpack.c.l.b16 %v3669
    %v3798 = vunpack.c.l.b16 %v3670
    %v3799 = vunpack.c.l.b16 %v3671
    %v3800 = vunpack.c.l.b16 %v3672
    %v3801 = vpack.c.b16 %v3738, %v3737
    %v3802 = vpack.c.b16 %v3740, %v3739
    %v3803 = vpack.c.b16 %v3742, %v3741
    %v3804 = vpack.c.b16 %v3744, %v3743
    %v3805 = vpack.c.b16 %v3746, %v3745
    %v3806 = vpack.c.b16 %v3748, %v3747
    %v3807 = vpack.c.b16 %v3750, %v3749
    %v3808 = vpack.c.b16 %v3752, %v3751
    %v3809 = vpack.c.b16 %v3754, %v3753
    %v3810 = vpack.c.b16 %v3756, %v3755
    %v3811 = vpack.c.b16 %v3758, %v3757
    %v3812 = vpack.c.b16 %v3760, %v3759
    %v3813 = vpack.c.b16 %v3762, %v3761
    %v3814 = vpack.c.b16 %v3764, %v3763
    %v3815 = vpack.c.b16 %v3766, %v3765
    %v3816 = vpack.c.b16 %v3768, %v3767
    %v3817 = vpack.c.b16 %v3770, %v3769
    %v3818 = vpack.c.b16 %v3772, %v3771
    %v3819 = vpack.c.b16 %v3774, %v3773
    %v3820 = vpack.c.b16 %v3776, %v3775
    %v3821 = vpack.c.b16 %v3778, %v3777
    %v3822 = vpack.c.b16 %v3780, %v3779
    %v3823 = vpack.c.b16 %v3782, %v3781
    %v3824 = vpack.c.b16 %v3784, %v3783
    %v3825 = vpack.c.b16 %v3786, %v3785
    %v3826 = vpack.c.b16 %v3788, %v3787
    %v3827 = vpack.c.b16 %v3790, %v3789
    %v3828 = vpack.c.b16 %v3792, %v3791
    %v3829 = vpack.c.b16 %v3794, %v3793
    %v3830 = vpack.c.b16 %v3796, %v3795
    %v3831 = vpack.c.b16 %v3798, %v3797
    %v3832 = vpack.c.b16 %v3800, %v3799
    %3865 = vmatprep.subr.bf16.mxu0 0
    %3866 = vmatpush1.bf16.msra.mxu0 %v3801
    %3867 = vmatprep.subr.bf16.mxu0 0
    %3868 = vmatpush1.bf16.msra.mxu0 %v3802
    %3869 = vmatprep.subr.bf16.mxu0 0
    %3870 = vmatpush1.bf16.msra.mxu0 %v3803
    %3871 = vmatprep.subr.bf16.mxu0 0
    %3872 = vmatpush1.bf16.msra.mxu0 %v3804
    %3873 = vmatprep.subr.bf16.mxu0 0
    %3874 = vmatpush1.bf16.msra.mxu0 %v3805
    %3875 = vmatprep.subr.bf16.mxu0 0
    %3876 = vmatpush1.bf16.msra.mxu0 %v3806
    %3877 = vmatprep.subr.bf16.mxu0 0
    %3878 = vmatpush1.bf16.msra.mxu0 %v3807
    %3879 = vmatprep.subr.bf16.mxu0 0
    %3880 = vmatpush1.bf16.msra.mxu0 %v3808
    %3881 = vmatprep.subr.bf16.mxu0 0
    %3882 = vmatpush1.bf16.msra.mxu0 %v3809
    %3883 = vmatprep.subr.bf16.mxu0 0
    %3884 = vmatpush1.bf16.msra.mxu0 %v3810
    %3885 = vmatprep.subr.bf16.mxu0 0
    %3886 = vmatpush1.bf16.msra.mxu0 %v3811
    %3887 = vmatprep.subr.bf16.mxu0 0
    %3888 = vmatpush1.bf16.msra.mxu0 %v3812
    %3889 = vmatprep.subr.bf16.mxu0 0
    %3890 = vmatpush1.bf16.msra.mxu0 %v3813
    %3891 = vmatprep.subr.bf16.mxu0 0
    %3892 = vmatpush1.bf16.msra.mxu0 %v3814
    %3893 = vmatprep.subr.bf16.mxu0 0
    %3894 = vmatpush1.bf16.msra.mxu0 %v3815
    %3895 = vmatprep.subr.bf16.mxu0 0
    %3896 = vmatpush1.bf16.msra.mxu0 %v3816
    %3897 = vmatprep.mubr.bf16.mxu0 %v3598
    %3898 = vmatmul.mubr.bf16.gmra.mrb[0].mxu0 %v3597
    %v3899 = vpop.f32.mrb[0].mxu0
    %v3900 = vadd.f32 0.0, %v3899
    %v3901 = vpop.f32.mrb[0].mxu0
    %v3902 = vpop.f32.mrb[0].mxu0
    %v3903 = vadd.f32 0.0, %v3902
    %v3904 = vpop.f32.mrb[0].mxu0
    %3905 = vmatprep.mubr.bf16.mxu0 %v3602
    %3906 = vmatmul.mubr.bf16.gmra.mrb[0].mxu0 %v3601
    %v3907 = vpop.f32.mrb[0].mxu0
    %v3908 = vadd.f32 0.0, %v3907
    %v3909 = vpop.f32.mrb[0].mxu0
    %v3910 = vpop.f32.mrb[0].mxu0
    %v3911 = vadd.f32 0.0, %v3910
    %v3912 = vpop.f32.mrb[0].mxu0
    %3913 = vmatprep.mubr.bf16.mxu0 %v3606
    %3914 = vmatmul.mubr.bf16.gmra.mrb[0].mxu0 %v3605
    %v3915 = vpop.f32.mrb[0].mxu0
    %v3916 = vadd.f32 0.0, %v3915
    %v3917 = vpop.f32.mrb[0].mxu0
    %v3918 = vpop.f32.mrb[0].mxu0
    %v3919 = vpop.f32.mrb[0].mxu0
    %3920 = vdwg.mxu0
    %3921 = vmatprep.subr.bf16.mxu0 0
    %3922 = vmatpush1.bf16.msra.mxu0 %v3817
    %3923 = vmatprep.subr.bf16.mxu0 0
    %3924 = vmatpush1.bf16.msra.mxu0 %v3818
    %3925 = vmatprep.subr.bf16.mxu0 0
    %3926 = vmatpush1.bf16.msra.mxu0 %v3819
    %3927 = vmatprep.subr.bf16.mxu0 0
    %3928 = vmatpush1.bf16.msra.mxu0 %v3820
    %3929 = vmatprep.subr.bf16.mxu0 0
    %3930 = vmatpush1.bf16.msra.mxu0 %v3821
    %3931 = vmatprep.subr.bf16.mxu0 0
    %3932 = vmatpush1.bf16.msra.mxu0 %v3822
    %3933 = vmatprep.subr.bf16.mxu0 0
    %3934 = vmatpush1.bf16.msra.mxu0 %v3823
    %3935 = vmatprep.subr.bf16.mxu0 0
    %3936 = vmatpush1.bf16.msra.mxu0 %v3824
    %3937 = vmatprep.subr.bf16.mxu0 0
    %3938 = vmatpush1.bf16.msra.mxu0 %v3825
    %3939 = vmatprep.subr.bf16.mxu0 0
    %3940 = vmatpush1.bf16.msra.mxu0 %v3826
    %3941 = vmatprep.subr.bf16.mxu0 0
    %3942 = vmatpush1.bf16.msra.mxu0 %v3827
    %3943 = vmatprep.subr.bf16.mxu0 0
    %3944 = vmatpush1.bf16.msra.mxu0 %v3828
    %3945 = vmatprep.subr.bf16.mxu0 0
    %3946 = vmatpush1.bf16.msra.mxu0 %v3829
    %3947 = vmatprep.subr.bf16.mxu0 0
    %3948 = vmatpush1.bf16.msra.mxu0 %v3830
    %3949 = vmatprep.subr.bf16.mxu0 0
    %3950 = vmatpush1.bf16.msra.mxu0 %v3831
    %3951 = vmatprep.subr.bf16.mxu0 0
    %3952 = vmatpush1.bf16.msra.mxu0 %v3832
    %3953 = vmatprep.mubr.bf16.mxu0 %v3600
    %3954 = vmatmul.mubr.bf16.gmra.mrb[0].mxu0 %v3599
    %v3955 = vpop.f32.mrb[0].mxu0
    %v3956 = vadd.f32 %v3900, %v3955
    %v3957 = vpop.f32.mrb[0].mxu0
    %v3958 = vpop.f32.mrb[0].mxu0
    %v3959 = vadd.f32 %v3903, %v3958
    %v3960 = vpop.f32.mrb[0].mxu0
    %3961 = vmatprep.mubr.bf16.mxu0 %v3604
    %3962 = vmatmul.mubr.bf16.gmra.mrb[0].mxu0 %v3603
    %v3963 = vpop.f32.mrb[0].mxu0
    %v3964 = vadd.f32 %v3908, %v3963
    %v3965 = vpop.f32.mrb[0].mxu0
    %v3966 = vpop.f32.mrb[0].mxu0
    %v3967 = vadd.f32 %v3911, %v3966
    %v3968 = vpop.f32.mrb[0].mxu0
    %3969 = vmatprep.mubr.bf16.mxu0 %v3608
    %3970 = vmatmul.mubr.bf16.gmra.mrb[0].mxu0 %v3607
    %v3971 = vpop.f32.mrb[0].mxu0
    %v3972 = vadd.f32 %v3916, %v3971
    %v3973 = vpop.f32.mrb[0].mxu0
    %v3974 = vpop.f32.mrb[0].mxu0
    %v3975 = vpop.f32.mrb[0].mxu0
    %3976 = vdwg.mxu0
    %v3977 = vadd.f32 %v2641, %v3956
    %v3978 = vadd.f32 %v2642, %v3959
    %v3979 = vadd.f32 %v2643, %v3964
    %v3980 = vadd.f32 %v2644, %v3967
    %v3981 = vadd.f32 %v2645, %v3972
    %v3983 = vlaneseq
    %v3984 = vshrl.u32 %v3983, 7
    %v3985 = vsub.s32 0, %v3984
    %v3986 = vrot.slane %v2649, %v3985
    %v3988 = vadd.f32 %v3977, %v3986
    %v3989 = vadd.f32 %v3978, %v3986
    %v3990 = vadd.f32 %v3979, %v3986
    %v3991 = vadd.f32 %v3980, %v3986
    %v3992 = vadd.f32 %v3981, %v3986
    %s3993 = scalar_lea.vmem %s6, 13
    %v3994 = vld [vmem:[%s3993] sm:$0x1]
    %v3995 = vld [vmem:[%s3993 + $0x1] sm:$0x1]
    %v3996 = vld [vmem:[%s3993 + $0x2] sm:$0x7]
    %v3997 = vld [vmem:[%s3993 + $0x5] sm:$0x1]
    %3998 = vadd.xlane.f32.xlu0 %v3988
    %v3999 = vpop.xlane.xlu0 %3998
    %4000 = vadd.xlane.f32.xlu0 %v3989
    %v4001 = vpop.xlane.xlu0 %4000
    %4002 = vadd.xlane.f32.xlu0 %v3990
    %v4003 = vpop.xlane.xlu0 %4002
    %4004 = vadd.xlane.f32.xlu0 %v3991
    %v4005 = vpop.xlane.xlu0 %4004
    %v4006 = vsel %vm161, %v3992, 0.0
    %4007 = vadd.xlane.f32.xlu0 %v4006
    %v4008 = vpop.xlane.xlu0 %4007
    %v4009 = vmul.f32 %v3999, %v191
    %v4010 = vmul.f32 %v4001, %v191
    %v4011 = vmul.f32 %v4003, %v191
    %v4012 = vmul.f32 %v4005, %v191
    %v4013 = vmul.f32 %v4008, %v191
    %v4014 = vmul.f32 %v3988, %v3988
    %v4015 = vmul.f32 %v3989, %v3989
    %v4016 = vmul.f32 %v3990, %v3990
    %v4017 = vmul.f32 %v3991, %v3991
    %v4018 = vmul.f32 %v3992, %v3992
    %4019 = vadd.xlane.f32.xlu0 %v4014
    %v4020 = vpop.xlane.xlu0 %4019
    %4021 = vadd.xlane.f32.xlu0 %v4015
    %v4022 = vpop.xlane.xlu0 %4021
    %4023 = vadd.xlane.f32.xlu0 %v4016
    %v4024 = vpop.xlane.xlu0 %4023
    %4025 = vadd.xlane.f32.xlu0 %v4017
    %v4026 = vpop.xlane.xlu0 %4025
    %v4027 = vsel %vm161, %v4018, 0.0
    %4028 = vadd.xlane.f32.xlu0 %v4027
    %v4029 = vpop.xlane.xlu0 %4028
    %v4030 = vmul.f32 %v4020, %v191
    %v4031 = vmul.f32 %v4022, %v191
    %v4032 = vmul.f32 %v4024, %v191
    %v4033 = vmul.f32 %v4026, %v191
    %v4034 = vmul.f32 %v4029, %v191
    %v4035 = vmul.f32 %v4009, %v4009
    %v4036 = vmul.f32 %v4010, %v4010
    %v4037 = vmul.f32 %v4011, %v4011
    %v4038 = vmul.f32 %v4012, %v4012
    %v4039 = vmul.f32 %v4013, %v4013
    %v4040 = vsub.f32 %v4030, %v4035
    %v4041 = vsub.f32 %v4031, %v4036
    %v4042 = vsub.f32 %v4032, %v4037
    %v4043 = vsub.f32 %v4033, %v4038
    %v4044 = vsub.f32 %v4034, %v4039
    %v4045 = vsub.f32 %v3988, %v4009
    %v4046 = vsub.f32 %v3989, %v4010
    %v4047 = vsub.f32 %v3990, %v4011
    %v4048 = vsub.f32 %v3991, %v4012
    %v4049 = vsub.f32 %v3992, %v4013
    %v4050 = vadd.f32 %v4040, 1e-05
    %v4051 = vadd.f32 %v4041, 1e-05
    %v4052 = vadd.f32 %v4042, 1e-05
    %v4053 = vadd.f32 %v4043, 1e-05
    %v4054 = vadd.f32 %v4044, 1e-05
    %v4055 = vrsqrt.pop %v4050
    %v4056 = vrsqrt.pop %v4051
    %v4057 = vrsqrt.pop %v4052
    %v4058 = vrsqrt.pop %v4053
    %v4059 = vrsqrt.pop %v4054
    %v4060 = vmul.f32 %v4045, %v4055
    %v4061 = vmul.f32 %v4046, %v4056
    %v4062 = vmul.f32 %v4047, %v4057
    %v4063 = vmul.f32 %v4048, %v4058
    %v4064 = vmul.f32 %v4049, %v4059
    %v4066 = vlaneseq
    %v4067 = vshrl.u32 %v4066, 7
    %v4068 = vsub.s32 0, %v4067
    %v4069 = vrot.slane %v3994, %v4068
    %v4071 = vmul.f32 %v4060, %v4069
    %v4072 = vmul.f32 %v4061, %v4069
    %v4073 = vmul.f32 %v4062, %v4069
    %v4074 = vmul.f32 %v4063, %v4069
    %v4075 = vmul.f32 %v4064, %v4069
    %v4077 = vlaneseq
    %v4078 = vshrl.u32 %v4077, 7
    %v4079 = vsub.s32 0, %v4078
    %v4080 = vrot.slane %v3995, %v4079
    %v4082 = vadd.f32 %v4071, %v4080
    %v4083 = vadd.f32 %v4072, %v4080
    %v4084 = vadd.f32 %v4073, %v4080
    %v4085 = vadd.f32 %v4074, %v4080
    %v4086 = vadd.f32 %v4075, %v4080
    %v4087 = vpack.c.bf16 %v4083, %v4082
    %v4088 = vpack.c.bf16 %v4085, %v4084
    %v4089 = vpack.c.bf16 %v4086, %v4086
    %s4090 = scalar_lea.vmem %s4, 512
    %v4091 = vld [vmem:[%s4090] sm:$0xff]
    %v4092 = vld [vmem:[%s4090 + $0x8] sm:$0xf]
    %v4093 = vld [vmem:[%s4090 + $0x20] sm:$0xff]
    %v4094 = vld [vmem:[%s4090 + $0x28] sm:$0xf]
    %v4095 = vld [vmem:[%s4090 + $0x40] sm:$0xff]
    %v4096 = vld [vmem:[%s4090 + $0x48] sm:$0xf]
    %v4097 = vld [vmem:[%s4090 + $0x60] sm:$0xff]
    %v4098 = vld [vmem:[%s4090 + $0x68] sm:$0xf]
    %v4099 = vld [vmem:[%s4090 + $0x80] sm:$0xff]
    %v4100 = vld [vmem:[%s4090 + $0x88] sm:$0xf]
    %v4101 = vld [vmem:[%s4090 + $0xa0] sm:$0xff]
    %v4102 = vld [vmem:[%s4090 + $0xa8] sm:$0xf]
    %v4103 = vld [vmem:[%s4090 + $0xc0] sm:$0xff]
    %v4104 = vld [vmem:[%s4090 + $0xc8] sm:$0xf]
    %v4105 = vld [vmem:[%s4090 + $0xe0] sm:$0xff]
    %v4106 = vld [vmem:[%s4090 + $0xe8] sm:$0xf]
    %v4107 = vld [vmem:[%s4090 + $0x100] sm:$0xff]
    %v4108 = vld [vmem:[%s4090 + $0x108] sm:$0xf]
    %v4109 = vld [vmem:[%s4090 + $0x120] sm:$0xff]
    %v4110 = vld [vmem:[%s4090 + $0x128] sm:$0xf]
    %v4111 = vld [vmem:[%s4090 + $0x140] sm:$0xff]
    %v4112 = vld [vmem:[%s4090 + $0x148] sm:$0xf]
    %v4113 = vld [vmem:[%s4090 + $0x160] sm:$0xff]
    %v4114 = vld [vmem:[%s4090 + $0x168] sm:$0xf]
    %v4115 = vld [vmem:[%s4090 + $0x180] sm:$0xff]
    %v4116 = vld [vmem:[%s4090 + $0x188] sm:$0xf]
    %v4117 = vld [vmem:[%s4090 + $0x1a0] sm:$0xff]
    %v4118 = vld [vmem:[%s4090 + $0x1a8] sm:$0xf]
    %v4119 = vld [vmem:[%s4090 + $0x1c0] sm:$0xff]
    %v4120 = vld [vmem:[%s4090 + $0x1c8] sm:$0xf]
    %v4121 = vld [vmem:[%s4090 + $0x1e0] sm:$0xff]
    %v4122 = vld [vmem:[%s4090 + $0x1e8] sm:$0xf]
    %v4124 = vlaneseq
    %v4125 = vshrl.u32 %v4124, 7
    %v4126 = vsub.s32 0, %v4125
    %v4127 = vrot.slane %v3996, %v4126
    %v4128 = vlaneseq
    %v4129 = vshrl.u32 %v4128, 7
    %v4130 = vsub.s32 1, %v4129
    %v4131 = vrot.slane %v3996, %v4130
    %v4132 = vlaneseq
    %v4133 = vshrl.u32 %v4132, 7
    %v4134 = vsub.s32 2, %v4133
    %v4135 = vrot.slane %v3996, %v4134
    %v4171 = vunpack.c.l.b16 %v4091
    %v4172 = vunpack.c.h.b16 %v4091
    %v4173 = vunpack.c.l.b16 %v4092
    %v4174 = vunpack.c.l.b16 %v4093
    %v4175 = vunpack.c.h.b16 %v4093
    %v4176 = vunpack.c.l.b16 %v4094
    %v4177 = vunpack.c.l.b16 %v4095
    %v4178 = vunpack.c.h.b16 %v4095
    %v4179 = vunpack.c.l.b16 %v4096
    %v4180 = vunpack.c.l.b16 %v4097
    %v4181 = vunpack.c.h.b16 %v4097
    %v4182 = vunpack.c.l.b16 %v4098
    %v4183 = vunpack.c.l.b16 %v4099
    %v4184 = vunpack.c.h.b16 %v4099
    %v4185 = vunpack.c.l.b16 %v4100
    %v4186 = vunpack.c.l.b16 %v4101
    %v4187 = vunpack.c.h.b16 %v4101
    %v4188 = vunpack.c.l.b16 %v4102
    %v4189 = vunpack.c.l.b16 %v4103
    %v4190 = vunpack.c.h.b16 %v4103
    %v4191 = vunpack.c.l.b16 %v4104
    %v4192 = vunpack.c.l.b16 %v4105
    %v4193 = vunpack.c.h.b16 %v4105
    %v4194 = vunpack.c.l.b16 %v4106
    %v4195 = vunpack.c.l.b16 %v4107
    %v4196 = vunpack.c.h.b16 %v4107
    %v4197 = vunpack.c.l.b16 %v4108
    %v4198 = vunpack.c.l.b16 %v4109
    %v4199 = vunpack.c.h.b16 %v4109
    %v4200 = vunpack.c.l.b16 %v4110
    %v4201 = vunpack.c.l.b16 %v4111
    %v4202 = vunpack.c.h.b16 %v4111
    %v4203 = vunpack.c.l.b16 %v4112
    %v4204 = vunpack.c.l.b16 %v4113
    %v4205 = vunpack.c.h.b16 %v4113
    %v4206 = vunpack.c.l.b16 %v4114
    %v4207 = vunpack.c.l.b16 %v4115
    %v4208 = vunpack.c.h.b16 %v4115
    %v4209 = vunpack.c.l.b16 %v4116
    %v4210 = vunpack.c.l.b16 %v4117
    %v4211 = vunpack.c.h.b16 %v4117
    %v4212 = vunpack.c.l.b16 %v4118
    %v4213 = vunpack.c.l.b16 %v4119
    %v4214 = vunpack.c.h.b16 %v4119
    %v4215 = vunpack.c.l.b16 %v4120
    %v4216 = vunpack.c.l.b16 %v4121
    %v4217 = vunpack.c.h.b16 %v4121
    %v4218 = vunpack.c.l.b16 %v4122
    %v4219 = vpack.c.b16 %v4174, %v4171
    %v4220 = vpack.c.b16 %v4175, %v4172
    %v4221 = vpack.c.b16 %v4176, %v4173
    %v4222 = vpack.c.b16 %v4180, %v4177
    %v4223 = vpack.c.b16 %v4181, %v4178
    %v4224 = vpack.c.b16 %v4182, %v4179
    %v4225 = vpack.c.b16 %v4186, %v4183
    %v4226 = vpack.c.b16 %v4187, %v4184
    %v4227 = vpack.c.b16 %v4188, %v4185
    %v4228 = vpack.c.b16 %v4192, %v4189
    %v4229 = vpack.c.b16 %v4193, %v4190
    %v4230 = vpack.c.b16 %v4194, %v4191
    %v4231 = vpack.c.b16 %v4198, %v4195
    %v4232 = vpack.c.b16 %v4199, %v4196
    %v4233 = vpack.c.b16 %v4200, %v4197
    %v4234 = vpack.c.b16 %v4204, %v4201
    %v4235 = vpack.c.b16 %v4205, %v4202
    %v4236 = vpack.c.b16 %v4206, %v4203
    %v4237 = vpack.c.b16 %v4210, %v4207
    %v4238 = vpack.c.b16 %v4211, %v4208
    %v4239 = vpack.c.b16 %v4212, %v4209
    %v4240 = vpack.c.b16 %v4216, %v4213
    %v4241 = vpack.c.b16 %v4217, %v4214
    %v4242 = vpack.c.b16 %v4218, %v4215
    %4267 = vmatprep.subr.bf16.mxu0 %v4220
    %4268 = vmatpush1.bf16.msra.mxu0 %v4219
    %4269 = vmatprep.subr.bf16.mxu0 %v4223
    %4270 = vmatpush1.bf16.msra.mxu0 %v4222
    %4271 = vmatprep.subr.bf16.mxu0 %v4226
    %4272 = vmatpush1.bf16.msra.mxu0 %v4225
    %4273 = vmatprep.subr.bf16.mxu0 %v4229
    %4274 = vmatpush1.bf16.msra.mxu0 %v4228
    %4275 = vmatprep.subr.bf16.mxu0 %v4232
    %4276 = vmatpush1.bf16.msra.mxu0 %v4231
    %4277 = vmatprep.subr.bf16.mxu0 %v4235
    %4278 = vmatpush1.bf16.msra.mxu0 %v4234
    %4279 = vmatprep.subr.bf16.mxu0 %v4238
    %4280 = vmatpush1.bf16.msra.mxu0 %v4237
    %4281 = vmatprep.subr.bf16.mxu0 %v4241
    %4282 = vmatpush1.bf16.msra.mxu0 %v4240
    %4283 = vmatprep.subr.bf16.mxu0 0
    %4284 = vmatpush1.bf16.msra.mxu0 0
    %4285 = vmatprep.subr.bf16.mxu0 0
    %4286 = vmatpush1.bf16.msra.mxu0 0
    %4287 = vmatprep.subr.bf16.mxu0 0
    %4288 = vmatpush1.bf16.msra.mxu0 0
    %4289 = vmatprep.subr.bf16.mxu0 0
    %4290 = vmatpush1.bf16.msra.mxu0 0
    %4291 = vmatprep.subr.bf16.mxu0 0
    %4292 = vmatpush1.bf16.msra.mxu0 0
    %4293 = vmatprep.subr.bf16.mxu0 0
    %4294 = vmatpush1.bf16.msra.mxu0 0
    %4295 = vmatprep.subr.bf16.mxu0 0
    %4296 = vmatpush1.bf16.msra.mxu0 0
    %4297 = vmatprep.subr.bf16.mxu0 0
    %4298 = vmatpush1.bf16.msra.mxu0 0
    %4299 = vmatprep.mubr.bf16.mxu0 0
    %4300 = vmatmul.mubr.bf16.gmra.mrb[0].mxu0 %v4087
    %v4301 = vpop.f32.mrb[0].mxu0
    %v4302 = vadd.f32 %v4127, %v4301
    %v4303 = vpop.f32.mrb[0].mxu0
    %v4304 = vadd.f32 %v4131, %v4303
    %v4305 = vpop.f32.mrb[0].mxu0
    %v4306 = vadd.f32 %v4127, %v4305
    %v4307 = vpop.f32.mrb[0].mxu0
    %v4308 = vadd.f32 %v4131, %v4307
    %4309 = vmatprep.mubr.bf16.mxu0 0
    %4310 = vmatmul.mubr.bf16.gmra.mrb[0].mxu0 %v4088
    %v4311 = vpop.f32.mrb[0].mxu0
    %v4312 = vadd.f32 %v4127, %v4311
    %v4313 = vpop.f32.mrb[0].mxu0
    %v4314 = vadd.f32 %v4131, %v4313
    %v4315 = vpop.f32.mrb[0].mxu0
    %v4316 = vadd.f32 %v4127, %v4315
    %v4317 = vpop.f32.mrb[0].mxu0
    %v4318 = vadd.f32 %v4131, %v4317
    %4319 = vmatprep.mubr.bf16.mxu0 0
    %4320 = vmatmul.mubr.bf16.gmra.mrb[0].mxu0 %v4089
    %v4321 = vpop.f32.mrb[0].mxu0
    %v4322 = vadd.f32 %v4127, %v4321
    %v4323 = vpop.f32.mrb[0].mxu0
    %v4324 = vadd.f32 %v4131, %v4323
    %v4325 = vpop.f32.mrb[0].mxu0
    %v4326 = vpop.f32.mrb[0].mxu0
    %4327 = vdwg.mxu0
    %4328 = vmatprep.subr.bf16.mxu0 0
    %4329 = vmatpush1.bf16.msra.mxu0 %v4221
    %4330 = vmatprep.subr.bf16.mxu0 0
    %4331 = vmatpush1.bf16.msra.mxu0 %v4224
    %4332 = vmatprep.subr.bf16.mxu0 0
    %4333 = vmatpush1.bf16.msra.mxu0 %v4227
    %4334 = vmatprep.subr.bf16.mxu0 0
    %4335 = vmatpush1.bf16.msra.mxu0 %v4230
    %4336 = vmatprep.subr.bf16.mxu0 0
    %4337 = vmatpush1.bf16.msra.mxu0 %v4233
    %4338 = vmatprep.subr.bf16.mxu0 0
    %4339 = vmatpush1.bf16.msra.mxu0 %v4236
    %4340 = vmatprep.subr.bf16.mxu0 0
    %4341 = vmatpush1.bf16.msra.mxu0 %v4239
    %4342 = vmatprep.subr.bf16.mxu0 0
    %4343 = vmatpush1.bf16.msra.mxu0 %v4242
    %4344 = vmatprep.subr.bf16.mxu0 0
    %4345 = vmatpush1.bf16.msra.mxu0 0
    %4346 = vmatprep.subr.bf16.mxu0 0
    %4347 = vmatpush1.bf16.msra.mxu0 0
    %4348 = vmatprep.subr.bf16.mxu0 0
    %4349 = vmatpush1.bf16.msra.mxu0 0
    %4350 = vmatprep.subr.bf16.mxu0 0
    %4351 = vmatpush1.bf16.msra.mxu0 0
    %4352 = vmatprep.subr.bf16.mxu0 0
    %4353 = vmatpush1.bf16.msra.mxu0 0
    %4354 = vmatprep.subr.bf16.mxu0 0
    %4355 = vmatpush1.bf16.msra.mxu0 0
    %4356 = vmatprep.subr.bf16.mxu0 0
    %4357 = vmatpush1.bf16.msra.mxu0 0
    %4358 = vmatprep.subr.bf16.mxu0 0
    %4359 = vmatpush1.bf16.msra.mxu0 0
    %4360 = vmatprep.mubr.bf16.mxu0 0
    %4361 = vmatmul.mubr.bf16.gmra.mrb[0].mxu0 %v4087
    %v4362 = vpop.f32.mrb[0].mxu0
    %v4363 = vadd.f32 %v4135, %v4362
    %v4364 = vpop.f32.mrb[0].mxu0
    %v4365 = vpop.f32.mrb[0].mxu0
    %v4366 = vadd.f32 %v4135, %v4365
    %v4367 = vpop.f32.mrb[0].mxu0
    %4368 = vmatprep.mubr.bf16.mxu0 0
    %4369 = vmatmul.mubr.bf16.gmra.mrb[0].mxu0 %v4088
    %v4370 = vpop.f32.mrb[0].mxu0
    %v4371 = vadd.f32 %v4135, %v4370
    %v4372 = vpop.f32.mrb[0].mxu0
    %v4373 = vpop.f32.mrb[0].mxu0
    %v4374 = vadd.f32 %v4135, %v4373
    %v4375 = vpop.f32.mrb[0].mxu0
    %4376 = vmatprep.mubr.bf16.mxu0 0
    %4377 = vmatmul.mubr.bf16.gmra.mrb[0].mxu0 %v4089
    %v4378 = vpop.f32.mrb[0].mxu0
    %v4379 = vadd.f32 %v4135, %v4378
    %v4380 = vpop.f32.mrb[0].mxu0
    %v4381 = vpop.f32.mrb[0].mxu0
    %v4382 = vpop.f32.mrb[0].mxu0
    %4383 = vdwg.mxu0
    %v4384 = vpack.c.bf16 %v4306, %v4302
    %v4385 = vpack.c.bf16 %v4316, %v4312
    %v4386 = vpack.c.bf16 %v4322, %v4322
    %v4387 = vpack.c.bf16 %v4308, %v4304
    %v4388 = vpack.c.bf16 %v4318, %v4314
    %v4389 = vpack.c.bf16 %v4324, %v4324
    %v4390 = vpack.c.bf16 %v4366, %v4363
    %v4391 = vpack.c.bf16 %v4374, %v4371
    %v4392 = vpack.c.bf16 %v4379, %v4379
    %v4394 = vsel %vm575, %v4384, 0
    %v4397 = vsel %vm575, %v4385, 0
    %v4400 = vsel %vm575, %v4386, 0
    %v4403 = vsel %vm575, %v4387, 0
    %v4406 = vsel %vm575, %v4388, 0
    %v4409 = vsel %vm575, %v4389, 0
    %4411 = vmatprep.subr.bf16.mxu0 0
    %4412 = vmatpush1.bf16.xpose.msra.mxu0 %v4403
    %4413 = vmatprep.subr.bf16.mxu0 0
    %4414 = vmatpush1.bf16.xpose.msra.mxu0 %v4406
    %4415 = vmatprep.subr.bf16.mxu0 0
    %4416 = vmatpush1.bf16.xpose.msra.mxu0 %v4409
    %4417 = vmatprep.subr.bf16.mxu0 0
    %4418 = vmatpush1.bf16.xpose.msra.mxu0 0
    %4419 = vmatprep.subr.bf16.mxu0 0
    %4420 = vmatpush1.bf16.xpose.msra.mxu0 0
    %4421 = vmatprep.subr.bf16.mxu0 0
    %4422 = vmatpush1.bf16.xpose.msra.mxu0 0
    %4423 = vmatprep.subr.bf16.mxu0 0
    %4424 = vmatpush1.bf16.xpose.msra.mxu0 0
    %4425 = vmatprep.subr.bf16.mxu0 0
    %4426 = vmatpush1.bf16.xpose.msra.mxu0 0
    %4427 = vmatprep.subr.bf16.mxu0 0
    %4428 = vmatpush1.bf16.xpose.msra.mxu0 0
    %4429 = vmatprep.subr.bf16.mxu0 0
    %4430 = vmatpush1.bf16.xpose.msra.mxu0 0
    %4431 = vmatprep.subr.bf16.mxu0 0
    %4432 = vmatpush1.bf16.xpose.msra.mxu0 0
    %4433 = vmatprep.subr.bf16.mxu0 0
    %4434 = vmatpush1.bf16.xpose.msra.mxu0 0
    %4435 = vmatprep.subr.bf16.mxu0 0
    %4436 = vmatpush1.bf16.xpose.msra.mxu0 0
    %4437 = vmatprep.subr.bf16.mxu0 0
    %4438 = vmatpush1.bf16.xpose.msra.mxu0 0
    %4439 = vmatprep.subr.bf16.mxu0 0
    %4440 = vmatpush1.bf16.xpose.msra.mxu0 0
    %4441 = vmatprep.subr.bf16.mxu0 0
    %4442 = vmatpush1.bf16.xpose.msra.mxu0 0
    %4443 = vmatprep.mubr.bf16.mxu0 0
    %4444 = vmatmul.mubr.bf16.gmra.mrb[0].mxu0 %v4394
    %v4445 = vpop.f32.mrb[0].mxu0
    %v4446 = vadd.f32 %v34, %v4445
    %v4447 = vpop.f32.mrb[0].mxu0
    %v4448 = vpop.f32.mrb[0].mxu0
    %v4449 = vadd.f32 %v35, %v4448
    %v4450 = vpop.f32.mrb[0].mxu0
    %4451 = vmatprep.mubr.bf16.mxu0 0
    %4452 = vmatmul.mubr.bf16.gmra.mrb[0].mxu0 %v4397
    %v4453 = vpop.f32.mrb[0].mxu0
    %v4454 = vadd.f32 %v36, %v4453
    %v4455 = vpop.f32.mrb[0].mxu0
    %v4456 = vpop.f32.mrb[0].mxu0
    %v4457 = vadd.f32 %v37, %v4456
    %v4458 = vpop.f32.mrb[0].mxu0
    %4459 = vmatprep.mubr.bf16.mxu0 0
    %4460 = vmatmul.mubr.bf16.gmra.mrb[0].mxu0 %v4400
    %v4461 = vpop.f32.mrb[0].mxu0
    %v4462 = vadd.f32 %v38, %v4461
    %v4463 = vpop.f32.mrb[0].mxu0
    %v4464 = vpop.f32.mrb[0].mxu0
    %v4465 = vpop.f32.mrb[0].mxu0
    %4466 = vdwg.mxu0
    %v4467 = vsel %vm650, %v4446, -inf
    %4468 = vmax.xlane.f32.xlu0 %v4467
    %v4469 = vpop.xlane.xlu0 %4468
    %v4470 = vsel %vm650, %v4449, -inf
    %4471 = vmax.xlane.f32.xlu0 %v4470
    %v4472 = vpop.xlane.xlu0 %4471
    %v4473 = vsel %vm650, %v4454, -inf
    %4474 = vmax.xlane.f32.xlu0 %v4473
    %v4475 = vpop.xlane.xlu0 %4474
    %v4476 = vsel %vm650, %v4457, -inf
    %4477 = vmax.xlane.f32.xlu0 %v4476
    %v4478 = vpop.xlane.xlu0 %4477
    %v4479 = vsel %vm663, %v4462, -inf
    %4480 = vmax.xlane.f32.xlu0 %v4479
    %v4481 = vpop.xlane.xlu0 %4480
    %v4482 = vsub.f32 %v4446, %v4469
    %v4483 = vsub.f32 %v4449, %v4472
    %v4484 = vsub.f32 %v4454, %v4475
    %v4485 = vsub.f32 %v4457, %v4478
    %v4486 = vsub.f32 %v4462, %v4481
    %v4487 = vmul.f32 %v4482, 1.442695
    %v4488 = vpow.pop %v4487
    %v4489 = vmul.f32 %v4483, 1.442695
    %v4490 = vpow.pop %v4489
    %v4491 = vmul.f32 %v4484, 1.442695
    %v4492 = vpow.pop %v4491
    %v4493 = vmul.f32 %v4485, 1.442695
    %v4494 = vpow.pop %v4493
    %v4495 = vmul.f32 %v4486, 1.442695
    %v4496 = vpow.pop %v4495
    %v4497 = vsel %vm650, %v4488, 0.0
    %4498 = vadd.xlane.f32.xlu0 %v4497
    %v4499 = vpop.xlane.xlu0 %4498
    %v4500 = vsel %vm650, %v4490, 0.0
    %4501 = vadd.xlane.f32.xlu0 %v4500
    %v4502 = vpop.xlane.xlu0 %4501
    %v4503 = vsel %vm650, %v4492, 0.0
    %4504 = vadd.xlane.f32.xlu0 %v4503
    %v4505 = vpop.xlane.xlu0 %4504
    %v4506 = vsel %vm650, %v4494, 0.0
    %4507 = vadd.xlane.f32.xlu0 %v4506
    %v4508 = vpop.xlane.xlu0 %4507
    %v4509 = vsel %vm663, %v4496, 0.0
    %4510 = vadd.xlane.f32.xlu0 %v4509
    %v4511 = vpop.xlane.xlu0 %4510
    %v4512 = vrcp.pop %v4499
    %v4513 = vrcp.pop %v4502
    %v4514 = vrcp.pop %v4505
    %v4515 = vrcp.pop %v4508
    %v4516 = vrcp.pop %v4511
    %v4517 = vmul.f32 %v4488, %v4512
    %v4518 = vmul.f32 %v4490, %v4513
    %v4519 = vmul.f32 %v4492, %v4514
    %v4520 = vmul.f32 %v4494, %v4515
    %v4521 = vmul.f32 %v4496, %v4516
    %v4522 = vpack.c.bf16 %v4518, %v4517
    %v4523 = vpack.c.bf16 %v4520, %v4519
    %v4524 = vpack.c.bf16 %v4521, %v4521
    %v4526 = vsel %vm650, %v4522, 0
    %v4529 = vsel %vm650, %v4523, 0
    %v4532 = vsel %vm650, %v4524, 0
    %v4535 = vsel %vm141, %v4392, 0
    %4537 = vmatprep.subr.bf16.mxu0 0
    %4538 = vmatpush1.bf16.msra.mxu0 %v4390
    %4539 = vmatprep.subr.bf16.mxu0 0
    %4540 = vmatpush1.bf16.msra.mxu0 %v4391
    %4541 = vmatprep.subr.bf16.mxu0 0
    %4542 = vmatpush1.bf16.msra.mxu0 %v4535
    %4543 = vmatprep.subr.bf16.mxu0 0
    %4544 = vmatpush1.bf16.msra.mxu0 0
    %4545 = vmatprep.subr.bf16.mxu0 0
    %4546 = vmatpush1.bf16.msra.mxu0 0
    %4547 = vmatprep.subr.bf16.mxu0 0
    %4548 = vmatpush1.bf16.msra.mxu0 0
    %4549 = vmatprep.subr.bf16.mxu0 0
    %4550 = vmatpush1.bf16.msra.mxu0 0
    %4551 = vmatprep.subr.bf16.mxu0 0
    %4552 = vmatpush1.bf16.msra.mxu0 0
    %4553 = vmatprep.subr.bf16.mxu0 0
    %4554 = vmatpush1.bf16.msra.mxu0 0
    %4555 = vmatprep.subr.bf16.mxu0 0
    %4556 = vmatpush1.bf16.msra.mxu0 0
    %4557 = vmatprep.subr.bf16.mxu0 0
    %4558 = vmatpush1.bf16.msra.mxu0 0
    %4559 = vmatprep.subr.bf16.mxu0 0
    %4560 = vmatpush1.bf16.msra.mxu0 0
    %4561 = vmatprep.subr.bf16.mxu0 0
    %4562 = vmatpush1.bf16.msra.mxu0 0
    %4563 = vmatprep.subr.bf16.mxu0 0
    %4564 = vmatpush1.bf16.msra.mxu0 0
    %4565 = vmatprep.subr.bf16.mxu0 0
    %4566 = vmatpush1.bf16.msra.mxu0 0
    %4567 = vmatprep.subr.bf16.mxu0 0
    %4568 = vmatpush1.bf16.msra.mxu0 0
    %4569 = vmatprep.mubr.bf16.mxu0 0
    %4570 = vmatmul.mubr.bf16.gmra.mrb[0].mxu0 %v4526
    %v4571 = vpop.f32.mrb[0].mxu0
    %v4572 = vadd.f32 0.0, %v4571
    %v4573 = vpop.f32.mrb[0].mxu0
    %v4574 = vpop.f32.mrb[0].mxu0
    %v4575 = vadd.f32 0.0, %v4574
    %v4576 = vpop.f32.mrb[0].mxu0
    %4577 = vmatprep.mubr.bf16.mxu0 0
    %4578 = vmatmul.mubr.bf16.gmra.mrb[0].mxu0 %v4529
    %v4579 = vpop.f32.mrb[0].mxu0
    %v4580 = vadd.f32 0.0, %v4579
    %v4581 = vpop.f32.mrb[0].mxu0
    %v4582 = vpop.f32.mrb[0].mxu0
    %v4583 = vadd.f32 0.0, %v4582
    %v4584 = vpop.f32.mrb[0].mxu0
    %4585 = vmatprep.mubr.bf16.mxu0 0
    %4586 = vmatmul.mubr.bf16.gmra.mrb[0].mxu0 %v4532
    %v4587 = vpop.f32.mrb[0].mxu0
    %v4588 = vadd.f32 0.0, %v4587
    %v4589 = vpop.f32.mrb[0].mxu0
    %v4590 = vpop.f32.mrb[0].mxu0
    %v4591 = vpop.f32.mrb[0].mxu0
    %4592 = vdwg.mxu0
    %4596 = vrot.lane.b32.xlu0 %v4384, 112
    %v4597 = vpop.permute.xlu0 %4596
    %4598 = vrot.lane.b32.xlu0 %v4385, 112
    %v4599 = vpop.permute.xlu0 %4598
    %4600 = vrot.lane.b32.xlu0 %v4386, 112
    %v4601 = vpop.permute.xlu0 %4600
    %4605 = vrot.lane.b32.xlu0 %v4387, 112
    %v4606 = vpop.permute.xlu0 %4605
    %4607 = vrot.lane.b32.xlu0 %v4388, 112
    %v4608 = vpop.permute.xlu0 %4607
    %4609 = vrot.lane.b32.xlu0 %v4389, 112
    %v4610 = vpop.permute.xlu0 %4609
    %v4612 = vsel %vm575, %v4597, 0
    %v4615 = vsel %vm575, %v4599, 0
    %v4618 = vsel %vm575, %v4601, 0
    %v4621 = vsel %vm575, %v4606, 0
    %v4624 = vsel %vm575, %v4608, 0
    %v4627 = vsel %vm575, %v4610, 0
    %4629 = vmatprep.subr.bf16.mxu0 0
    %4630 = vmatpush1.bf16.xpose.msra.mxu0 %v4621
    %4631 = vmatprep.subr.bf16.mxu0 0
    %4632 = vmatpush1.bf16.xpose.msra.mxu0 %v4624
    %4633 = vmatprep.subr.bf16.mxu0 0
    %4634 = vmatpush1.bf16.xpose.msra.mxu0 %v4627
    %4635 = vmatprep.subr.bf16.mxu0 0
    %4636 = vmatpush1.bf16.xpose.msra.mxu0 0
    %4637 = vmatprep.subr.bf16.mxu0 0
    %4638 = vmatpush1.bf16.xpose.msra.mxu0 0
    %4639 = vmatprep.subr.bf16.mxu0 0
    %4640 = vmatpush1.bf16.xpose.msra.mxu0 0
    %4641 = vmatprep.subr.bf16.mxu0 0
    %4642 = vmatpush1.bf16.xpose.msra.mxu0 0
    %4643 = vmatprep.subr.bf16.mxu0 0
    %4644 = vmatpush1.bf16.xpose.msra.mxu0 0
    %4645 = vmatprep.subr.bf16.mxu0 0
    %4646 = vmatpush1.bf16.xpose.msra.mxu0 0
    %4647 = vmatprep.subr.bf16.mxu0 0
    %4648 = vmatpush1.bf16.xpose.msra.mxu0 0
    %4649 = vmatprep.subr.bf16.mxu0 0
    %4650 = vmatpush1.bf16.xpose.msra.mxu0 0
    %4651 = vmatprep.subr.bf16.mxu0 0
    %4652 = vmatpush1.bf16.xpose.msra.mxu0 0
    %4653 = vmatprep.subr.bf16.mxu0 0
    %4654 = vmatpush1.bf16.xpose.msra.mxu0 0
    %4655 = vmatprep.subr.bf16.mxu0 0
    %4656 = vmatpush1.bf16.xpose.msra.mxu0 0
    %4657 = vmatprep.subr.bf16.mxu0 0
    %4658 = vmatpush1.bf16.xpose.msra.mxu0 0
    %4659 = vmatprep.subr.bf16.mxu0 0
    %4660 = vmatpush1.bf16.xpose.msra.mxu0 0
    %4661 = vmatprep.mubr.bf16.mxu0 0
    %4662 = vmatmul.mubr.bf16.gmra.mrb[0].mxu0 %v4612
    %v4663 = vpop.f32.mrb[0].mxu0
    %v4664 = vadd.f32 %v34, %v4663
    %v4665 = vpop.f32.mrb[0].mxu0
    %v4666 = vpop.f32.mrb[0].mxu0
    %v4667 = vadd.f32 %v35, %v4666
    %v4668 = vpop.f32.mrb[0].mxu0
    %4669 = vmatprep.mubr.bf16.mxu0 0
    %4670 = vmatmul.mubr.bf16.gmra.mrb[0].mxu0 %v4615
    %v4671 = vpop.f32.mrb[0].mxu0
    %v4672 = vadd.f32 %v36, %v4671
    %v4673 = vpop.f32.mrb[0].mxu0
    %v4674 = vpop.f32.mrb[0].mxu0
    %v4675 = vadd.f32 %v37, %v4674
    %v4676 = vpop.f32.mrb[0].mxu0
    %4677 = vmatprep.mubr.bf16.mxu0 0
    %4678 = vmatmul.mubr.bf16.gmra.mrb[0].mxu0 %v4618
    %v4679 = vpop.f32.mrb[0].mxu0
    %v4680 = vadd.f32 %v38, %v4679
    %v4681 = vpop.f32.mrb[0].mxu0
    %v4682 = vpop.f32.mrb[0].mxu0
    %v4683 = vpop.f32.mrb[0].mxu0
    %4684 = vdwg.mxu0
    %v4685 = vsel %vm650, %v4664, -inf
    %4686 = vmax.xlane.f32.xlu0 %v4685
    %v4687 = vpop.xlane.xlu0 %4686
    %v4688 = vsel %vm650, %v4667, -inf
    %4689 = vmax.xlane.f32.xlu0 %v4688
    %v4690 = vpop.xlane.xlu0 %4689
    %v4691 = vsel %vm650, %v4672, -inf
    %4692 = vmax.xlane.f32.xlu0 %v4691
    %v4693 = vpop.xlane.xlu0 %4692
    %v4694 = vsel %vm650, %v4675, -inf
    %4695 = vmax.xlane.f32.xlu0 %v4694
    %v4696 = vpop.xlane.xlu0 %4695
    %v4697 = vsel %vm663, %v4680, -inf
    %4698 = vmax.xlane.f32.xlu0 %v4697
    %v4699 = vpop.xlane.xlu0 %4698
    %v4700 = vsub.f32 %v4664, %v4687
    %v4701 = vsub.f32 %v4667, %v4690
    %v4702 = vsub.f32 %v4672, %v4693
    %v4703 = vsub.f32 %v4675, %v4696
    %v4704 = vsub.f32 %v4680, %v4699
    %v4705 = vmul.f32 %v4700, 1.442695
    %v4706 = vpow.pop %v4705
    %v4707 = vmul.f32 %v4701, 1.442695
    %v4708 = vpow.pop %v4707
    %v4709 = vmul.f32 %v4702, 1.442695
    %v4710 = vpow.pop %v4709
    %v4711 = vmul.f32 %v4703, 1.442695
    %v4712 = vpow.pop %v4711
    %v4713 = vmul.f32 %v4704, 1.442695
    %v4714 = vpow.pop %v4713
    %v4715 = vsel %vm650, %v4706, 0.0
    %4716 = vadd.xlane.f32.xlu0 %v4715
    %v4717 = vpop.xlane.xlu0 %4716
    %v4718 = vsel %vm650, %v4708, 0.0
    %4719 = vadd.xlane.f32.xlu0 %v4718
    %v4720 = vpop.xlane.xlu0 %4719
    %v4721 = vsel %vm650, %v4710, 0.0
    %4722 = vadd.xlane.f32.xlu0 %v4721
    %v4723 = vpop.xlane.xlu0 %4722
    %v4724 = vsel %vm650, %v4712, 0.0
    %4725 = vadd.xlane.f32.xlu0 %v4724
    %v4726 = vpop.xlane.xlu0 %4725
    %v4727 = vsel %vm663, %v4714, 0.0
    %4728 = vadd.xlane.f32.xlu0 %v4727
    %v4729 = vpop.xlane.xlu0 %4728
    %v4730 = vrcp.pop %v4717
    %v4731 = vrcp.pop %v4720
    %v4732 = vrcp.pop %v4723
    %v4733 = vrcp.pop %v4726
    %v4734 = vrcp.pop %v4729
    %v4735 = vmul.f32 %v4706, %v4730
    %v4736 = vmul.f32 %v4708, %v4731
    %v4737 = vmul.f32 %v4710, %v4732
    %v4738 = vmul.f32 %v4712, %v4733
    %v4739 = vmul.f32 %v4714, %v4734
    %v4740 = vpack.c.bf16 %v4736, %v4735
    %v4741 = vpack.c.bf16 %v4738, %v4737
    %v4742 = vpack.c.bf16 %v4739, %v4739
    %4746 = vrot.lane.b32.xlu0 %v4390, 112
    %v4747 = vpop.permute.xlu0 %4746
    %4748 = vrot.lane.b32.xlu0 %v4391, 112
    %v4749 = vpop.permute.xlu0 %4748
    %4750 = vrot.lane.b32.xlu0 %v4392, 112
    %v4751 = vpop.permute.xlu0 %4750
    %v4755 = vsel %vm650, %v4740, 0
    %v4758 = vsel %vm650, %v4741, 0
    %v4761 = vsel %vm650, %v4742, 0
    %v4764 = vsel %vm141, %v4751, 0
    %4766 = vmatprep.subr.bf16.mxu0 0
    %4767 = vmatpush1.bf16.msra.mxu0 %v4747
    %4768 = vmatprep.subr.bf16.mxu0 0
    %4769 = vmatpush1.bf16.msra.mxu0 %v4749
    %4770 = vmatprep.subr.bf16.mxu0 0
    %4771 = vmatpush1.bf16.msra.mxu0 %v4764
    %4772 = vmatprep.subr.bf16.mxu0 0
    %4773 = vmatpush1.bf16.msra.mxu0 0
    %4774 = vmatprep.subr.bf16.mxu0 0
    %4775 = vmatpush1.bf16.msra.mxu0 0
    %4776 = vmatprep.subr.bf16.mxu0 0
    %4777 = vmatpush1.bf16.msra.mxu0 0
    %4778 = vmatprep.subr.bf16.mxu0 0
    %4779 = vmatpush1.bf16.msra.mxu0 0
    %4780 = vmatprep.subr.bf16.mxu0 0
    %4781 = vmatpush1.bf16.msra.mxu0 0
    %4782 = vmatprep.subr.bf16.mxu0 0
    %4783 = vmatpush1.bf16.msra.mxu0 0
    %4784 = vmatprep.subr.bf16.mxu0 0
    %4785 = vmatpush1.bf16.msra.mxu0 0
    %4786 = vmatprep.subr.bf16.mxu0 0
    %4787 = vmatpush1.bf16.msra.mxu0 0
    %4788 = vmatprep.subr.bf16.mxu0 0
    %4789 = vmatpush1.bf16.msra.mxu0 0
    %4790 = vmatprep.subr.bf16.mxu0 0
    %4791 = vmatpush1.bf16.msra.mxu0 0
    %4792 = vmatprep.subr.bf16.mxu0 0
    %4793 = vmatpush1.bf16.msra.mxu0 0
    %4794 = vmatprep.subr.bf16.mxu0 0
    %4795 = vmatpush1.bf16.msra.mxu0 0
    %4796 = vmatprep.subr.bf16.mxu0 0
    %4797 = vmatpush1.bf16.msra.mxu0 0
    %4798 = vmatprep.mubr.bf16.mxu0 0
    %4799 = vmatmul.mubr.bf16.gmra.mrb[0].mxu0 %v4755
    %v4800 = vpop.f32.mrb[0].mxu0
    %v4801 = vadd.f32 0.0, %v4800
    %v4802 = vpop.f32.mrb[0].mxu0
    %v4803 = vpop.f32.mrb[0].mxu0
    %v4804 = vadd.f32 0.0, %v4803
    %v4805 = vpop.f32.mrb[0].mxu0
    %4806 = vmatprep.mubr.bf16.mxu0 0
    %4807 = vmatmul.mubr.bf16.gmra.mrb[0].mxu0 %v4758
    %v4808 = vpop.f32.mrb[0].mxu0
    %v4809 = vadd.f32 0.0, %v4808
    %v4810 = vpop.f32.mrb[0].mxu0
    %v4811 = vpop.f32.mrb[0].mxu0
    %v4812 = vadd.f32 0.0, %v4811
    %v4813 = vpop.f32.mrb[0].mxu0
    %4814 = vmatprep.mubr.bf16.mxu0 0
    %4815 = vmatmul.mubr.bf16.gmra.mrb[0].mxu0 %v4761
    %v4816 = vpop.f32.mrb[0].mxu0
    %v4817 = vadd.f32 0.0, %v4816
    %v4818 = vpop.f32.mrb[0].mxu0
    %v4819 = vpop.f32.mrb[0].mxu0
    %v4820 = vpop.f32.mrb[0].mxu0
    %4821 = vdwg.mxu0
    %4822 = vrot.lane.b32.xlu0 %v4384, 96
    %v4823 = vpop.permute.xlu0 %4822
    %4824 = vrot.lane.b32.xlu0 %v4385, 96
    %v4825 = vpop.permute.xlu0 %4824
    %4826 = vrot.lane.b32.xlu0 %v4386, 96
    %v4827 = vpop.permute.xlu0 %4826
    %4828 = vrot.lane.b32.xlu0 %v4387, 96
    %v4829 = vpop.permute.xlu0 %4828
    %4830 = vrot.lane.b32.xlu0 %v4388, 96
    %v4831 = vpop.permute.xlu0 %4830
    %4832 = vrot.lane.b32.xlu0 %v4389, 96
    %v4833 = vpop.permute.xlu0 %4832
    %v4835 = vsel %vm575, %v4823, 0
    %v4838 = vsel %vm575, %v4825, 0
    %v4841 = vsel %vm575, %v4827, 0
    %v4844 = vsel %vm575, %v4829, 0
    %v4847 = vsel %vm575, %v4831, 0
    %v4850 = vsel %vm575, %v4833, 0
    %4852 = vmatprep.subr.bf16.mxu0 0
    %4853 = vmatpush1.bf16.xpose.msra.mxu0 %v4844
    %4854 = vmatprep.subr.bf16.mxu0 0
    %4855 = vmatpush1.bf16.xpose.msra.mxu0 %v4847
    %4856 = vmatprep.subr.bf16.mxu0 0
    %4857 = vmatpush1.bf16.xpose.msra.mxu0 %v4850
    %4858 = vmatprep.subr.bf16.mxu0 0
    %4859 = vmatpush1.bf16.xpose.msra.mxu0 0
    %4860 = vmatprep.subr.bf16.mxu0 0
    %4861 = vmatpush1.bf16.xpose.msra.mxu0 0
    %4862 = vmatprep.subr.bf16.mxu0 0
    %4863 = vmatpush1.bf16.xpose.msra.mxu0 0
    %4864 = vmatprep.subr.bf16.mxu0 0
    %4865 = vmatpush1.bf16.xpose.msra.mxu0 0
    %4866 = vmatprep.subr.bf16.mxu0 0
    %4867 = vmatpush1.bf16.xpose.msra.mxu0 0
    %4868 = vmatprep.subr.bf16.mxu0 0
    %4869 = vmatpush1.bf16.xpose.msra.mxu0 0
    %4870 = vmatprep.subr.bf16.mxu0 0
    %4871 = vmatpush1.bf16.xpose.msra.mxu0 0
    %4872 = vmatprep.subr.bf16.mxu0 0
    %4873 = vmatpush1.bf16.xpose.msra.mxu0 0
    %4874 = vmatprep.subr.bf16.mxu0 0
    %4875 = vmatpush1.bf16.xpose.msra.mxu0 0
    %4876 = vmatprep.subr.bf16.mxu0 0
    %4877 = vmatpush1.bf16.xpose.msra.mxu0 0
    %4878 = vmatprep.subr.bf16.mxu0 0
    %4879 = vmatpush1.bf16.xpose.msra.mxu0 0
    %4880 = vmatprep.subr.bf16.mxu0 0
    %4881 = vmatpush1.bf16.xpose.msra.mxu0 0
    %4882 = vmatprep.subr.bf16.mxu0 0
    %4883 = vmatpush1.bf16.xpose.msra.mxu0 0
    %4884 = vmatprep.mubr.bf16.mxu0 0
    %4885 = vmatmul.mubr.bf16.gmra.mrb[0].mxu0 %v4835
    %v4886 = vpop.f32.mrb[0].mxu0
    %v4887 = vadd.f32 %v34, %v4886
    %v4888 = vpop.f32.mrb[0].mxu0
    %v4889 = vpop.f32.mrb[0].mxu0
    %v4890 = vadd.f32 %v35, %v4889
    %v4891 = vpop.f32.mrb[0].mxu0
    %4892 = vmatprep.mubr.bf16.mxu0 0
    %4893 = vmatmul.mubr.bf16.gmra.mrb[0].mxu0 %v4838
    %v4894 = vpop.f32.mrb[0].mxu0
    %v4895 = vadd.f32 %v36, %v4894
    %v4896 = vpop.f32.mrb[0].mxu0
    %v4897 = vpop.f32.mrb[0].mxu0
    %v4898 = vadd.f32 %v37, %v4897
    %v4899 = vpop.f32.mrb[0].mxu0
    %4900 = vmatprep.mubr.bf16.mxu0 0
    %4901 = vmatmul.mubr.bf16.gmra.mrb[0].mxu0 %v4841
    %v4902 = vpop.f32.mrb[0].mxu0
    %v4903 = vadd.f32 %v38, %v4902
    %v4904 = vpop.f32.mrb[0].mxu0
    %v4905 = vpop.f32.mrb[0].mxu0
    %v4906 = vpop.f32.mrb[0].mxu0
    %4907 = vdwg.mxu0
    %v4908 = vsel %vm650, %v4887, -inf
    %4909 = vmax.xlane.f32.xlu0 %v4908
    %v4910 = vpop.xlane.xlu0 %4909
    %v4911 = vsel %vm650, %v4890, -inf
    %4912 = vmax.xlane.f32.xlu0 %v4911
    %v4913 = vpop.xlane.xlu0 %4912
    %v4914 = vsel %vm650, %v4895, -inf
    %4915 = vmax.xlane.f32.xlu0 %v4914
    %v4916 = vpop.xlane.xlu0 %4915
    %v4917 = vsel %vm650, %v4898, -inf
    %4918 = vmax.xlane.f32.xlu0 %v4917
    %v4919 = vpop.xlane.xlu0 %4918
    %v4920 = vsel %vm663, %v4903, -inf
    %4921 = vmax.xlane.f32.xlu0 %v4920
    %v4922 = vpop.xlane.xlu0 %4921
    %v4923 = vsub.f32 %v4887, %v4910
    %v4924 = vsub.f32 %v4890, %v4913
    %v4925 = vsub.f32 %v4895, %v4916
    %v4926 = vsub.f32 %v4898, %v4919
    %v4927 = vsub.f32 %v4903, %v4922
    %v4928 = vmul.f32 %v4923, 1.442695
    %v4929 = vpow.pop %v4928
    %v4930 = vmul.f32 %v4924, 1.442695
    %v4931 = vpow.pop %v4930
    %v4932 = vmul.f32 %v4925, 1.442695
    %v4933 = vpow.pop %v4932
    %v4934 = vmul.f32 %v4926, 1.442695
    %v4935 = vpow.pop %v4934
    %v4936 = vmul.f32 %v4927, 1.442695
    %v4937 = vpow.pop %v4936
    %v4938 = vsel %vm650, %v4929, 0.0
    %4939 = vadd.xlane.f32.xlu0 %v4938
    %v4940 = vpop.xlane.xlu0 %4939
    %v4941 = vsel %vm650, %v4931, 0.0
    %4942 = vadd.xlane.f32.xlu0 %v4941
    %v4943 = vpop.xlane.xlu0 %4942
    %v4944 = vsel %vm650, %v4933, 0.0
    %4945 = vadd.xlane.f32.xlu0 %v4944
    %v4946 = vpop.xlane.xlu0 %4945
    %v4947 = vsel %vm650, %v4935, 0.0
    %4948 = vadd.xlane.f32.xlu0 %v4947
    %v4949 = vpop.xlane.xlu0 %4948
    %v4950 = vsel %vm663, %v4937, 0.0
    %4951 = vadd.xlane.f32.xlu0 %v4950
    %v4952 = vpop.xlane.xlu0 %4951
    %v4953 = vrcp.pop %v4940
    %v4954 = vrcp.pop %v4943
    %v4955 = vrcp.pop %v4946
    %v4956 = vrcp.pop %v4949
    %v4957 = vrcp.pop %v4952
    %v4958 = vmul.f32 %v4929, %v4953
    %v4959 = vmul.f32 %v4931, %v4954
    %v4960 = vmul.f32 %v4933, %v4955
    %v4961 = vmul.f32 %v4935, %v4956
    %v4962 = vmul.f32 %v4937, %v4957
    %v4963 = vpack.c.bf16 %v4959, %v4958
    %v4964 = vpack.c.bf16 %v4961, %v4960
    %v4965 = vpack.c.bf16 %v4962, %v4962
    %4966 = vrot.lane.b32.xlu0 %v4390, 96
    %v4967 = vpop.permute.xlu0 %4966
    %4968 = vrot.lane.b32.xlu0 %v4391, 96
    %v4969 = vpop.permute.xlu0 %4968
    %4970 = vrot.lane.b32.xlu0 %v4392, 96
    %v4971 = vpop.permute.xlu0 %4970
    %v4975 = vsel %vm650, %v4963, 0
    %v4978 = vsel %vm650, %v4964, 0
    %v4981 = vsel %vm650, %v4965, 0
    %v4984 = vsel %vm141, %v4971, 0
    %4986 = vmatprep.subr.bf16.mxu0 0
    %4987 = vmatpush1.bf16.msra.mxu0 %v4967
    %4988 = vmatprep.subr.bf16.mxu0 0
    %4989 = vmatpush1.bf16.msra.mxu0 %v4969
    %4990 = vmatprep.subr.bf16.mxu0 0
    %4991 = vmatpush1.bf16.msra.mxu0 %v4984
    %4992 = vmatprep.subr.bf16.mxu0 0
    %4993 = vmatpush1.bf16.msra.mxu0 0
    %4994 = vmatprep.subr.bf16.mxu0 0
    %4995 = vmatpush1.bf16.msra.mxu0 0
    %4996 = vmatprep.subr.bf16.mxu0 0
    %4997 = vmatpush1.bf16.msra.mxu0 0
    %4998 = vmatprep.subr.bf16.mxu0 0
    %4999 = vmatpush1.bf16.msra.mxu0 0
    %5000 = vmatprep.subr.bf16.mxu0 0
    %5001 = vmatpush1.bf16.msra.mxu0 0
    %5002 = vmatprep.subr.bf16.mxu0 0
    %5003 = vmatpush1.bf16.msra.mxu0 0
    %5004 = vmatprep.subr.bf16.mxu0 0
    %5005 = vmatpush1.bf16.msra.mxu0 0
    %5006 = vmatprep.subr.bf16.mxu0 0
    %5007 = vmatpush1.bf16.msra.mxu0 0
    %5008 = vmatprep.subr.bf16.mxu0 0
    %5009 = vmatpush1.bf16.msra.mxu0 0
    %5010 = vmatprep.subr.bf16.mxu0 0
    %5011 = vmatpush1.bf16.msra.mxu0 0
    %5012 = vmatprep.subr.bf16.mxu0 0
    %5013 = vmatpush1.bf16.msra.mxu0 0
    %5014 = vmatprep.subr.bf16.mxu0 0
    %5015 = vmatpush1.bf16.msra.mxu0 0
    %5016 = vmatprep.subr.bf16.mxu0 0
    %5017 = vmatpush1.bf16.msra.mxu0 0
    %5018 = vmatprep.mubr.bf16.mxu0 0
    %5019 = vmatmul.mubr.bf16.gmra.mrb[0].mxu0 %v4975
    %v5020 = vpop.f32.mrb[0].mxu0
    %v5021 = vadd.f32 0.0, %v5020
    %v5022 = vpop.f32.mrb[0].mxu0
    %v5023 = vpop.f32.mrb[0].mxu0
    %v5024 = vadd.f32 0.0, %v5023
    %v5025 = vpop.f32.mrb[0].mxu0
    %5026 = vmatprep.mubr.bf16.mxu0 0
    %5027 = vmatmul.mubr.bf16.gmra.mrb[0].mxu0 %v4978
    %v5028 = vpop.f32.mrb[0].mxu0
    %v5029 = vadd.f32 0.0, %v5028
    %v5030 = vpop.f32.mrb[0].mxu0
    %v5031 = vpop.f32.mrb[0].mxu0
    %v5032 = vadd.f32 0.0, %v5031
    %v5033 = vpop.f32.mrb[0].mxu0
    %5034 = vmatprep.mubr.bf16.mxu0 0
    %5035 = vmatmul.mubr.bf16.gmra.mrb[0].mxu0 %v4981
    %v5036 = vpop.f32.mrb[0].mxu0
    %v5037 = vadd.f32 0.0, %v5036
    %v5038 = vpop.f32.mrb[0].mxu0
    %v5039 = vpop.f32.mrb[0].mxu0
    %v5040 = vpop.f32.mrb[0].mxu0
    %5041 = vdwg.mxu0
    %5042 = vrot.lane.b32.xlu0 %v4384, 80
    %v5043 = vpop.permute.xlu0 %5042
    %5044 = vrot.lane.b32.xlu0 %v4385, 80
    %v5045 = vpop.permute.xlu0 %5044
    %5046 = vrot.lane.b32.xlu0 %v4386, 80
    %v5047 = vpop.permute.xlu0 %5046
    %5048 = vrot.lane.b32.xlu0 %v4387, 80
    %v5049 = vpop.permute.xlu0 %5048
    %5050 = vrot.lane.b32.xlu0 %v4388, 80
    %v5051 = vpop.permute.xlu0 %5050
    %5052 = vrot.lane.b32.xlu0 %v4389, 80
    %v5053 = vpop.permute.xlu0 %5052
    %v5055 = vsel %vm575, %v5043, 0
    %v5058 = vsel %vm575, %v5045, 0
    %v5061 = vsel %vm575, %v5047, 0
    %v5064 = vsel %vm575, %v5049, 0
    %v5067 = vsel %vm575, %v5051, 0
    %v5070 = vsel %vm575, %v5053, 0
    %5072 = vmatprep.subr.bf16.mxu0 0
    %5073 = vmatpush1.bf16.xpose.msra.mxu0 %v5064
    %5074 = vmatprep.subr.bf16.mxu0 0
    %5075 = vmatpush1.bf16.xpose.msra.mxu0 %v5067
    %5076 = vmatprep.subr.bf16.mxu0 0
    %5077 = vmatpush1.bf16.xpose.msra.mxu0 %v5070
    %5078 = vmatprep.subr.bf16.mxu0 0
    %5079 = vmatpush1.bf16.xpose.msra.mxu0 0
    %5080 = vmatprep.subr.bf16.mxu0 0
    %5081 = vmatpush1.bf16.xpose.msra.mxu0 0
    %5082 = vmatprep.subr.bf16.mxu0 0
    %5083 = vmatpush1.bf16.xpose.msra.mxu0 0
    %5084 = vmatprep.subr.bf16.mxu0 0
    %5085 = vmatpush1.bf16.xpose.msra.mxu0 0
    %5086 = vmatprep.subr.bf16.mxu0 0
    %5087 = vmatpush1.bf16.xpose.msra.mxu0 0
    %5088 = vmatprep.subr.bf16.mxu0 0
    %5089 = vmatpush1.bf16.xpose.msra.mxu0 0
    %5090 = vmatprep.subr.bf16.mxu0 0
    %5091 = vmatpush1.bf16.xpose.msra.mxu0 0
    %5092 = vmatprep.subr.bf16.mxu0 0
    %5093 = vmatpush1.bf16.xpose.msra.mxu0 0
    %5094 = vmatprep.subr.bf16.mxu0 0
    %5095 = vmatpush1.bf16.xpose.msra.mxu0 0
    %5096 = vmatprep.subr.bf16.mxu0 0
    %5097 = vmatpush1.bf16.xpose.msra.mxu0 0
    %5098 = vmatprep.subr.bf16.mxu0 0
    %5099 = vmatpush1.bf16.xpose.msra.mxu0 0
    %5100 = vmatprep.subr.bf16.mxu0 0
    %5101 = vmatpush1.bf16.xpose.msra.mxu0 0
    %5102 = vmatprep.subr.bf16.mxu0 0
    %5103 = vmatpush1.bf16.xpose.msra.mxu0 0
    %5104 = vmatprep.mubr.bf16.mxu0 0
    %5105 = vmatmul.mubr.bf16.gmra.mrb[0].mxu0 %v5055
    %v5106 = vpop.f32.mrb[0].mxu0
    %v5107 = vadd.f32 %v34, %v5106
    %v5108 = vpop.f32.mrb[0].mxu0
    %v5109 = vpop.f32.mrb[0].mxu0
    %v5110 = vadd.f32 %v35, %v5109
    %v5111 = vpop.f32.mrb[0].mxu0
    %5112 = vmatprep.mubr.bf16.mxu0 0
    %5113 = vmatmul.mubr.bf16.gmra.mrb[0].mxu0 %v5058
    %v5114 = vpop.f32.mrb[0].mxu0
    %v5115 = vadd.f32 %v36, %v5114
    %v5116 = vpop.f32.mrb[0].mxu0
    %v5117 = vpop.f32.mrb[0].mxu0
    %v5118 = vadd.f32 %v37, %v5117
    %v5119 = vpop.f32.mrb[0].mxu0
    %5120 = vmatprep.mubr.bf16.mxu0 0
    %5121 = vmatmul.mubr.bf16.gmra.mrb[0].mxu0 %v5061
    %v5122 = vpop.f32.mrb[0].mxu0
    %v5123 = vadd.f32 %v38, %v5122
    %v5124 = vpop.f32.mrb[0].mxu0
    %v5125 = vpop.f32.mrb[0].mxu0
    %v5126 = vpop.f32.mrb[0].mxu0
    %5127 = vdwg.mxu0
    %v5128 = vsel %vm650, %v5107, -inf
    %5129 = vmax.xlane.f32.xlu0 %v5128
    %v5130 = vpop.xlane.xlu0 %5129
    %v5131 = vsel %vm650, %v5110, -inf
    %5132 = vmax.xlane.f32.xlu0 %v5131
    %v5133 = vpop.xlane.xlu0 %5132
    %v5134 = vsel %vm650, %v5115, -inf
    %5135 = vmax.xlane.f32.xlu0 %v5134
    %v5136 = vpop.xlane.xlu0 %5135
    %v5137 = vsel %vm650, %v5118, -inf
    %5138 = vmax.xlane.f32.xlu0 %v5137
    %v5139 = vpop.xlane.xlu0 %5138
    %v5140 = vsel %vm663, %v5123, -inf
    %5141 = vmax.xlane.f32.xlu0 %v5140
    %v5142 = vpop.xlane.xlu0 %5141
    %v5143 = vsub.f32 %v5107, %v5130
    %v5144 = vsub.f32 %v5110, %v5133
    %v5145 = vsub.f32 %v5115, %v5136
    %v5146 = vsub.f32 %v5118, %v5139
    %v5147 = vsub.f32 %v5123, %v5142
    %v5148 = vmul.f32 %v5143, 1.442695
    %v5149 = vpow.pop %v5148
    %v5150 = vmul.f32 %v5144, 1.442695
    %v5151 = vpow.pop %v5150
    %v5152 = vmul.f32 %v5145, 1.442695
    %v5153 = vpow.pop %v5152
    %v5154 = vmul.f32 %v5146, 1.442695
    %v5155 = vpow.pop %v5154
    %v5156 = vmul.f32 %v5147, 1.442695
    %v5157 = vpow.pop %v5156
    %v5158 = vsel %vm650, %v5149, 0.0
    %5159 = vadd.xlane.f32.xlu0 %v5158
    %v5160 = vpop.xlane.xlu0 %5159
    %v5161 = vsel %vm650, %v5151, 0.0
    %5162 = vadd.xlane.f32.xlu0 %v5161
    %v5163 = vpop.xlane.xlu0 %5162
    %v5164 = vsel %vm650, %v5153, 0.0
    %5165 = vadd.xlane.f32.xlu0 %v5164
    %v5166 = vpop.xlane.xlu0 %5165
    %v5167 = vsel %vm650, %v5155, 0.0
    %5168 = vadd.xlane.f32.xlu0 %v5167
    %v5169 = vpop.xlane.xlu0 %5168
    %v5170 = vsel %vm663, %v5157, 0.0
    %5171 = vadd.xlane.f32.xlu0 %v5170
    %v5172 = vpop.xlane.xlu0 %5171
    %v5173 = vrcp.pop %v5160
    %v5174 = vrcp.pop %v5163
    %v5175 = vrcp.pop %v5166
    %v5176 = vrcp.pop %v5169
    %v5177 = vrcp.pop %v5172
    %v5178 = vmul.f32 %v5149, %v5173
    %v5179 = vmul.f32 %v5151, %v5174
    %v5180 = vmul.f32 %v5153, %v5175
    %v5181 = vmul.f32 %v5155, %v5176
    %v5182 = vmul.f32 %v5157, %v5177
    %v5183 = vpack.c.bf16 %v5179, %v5178
    %v5184 = vpack.c.bf16 %v5181, %v5180
    %v5185 = vpack.c.bf16 %v5182, %v5182
    %5186 = vrot.lane.b32.xlu0 %v4390, 80
    %v5187 = vpop.permute.xlu0 %5186
    %5188 = vrot.lane.b32.xlu0 %v4391, 80
    %v5189 = vpop.permute.xlu0 %5188
    %5190 = vrot.lane.b32.xlu0 %v4392, 80
    %v5191 = vpop.permute.xlu0 %5190
    %v5195 = vsel %vm650, %v5183, 0
    %v5198 = vsel %vm650, %v5184, 0
    %v5201 = vsel %vm650, %v5185, 0
    %v5204 = vsel %vm141, %v5191, 0
    %5206 = vmatprep.subr.bf16.mxu0 0
    %5207 = vmatpush1.bf16.msra.mxu0 %v5187
    %5208 = vmatprep.subr.bf16.mxu0 0
    %5209 = vmatpush1.bf16.msra.mxu0 %v5189
    %5210 = vmatprep.subr.bf16.mxu0 0
    %5211 = vmatpush1.bf16.msra.mxu0 %v5204
    %5212 = vmatprep.subr.bf16.mxu0 0
    %5213 = vmatpush1.bf16.msra.mxu0 0
    %5214 = vmatprep.subr.bf16.mxu0 0
    %5215 = vmatpush1.bf16.msra.mxu0 0
    %5216 = vmatprep.subr.bf16.mxu0 0
    %5217 = vmatpush1.bf16.msra.mxu0 0
    %5218 = vmatprep.subr.bf16.mxu0 0
    %5219 = vmatpush1.bf16.msra.mxu0 0
    %5220 = vmatprep.subr.bf16.mxu0 0
    %5221 = vmatpush1.bf16.msra.mxu0 0
    %5222 = vmatprep.subr.bf16.mxu0 0
    %5223 = vmatpush1.bf16.msra.mxu0 0
    %5224 = vmatprep.subr.bf16.mxu0 0
    %5225 = vmatpush1.bf16.msra.mxu0 0
    %5226 = vmatprep.subr.bf16.mxu0 0
    %5227 = vmatpush1.bf16.msra.mxu0 0
    %5228 = vmatprep.subr.bf16.mxu0 0
    %5229 = vmatpush1.bf16.msra.mxu0 0
    %5230 = vmatprep.subr.bf16.mxu0 0
    %5231 = vmatpush1.bf16.msra.mxu0 0
    %5232 = vmatprep.subr.bf16.mxu0 0
    %5233 = vmatpush1.bf16.msra.mxu0 0
    %5234 = vmatprep.subr.bf16.mxu0 0
    %5235 = vmatpush1.bf16.msra.mxu0 0
    %5236 = vmatprep.subr.bf16.mxu0 0
    %5237 = vmatpush1.bf16.msra.mxu0 0
    %5238 = vmatprep.mubr.bf16.mxu0 0
    %5239 = vmatmul.mubr.bf16.gmra.mrb[0].mxu0 %v5195
    %v5240 = vpop.f32.mrb[0].mxu0
    %v5241 = vadd.f32 0.0, %v5240
    %v5242 = vpop.f32.mrb[0].mxu0
    %v5243 = vpop.f32.mrb[0].mxu0
    %v5244 = vadd.f32 0.0, %v5243
    %v5245 = vpop.f32.mrb[0].mxu0
    %5246 = vmatprep.mubr.bf16.mxu0 0
    %5247 = vmatmul.mubr.bf16.gmra.mrb[0].mxu0 %v5198
    %v5248 = vpop.f32.mrb[0].mxu0
    %v5249 = vadd.f32 0.0, %v5248
    %v5250 = vpop.f32.mrb[0].mxu0
    %v5251 = vpop.f32.mrb[0].mxu0
    %v5252 = vadd.f32 0.0, %v5251
    %v5253 = vpop.f32.mrb[0].mxu0
    %5254 = vmatprep.mubr.bf16.mxu0 0
    %5255 = vmatmul.mubr.bf16.gmra.mrb[0].mxu0 %v5201
    %v5256 = vpop.f32.mrb[0].mxu0
    %v5257 = vadd.f32 0.0, %v5256
    %v5258 = vpop.f32.mrb[0].mxu0
    %v5259 = vpop.f32.mrb[0].mxu0
    %v5260 = vpop.f32.mrb[0].mxu0
    %5261 = vdwg.mxu0
    %5262 = vrot.lane.b32.xlu0 %v4384, 64
    %v5263 = vpop.permute.xlu0 %5262
    %5264 = vrot.lane.b32.xlu0 %v4385, 64
    %v5265 = vpop.permute.xlu0 %5264
    %5266 = vrot.lane.b32.xlu0 %v4386, 64
    %v5267 = vpop.permute.xlu0 %5266
    %5268 = vrot.lane.b32.xlu0 %v4387, 64
    %v5269 = vpop.permute.xlu0 %5268
    %5270 = vrot.lane.b32.xlu0 %v4388, 64
    %v5271 = vpop.permute.xlu0 %5270
    %5272 = vrot.lane.b32.xlu0 %v4389, 64
    %v5273 = vpop.permute.xlu0 %5272
    %v5275 = vsel %vm575, %v5263, 0
    %v5278 = vsel %vm575, %v5265, 0
    %v5281 = vsel %vm575, %v5267, 0
    %v5284 = vsel %vm575, %v5269, 0
    %v5287 = vsel %vm575, %v5271, 0
    %v5290 = vsel %vm575, %v5273, 0
    %5292 = vmatprep.subr.bf16.mxu0 0
    %5293 = vmatpush1.bf16.xpose.msra.mxu0 %v5284
    %5294 = vmatprep.subr.bf16.mxu0 0
    %5295 = vmatpush1.bf16.xpose.msra.mxu0 %v5287
    %5296 = vmatprep.subr.bf16.mxu0 0
    %5297 = vmatpush1.bf16.xpose.msra.mxu0 %v5290
    %5298 = vmatprep.subr.bf16.mxu0 0
    %5299 = vmatpush1.bf16.xpose.msra.mxu0 0
    %5300 = vmatprep.subr.bf16.mxu0 0
    %5301 = vmatpush1.bf16.xpose.msra.mxu0 0
    %5302 = vmatprep.subr.bf16.mxu0 0
    %5303 = vmatpush1.bf16.xpose.msra.mxu0 0
    %5304 = vmatprep.subr.bf16.mxu0 0
    %5305 = vmatpush1.bf16.xpose.msra.mxu0 0
    %5306 = vmatprep.subr.bf16.mxu0 0
    %5307 = vmatpush1.bf16.xpose.msra.mxu0 0
    %5308 = vmatprep.subr.bf16.mxu0 0
    %5309 = vmatpush1.bf16.xpose.msra.mxu0 0
    %5310 = vmatprep.subr.bf16.mxu0 0
    %5311 = vmatpush1.bf16.xpose.msra.mxu0 0
    %5312 = vmatprep.subr.bf16.mxu0 0
    %5313 = vmatpush1.bf16.xpose.msra.mxu0 0
    %5314 = vmatprep.subr.bf16.mxu0 0
    %5315 = vmatpush1.bf16.xpose.msra.mxu0 0
    %5316 = vmatprep.subr.bf16.mxu0 0
    %5317 = vmatpush1.bf16.xpose.msra.mxu0 0
    %5318 = vmatprep.subr.bf16.mxu0 0
    %5319 = vmatpush1.bf16.xpose.msra.mxu0 0
    %5320 = vmatprep.subr.bf16.mxu0 0
    %5321 = vmatpush1.bf16.xpose.msra.mxu0 0
    %5322 = vmatprep.subr.bf16.mxu0 0
    %5323 = vmatpush1.bf16.xpose.msra.mxu0 0
    %5324 = vmatprep.mubr.bf16.mxu0 0
    %5325 = vmatmul.mubr.bf16.gmra.mrb[0].mxu0 %v5275
    %v5326 = vpop.f32.mrb[0].mxu0
    %v5327 = vadd.f32 %v34, %v5326
    %v5328 = vpop.f32.mrb[0].mxu0
    %v5329 = vpop.f32.mrb[0].mxu0
    %v5330 = vadd.f32 %v35, %v5329
    %v5331 = vpop.f32.mrb[0].mxu0
    %5332 = vmatprep.mubr.bf16.mxu0 0
    %5333 = vmatmul.mubr.bf16.gmra.mrb[0].mxu0 %v5278
    %v5334 = vpop.f32.mrb[0].mxu0
    %v5335 = vadd.f32 %v36, %v5334
    %v5336 = vpop.f32.mrb[0].mxu0
    %v5337 = vpop.f32.mrb[0].mxu0
    %v5338 = vadd.f32 %v37, %v5337
    %v5339 = vpop.f32.mrb[0].mxu0
    %5340 = vmatprep.mubr.bf16.mxu0 0
    %5341 = vmatmul.mubr.bf16.gmra.mrb[0].mxu0 %v5281
    %v5342 = vpop.f32.mrb[0].mxu0
    %v5343 = vadd.f32 %v38, %v5342
    %v5344 = vpop.f32.mrb[0].mxu0
    %v5345 = vpop.f32.mrb[0].mxu0
    %v5346 = vpop.f32.mrb[0].mxu0
    %5347 = vdwg.mxu0
    %v5348 = vsel %vm650, %v5327, -inf
    %5349 = vmax.xlane.f32.xlu0 %v5348
    %v5350 = vpop.xlane.xlu0 %5349
    %v5351 = vsel %vm650, %v5330, -inf
    %5352 = vmax.xlane.f32.xlu0 %v5351
    %v5353 = vpop.xlane.xlu0 %5352
    %v5354 = vsel %vm650, %v5335, -inf
    %5355 = vmax.xlane.f32.xlu0 %v5354
    %v5356 = vpop.xlane.xlu0 %5355
    %v5357 = vsel %vm650, %v5338, -inf
    %5358 = vmax.xlane.f32.xlu0 %v5357
    %v5359 = vpop.xlane.xlu0 %5358
    %v5360 = vsel %vm663, %v5343, -inf
    %5361 = vmax.xlane.f32.xlu0 %v5360
    %v5362 = vpop.xlane.xlu0 %5361
    %v5363 = vsub.f32 %v5327, %v5350
    %v5364 = vsub.f32 %v5330, %v5353
    %v5365 = vsub.f32 %v5335, %v5356
    %v5366 = vsub.f32 %v5338, %v5359
    %v5367 = vsub.f32 %v5343, %v5362
    %v5368 = vmul.f32 %v5363, 1.442695
    %v5369 = vpow.pop %v5368
    %v5370 = vmul.f32 %v5364, 1.442695
    %v5371 = vpow.pop %v5370
    %v5372 = vmul.f32 %v5365, 1.442695
    %v5373 = vpow.pop %v5372
    %v5374 = vmul.f32 %v5366, 1.442695
    %v5375 = vpow.pop %v5374
    %v5376 = vmul.f32 %v5367, 1.442695
    %v5377 = vpow.pop %v5376
    %v5378 = vsel %vm650, %v5369, 0.0
    %5379 = vadd.xlane.f32.xlu0 %v5378
    %v5380 = vpop.xlane.xlu0 %5379
    %v5381 = vsel %vm650, %v5371, 0.0
    %5382 = vadd.xlane.f32.xlu0 %v5381
    %v5383 = vpop.xlane.xlu0 %5382
    %v5384 = vsel %vm650, %v5373, 0.0
    %5385 = vadd.xlane.f32.xlu0 %v5384
    %v5386 = vpop.xlane.xlu0 %5385
    %v5387 = vsel %vm650, %v5375, 0.0
    %5388 = vadd.xlane.f32.xlu0 %v5387
    %v5389 = vpop.xlane.xlu0 %5388
    %v5390 = vsel %vm663, %v5377, 0.0
    %5391 = vadd.xlane.f32.xlu0 %v5390
    %v5392 = vpop.xlane.xlu0 %5391
    %v5393 = vrcp.pop %v5380
    %v5394 = vrcp.pop %v5383
    %v5395 = vrcp.pop %v5386
    %v5396 = vrcp.pop %v5389
    %v5397 = vrcp.pop %v5392
    %v5398 = vmul.f32 %v5369, %v5393
    %v5399 = vmul.f32 %v5371, %v5394
    %v5400 = vmul.f32 %v5373, %v5395
    %v5401 = vmul.f32 %v5375, %v5396
    %v5402 = vmul.f32 %v5377, %v5397
    %v5403 = vpack.c.bf16 %v5399, %v5398
    %v5404 = vpack.c.bf16 %v5401, %v5400
    %v5405 = vpack.c.bf16 %v5402, %v5402
    %5406 = vrot.lane.b32.xlu0 %v4390, 64
    %v5407 = vpop.permute.xlu0 %5406
    %5408 = vrot.lane.b32.xlu0 %v4391, 64
    %v5409 = vpop.permute.xlu0 %5408
    %5410 = vrot.lane.b32.xlu0 %v4392, 64
    %v5411 = vpop.permute.xlu0 %5410
    %v5415 = vsel %vm650, %v5403, 0
    %v5418 = vsel %vm650, %v5404, 0
    %v5421 = vsel %vm650, %v5405, 0
    %v5424 = vsel %vm141, %v5411, 0
    %5426 = vmatprep.subr.bf16.mxu0 0
    %5427 = vmatpush1.bf16.msra.mxu0 %v5407
    %5428 = vmatprep.subr.bf16.mxu0 0
    %5429 = vmatpush1.bf16.msra.mxu0 %v5409
    %5430 = vmatprep.subr.bf16.mxu0 0
    %5431 = vmatpush1.bf16.msra.mxu0 %v5424
    %5432 = vmatprep.subr.bf16.mxu0 0
    %5433 = vmatpush1.bf16.msra.mxu0 0
    %5434 = vmatprep.subr.bf16.mxu0 0
    %5435 = vmatpush1.bf16.msra.mxu0 0
    %5436 = vmatprep.subr.bf16.mxu0 0
    %5437 = vmatpush1.bf16.msra.mxu0 0
    %5438 = vmatprep.subr.bf16.mxu0 0
    %5439 = vmatpush1.bf16.msra.mxu0 0
    %5440 = vmatprep.subr.bf16.mxu0 0
    %5441 = vmatpush1.bf16.msra.mxu0 0
    %5442 = vmatprep.subr.bf16.mxu0 0
    %5443 = vmatpush1.bf16.msra.mxu0 0
    %5444 = vmatprep.subr.bf16.mxu0 0
    %5445 = vmatpush1.bf16.msra.mxu0 0
    %5446 = vmatprep.subr.bf16.mxu0 0
    %5447 = vmatpush1.bf16.msra.mxu0 0
    %5448 = vmatprep.subr.bf16.mxu0 0
    %5449 = vmatpush1.bf16.msra.mxu0 0
    %5450 = vmatprep.subr.bf16.mxu0 0
    %5451 = vmatpush1.bf16.msra.mxu0 0
    %5452 = vmatprep.subr.bf16.mxu0 0
    %5453 = vmatpush1.bf16.msra.mxu0 0
    %5454 = vmatprep.subr.bf16.mxu0 0
    %5455 = vmatpush1.bf16.msra.mxu0 0
    %5456 = vmatprep.subr.bf16.mxu0 0
    %5457 = vmatpush1.bf16.msra.mxu0 0
    %5458 = vmatprep.mubr.bf16.mxu0 0
    %5459 = vmatmul.mubr.bf16.gmra.mrb[0].mxu0 %v5415
    %v5460 = vpop.f32.mrb[0].mxu0
    %v5461 = vadd.f32 0.0, %v5460
    %v5462 = vpop.f32.mrb[0].mxu0
    %v5463 = vpop.f32.mrb[0].mxu0
    %v5464 = vadd.f32 0.0, %v5463
    %v5465 = vpop.f32.mrb[0].mxu0
    %5466 = vmatprep.mubr.bf16.mxu0 0
    %5467 = vmatmul.mubr.bf16.gmra.mrb[0].mxu0 %v5418
    %v5468 = vpop.f32.mrb[0].mxu0
    %v5469 = vadd.f32 0.0, %v5468
    %v5470 = vpop.f32.mrb[0].mxu0
    %v5471 = vpop.f32.mrb[0].mxu0
    %v5472 = vadd.f32 0.0, %v5471
    %v5473 = vpop.f32.mrb[0].mxu0
    %5474 = vmatprep.mubr.bf16.mxu0 0
    %5475 = vmatmul.mubr.bf16.gmra.mrb[0].mxu0 %v5421
    %v5476 = vpop.f32.mrb[0].mxu0
    %v5477 = vadd.f32 0.0, %v5476
    %v5478 = vpop.f32.mrb[0].mxu0
    %v5479 = vpop.f32.mrb[0].mxu0
    %v5480 = vpop.f32.mrb[0].mxu0
    %5481 = vdwg.mxu0
    %5482 = vrot.lane.b32.xlu0 %v4384, 48
    %v5483 = vpop.permute.xlu0 %5482
    %5484 = vrot.lane.b32.xlu0 %v4385, 48
    %v5485 = vpop.permute.xlu0 %5484
    %5486 = vrot.lane.b32.xlu0 %v4386, 48
    %v5487 = vpop.permute.xlu0 %5486
    %5488 = vrot.lane.b32.xlu0 %v4387, 48
    %v5489 = vpop.permute.xlu0 %5488
    %5490 = vrot.lane.b32.xlu0 %v4388, 48
    %v5491 = vpop.permute.xlu0 %5490
    %5492 = vrot.lane.b32.xlu0 %v4389, 48
    %v5493 = vpop.permute.xlu0 %5492
    %v5495 = vsel %vm575, %v5483, 0
    %v5498 = vsel %vm575, %v5485, 0
    %v5501 = vsel %vm575, %v5487, 0
    %v5504 = vsel %vm575, %v5489, 0
    %v5507 = vsel %vm575, %v5491, 0
    %v5510 = vsel %vm575, %v5493, 0
    %5512 = vmatprep.subr.bf16.mxu0 0
    %5513 = vmatpush1.bf16.xpose.msra.mxu0 %v5504
    %5514 = vmatprep.subr.bf16.mxu0 0
    %5515 = vmatpush1.bf16.xpose.msra.mxu0 %v5507
    %5516 = vmatprep.subr.bf16.mxu0 0
    %5517 = vmatpush1.bf16.xpose.msra.mxu0 %v5510
    %5518 = vmatprep.subr.bf16.mxu0 0
    %5519 = vmatpush1.bf16.xpose.msra.mxu0 0
    %5520 = vmatprep.subr.bf16.mxu0 0
    %5521 = vmatpush1.bf16.xpose.msra.mxu0 0
    %5522 = vmatprep.subr.bf16.mxu0 0
    %5523 = vmatpush1.bf16.xpose.msra.mxu0 0
    %5524 = vmatprep.subr.bf16.mxu0 0
    %5525 = vmatpush1.bf16.xpose.msra.mxu0 0
    %5526 = vmatprep.subr.bf16.mxu0 0
    %5527 = vmatpush1.bf16.xpose.msra.mxu0 0
    %5528 = vmatprep.subr.bf16.mxu0 0
    %5529 = vmatpush1.bf16.xpose.msra.mxu0 0
    %5530 = vmatprep.subr.bf16.mxu0 0
    %5531 = vmatpush1.bf16.xpose.msra.mxu0 0
    %5532 = vmatprep.subr.bf16.mxu0 0
    %5533 = vmatpush1.bf16.xpose.msra.mxu0 0
    %5534 = vmatprep.subr.bf16.mxu0 0
    %5535 = vmatpush1.bf16.xpose.msra.mxu0 0
    %5536 = vmatprep.subr.bf16.mxu0 0
    %5537 = vmatpush1.bf16.xpose.msra.mxu0 0
    %5538 = vmatprep.subr.bf16.mxu0 0
    %5539 = vmatpush1.bf16.xpose.msra.mxu0 0
    %5540 = vmatprep.subr.bf16.mxu0 0
    %5541 = vmatpush1.bf16.xpose.msra.mxu0 0
    %5542 = vmatprep.subr.bf16.mxu0 0
    %5543 = vmatpush1.bf16.xpose.msra.mxu0 0
    %5544 = vmatprep.mubr.bf16.mxu0 0
    %5545 = vmatmul.mubr.bf16.gmra.mrb[0].mxu0 %v5495
    %v5546 = vpop.f32.mrb[0].mxu0
    %v5547 = vadd.f32 %v34, %v5546
    %v5548 = vpop.f32.mrb[0].mxu0
    %v5549 = vpop.f32.mrb[0].mxu0
    %v5550 = vadd.f32 %v35, %v5549
    %v5551 = vpop.f32.mrb[0].mxu0
    %5552 = vmatprep.mubr.bf16.mxu0 0
    %5553 = vmatmul.mubr.bf16.gmra.mrb[0].mxu0 %v5498
    %v5554 = vpop.f32.mrb[0].mxu0
    %v5555 = vadd.f32 %v36, %v5554
    %v5556 = vpop.f32.mrb[0].mxu0
    %v5557 = vpop.f32.mrb[0].mxu0
    %v5558 = vadd.f32 %v37, %v5557
    %v5559 = vpop.f32.mrb[0].mxu0
    %5560 = vmatprep.mubr.bf16.mxu0 0
    %5561 = vmatmul.mubr.bf16.gmra.mrb[0].mxu0 %v5501
    %v5562 = vpop.f32.mrb[0].mxu0
    %v5563 = vadd.f32 %v38, %v5562
    %v5564 = vpop.f32.mrb[0].mxu0
    %v5565 = vpop.f32.mrb[0].mxu0
    %v5566 = vpop.f32.mrb[0].mxu0
    %5567 = vdwg.mxu0
    %v5568 = vsel %vm650, %v5547, -inf
    %5569 = vmax.xlane.f32.xlu0 %v5568
    %v5570 = vpop.xlane.xlu0 %5569
    %v5571 = vsel %vm650, %v5550, -inf
    %5572 = vmax.xlane.f32.xlu0 %v5571
    %v5573 = vpop.xlane.xlu0 %5572
    %v5574 = vsel %vm650, %v5555, -inf
    %5575 = vmax.xlane.f32.xlu0 %v5574
    %v5576 = vpop.xlane.xlu0 %5575
    %v5577 = vsel %vm650, %v5558, -inf
    %5578 = vmax.xlane.f32.xlu0 %v5577
    %v5579 = vpop.xlane.xlu0 %5578
    %v5580 = vsel %vm663, %v5563, -inf
    %5581 = vmax.xlane.f32.xlu0 %v5580
    %v5582 = vpop.xlane.xlu0 %5581
    %v5583 = vsub.f32 %v5547, %v5570
    %v5584 = vsub.f32 %v5550, %v5573
    %v5585 = vsub.f32 %v5555, %v5576
    %v5586 = vsub.f32 %v5558, %v5579
    %v5587 = vsub.f32 %v5563, %v5582
    %v5588 = vmul.f32 %v5583, 1.442695
    %v5589 = vpow.pop %v5588
    %v5590 = vmul.f32 %v5584, 1.442695
    %v5591 = vpow.pop %v5590
    %v5592 = vmul.f32 %v5585, 1.442695
    %v5593 = vpow.pop %v5592
    %v5594 = vmul.f32 %v5586, 1.442695
    %v5595 = vpow.pop %v5594
    %v5596 = vmul.f32 %v5587, 1.442695
    %v5597 = vpow.pop %v5596
    %v5598 = vsel %vm650, %v5589, 0.0
    %5599 = vadd.xlane.f32.xlu0 %v5598
    %v5600 = vpop.xlane.xlu0 %5599
    %v5601 = vsel %vm650, %v5591, 0.0
    %5602 = vadd.xlane.f32.xlu0 %v5601
    %v5603 = vpop.xlane.xlu0 %5602
    %v5604 = vsel %vm650, %v5593, 0.0
    %5605 = vadd.xlane.f32.xlu0 %v5604
    %v5606 = vpop.xlane.xlu0 %5605
    %v5607 = vsel %vm650, %v5595, 0.0
    %5608 = vadd.xlane.f32.xlu0 %v5607
    %v5609 = vpop.xlane.xlu0 %5608
    %v5610 = vsel %vm663, %v5597, 0.0
    %5611 = vadd.xlane.f32.xlu0 %v5610
    %v5612 = vpop.xlane.xlu0 %5611
    %v5613 = vrcp.pop %v5600
    %v5614 = vrcp.pop %v5603
    %v5615 = vrcp.pop %v5606
    %v5616 = vrcp.pop %v5609
    %v5617 = vrcp.pop %v5612
    %v5618 = vmul.f32 %v5589, %v5613
    %v5619 = vmul.f32 %v5591, %v5614
    %v5620 = vmul.f32 %v5593, %v5615
    %v5621 = vmul.f32 %v5595, %v5616
    %v5622 = vmul.f32 %v5597, %v5617
    %v5623 = vpack.c.bf16 %v5619, %v5618
    %v5624 = vpack.c.bf16 %v5621, %v5620
    %v5625 = vpack.c.bf16 %v5622, %v5622
    %5626 = vrot.lane.b32.xlu0 %v4390, 48
    %v5627 = vpop.permute.xlu0 %5626
    %5628 = vrot.lane.b32.xlu0 %v4391, 48
    %v5629 = vpop.permute.xlu0 %5628
    %5630 = vrot.lane.b32.xlu0 %v4392, 48
    %v5631 = vpop.permute.xlu0 %5630
    %v5635 = vsel %vm650, %v5623, 0
    %v5638 = vsel %vm650, %v5624, 0
    %v5641 = vsel %vm650, %v5625, 0
    %v5644 = vsel %vm141, %v5631, 0
    %5646 = vmatprep.subr.bf16.mxu0 0
    %5647 = vmatpush1.bf16.msra.mxu0 %v5627
    %5648 = vmatprep.subr.bf16.mxu0 0
    %5649 = vmatpush1.bf16.msra.mxu0 %v5629
    %5650 = vmatprep.subr.bf16.mxu0 0
    %5651 = vmatpush1.bf16.msra.mxu0 %v5644
    %5652 = vmatprep.subr.bf16.mxu0 0
    %5653 = vmatpush1.bf16.msra.mxu0 0
    %5654 = vmatprep.subr.bf16.mxu0 0
    %5655 = vmatpush1.bf16.msra.mxu0 0
    %5656 = vmatprep.subr.bf16.mxu0 0
    %5657 = vmatpush1.bf16.msra.mxu0 0
    %5658 = vmatprep.subr.bf16.mxu0 0
    %5659 = vmatpush1.bf16.msra.mxu0 0
    %5660 = vmatprep.subr.bf16.mxu0 0
    %5661 = vmatpush1.bf16.msra.mxu0 0
    %5662 = vmatprep.subr.bf16.mxu0 0
    %5663 = vmatpush1.bf16.msra.mxu0 0
    %5664 = vmatprep.subr.bf16.mxu0 0
    %5665 = vmatpush1.bf16.msra.mxu0 0
    %5666 = vmatprep.subr.bf16.mxu0 0
    %5667 = vmatpush1.bf16.msra.mxu0 0
    %5668 = vmatprep.subr.bf16.mxu0 0
    %5669 = vmatpush1.bf16.msra.mxu0 0
    %5670 = vmatprep.subr.bf16.mxu0 0
    %5671 = vmatpush1.bf16.msra.mxu0 0
    %5672 = vmatprep.subr.bf16.mxu0 0
    %5673 = vmatpush1.bf16.msra.mxu0 0
    %5674 = vmatprep.subr.bf16.mxu0 0
    %5675 = vmatpush1.bf16.msra.mxu0 0
    %5676 = vmatprep.subr.bf16.mxu0 0
    %5677 = vmatpush1.bf16.msra.mxu0 0
    %5678 = vmatprep.mubr.bf16.mxu0 0
    %5679 = vmatmul.mubr.bf16.gmra.mrb[0].mxu0 %v5635
    %v5680 = vpop.f32.mrb[0].mxu0
    %v5681 = vadd.f32 0.0, %v5680
    %v5682 = vpop.f32.mrb[0].mxu0
    %v5683 = vpop.f32.mrb[0].mxu0
    %v5684 = vadd.f32 0.0, %v5683
    %v5685 = vpop.f32.mrb[0].mxu0
    %5686 = vmatprep.mubr.bf16.mxu0 0
    %5687 = vmatmul.mubr.bf16.gmra.mrb[0].mxu0 %v5638
    %v5688 = vpop.f32.mrb[0].mxu0
    %v5689 = vadd.f32 0.0, %v5688
    %v5690 = vpop.f32.mrb[0].mxu0
    %v5691 = vpop.f32.mrb[0].mxu0
    %v5692 = vadd.f32 0.0, %v5691
    %v5693 = vpop.f32.mrb[0].mxu0
    %5694 = vmatprep.mubr.bf16.mxu0 0
    %5695 = vmatmul.mubr.bf16.gmra.mrb[0].mxu0 %v5641
    %v5696 = vpop.f32.mrb[0].mxu0
    %v5697 = vadd.f32 0.0, %v5696
    %v5698 = vpop.f32.mrb[0].mxu0
    %v5699 = vpop.f32.mrb[0].mxu0
    %v5700 = vpop.f32.mrb[0].mxu0
    %5701 = vdwg.mxu0
    %5702 = vrot.lane.b32.xlu0 %v4384, 32
    %v5703 = vpop.permute.xlu0 %5702
    %5704 = vrot.lane.b32.xlu0 %v4385, 32
    %v5705 = vpop.permute.xlu0 %5704
    %5706 = vrot.lane.b32.xlu0 %v4386, 32
    %v5707 = vpop.permute.xlu0 %5706
    %5708 = vrot.lane.b32.xlu0 %v4387, 32
    %v5709 = vpop.permute.xlu0 %5708
    %5710 = vrot.lane.b32.xlu0 %v4388, 32
    %v5711 = vpop.permute.xlu0 %5710
    %5712 = vrot.lane.b32.xlu0 %v4389, 32
    %v5713 = vpop.permute.xlu0 %5712
    %v5715 = vsel %vm575, %v5703, 0
    %v5718 = vsel %vm575, %v5705, 0
    %v5721 = vsel %vm575, %v5707, 0
    %v5724 = vsel %vm575, %v5709, 0
    %v5727 = vsel %vm575, %v5711, 0
    %v5730 = vsel %vm575, %v5713, 0
    %5732 = vmatprep.subr.bf16.mxu0 0
    %5733 = vmatpush1.bf16.xpose.msra.mxu0 %v5724
    %5734 = vmatprep.subr.bf16.mxu0 0
    %5735 = vmatpush1.bf16.xpose.msra.mxu0 %v5727
    %5736 = vmatprep.subr.bf16.mxu0 0
    %5737 = vmatpush1.bf16.xpose.msra.mxu0 %v5730
    %5738 = vmatprep.subr.bf16.mxu0 0
    %5739 = vmatpush1.bf16.xpose.msra.mxu0 0
    %5740 = vmatprep.subr.bf16.mxu0 0
    %5741 = vmatpush1.bf16.xpose.msra.mxu0 0
    %5742 = vmatprep.subr.bf16.mxu0 0
    %5743 = vmatpush1.bf16.xpose.msra.mxu0 0
    %5744 = vmatprep.subr.bf16.mxu0 0
    %5745 = vmatpush1.bf16.xpose.msra.mxu0 0
    %5746 = vmatprep.subr.bf16.mxu0 0
    %5747 = vmatpush1.bf16.xpose.msra.mxu0 0
    %5748 = vmatprep.subr.bf16.mxu0 0
    %5749 = vmatpush1.bf16.xpose.msra.mxu0 0
    %5750 = vmatprep.subr.bf16.mxu0 0
    %5751 = vmatpush1.bf16.xpose.msra.mxu0 0
    %5752 = vmatprep.subr.bf16.mxu0 0
    %5753 = vmatpush1.bf16.xpose.msra.mxu0 0
    %5754 = vmatprep.subr.bf16.mxu0 0
    %5755 = vmatpush1.bf16.xpose.msra.mxu0 0
    %5756 = vmatprep.subr.bf16.mxu0 0
    %5757 = vmatpush1.bf16.xpose.msra.mxu0 0
    %5758 = vmatprep.subr.bf16.mxu0 0
    %5759 = vmatpush1.bf16.xpose.msra.mxu0 0
    %5760 = vmatprep.subr.bf16.mxu0 0
    %5761 = vmatpush1.bf16.xpose.msra.mxu0 0
    %5762 = vmatprep.subr.bf16.mxu0 0
    %5763 = vmatpush1.bf16.xpose.msra.mxu0 0
    %5764 = vmatprep.mubr.bf16.mxu0 0
    %5765 = vmatmul.mubr.bf16.gmra.mrb[0].mxu0 %v5715
    %v5766 = vpop.f32.mrb[0].mxu0
    %v5767 = vadd.f32 %v34, %v5766
    %v5768 = vpop.f32.mrb[0].mxu0
    %v5769 = vpop.f32.mrb[0].mxu0
    %v5770 = vadd.f32 %v35, %v5769
    %v5771 = vpop.f32.mrb[0].mxu0
    %5772 = vmatprep.mubr.bf16.mxu0 0
    %5773 = vmatmul.mubr.bf16.gmra.mrb[0].mxu0 %v5718
    %v5774 = vpop.f32.mrb[0].mxu0
    %v5775 = vadd.f32 %v36, %v5774
    %v5776 = vpop.f32.mrb[0].mxu0
    %v5777 = vpop.f32.mrb[0].mxu0
    %v5778 = vadd.f32 %v37, %v5777
    %v5779 = vpop.f32.mrb[0].mxu0
    %5780 = vmatprep.mubr.bf16.mxu0 0
    %5781 = vmatmul.mubr.bf16.gmra.mrb[0].mxu0 %v5721
    %v5782 = vpop.f32.mrb[0].mxu0
    %v5783 = vadd.f32 %v38, %v5782
    %v5784 = vpop.f32.mrb[0].mxu0
    %v5785 = vpop.f32.mrb[0].mxu0
    %v5786 = vpop.f32.mrb[0].mxu0
    %5787 = vdwg.mxu0
    %v5788 = vsel %vm650, %v5767, -inf
    %5789 = vmax.xlane.f32.xlu0 %v5788
    %v5790 = vpop.xlane.xlu0 %5789
    %v5791 = vsel %vm650, %v5770, -inf
    %5792 = vmax.xlane.f32.xlu0 %v5791
    %v5793 = vpop.xlane.xlu0 %5792
    %v5794 = vsel %vm650, %v5775, -inf
    %5795 = vmax.xlane.f32.xlu0 %v5794
    %v5796 = vpop.xlane.xlu0 %5795
    %v5797 = vsel %vm650, %v5778, -inf
    %5798 = vmax.xlane.f32.xlu0 %v5797
    %v5799 = vpop.xlane.xlu0 %5798
    %v5800 = vsel %vm663, %v5783, -inf
    %5801 = vmax.xlane.f32.xlu0 %v5800
    %v5802 = vpop.xlane.xlu0 %5801
    %v5803 = vsub.f32 %v5767, %v5790
    %v5804 = vsub.f32 %v5770, %v5793
    %v5805 = vsub.f32 %v5775, %v5796
    %v5806 = vsub.f32 %v5778, %v5799
    %v5807 = vsub.f32 %v5783, %v5802
    %v5808 = vmul.f32 %v5803, 1.442695
    %v5809 = vpow.pop %v5808
    %v5810 = vmul.f32 %v5804, 1.442695
    %v5811 = vpow.pop %v5810
    %v5812 = vmul.f32 %v5805, 1.442695
    %v5813 = vpow.pop %v5812
    %v5814 = vmul.f32 %v5806, 1.442695
    %v5815 = vpow.pop %v5814
    %v5816 = vmul.f32 %v5807, 1.442695
    %v5817 = vpow.pop %v5816
    %v5818 = vsel %vm650, %v5809, 0.0
    %5819 = vadd.xlane.f32.xlu0 %v5818
    %v5820 = vpop.xlane.xlu0 %5819
    %v5821 = vsel %vm650, %v5811, 0.0
    %5822 = vadd.xlane.f32.xlu0 %v5821
    %v5823 = vpop.xlane.xlu0 %5822
    %v5824 = vsel %vm650, %v5813, 0.0
    %5825 = vadd.xlane.f32.xlu0 %v5824
    %v5826 = vpop.xlane.xlu0 %5825
    %v5827 = vsel %vm650, %v5815, 0.0
    %5828 = vadd.xlane.f32.xlu0 %v5827
    %v5829 = vpop.xlane.xlu0 %5828
    %v5830 = vsel %vm663, %v5817, 0.0
    %5831 = vadd.xlane.f32.xlu0 %v5830
    %v5832 = vpop.xlane.xlu0 %5831
    %v5833 = vrcp.pop %v5820
    %v5834 = vrcp.pop %v5823
    %v5835 = vrcp.pop %v5826
    %v5836 = vrcp.pop %v5829
    %v5837 = vrcp.pop %v5832
    %v5838 = vmul.f32 %v5809, %v5833
    %v5839 = vmul.f32 %v5811, %v5834
    %v5840 = vmul.f32 %v5813, %v5835
    %v5841 = vmul.f32 %v5815, %v5836
    %v5842 = vmul.f32 %v5817, %v5837
    %v5843 = vpack.c.bf16 %v5839, %v5838
    %v5844 = vpack.c.bf16 %v5841, %v5840
    %v5845 = vpack.c.bf16 %v5842, %v5842
    %5846 = vrot.lane.b32.xlu0 %v4390, 32
    %v5847 = vpop.permute.xlu0 %5846
    %5848 = vrot.lane.b32.xlu0 %v4391, 32
    %v5849 = vpop.permute.xlu0 %5848
    %5850 = vrot.lane.b32.xlu0 %v4392, 32
    %v5851 = vpop.permute.xlu0 %5850
    %v5855 = vsel %vm650, %v5843, 0
    %v5858 = vsel %vm650, %v5844, 0
    %v5861 = vsel %vm650, %v5845, 0
    %v5864 = vsel %vm141, %v5851, 0
    %5866 = vmatprep.subr.bf16.mxu0 0
    %5867 = vmatpush1.bf16.msra.mxu0 %v5847
    %5868 = vmatprep.subr.bf16.mxu0 0
    %5869 = vmatpush1.bf16.msra.mxu0 %v5849
    %5870 = vmatprep.subr.bf16.mxu0 0
    %5871 = vmatpush1.bf16.msra.mxu0 %v5864
    %5872 = vmatprep.subr.bf16.mxu0 0
    %5873 = vmatpush1.bf16.msra.mxu0 0
    %5874 = vmatprep.subr.bf16.mxu0 0
    %5875 = vmatpush1.bf16.msra.mxu0 0
    %5876 = vmatprep.subr.bf16.mxu0 0
    %5877 = vmatpush1.bf16.msra.mxu0 0
    %5878 = vmatprep.subr.bf16.mxu0 0
    %5879 = vmatpush1.bf16.msra.mxu0 0
    %5880 = vmatprep.subr.bf16.mxu0 0
    %5881 = vmatpush1.bf16.msra.mxu0 0
    %5882 = vmatprep.subr.bf16.mxu0 0
    %5883 = vmatpush1.bf16.msra.mxu0 0
    %5884 = vmatprep.subr.bf16.mxu0 0
    %5885 = vmatpush1.bf16.msra.mxu0 0
    %5886 = vmatprep.subr.bf16.mxu0 0
    %5887 = vmatpush1.bf16.msra.mxu0 0
    %5888 = vmatprep.subr.bf16.mxu0 0
    %5889 = vmatpush1.bf16.msra.mxu0 0
    %5890 = vmatprep.subr.bf16.mxu0 0
    %5891 = vmatpush1.bf16.msra.mxu0 0
    %5892 = vmatprep.subr.bf16.mxu0 0
    %5893 = vmatpush1.bf16.msra.mxu0 0
    %5894 = vmatprep.subr.bf16.mxu0 0
    %5895 = vmatpush1.bf16.msra.mxu0 0
    %5896 = vmatprep.subr.bf16.mxu0 0
    %5897 = vmatpush1.bf16.msra.mxu0 0
    %5898 = vmatprep.mubr.bf16.mxu0 0
    %5899 = vmatmul.mubr.bf16.gmra.mrb[0].mxu0 %v5855
    %v5900 = vpop.f32.mrb[0].mxu0
    %v5901 = vadd.f32 0.0, %v5900
    %v5902 = vpop.f32.mrb[0].mxu0
    %v5903 = vpop.f32.mrb[0].mxu0
    %v5904 = vadd.f32 0.0, %v5903
    %v5905 = vpop.f32.mrb[0].mxu0
    %5906 = vmatprep.mubr.bf16.mxu0 0
    %5907 = vmatmul.mubr.bf16.gmra.mrb[0].mxu0 %v5858
    %v5908 = vpop.f32.mrb[0].mxu0
    %v5909 = vadd.f32 0.0, %v5908
    %v5910 = vpop.f32.mrb[0].mxu0
    %v5911 = vpop.f32.mrb[0].mxu0
    %v5912 = vadd.f32 0.0, %v5911
    %v5913 = vpop.f32.mrb[0].mxu0
    %5914 = vmatprep.mubr.bf16.mxu0 0
    %5915 = vmatmul.mubr.bf16.gmra.mrb[0].mxu0 %v5861
    %v5916 = vpop.f32.mrb[0].mxu0
    %v5917 = vadd.f32 0.0, %v5916
    %v5918 = vpop.f32.mrb[0].mxu0
    %v5919 = vpop.f32.mrb[0].mxu0
    %v5920 = vpop.f32.mrb[0].mxu0
    %5921 = vdwg.mxu0
    %5922 = vrot.lane.b32.xlu0 %v4384, 16
    %v5923 = vpop.permute.xlu0 %5922
    %5924 = vrot.lane.b32.xlu0 %v4385, 16
    %v5925 = vpop.permute.xlu0 %5924
    %5926 = vrot.lane.b32.xlu0 %v4386, 16
    %v5927 = vpop.permute.xlu0 %5926
    %5928 = vrot.lane.b32.xlu0 %v4387, 16
    %v5929 = vpop.permute.xlu0 %5928
    %5930 = vrot.lane.b32.xlu0 %v4388, 16
    %v5931 = vpop.permute.xlu0 %5930
    %5932 = vrot.lane.b32.xlu0 %v4389, 16
    %v5933 = vpop.permute.xlu0 %5932
    %v5935 = vsel %vm575, %v5923, 0
    %v5938 = vsel %vm575, %v5925, 0
    %v5941 = vsel %vm575, %v5927, 0
    %v5944 = vsel %vm575, %v5929, 0
    %v5947 = vsel %vm575, %v5931, 0
    %v5950 = vsel %vm575, %v5933, 0
    %5952 = vmatprep.subr.bf16.mxu0 0
    %5953 = vmatpush1.bf16.xpose.msra.mxu0 %v5944
    %5954 = vmatprep.subr.bf16.mxu0 0
    %5955 = vmatpush1.bf16.xpose.msra.mxu0 %v5947
    %5956 = vmatprep.subr.bf16.mxu0 0
    %5957 = vmatpush1.bf16.xpose.msra.mxu0 %v5950
    %5958 = vmatprep.subr.bf16.mxu0 0
    %5959 = vmatpush1.bf16.xpose.msra.mxu0 0
    %5960 = vmatprep.subr.bf16.mxu0 0
    %5961 = vmatpush1.bf16.xpose.msra.mxu0 0
    %5962 = vmatprep.subr.bf16.mxu0 0
    %5963 = vmatpush1.bf16.xpose.msra.mxu0 0
    %5964 = vmatprep.subr.bf16.mxu0 0
    %5965 = vmatpush1.bf16.xpose.msra.mxu0 0
    %5966 = vmatprep.subr.bf16.mxu0 0
    %5967 = vmatpush1.bf16.xpose.msra.mxu0 0
    %5968 = vmatprep.subr.bf16.mxu0 0
    %5969 = vmatpush1.bf16.xpose.msra.mxu0 0
    %5970 = vmatprep.subr.bf16.mxu0 0
    %5971 = vmatpush1.bf16.xpose.msra.mxu0 0
    %5972 = vmatprep.subr.bf16.mxu0 0
    %5973 = vmatpush1.bf16.xpose.msra.mxu0 0
    %5974 = vmatprep.subr.bf16.mxu0 0
    %5975 = vmatpush1.bf16.xpose.msra.mxu0 0
    %5976 = vmatprep.subr.bf16.mxu0 0
    %5977 = vmatpush1.bf16.xpose.msra.mxu0 0
    %5978 = vmatprep.subr.bf16.mxu0 0
    %5979 = vmatpush1.bf16.xpose.msra.mxu0 0
    %5980 = vmatprep.subr.bf16.mxu0 0
    %5981 = vmatpush1.bf16.xpose.msra.mxu0 0
    %5982 = vmatprep.subr.bf16.mxu0 0
    %5983 = vmatpush1.bf16.xpose.msra.mxu0 0
    %5984 = vmatprep.mubr.bf16.mxu0 0
    %5985 = vmatmul.mubr.bf16.gmra.mrb[0].mxu0 %v5935
    %v5986 = vpop.f32.mrb[0].mxu0
    %v5987 = vadd.f32 %v34, %v5986
    %v5988 = vpop.f32.mrb[0].mxu0
    %v5989 = vpop.f32.mrb[0].mxu0
    %v5990 = vadd.f32 %v35, %v5989
    %v5991 = vpop.f32.mrb[0].mxu0
    %5992 = vmatprep.mubr.bf16.mxu0 0
    %5993 = vmatmul.mubr.bf16.gmra.mrb[0].mxu0 %v5938
    %v5994 = vpop.f32.mrb[0].mxu0
    %v5995 = vadd.f32 %v36, %v5994
    %v5996 = vpop.f32.mrb[0].mxu0
    %v5997 = vpop.f32.mrb[0].mxu0
    %v5998 = vadd.f32 %v37, %v5997
    %v5999 = vpop.f32.mrb[0].mxu0
    %6000 = vmatprep.mubr.bf16.mxu0 0
    %6001 = vmatmul.mubr.bf16.gmra.mrb[0].mxu0 %v5941
    %v6002 = vpop.f32.mrb[0].mxu0
    %v6003 = vadd.f32 %v38, %v6002
    %v6004 = vpop.f32.mrb[0].mxu0
    %v6005 = vpop.f32.mrb[0].mxu0
    %v6006 = vpop.f32.mrb[0].mxu0
    %6007 = vdwg.mxu0
    %v6008 = vsel %vm650, %v5987, -inf
    %6009 = vmax.xlane.f32.xlu0 %v6008
    %v6010 = vpop.xlane.xlu0 %6009
    %v6011 = vsel %vm650, %v5990, -inf
    %6012 = vmax.xlane.f32.xlu0 %v6011
    %v6013 = vpop.xlane.xlu0 %6012
    %v6014 = vsel %vm650, %v5995, -inf
    %6015 = vmax.xlane.f32.xlu0 %v6014
    %v6016 = vpop.xlane.xlu0 %6015
    %v6017 = vsel %vm650, %v5998, -inf
    %6018 = vmax.xlane.f32.xlu0 %v6017
    %v6019 = vpop.xlane.xlu0 %6018
    %v6020 = vsel %vm663, %v6003, -inf
    %6021 = vmax.xlane.f32.xlu0 %v6020
    %v6022 = vpop.xlane.xlu0 %6021
    %v6023 = vsub.f32 %v5987, %v6010
    %v6024 = vsub.f32 %v5990, %v6013
    %v6025 = vsub.f32 %v5995, %v6016
    %v6026 = vsub.f32 %v5998, %v6019
    %v6027 = vsub.f32 %v6003, %v6022
    %v6028 = vmul.f32 %v6023, 1.442695
    %v6029 = vpow.pop %v6028
    %v6030 = vmul.f32 %v6024, 1.442695
    %v6031 = vpow.pop %v6030
    %v6032 = vmul.f32 %v6025, 1.442695
    %v6033 = vpow.pop %v6032
    %v6034 = vmul.f32 %v6026, 1.442695
    %v6035 = vpow.pop %v6034
    %v6036 = vmul.f32 %v6027, 1.442695
    %v6037 = vpow.pop %v6036
    %v6038 = vsel %vm650, %v6029, 0.0
    %6039 = vadd.xlane.f32.xlu0 %v6038
    %v6040 = vpop.xlane.xlu0 %6039
    %v6041 = vsel %vm650, %v6031, 0.0
    %6042 = vadd.xlane.f32.xlu0 %v6041
    %v6043 = vpop.xlane.xlu0 %6042
    %v6044 = vsel %vm650, %v6033, 0.0
    %6045 = vadd.xlane.f32.xlu0 %v6044
    %v6046 = vpop.xlane.xlu0 %6045
    %v6047 = vsel %vm650, %v6035, 0.0
    %6048 = vadd.xlane.f32.xlu0 %v6047
    %v6049 = vpop.xlane.xlu0 %6048
    %v6050 = vsel %vm663, %v6037, 0.0
    %6051 = vadd.xlane.f32.xlu0 %v6050
    %v6052 = vpop.xlane.xlu0 %6051
    %v6053 = vrcp.pop %v6040
    %v6054 = vrcp.pop %v6043
    %v6055 = vrcp.pop %v6046
    %v6056 = vrcp.pop %v6049
    %v6057 = vrcp.pop %v6052
    %v6058 = vmul.f32 %v6029, %v6053
    %v6059 = vmul.f32 %v6031, %v6054
    %v6060 = vmul.f32 %v6033, %v6055
    %v6061 = vmul.f32 %v6035, %v6056
    %v6062 = vmul.f32 %v6037, %v6057
    %v6063 = vpack.c.bf16 %v6059, %v6058
    %v6064 = vpack.c.bf16 %v6061, %v6060
    %v6065 = vpack.c.bf16 %v6062, %v6062
    %6066 = vrot.lane.b32.xlu0 %v4390, 16
    %v6067 = vpop.permute.xlu0 %6066
    %6068 = vrot.lane.b32.xlu0 %v4391, 16
    %v6069 = vpop.permute.xlu0 %6068
    %6070 = vrot.lane.b32.xlu0 %v4392, 16
    %v6071 = vpop.permute.xlu0 %6070
    %v6075 = vsel %vm650, %v6063, 0
    %v6078 = vsel %vm650, %v6064, 0
    %v6081 = vsel %vm650, %v6065, 0
    %v6084 = vsel %vm141, %v6071, 0
    %6086 = vmatprep.subr.bf16.mxu0 0
    %6087 = vmatpush1.bf16.msra.mxu0 %v6067
    %6088 = vmatprep.subr.bf16.mxu0 0
    %6089 = vmatpush1.bf16.msra.mxu0 %v6069
    %6090 = vmatprep.subr.bf16.mxu0 0
    %6091 = vmatpush1.bf16.msra.mxu0 %v6084
    %6092 = vmatprep.subr.bf16.mxu0 0
    %6093 = vmatpush1.bf16.msra.mxu0 0
    %6094 = vmatprep.subr.bf16.mxu0 0
    %6095 = vmatpush1.bf16.msra.mxu0 0
    %6096 = vmatprep.subr.bf16.mxu0 0
    %6097 = vmatpush1.bf16.msra.mxu0 0
    %6098 = vmatprep.subr.bf16.mxu0 0
    %6099 = vmatpush1.bf16.msra.mxu0 0
    %6100 = vmatprep.subr.bf16.mxu0 0
    %6101 = vmatpush1.bf16.msra.mxu0 0
    %6102 = vmatprep.subr.bf16.mxu0 0
    %6103 = vmatpush1.bf16.msra.mxu0 0
    %6104 = vmatprep.subr.bf16.mxu0 0
    %6105 = vmatpush1.bf16.msra.mxu0 0
    %6106 = vmatprep.subr.bf16.mxu0 0
    %6107 = vmatpush1.bf16.msra.mxu0 0
    %6108 = vmatprep.subr.bf16.mxu0 0
    %6109 = vmatpush1.bf16.msra.mxu0 0
    %6110 = vmatprep.subr.bf16.mxu0 0
    %6111 = vmatpush1.bf16.msra.mxu0 0
    %6112 = vmatprep.subr.bf16.mxu0 0
    %6113 = vmatpush1.bf16.msra.mxu0 0
    %6114 = vmatprep.subr.bf16.mxu0 0
    %6115 = vmatpush1.bf16.msra.mxu0 0
    %6116 = vmatprep.subr.bf16.mxu0 0
    %6117 = vmatpush1.bf16.msra.mxu0 0
    %6118 = vmatprep.mubr.bf16.mxu0 0
    %6119 = vmatmul.mubr.bf16.gmra.mrb[0].mxu0 %v6075
    %v6120 = vpop.f32.mrb[0].mxu0
    %v6121 = vadd.f32 0.0, %v6120
    %v6122 = vpop.f32.mrb[0].mxu0
    %v6123 = vpop.f32.mrb[0].mxu0
    %v6124 = vadd.f32 0.0, %v6123
    %v6125 = vpop.f32.mrb[0].mxu0
    %6126 = vmatprep.mubr.bf16.mxu0 0
    %6127 = vmatmul.mubr.bf16.gmra.mrb[0].mxu0 %v6078
    %v6128 = vpop.f32.mrb[0].mxu0
    %v6129 = vadd.f32 0.0, %v6128
    %v6130 = vpop.f32.mrb[0].mxu0
    %v6131 = vpop.f32.mrb[0].mxu0
    %v6132 = vadd.f32 0.0, %v6131
    %v6133 = vpop.f32.mrb[0].mxu0
    %6134 = vmatprep.mubr.bf16.mxu0 0
    %6135 = vmatmul.mubr.bf16.gmra.mrb[0].mxu0 %v6081
    %v6136 = vpop.f32.mrb[0].mxu0
    %v6137 = vadd.f32 0.0, %v6136
    %v6138 = vpop.f32.mrb[0].mxu0
    %v6139 = vpop.f32.mrb[0].mxu0
    %v6140 = vpop.f32.mrb[0].mxu0
    %6141 = vdwg.mxu0
    %6147 = vrot.lane.b32.xlu0 %v4801, 16
    %v6148 = vpop.permute.xlu0 %6147
    %6149 = vrot.lane.b32.xlu0 %v4804, 16
    %v6150 = vpop.permute.xlu0 %6149
    %6151 = vrot.lane.b32.xlu0 %v4809, 16
    %v6152 = vpop.permute.xlu0 %6151
    %6153 = vrot.lane.b32.xlu0 %v4812, 16
    %v6154 = vpop.permute.xlu0 %6153
    %6155 = vrot.lane.b32.xlu0 %v4817, 16
    %v6156 = vpop.permute.xlu0 %6155
    %6167 = vrot.lane.b32.xlu0 %v5021, 32
    %v6168 = vpop.permute.xlu0 %6167
    %6169 = vrot.lane.b32.xlu0 %v5024, 32
    %v6170 = vpop.permute.xlu0 %6169
    %6171 = vrot.lane.b32.xlu0 %v5029, 32
    %v6172 = vpop.permute.xlu0 %6171
    %6173 = vrot.lane.b32.xlu0 %v5032, 32
    %v6174 = vpop.permute.xlu0 %6173
    %6175 = vrot.lane.b32.xlu0 %v5037, 32
    %v6176 = vpop.permute.xlu0 %6175
    %6187 = vrot.lane.b32.xlu0 %v5241, 48
    %v6188 = vpop.permute.xlu0 %6187
    %6189 = vrot.lane.b32.xlu0 %v5244, 48
    %v6190 = vpop.permute.xlu0 %6189
    %6191 = vrot.lane.b32.xlu0 %v5249, 48
    %v6192 = vpop.permute.xlu0 %6191
    %6193 = vrot.lane.b32.xlu0 %v5252, 48
    %v6194 = vpop.permute.xlu0 %6193
    %6195 = vrot.lane.b32.xlu0 %v5257, 48
    %v6196 = vpop.permute.xlu0 %6195
    %6207 = vrot.lane.b32.xlu0 %v5461, 64
    %v6208 = vpop.permute.xlu0 %6207
    %6209 = vrot.lane.b32.xlu0 %v5464, 64
    %v6210 = vpop.permute.xlu0 %6209
    %6211 = vrot.lane.b32.xlu0 %v5469, 64
    %v6212 = vpop.permute.xlu0 %6211
    %6213 = vrot.lane.b32.xlu0 %v5472, 64
    %v6214 = vpop.permute.xlu0 %6213
    %6215 = vrot.lane.b32.xlu0 %v5477, 64
    %v6216 = vpop.permute.xlu0 %6215
    %6227 = vrot.lane.b32.xlu0 %v5681, 80
    %v6228 = vpop.permute.xlu0 %6227
    %6229 = vrot.lane.b32.xlu0 %v5684, 80
    %v6230 = vpop.permute.xlu0 %6229
    %6231 = vrot.lane.b32.xlu0 %v5689, 80
    %v6232 = vpop.permute.xlu0 %6231
    %6233 = vrot.lane.b32.xlu0 %v5692, 80
    %v6234 = vpop.permute.xlu0 %6233
    %6235 = vrot.lane.b32.xlu0 %v5697, 80
    %v6236 = vpop.permute.xlu0 %6235
    %6247 = vrot.lane.b32.xlu0 %v5901, 96
    %v6248 = vpop.permute.xlu0 %6247
    %6249 = vrot.lane.b32.xlu0 %v5904, 96
    %v6250 = vpop.permute.xlu0 %6249
    %6251 = vrot.lane.b32.xlu0 %v5909, 96
    %v6252 = vpop.permute.xlu0 %6251
    %6253 = vrot.lane.b32.xlu0 %v5912, 96
    %v6254 = vpop.permute.xlu0 %6253
    %6255 = vrot.lane.b32.xlu0 %v5917, 96
    %v6256 = vpop.permute.xlu0 %6255
    %6267 = vrot.lane.b32.xlu0 %v6121, 112
    %v6268 = vpop.permute.xlu0 %6267
    %6269 = vrot.lane.b32.xlu0 %v6124, 112
    %v6270 = vpop.permute.xlu0 %6269
    %6271 = vrot.lane.b32.xlu0 %v6129, 112
    %v6272 = vpop.permute.xlu0 %6271
    %6273 = vrot.lane.b32.xlu0 %v6132, 112
    %v6274 = vpop.permute.xlu0 %6273
    %6275 = vrot.lane.b32.xlu0 %v6137, 112
    %v6276 = vpop.permute.xlu0 %6275
    %v6282 = vsel %vm575, %v4572, %v6148
    %v6283 = vsel %vm575, %v4575, %v6150
    %v6284 = vsel %vm575, %v4580, %v6152
    %v6285 = vsel %vm575, %v4583, %v6154
    %v6286 = vsel %vm575, %v4588, %v6156
    %v6287 = vsel %vm2472, %v6282, %v6168
    %v6288 = vsel %vm2472, %v6283, %v6170
    %v6289 = vsel %vm2472, %v6284, %v6172
    %v6290 = vsel %vm2472, %v6285, %v6174
    %v6291 = vsel %vm2472, %v6286, %v6176
    %v6292 = vsel %vm79, %v6287, %v6188
    %v6293 = vsel %vm79, %v6288, %v6190
    %v6294 = vsel %vm79, %v6289, %v6192
    %v6295 = vsel %vm79, %v6290, %v6194
    %v6296 = vsel %vm79, %v6291, %v6196
    %v6297 = vsel %vm2483, %v6292, %v6208
    %v6298 = vsel %vm2483, %v6293, %v6210
    %v6299 = vsel %vm2483, %v6294, %v6212
    %v6300 = vsel %vm2483, %v6295, %v6214
    %v6301 = vsel %vm2483, %v6296, %v6216
    %v6302 = vsel %vm2489, %v6297, %v6228
    %v6303 = vsel %vm2489, %v6298, %v6230
    %v6304 = vsel %vm2489, %v6299, %v6232
    %v6305 = vsel %vm2489, %v6300, %v6234
    %v6306 = vsel %vm2489, %v6301, %v6236
    %v6307 = vsel %vm2495, %v6302, %v6248
    %v6308 = vsel %vm2495, %v6303, %v6250
    %v6309 = vsel %vm2495, %v6304, %v6252
    %v6310 = vsel %vm2495, %v6305, %v6254
    %v6311 = vsel %vm2495, %v6306, %v6256
    %v6312 = vsel %vm2501, %v6307, %v6268
    %v6313 = vsel %vm2501, %v6308, %v6270
    %v6314 = vsel %vm2501, %v6309, %v6272
    %v6315 = vsel %vm2501, %v6310, %v6274
    %v6316 = vsel %vm2501, %v6311, %v6276
    %v6317 = vpack.c.bf16 %v6313, %v6312
    %v6318 = vpack.c.bf16 %v6315, %v6314
    %v6319 = vpack.c.bf16 %v6316, %v6316
    %v6320 = vld [vmem:[%s4090 + $0xc] sm:$0xf]
    %v6321 = vld [vmem:[%s4090 + $0x2c] sm:$0xf]
    %v6322 = vld [vmem:[%s4090 + $0x4c] sm:$0xf]
    %v6323 = vld [vmem:[%s4090 + $0x6c] sm:$0xf]
    %v6324 = vld [vmem:[%s4090 + $0x8c] sm:$0xf]
    %v6325 = vld [vmem:[%s4090 + $0xac] sm:$0xf]
    %v6326 = vld [vmem:[%s4090 + $0xcc] sm:$0xf]
    %v6327 = vld [vmem:[%s4090 + $0xec] sm:$0xf]
    %v6328 = vld [vmem:[%s4090 + $0x10c] sm:$0xf]
    %v6329 = vld [vmem:[%s4090 + $0x12c] sm:$0xf]
    %v6330 = vld [vmem:[%s4090 + $0x14c] sm:$0xf]
    %v6331 = vld [vmem:[%s4090 + $0x16c] sm:$0xf]
    %v6332 = vld [vmem:[%s4090 + $0x18c] sm:$0xf]
    %v6333 = vld [vmem:[%s4090 + $0x1ac] sm:$0xf]
    %v6334 = vld [vmem:[%s4090 + $0x1cc] sm:$0xf]
    %v6335 = vld [vmem:[%s4090 + $0x1ec] sm:$0xf]
    %v6352 = vunpack.c.l.b16 %v6320
    %v6353 = vunpack.c.l.b16 %v6321
    %v6354 = vunpack.c.l.b16 %v6322
    %v6355 = vunpack.c.l.b16 %v6323
    %v6356 = vunpack.c.l.b16 %v6324
    %v6357 = vunpack.c.l.b16 %v6325
    %v6358 = vunpack.c.l.b16 %v6326
    %v6359 = vunpack.c.l.b16 %v6327
    %v6360 = vunpack.c.l.b16 %v6328
    %v6361 = vunpack.c.l.b16 %v6329
    %v6362 = vunpack.c.l.b16 %v6330
    %v6363 = vunpack.c.l.b16 %v6331
    %v6364 = vunpack.c.l.b16 %v6332
    %v6365 = vunpack.c.l.b16 %v6333
    %v6366 = vunpack.c.l.b16 %v6334
    %v6367 = vunpack.c.l.b16 %v6335
    %v6368 = vpack.c.b16 %v6353, %v6352
    %v6369 = vpack.c.b16 %v6355, %v6354
    %v6370 = vpack.c.b16 %v6357, %v6356
    %v6371 = vpack.c.b16 %v6359, %v6358
    %v6372 = vpack.c.b16 %v6361, %v6360
    %v6373 = vpack.c.b16 %v6363, %v6362
    %v6374 = vpack.c.b16 %v6365, %v6364
    %v6375 = vpack.c.b16 %v6367, %v6366
    %6384 = vmatprep.subr.bf16.mxu0 0
    %6385 = vmatpush1.bf16.msra.mxu0 %v6368
    %6386 = vmatprep.subr.bf16.mxu0 0
    %6387 = vmatpush1.bf16.msra.mxu0 %v6369
    %6388 = vmatprep.subr.bf16.mxu0 0
    %6389 = vmatpush1.bf16.msra.mxu0 %v6370
    %6390 = vmatprep.subr.bf16.mxu0 0
    %6391 = vmatpush1.bf16.msra.mxu0 %v6371
    %6392 = vmatprep.subr.bf16.mxu0 0
    %6393 = vmatpush1.bf16.msra.mxu0 %v6372
    %6394 = vmatprep.subr.bf16.mxu0 0
    %6395 = vmatpush1.bf16.msra.mxu0 %v6373
    %6396 = vmatprep.subr.bf16.mxu0 0
    %6397 = vmatpush1.bf16.msra.mxu0 %v6374
    %6398 = vmatprep.subr.bf16.mxu0 0
    %6399 = vmatpush1.bf16.msra.mxu0 %v6375
    %6400 = vmatprep.subr.bf16.mxu0 0
    %6401 = vmatpush1.bf16.msra.mxu0 0
    %6402 = vmatprep.subr.bf16.mxu0 0
    %6403 = vmatpush1.bf16.msra.mxu0 0
    %6404 = vmatprep.subr.bf16.mxu0 0
    %6405 = vmatpush1.bf16.msra.mxu0 0
    %6406 = vmatprep.subr.bf16.mxu0 0
    %6407 = vmatpush1.bf16.msra.mxu0 0
    %6408 = vmatprep.subr.bf16.mxu0 0
    %6409 = vmatpush1.bf16.msra.mxu0 0
    %6410 = vmatprep.subr.bf16.mxu0 0
    %6411 = vmatpush1.bf16.msra.mxu0 0
    %6412 = vmatprep.subr.bf16.mxu0 0
    %6413 = vmatpush1.bf16.msra.mxu0 0
    %6414 = vmatprep.subr.bf16.mxu0 0
    %6415 = vmatpush1.bf16.msra.mxu0 0
    %6416 = vmatprep.mubr.bf16.mxu0 0
    %6417 = vmatmul.mubr.bf16.gmra.mrb[0].mxu0 %v6317
    %v6418 = vpop.f32.mrb[0].mxu0
    %v6419 = vadd.f32 0.0, %v6418
    %v6420 = vpop.f32.mrb[0].mxu0
    %v6421 = vpop.f32.mrb[0].mxu0
    %v6422 = vadd.f32 0.0, %v6421
    %v6423 = vpop.f32.mrb[0].mxu0
    %6424 = vmatprep.mubr.bf16.mxu0 0
    %6425 = vmatmul.mubr.bf16.gmra.mrb[0].mxu0 %v6318
    %v6426 = vpop.f32.mrb[0].mxu0
    %v6427 = vadd.f32 0.0, %v6426
    %v6428 = vpop.f32.mrb[0].mxu0
    %v6429 = vpop.f32.mrb[0].mxu0
    %v6430 = vadd.f32 0.0, %v6429
    %v6431 = vpop.f32.mrb[0].mxu0
    %6432 = vmatprep.mubr.bf16.mxu0 0
    %6433 = vmatmul.mubr.bf16.gmra.mrb[0].mxu0 %v6319
    %v6434 = vpop.f32.mrb[0].mxu0
    %v6435 = vadd.f32 0.0, %v6434
    %v6436 = vpop.f32.mrb[0].mxu0
    %v6437 = vpop.f32.mrb[0].mxu0
    %v6438 = vpop.f32.mrb[0].mxu0
    %6439 = vdwg.mxu0
    %v6440 = vadd.f32 %v3988, %v6419
    %v6441 = vadd.f32 %v3989, %v6422
    %v6442 = vadd.f32 %v3990, %v6427
    %v6443 = vadd.f32 %v3991, %v6430
    %v6444 = vadd.f32 %v3992, %v6435
    %v6446 = vlaneseq
    %v6447 = vshrl.u32 %v6446, 7
    %v6448 = vsub.s32 0, %v6447
    %v6449 = vrot.slane %v3997, %v6448
    %v6451 = vadd.f32 %v6440, %v6449
    %v6452 = vadd.f32 %v6441, %v6449
    %v6453 = vadd.f32 %v6442, %v6449
    %v6454 = vadd.f32 %v6443, %v6449
    %v6455 = vadd.f32 %v6444, %v6449
    %v6456 = vld [vmem:[%s3993 + $0x6] sm:$0x1]
    %v6457 = vld [vmem:[%s3993 + $0x7] sm:$0x1]
    %v6458 = vld [vmem:[%s3993 + $0x8] sm:$0xf]
    %v6459 = vld [vmem:[%s3993 + $0xc] sm:$0x1]
    %6460 = vadd.xlane.f32.xlu0 %v6451
    %v6461 = vpop.xlane.xlu0 %6460
    %6462 = vadd.xlane.f32.xlu0 %v6452
    %v6463 = vpop.xlane.xlu0 %6462
    %6464 = vadd.xlane.f32.xlu0 %v6453
    %v6465 = vpop.xlane.xlu0 %6464
    %6466 = vadd.xlane.f32.xlu0 %v6454
    %v6467 = vpop.xlane.xlu0 %6466
    %v6468 = vsel %vm161, %v6455, 0.0
    %6469 = vadd.xlane.f32.xlu0 %v6468
    %v6470 = vpop.xlane.xlu0 %6469
    %v6471 = vmul.f32 %v6461, %v191
    %v6472 = vmul.f32 %v6463, %v191
    %v6473 = vmul.f32 %v6465, %v191
    %v6474 = vmul.f32 %v6467, %v191
    %v6475 = vmul.f32 %v6470, %v191
    %v6476 = vmul.f32 %v6451, %v6451
    %v6477 = vmul.f32 %v6452, %v6452
    %v6478 = vmul.f32 %v6453, %v6453
    %v6479 = vmul.f32 %v6454, %v6454
    %v6480 = vmul.f32 %v6455, %v6455
    %6481 = vadd.xlane.f32.xlu0 %v6476
    %v6482 = vpop.xlane.xlu0 %6481
    %6483 = vadd.xlane.f32.xlu0 %v6477
    %v6484 = vpop.xlane.xlu0 %6483
    %6485 = vadd.xlane.f32.xlu0 %v6478
    %v6486 = vpop.xlane.xlu0 %6485
    %6487 = vadd.xlane.f32.xlu0 %v6479
    %v6488 = vpop.xlane.xlu0 %6487
    %v6489 = vsel %vm161, %v6480, 0.0
    %6490 = vadd.xlane.f32.xlu0 %v6489
    %v6491 = vpop.xlane.xlu0 %6490
    %v6492 = vmul.f32 %v6482, %v191
    %v6493 = vmul.f32 %v6484, %v191
    %v6494 = vmul.f32 %v6486, %v191
    %v6495 = vmul.f32 %v6488, %v191
    %v6496 = vmul.f32 %v6491, %v191
    %v6497 = vmul.f32 %v6471, %v6471
    %v6498 = vmul.f32 %v6472, %v6472
    %v6499 = vmul.f32 %v6473, %v6473
    %v6500 = vmul.f32 %v6474, %v6474
    %v6501 = vmul.f32 %v6475, %v6475
    %v6502 = vsub.f32 %v6492, %v6497
    %v6503 = vsub.f32 %v6493, %v6498
    %v6504 = vsub.f32 %v6494, %v6499
    %v6505 = vsub.f32 %v6495, %v6500
    %v6506 = vsub.f32 %v6496, %v6501
    %v6507 = vsub.f32 %v6451, %v6471
    %v6508 = vsub.f32 %v6452, %v6472
    %v6509 = vsub.f32 %v6453, %v6473
    %v6510 = vsub.f32 %v6454, %v6474
    %v6511 = vsub.f32 %v6455, %v6475
    %v6512 = vadd.f32 %v6502, 1e-05
    %v6513 = vadd.f32 %v6503, 1e-05
    %v6514 = vadd.f32 %v6504, 1e-05
    %v6515 = vadd.f32 %v6505, 1e-05
    %v6516 = vadd.f32 %v6506, 1e-05
    %v6517 = vrsqrt.pop %v6512
    %v6518 = vrsqrt.pop %v6513
    %v6519 = vrsqrt.pop %v6514
    %v6520 = vrsqrt.pop %v6515
    %v6521 = vrsqrt.pop %v6516
    %v6522 = vmul.f32 %v6507, %v6517
    %v6523 = vmul.f32 %v6508, %v6518
    %v6524 = vmul.f32 %v6509, %v6519
    %v6525 = vmul.f32 %v6510, %v6520
    %v6526 = vmul.f32 %v6511, %v6521
    %v6528 = vlaneseq
    %v6529 = vshrl.u32 %v6528, 7
    %v6530 = vsub.s32 0, %v6529
    %v6531 = vrot.slane %v6456, %v6530
    %v6533 = vmul.f32 %v6522, %v6531
    %v6534 = vmul.f32 %v6523, %v6531
    %v6535 = vmul.f32 %v6524, %v6531
    %v6536 = vmul.f32 %v6525, %v6531
    %v6537 = vmul.f32 %v6526, %v6531
    %v6539 = vlaneseq
    %v6540 = vshrl.u32 %v6539, 7
    %v6541 = vsub.s32 0, %v6540
    %v6542 = vrot.slane %v6457, %v6541
    %v6544 = vadd.f32 %v6533, %v6542
    %v6545 = vadd.f32 %v6534, %v6542
    %v6546 = vadd.f32 %v6535, %v6542
    %v6547 = vadd.f32 %v6536, %v6542
    %v6548 = vadd.f32 %v6537, %v6542
    %v6549 = vpack.c.bf16 %v6545, %v6544
    %v6550 = vpack.c.bf16 %v6547, %v6546
    %v6551 = vpack.c.bf16 %v6548, %v6548
    %v6552 = vld [vmem:[%s4090 + $0x10] sm:$0xff]
    %v6553 = vld [vmem:[%s4090 + $0x18] sm:$0xff]
    %v6554 = vld [vmem:[%s4090 + $0x30] sm:$0xff]
    %v6555 = vld [vmem:[%s4090 + $0x38] sm:$0xff]
    %v6556 = vld [vmem:[%s4090 + $0x50] sm:$0xff]
    %v6557 = vld [vmem:[%s4090 + $0x58] sm:$0xff]
    %v6558 = vld [vmem:[%s4090 + $0x70] sm:$0xff]
    %v6559 = vld [vmem:[%s4090 + $0x78] sm:$0xff]
    %v6560 = vld [vmem:[%s4090 + $0x90] sm:$0xff]
    %v6561 = vld [vmem:[%s4090 + $0x98] sm:$0xff]
    %v6562 = vld [vmem:[%s4090 + $0xb0] sm:$0xff]
    %v6563 = vld [vmem:[%s4090 + $0xb8] sm:$0xff]
    %v6564 = vld [vmem:[%s4090 + $0xd0] sm:$0xff]
    %v6565 = vld [vmem:[%s4090 + $0xd8] sm:$0xff]
    %v6566 = vld [vmem:[%s4090 + $0xf0] sm:$0xff]
    %v6567 = vld [vmem:[%s4090 + $0xf8] sm:$0xff]
    %v6568 = vld [vmem:[%s4090 + $0x110] sm:$0xff]
    %v6569 = vld [vmem:[%s4090 + $0x118] sm:$0xff]
    %v6570 = vld [vmem:[%s4090 + $0x130] sm:$0xff]
    %v6571 = vld [vmem:[%s4090 + $0x138] sm:$0xff]
    %v6572 = vld [vmem:[%s4090 + $0x150] sm:$0xff]
    %v6573 = vld [vmem:[%s4090 + $0x158] sm:$0xff]
    %v6574 = vld [vmem:[%s4090 + $0x170] sm:$0xff]
    %v6575 = vld [vmem:[%s4090 + $0x178] sm:$0xff]
    %v6576 = vld [vmem:[%s4090 + $0x190] sm:$0xff]
    %v6577 = vld [vmem:[%s4090 + $0x198] sm:$0xff]
    %v6578 = vld [vmem:[%s4090 + $0x1b0] sm:$0xff]
    %v6579 = vld [vmem:[%s4090 + $0x1b8] sm:$0xff]
    %v6580 = vld [vmem:[%s4090 + $0x1d0] sm:$0xff]
    %v6581 = vld [vmem:[%s4090 + $0x1d8] sm:$0xff]
    %v6582 = vld [vmem:[%s4090 + $0x1f0] sm:$0xff]
    %v6583 = vld [vmem:[%s4090 + $0x1f8] sm:$0xff]
    %v6585 = vlaneseq
    %v6586 = vshrl.u32 %v6585, 7
    %v6587 = vsub.s32 0, %v6586
    %v6588 = vrot.slane %v6458, %v6587
    %v6589 = vlaneseq
    %v6590 = vshrl.u32 %v6589, 7
    %v6591 = vsub.s32 1, %v6590
    %v6592 = vrot.slane %v6458, %v6591
    %v6593 = vlaneseq
    %v6594 = vshrl.u32 %v6593, 7
    %v6595 = vsub.s32 2, %v6594
    %v6596 = vrot.slane %v6458, %v6595
    %v6597 = vlaneseq
    %v6598 = vshrl.u32 %v6597, 7
    %v6599 = vsub.s32 3, %v6598
    %v6600 = vrot.slane %v6458, %v6599
    %v6637 = vunpack.c.l.b16 %v6552
    %v6638 = vunpack.c.h.b16 %v6552
    %v6639 = vunpack.c.l.b16 %v6553
    %v6640 = vunpack.c.h.b16 %v6553
    %v6641 = vunpack.c.l.b16 %v6554
    %v6642 = vunpack.c.h.b16 %v6554
    %v6643 = vunpack.c.l.b16 %v6555
    %v6644 = vunpack.c.h.b16 %v6555
    %v6645 = vunpack.c.l.b16 %v6556
    %v6646 = vunpack.c.h.b16 %v6556
    %v6647 = vunpack.c.l.b16 %v6557
    %v6648 = vunpack.c.h.b16 %v6557
    %v6649 = vunpack.c.l.b16 %v6558
    %v6650 = vunpack.c.h.b16 %v6558
    %v6651 = vunpack.c.l.b16 %v6559
    %v6652 = vunpack.c.h.b16 %v6559
    %v6653 = vunpack.c.l.b16 %v6560
    %v6654 = vunpack.c.h.b16 %v6560
    %v6655 = vunpack.c.l.b16 %v6561
    %v6656 = vunpack.c.h.b16 %v6561
    %v6657 = vunpack.c.l.b16 %v6562
    %v6658 = vunpack.c.h.b16 %v6562
    %v6659 = vunpack.c.l.b16 %v6563
    %v6660 = vunpack.c.h.b16 %v6563
    %v6661 = vunpack.c.l.b16 %v6564
    %v6662 = vunpack.c.h.b16 %v6564
    %v6663 = vunpack.c.l.b16 %v6565
    %v6664 = vunpack.c.h.b16 %v6565
    %v6665 = vunpack.c.l.b16 %v6566
    %v6666 = vunpack.c.h.b16 %v6566
    %v6667 = vunpack.c.l.b16 %v6567
    %v6668 = vunpack.c.h.b16 %v6567
    %v6669 = vunpack.c.l.b16 %v6568
    %v6670 = vunpack.c.h.b16 %v6568
    %v6671 = vunpack.c.l.b16 %v6569
    %v6672 = vunpack.c.h.b16 %v6569
    %v6673 = vunpack.c.l.b16 %v6570
    %v6674 = vunpack.c.h.b16 %v6570
    %v6675 = vunpack.c.l.b16 %v6571
    %v6676 = vunpack.c.h.b16 %v6571
    %v6677 = vunpack.c.l.b16 %v6572
    %v6678 = vunpack.c.h.b16 %v6572
    %v6679 = vunpack.c.l.b16 %v6573
    %v6680 = vunpack.c.h.b16 %v6573
    %v6681 = vunpack.c.l.b16 %v6574
    %v6682 = vunpack.c.h.b16 %v6574
    %v6683 = vunpack.c.l.b16 %v6575
    %v6684 = vunpack.c.h.b16 %v6575
    %v6685 = vunpack.c.l.b16 %v6576
    %v6686 = vunpack.c.h.b16 %v6576
    %v6687 = vunpack.c.l.b16 %v6577
    %v6688 = vunpack.c.h.b16 %v6577
    %v6689 = vunpack.c.l.b16 %v6578
    %v6690 = vunpack.c.h.b16 %v6578
    %v6691 = vunpack.c.l.b16 %v6579
    %v6692 = vunpack.c.h.b16 %v6579
    %v6693 = vunpack.c.l.b16 %v6580
    %v6694 = vunpack.c.h.b16 %v6580
    %v6695 = vunpack.c.l.b16 %v6581
    %v6696 = vunpack.c.h.b16 %v6581
    %v6697 = vunpack.c.l.b16 %v6582
    %v6698 = vunpack.c.h.b16 %v6582
    %v6699 = vunpack.c.l.b16 %v6583
    %v6700 = vunpack.c.h.b16 %v6583
    %v6701 = vpack.c.b16 %v6641, %v6637
    %v6702 = vpack.c.b16 %v6642, %v6638
    %v6703 = vpack.c.b16 %v6643, %v6639
    %v6704 = vpack.c.b16 %v6644, %v6640
    %v6705 = vpack.c.b16 %v6649, %v6645
    %v6706 = vpack.c.b16 %v6650, %v6646
    %v6707 = vpack.c.b16 %v6651, %v6647
    %v6708 = vpack.c.b16 %v6652, %v6648
    %v6709 = vpack.c.b16 %v6657, %v6653
    %v6710 = vpack.c.b16 %v6658, %v6654
    %v6711 = vpack.c.b16 %v6659, %v6655
    %v6712 = vpack.c.b16 %v6660, %v6656
    %v6713 = vpack.c.b16 %v6665, %v6661
    %v6714 = vpack.c.b16 %v6666, %v6662
    %v6715 = vpack.c.b16 %v6667, %v6663
    %v6716 = vpack.c.b16 %v6668, %v6664
    %v6717 = vpack.c.b16 %v6673, %v6669
    %v6718 = vpack.c.b16 %v6674, %v6670
    %v6719 = vpack.c.b16 %v6675, %v6671
    %v6720 = vpack.c.b16 %v6676, %v6672
    %v6721 = vpack.c.b16 %v6681, %v6677
    %v6722 = vpack.c.b16 %v6682, %v6678
    %v6723 = vpack.c.b16 %v6683, %v6679
    %v6724 = vpack.c.b16 %v6684, %v6680
    %v6725 = vpack.c.b16 %v6689, %v6685
    %v6726 = vpack.c.b16 %v6690, %v6686
    %v6727 = vpack.c.b16 %v6691, %v6687
    %v6728 = vpack.c.b16 %v6692, %v6688
    %v6729 = vpack.c.b16 %v6697, %v6693
    %v6730 = vpack.c.b16 %v6698, %v6694
    %v6731 = vpack.c.b16 %v6699, %v6695
    %v6732 = vpack.c.b16 %v6700, %v6696
    %6765 = vmatprep.subr.bf16.mxu0 %v6702
    %6766 = vmatpush1.bf16.msra.mxu0 %v6701
    %6767 = vmatprep.subr.bf16.mxu0 %v6706
    %6768 = vmatpush1.bf16.msra.mxu0 %v6705
    %6769 = vmatprep.subr.bf16.mxu0 %v6710
    %6770 = vmatpush1.bf16.msra.mxu0 %v6709
    %6771 = vmatprep.subr.bf16.mxu0 %v6714
    %6772 = vmatpush1.bf16.msra.mxu0 %v6713
    %6773 = vmatprep.subr.bf16.mxu0 %v6718
    %6774 = vmatpush1.bf16.msra.mxu0 %v6717
    %6775 = vmatprep.subr.bf16.mxu0 %v6722
    %6776 = vmatpush1.bf16.msra.mxu0 %v6721
    %6777 = vmatprep.subr.bf16.mxu0 %v6726
    %6778 = vmatpush1.bf16.msra.mxu0 %v6725
    %6779 = vmatprep.subr.bf16.mxu0 %v6730
    %6780 = vmatpush1.bf16.msra.mxu0 %v6729
    %6781 = vmatprep.subr.bf16.mxu0 0
    %6782 = vmatpush1.bf16.msra.mxu0 0
    %6783 = vmatprep.subr.bf16.mxu0 0
    %6784 = vmatpush1.bf16.msra.mxu0 0
    %6785 = vmatprep.subr.bf16.mxu0 0
    %6786 = vmatpush1.bf16.msra.mxu0 0
    %6787 = vmatprep.subr.bf16.mxu0 0
    %6788 = vmatpush1.bf16.msra.mxu0 0
    %6789 = vmatprep.subr.bf16.mxu0 0
    %6790 = vmatpush1.bf16.msra.mxu0 0
    %6791 = vmatprep.subr.bf16.mxu0 0
    %6792 = vmatpush1.bf16.msra.mxu0 0
    %6793 = vmatprep.subr.bf16.mxu0 0
    %6794 = vmatpush1.bf16.msra.mxu0 0
    %6795 = vmatprep.subr.bf16.mxu0 0
    %6796 = vmatpush1.bf16.msra.mxu0 0
    %6797 = vmatprep.mubr.bf16.mxu0 0
    %6798 = vmatmul.mubr.bf16.gmra.mrb[0].mxu0 %v6549
    %v6799 = vpop.f32.mrb[0].mxu0
    %v6800 = vadd.f32 %v6588, %v6799
    %v6801 = vpop.f32.mrb[0].mxu0
    %v6802 = vadd.f32 %v6592, %v6801
    %v6803 = vpop.f32.mrb[0].mxu0
    %v6804 = vadd.f32 %v6588, %v6803
    %v6805 = vpop.f32.mrb[0].mxu0
    %v6806 = vadd.f32 %v6592, %v6805
    %6807 = vmatprep.mubr.bf16.mxu0 0
    %6808 = vmatmul.mubr.bf16.gmra.mrb[0].mxu0 %v6550
    %v6809 = vpop.f32.mrb[0].mxu0
    %v6810 = vadd.f32 %v6588, %v6809
    %v6811 = vpop.f32.mrb[0].mxu0
    %v6812 = vadd.f32 %v6592, %v6811
    %v6813 = vpop.f32.mrb[0].mxu0
    %v6814 = vadd.f32 %v6588, %v6813
    %v6815 = vpop.f32.mrb[0].mxu0
    %v6816 = vadd.f32 %v6592, %v6815
    %6817 = vmatprep.mubr.bf16.mxu0 0
    %6818 = vmatmul.mubr.bf16.gmra.mrb[0].mxu0 %v6551
    %v6819 = vpop.f32.mrb[0].mxu0
    %v6820 = vadd.f32 %v6588, %v6819
    %v6821 = vpop.f32.mrb[0].mxu0
    %v6822 = vadd.f32 %v6592, %v6821
    %v6823 = vpop.f32.mrb[0].mxu0
    %v6824 = vpop.f32.mrb[0].mxu0
    %6825 = vdwg.mxu0
    %6826 = vmatprep.subr.bf16.mxu0 %v6704
    %6827 = vmatpush1.bf16.msra.mxu0 %v6703
    %6828 = vmatprep.subr.bf16.mxu0 %v6708
    %6829 = vmatpush1.bf16.msra.mxu0 %v6707
    %6830 = vmatprep.subr.bf16.mxu0 %v6712
    %6831 = vmatpush1.bf16.msra.mxu0 %v6711
    %6832 = vmatprep.subr.bf16.mxu0 %v6716
    %6833 = vmatpush1.bf16.msra.mxu0 %v6715
    %6834 = vmatprep.subr.bf16.mxu0 %v6720
    %6835 = vmatpush1.bf16.msra.mxu0 %v6719
    %6836 = vmatprep.subr.bf16.mxu0 %v6724
    %6837 = vmatpush1.bf16.msra.mxu0 %v6723
    %6838 = vmatprep.subr.bf16.mxu0 %v6728
    %6839 = vmatpush1.bf16.msra.mxu0 %v6727
    %6840 = vmatprep.subr.bf16.mxu0 %v6732
    %6841 = vmatpush1.bf16.msra.mxu0 %v6731
    %6842 = vmatprep.subr.bf16.mxu0 0
    %6843 = vmatpush1.bf16.msra.mxu0 0
    %6844 = vmatprep.subr.bf16.mxu0 0
    %6845 = vmatpush1.bf16.msra.mxu0 0
    %6846 = vmatprep.subr.bf16.mxu0 0
    %6847 = vmatpush1.bf16.msra.mxu0 0
    %6848 = vmatprep.subr.bf16.mxu0 0
    %6849 = vmatpush1.bf16.msra.mxu0 0
    %6850 = vmatprep.subr.bf16.mxu0 0
    %6851 = vmatpush1.bf16.msra.mxu0 0
    %6852 = vmatprep.subr.bf16.mxu0 0
    %6853 = vmatpush1.bf16.msra.mxu0 0
    %6854 = vmatprep.subr.bf16.mxu0 0
    %6855 = vmatpush1.bf16.msra.mxu0 0
    %6856 = vmatprep.subr.bf16.mxu0 0
    %6857 = vmatpush1.bf16.msra.mxu0 0
    %6858 = vmatprep.mubr.bf16.mxu0 0
    %6859 = vmatmul.mubr.bf16.gmra.mrb[0].mxu0 %v6549
    %v6860 = vpop.f32.mrb[0].mxu0
    %v6861 = vadd.f32 %v6596, %v6860
    %v6862 = vpop.f32.mrb[0].mxu0
    %v6863 = vadd.f32 %v6600, %v6862
    %v6864 = vpop.f32.mrb[0].mxu0
    %v6865 = vadd.f32 %v6596, %v6864
    %v6866 = vpop.f32.mrb[0].mxu0
    %v6867 = vadd.f32 %v6600, %v6866
    %6868 = vmatprep.mubr.bf16.mxu0 0
    %6869 = vmatmul.mubr.bf16.gmra.mrb[0].mxu0 %v6550
    %v6870 = vpop.f32.mrb[0].mxu0
    %v6871 = vadd.f32 %v6596, %v6870
    %v6872 = vpop.f32.mrb[0].mxu0
    %v6873 = vadd.f32 %v6600, %v6872
    %v6874 = vpop.f32.mrb[0].mxu0
    %v6875 = vadd.f32 %v6596, %v6874
    %v6876 = vpop.f32.mrb[0].mxu0
    %v6877 = vadd.f32 %v6600, %v6876
    %6878 = vmatprep.mubr.bf16.mxu0 0
    %6879 = vmatmul.mubr.bf16.gmra.mrb[0].mxu0 %v6551
    %v6880 = vpop.f32.mrb[0].mxu0
    %v6881 = vadd.f32 %v6596, %v6880
    %v6882 = vpop.f32.mrb[0].mxu0
    %v6883 = vadd.f32 %v6600, %v6882
    %v6884 = vpop.f32.mrb[0].mxu0
    %v6885 = vpop.f32.mrb[0].mxu0
    %6886 = vdwg.mxu0
    %v6887 = vmul.f32 %v6800, 0.5
    %v6888 = vmul.f32 %v6802, 0.5
    %v6889 = vmul.f32 %v6861, 0.5
    %v6890 = vmul.f32 %v6863, 0.5
    %v6891 = vmul.f32 %v6804, 0.5
    %v6892 = vmul.f32 %v6806, 0.5
    %v6893 = vmul.f32 %v6865, 0.5
    %v6894 = vmul.f32 %v6867, 0.5
    %v6895 = vmul.f32 %v6810, 0.5
    %v6896 = vmul.f32 %v6812, 0.5
    %v6897 = vmul.f32 %v6871, 0.5
    %v6898 = vmul.f32 %v6873, 0.5
    %v6899 = vmul.f32 %v6814, 0.5
    %v6900 = vmul.f32 %v6816, 0.5
    %v6901 = vmul.f32 %v6875, 0.5
    %v6902 = vmul.f32 %v6877, 0.5
    %v6903 = vmul.f32 %v6820, 0.5
    %v6904 = vmul.f32 %v6822, 0.5
    %v6905 = vmul.f32 %v6881, 0.5
    %v6906 = vmul.f32 %v6883, 0.5
    %v6907 = vmul.f32 %v6800, 0.70710677
    %v6908 = vmul.f32 %v6802, 0.70710677
    %v6909 = vmul.f32 %v6861, 0.70710677
    %v6910 = vmul.f32 %v6863, 0.70710677
    %v6911 = vmul.f32 %v6804, 0.70710677
    %v6912 = vmul.f32 %v6806, 0.70710677
    %v6913 = vmul.f32 %v6865, 0.70710677
    %v6914 = vmul.f32 %v6867, 0.70710677
    %v6915 = vmul.f32 %v6810, 0.70710677
    %v6916 = vmul.f32 %v6812, 0.70710677
    %v6917 = vmul.f32 %v6871, 0.70710677
    %v6918 = vmul.f32 %v6873, 0.70710677
    %v6919 = vmul.f32 %v6814, 0.70710677
    %v6920 = vmul.f32 %v6816, 0.70710677
    %v6921 = vmul.f32 %v6875, 0.70710677
    %v6922 = vmul.f32 %v6877, 0.70710677
    %v6923 = vmul.f32 %v6820, 0.70710677
    %v6924 = vmul.f32 %v6822, 0.70710677
    %v6925 = vmul.f32 %v6881, 0.70710677
    %v6926 = vmul.f32 %v6883, 0.70710677
    %v6927 = vand.u32 2147483647, %v6907
    %v6928 = vand.u32 2147483647, %v6908
    %v6929 = vand.u32 2147483647, %v6909
    %v6930 = vand.u32 2147483647, %v6910
    %v6931 = vand.u32 2147483647, %v6911
    %v6932 = vand.u32 2147483647, %v6912
    %v6933 = vand.u32 2147483647, %v6913
    %v6934 = vand.u32 2147483647, %v6914
    %v6935 = vand.u32 2147483647, %v6915
    %v6936 = vand.u32 2147483647, %v6916
    %v6937 = vand.u32 2147483647, %v6917
    %v6938 = vand.u32 2147483647, %v6918
    %v6939 = vand.u32 2147483647, %v6919
    %v6940 = vand.u32 2147483647, %v6920
    %v6941 = vand.u32 2147483647, %v6921
    %v6942 = vand.u32 2147483647, %v6922
    %v6943 = vand.u32 2147483647, %v6923
    %v6944 = vand.u32 2147483647, %v6924
    %v6945 = vand.u32 2147483647, %v6925
    %v6946 = vand.u32 2147483647, %v6926
    %v6947 = vmul.f32 %v6927, 0.3275911
    %v6948 = vmul.f32 %v6928, 0.3275911
    %v6949 = vmul.f32 %v6929, 0.3275911
    %v6950 = vmul.f32 %v6930, 0.3275911
    %v6951 = vmul.f32 %v6931, 0.3275911
    %v6952 = vmul.f32 %v6932, 0.3275911
    %v6953 = vmul.f32 %v6933, 0.3275911
    %v6954 = vmul.f32 %v6934, 0.3275911
    %v6955 = vmul.f32 %v6935, 0.3275911
    %v6956 = vmul.f32 %v6936, 0.3275911
    %v6957 = vmul.f32 %v6937, 0.3275911
    %v6958 = vmul.f32 %v6938, 0.3275911
    %v6959 = vmul.f32 %v6939, 0.3275911
    %v6960 = vmul.f32 %v6940, 0.3275911
    %v6961 = vmul.f32 %v6941, 0.3275911
    %v6962 = vmul.f32 %v6942, 0.3275911
    %v6963 = vmul.f32 %v6943, 0.3275911
    %v6964 = vmul.f32 %v6944, 0.3275911
    %v6965 = vmul.f32 %v6945, 0.3275911
    %v6966 = vmul.f32 %v6946, 0.3275911
    %v6967 = vadd.f32 %v6947, 1.0
    %v6968 = vadd.f32 %v6948, 1.0
    %v6969 = vadd.f32 %v6949, 1.0
    %v6970 = vadd.f32 %v6950, 1.0
    %v6971 = vadd.f32 %v6951, 1.0
    %v6972 = vadd.f32 %v6952, 1.0
    %v6973 = vadd.f32 %v6953, 1.0
    %v6974 = vadd.f32 %v6954, 1.0
    %v6975 = vadd.f32 %v6955, 1.0
    %v6976 = vadd.f32 %v6956, 1.0
    %v6977 = vadd.f32 %v6957, 1.0
    %v6978 = vadd.f32 %v6958, 1.0
    %v6979 = vadd.f32 %v6959, 1.0
    %v6980 = vadd.f32 %v6960, 1.0
    %v6981 = vadd.f32 %v6961, 1.0
    %v6982 = vadd.f32 %v6962, 1.0
    %v6983 = vadd.f32 %v6963, 1.0
    %v6984 = vadd.f32 %v6964, 1.0
    %v6985 = vadd.f32 %v6965, 1.0
    %v6986 = vadd.f32 %v6966, 1.0
    %v6987 = vrcp.pop %v6967
    %v6988 = vrcp.pop %v6968
    %v6989 = vrcp.pop %v6969
    %v6990 = vrcp.pop %v6970
    %v6991 = vrcp.pop %v6971
    %v6992 = vrcp.pop %v6972
    %v6993 = vrcp.pop %v6973
    %v6994 = vrcp.pop %v6974
    %v6995 = vrcp.pop %v6975
    %v6996 = vrcp.pop %v6976
    %v6997 = vrcp.pop %v6977
    %v6998 = vrcp.pop %v6978
    %v6999 = vrcp.pop %v6979
    %v7000 = vrcp.pop %v6980
    %v7001 = vrcp.pop %v6981
    %v7002 = vrcp.pop %v6982
    %v7003 = vrcp.pop %v6983
    %v7004 = vrcp.pop %v6984
    %v7005 = vrcp.pop %v6985
    %v7006 = vrcp.pop %v6986
    %v7007 = vmul.f32 %v6987, 1.0614054
    %v7008 = vmul.f32 %v6988, 1.0614054
    %v7009 = vmul.f32 %v6989, 1.0614054
    %v7010 = vmul.f32 %v6990, 1.0614054
    %v7011 = vmul.f32 %v6991, 1.0614054
    %v7012 = vmul.f32 %v6992, 1.0614054
    %v7013 = vmul.f32 %v6993, 1.0614054
    %v7014 = vmul.f32 %v6994, 1.0614054
    %v7015 = vmul.f32 %v6995, 1.0614054
    %v7016 = vmul.f32 %v6996, 1.0614054
    %v7017 = vmul.f32 %v6997, 1.0614054
    %v7018 = vmul.f32 %v6998, 1.0614054
    %v7019 = vmul.f32 %v6999, 1.0614054
    %v7020 = vmul.f32 %v7000, 1.0614054
    %v7021 = vmul.f32 %v7001, 1.0614054
    %v7022 = vmul.f32 %v7002, 1.0614054
    %v7023 = vmul.f32 %v7003, 1.0614054
    %v7024 = vmul.f32 %v7004, 1.0614054
    %v7025 = vmul.f32 %v7005, 1.0614054
    %v7026 = vmul.f32 %v7006, 1.0614054
    %v7027 = vadd.f32 %v7007, -1.4531521
    %v7028 = vadd.f32 %v7008, -1.4531521
    %v7029 = vadd.f32 %v7009, -1.4531521
    %v7030 = vadd.f32 %v7010, -1.4531521
    %v7031 = vadd.f32 %v7011, -1.4531521
    %v7032 = vadd.f32 %v7012, -1.4531521
    %v7033 = vadd.f32 %v7013, -1.4531521
    %v7034 = vadd.f32 %v7014, -1.4531521
    %v7035 = vadd.f32 %v7015, -1.4531521
    %v7036 = vadd.f32 %v7016, -1.4531521
    %v7037 = vadd.f32 %v7017, -1.4531521
    %v7038 = vadd.f32 %v7018, -1.4531521
    %v7039 = vadd.f32 %v7019, -1.4531521
    %v7040 = vadd.f32 %v7020, -1.4531521
    %v7041 = vadd.f32 %v7021, -1.4531521
    %v7042 = vadd.f32 %v7022, -1.4531521
    %v7043 = vadd.f32 %v7023, -1.4531521
    %v7044 = vadd.f32 %v7024, -1.4531521
    %v7045 = vadd.f32 %v7025, -1.4531521
    %v7046 = vadd.f32 %v7026, -1.4531521
    %v7047 = vmul.f32 %v7027, %v6987
    %v7048 = vmul.f32 %v7028, %v6988
    %v7049 = vmul.f32 %v7029, %v6989
    %v7050 = vmul.f32 %v7030, %v6990
    %v7051 = vmul.f32 %v7031, %v6991
    %v7052 = vmul.f32 %v7032, %v6992
    %v7053 = vmul.f32 %v7033, %v6993
    %v7054 = vmul.f32 %v7034, %v6994
    %v7055 = vmul.f32 %v7035, %v6995
    %v7056 = vmul.f32 %v7036, %v6996
    %v7057 = vmul.f32 %v7037, %v6997
    %v7058 = vmul.f32 %v7038, %v6998
    %v7059 = vmul.f32 %v7039, %v6999
    %v7060 = vmul.f32 %v7040, %v7000
    %v7061 = vmul.f32 %v7041, %v7001
    %v7062 = vmul.f32 %v7042, %v7002
    %v7063 = vmul.f32 %v7043, %v7003
    %v7064 = vmul.f32 %v7044, %v7004
    %v7065 = vmul.f32 %v7045, %v7005
    %v7066 = vmul.f32 %v7046, %v7006
    %v7067 = vadd.f32 %v7047, 1.4214138
    %v7068 = vadd.f32 %v7048, 1.4214138
    %v7069 = vadd.f32 %v7049, 1.4214138
    %v7070 = vadd.f32 %v7050, 1.4214138
    %v7071 = vadd.f32 %v7051, 1.4214138
    %v7072 = vadd.f32 %v7052, 1.4214138
    %v7073 = vadd.f32 %v7053, 1.4214138
    %v7074 = vadd.f32 %v7054, 1.4214138
    %v7075 = vadd.f32 %v7055, 1.4214138
    %v7076 = vadd.f32 %v7056, 1.4214138
    %v7077 = vadd.f32 %v7057, 1.4214138
    %v7078 = vadd.f32 %v7058, 1.4214138
    %v7079 = vadd.f32 %v7059, 1.4214138
    %v7080 = vadd.f32 %v7060, 1.4214138
    %v7081 = vadd.f32 %v7061, 1.4214138
    %v7082 = vadd.f32 %v7062, 1.4214138
    %v7083 = vadd.f32 %v7063, 1.4214138
    %v7084 = vadd.f32 %v7064, 1.4214138
    %v7085 = vadd.f32 %v7065, 1.4214138
    %v7086 = vadd.f32 %v7066, 1.4214138
    %v7087 = vmul.f32 %v7067, %v6987
    %v7088 = vmul.f32 %v7068, %v6988
    %v7089 = vmul.f32 %v7069, %v6989
    %v7090 = vmul.f32 %v7070, %v6990
    %v7091 = vmul.f32 %v7071, %v6991
    %v7092 = vmul.f32 %v7072, %v6992
    %v7093 = vmul.f32 %v7073, %v6993
    %v7094 = vmul.f32 %v7074, %v6994
    %v7095 = vmul.f32 %v7075, %v6995
    %v7096 = vmul.f32 %v7076, %v6996
    %v7097 = vmul.f32 %v7077, %v6997
    %v7098 = vmul.f32 %v7078, %v6998
    %v7099 = vmul.f32 %v7079, %v6999
    %v7100 = vmul.f32 %v7080, %v7000
    %v7101 = vmul.f32 %v7081, %v7001
    %v7102 = vmul.f32 %v7082, %v7002
    %v7103 = vmul.f32 %v7083, %v7003
    %v7104 = vmul.f32 %v7084, %v7004
    %v7105 = vmul.f32 %v7085, %v7005
    %v7106 = vmul.f32 %v7086, %v7006
    %v7107 = vadd.f32 %v7087, -0.28449672
    %v7108 = vadd.f32 %v7088, -0.28449672
    %v7109 = vadd.f32 %v7089, -0.28449672
    %v7110 = vadd.f32 %v7090, -0.28449672
    %v7111 = vadd.f32 %v7091, -0.28449672
    %v7112 = vadd.f32 %v7092, -0.28449672
    %v7113 = vadd.f32 %v7093, -0.28449672
    %v7114 = vadd.f32 %v7094, -0.28449672
    %v7115 = vadd.f32 %v7095, -0.28449672
    %v7116 = vadd.f32 %v7096, -0.28449672
    %v7117 = vadd.f32 %v7097, -0.28449672
    %v7118 = vadd.f32 %v7098, -0.28449672
    %v7119 = vadd.f32 %v7099, -0.28449672
    %v7120 = vadd.f32 %v7100, -0.28449672
    %v7121 = vadd.f32 %v7101, -0.28449672
    %v7122 = vadd.f32 %v7102, -0.28449672
    %v7123 = vadd.f32 %v7103, -0.28449672
    %v7124 = vadd.f32 %v7104, -0.28449672
    %v7125 = vadd.f32 %v7105, -0.28449672
    %v7126 = vadd.f32 %v7106, -0.28449672
    %v7127 = vmul.f32 %v7107, %v6987
    %v7128 = vmul.f32 %v7108, %v6988
    %v7129 = vmul.f32 %v7109, %v6989
    %v7130 = vmul.f32 %v7110, %v6990
    %v7131 = vmul.f32 %v7111, %v6991
    %v7132 = vmul.f32 %v7112, %v6992
    %v7133 = vmul.f32 %v7113, %v6993
    %v7134 = vmul.f32 %v7114, %v6994
    %v7135 = vmul.f32 %v7115, %v6995
    %v7136 = vmul.f32 %v7116, %v6996
    %v7137 = vmul.f32 %v7117, %v6997
    %v7138 = vmul.f32 %v7118, %v6998
    %v7139 = vmul.f32 %v7119, %v6999
    %v7140 = vmul.f32 %v7120, %v7000
    %v7141 = vmul.f32 %v7121, %v7001
    %v7142 = vmul.f32 %v7122, %v7002
    %v7143 = vmul.f32 %v7123, %v7003
    %v7144 = vmul.f32 %v7124, %v7004
    %v7145 = vmul.f32 %v7125, %v7005
    %v7146 = vmul.f32 %v7126, %v7006
    %v7147 = vadd.f32 %v7127, 0.2548296
    %v7148 = vadd.f32 %v7128, 0.2548296
    %v7149 = vadd.f32 %v7129, 0.2548296
    %v7150 = vadd.f32 %v7130, 0.2548296
    %v7151 = vadd.f32 %v7131, 0.2548296
    %v7152 = vadd.f32 %v7132, 0.2548296
    %v7153 = vadd.f32 %v7133, 0.2548296
    %v7154 = vadd.f32 %v7134, 0.2548296
    %v7155 = vadd.f32 %v7135, 0.2548296
    %v7156 = vadd.f32 %v7136, 0.2548296
    %v7157 = vadd.f32 %v7137, 0.2548296
    %v7158 = vadd.f32 %v7138, 0.2548296
    %v7159 = vadd.f32 %v7139, 0.2548296
    %v7160 = vadd.f32 %v7140, 0.2548296
    %v7161 = vadd.f32 %v7141, 0.2548296
    %v7162 = vadd.f32 %v7142, 0.2548296
    %v7163 = vadd.f32 %v7143, 0.2548296
    %v7164 = vadd.f32 %v7144, 0.2548296
    %v7165 = vadd.f32 %v7145, 0.2548296
    %v7166 = vadd.f32 %v7146, 0.2548296
    %v7167 = vmul.f32 %v7147, %v6987
    %v7168 = vmul.f32 %v7148, %v6988
    %v7169 = vmul.f32 %v7149, %v6989
    %v7170 = vmul.f32 %v7150, %v6990
    %v7171 = vmul.f32 %v7151, %v6991
    %v7172 = vmul.f32 %v7152, %v6992
    %v7173 = vmul.f32 %v7153, %v6993
    %v7174 = vmul.f32 %v7154, %v6994
    %v7175 = vmul.f32 %v7155, %v6995
    %v7176 = vmul.f32 %v7156, %v6996
    %v7177 = vmul.f32 %v7157, %v6997
    %v7178 = vmul.f32 %v7158, %v6998
    %v7179 = vmul.f32 %v7159, %v6999
    %v7180 = vmul.f32 %v7160, %v7000
    %v7181 = vmul.f32 %v7161, %v7001
    %v7182 = vmul.f32 %v7162, %v7002
    %v7183 = vmul.f32 %v7163, %v7003
    %v7184 = vmul.f32 %v7164, %v7004
    %v7185 = vmul.f32 %v7165, %v7005
    %v7186 = vmul.f32 %v7166, %v7006
    %v7187 = vsub.f32 0.0, %v6927
    %v7188 = vsub.f32 0.0, %v6928
    %v7189 = vsub.f32 0.0, %v6929
    %v7190 = vsub.f32 0.0, %v6930
    %v7191 = vsub.f32 0.0, %v6931
    %v7192 = vsub.f32 0.0, %v6932
    %v7193 = vsub.f32 0.0, %v6933
    %v7194 = vsub.f32 0.0, %v6934
    %v7195 = vsub.f32 0.0, %v6935
    %v7196 = vsub.f32 0.0, %v6936
    %v7197 = vsub.f32 0.0, %v6937
    %v7198 = vsub.f32 0.0, %v6938
    %v7199 = vsub.f32 0.0, %v6939
    %v7200 = vsub.f32 0.0, %v6940
    %v7201 = vsub.f32 0.0, %v6941
    %v7202 = vsub.f32 0.0, %v6942
    %v7203 = vsub.f32 0.0, %v6943
    %v7204 = vsub.f32 0.0, %v6944
    %v7205 = vsub.f32 0.0, %v6945
    %v7206 = vsub.f32 0.0, %v6946
    %v7207 = vmul.f32 %v7187, %v6927
    %v7208 = vmul.f32 %v7188, %v6928
    %v7209 = vmul.f32 %v7189, %v6929
    %v7210 = vmul.f32 %v7190, %v6930
    %v7211 = vmul.f32 %v7191, %v6931
    %v7212 = vmul.f32 %v7192, %v6932
    %v7213 = vmul.f32 %v7193, %v6933
    %v7214 = vmul.f32 %v7194, %v6934
    %v7215 = vmul.f32 %v7195, %v6935
    %v7216 = vmul.f32 %v7196, %v6936
    %v7217 = vmul.f32 %v7197, %v6937
    %v7218 = vmul.f32 %v7198, %v6938
    %v7219 = vmul.f32 %v7199, %v6939
    %v7220 = vmul.f32 %v7200, %v6940
    %v7221 = vmul.f32 %v7201, %v6941
    %v7222 = vmul.f32 %v7202, %v6942
    %v7223 = vmul.f32 %v7203, %v6943
    %v7224 = vmul.f32 %v7204, %v6944
    %v7225 = vmul.f32 %v7205, %v6945
    %v7226 = vmul.f32 %v7206, %v6946
    %v7227 = vmul.f32 %v7207, 1.442695
    %v7228 = vpow.pop %v7227
    %v7229 = vmul.f32 %v7208, 1.442695
    %v7230 = vpow.pop %v7229
    %v7231 = vmul.f32 %v7209, 1.442695
    %v7232 = vpow.pop %v7231
    %v7233 = vmul.f32 %v7210, 1.442695
    %v7234 = vpow.pop %v7233
    %v7235 = vmul.f32 %v7211, 1.442695
    %v7236 = vpow.pop %v7235
    %v7237 = vmul.f32 %v7212, 1.442695
    %v7238 = vpow.pop %v7237
    %v7239 = vmul.f32 %v7213, 1.442695
    %v7240 = vpow.pop %v7239
    %v7241 = vmul.f32 %v7214, 1.442695
    %v7242 = vpow.pop %v7241
    %v7243 = vmul.f32 %v7215, 1.442695
    %v7244 = vpow.pop %v7243
    %v7245 = vmul.f32 %v7216, 1.442695
    %v7246 = vpow.pop %v7245
    %v7247 = vmul.f32 %v7217, 1.442695
    %v7248 = vpow.pop %v7247
    %v7249 = vmul.f32 %v7218, 1.442695
    %v7250 = vpow.pop %v7249
    %v7251 = vmul.f32 %v7219, 1.442695
    %v7252 = vpow.pop %v7251
    %v7253 = vmul.f32 %v7220, 1.442695
    %v7254 = vpow.pop %v7253
    %v7255 = vmul.f32 %v7221, 1.442695
    %v7256 = vpow.pop %v7255
    %v7257 = vmul.f32 %v7222, 1.442695
    %v7258 = vpow.pop %v7257
    %v7259 = vmul.f32 %v7223, 1.442695
    %v7260 = vpow.pop %v7259
    %v7261 = vmul.f32 %v7224, 1.442695
    %v7262 = vpow.pop %v7261
    %v7263 = vmul.f32 %v7225, 1.442695
    %v7264 = vpow.pop %v7263
    %v7265 = vmul.f32 %v7226, 1.442695
    %v7266 = vpow.pop %v7265
    %v7267 = vmul.f32 %v7167, %v7228
    %v7268 = vmul.f32 %v7168, %v7230
    %v7269 = vmul.f32 %v7169, %v7232
    %v7270 = vmul.f32 %v7170, %v7234
    %v7271 = vmul.f32 %v7171, %v7236
    %v7272 = vmul.f32 %v7172, %v7238
    %v7273 = vmul.f32 %v7173, %v7240
    %v7274 = vmul.f32 %v7174, %v7242
    %v7275 = vmul.f32 %v7175, %v7244
    %v7276 = vmul.f32 %v7176, %v7246
    %v7277 = vmul.f32 %v7177, %v7248
    %v7278 = vmul.f32 %v7178, %v7250
    %v7279 = vmul.f32 %v7179, %v7252
    %v7280 = vmul.f32 %v7180, %v7254
    %v7281 = vmul.f32 %v7181, %v7256
    %v7282 = vmul.f32 %v7182, %v7258
    %v7283 = vmul.f32 %v7183, %v7260
    %v7284 = vmul.f32 %v7184, %v7262
    %v7285 = vmul.f32 %v7185, %v7264
    %v7286 = vmul.f32 %v7186, %v7266
    %v7287 = vsub.f32 1.0, %v7267
    %v7288 = vsub.f32 1.0, %v7268
    %v7289 = vsub.f32 1.0, %v7269
    %v7290 = vsub.f32 1.0, %v7270
    %v7291 = vsub.f32 1.0, %v7271
    %v7292 = vsub.f32 1.0, %v7272
    %v7293 = vsub.f32 1.0, %v7273
    %v7294 = vsub.f32 1.0, %v7274
    %v7295 = vsub.f32 1.0, %v7275
    %v7296 = vsub.f32 1.0, %v7276
    %v7297 = vsub.f32 1.0, %v7277
    %v7298 = vsub.f32 1.0, %v7278
    %v7299 = vsub.f32 1.0, %v7279
    %v7300 = vsub.f32 1.0, %v7280
    %v7301 = vsub.f32 1.0, %v7281
    %v7302 = vsub.f32 1.0, %v7282
    %v7303 = vsub.f32 1.0, %v7283
    %v7304 = vsub.f32 1.0, %v7284
    %v7305 = vsub.f32 1.0, %v7285
    %v7306 = vsub.f32 1.0, %v7286
    %vm7307 = vcmp.ge.f32.partialorder %v6907, 0.0
    %vm7308 = vcmp.ge.f32.partialorder %v6908, 0.0
    %vm7309 = vcmp.ge.f32.partialorder %v6909, 0.0
    %vm7310 = vcmp.ge.f32.partialorder %v6910, 0.0
    %vm7311 = vcmp.ge.f32.partialorder %v6911, 0.0
    %vm7312 = vcmp.ge.f32.partialorder %v6912, 0.0
    %vm7313 = vcmp.ge.f32.partialorder %v6913, 0.0
    %vm7314 = vcmp.ge.f32.partialorder %v6914, 0.0
    %vm7315 = vcmp.ge.f32.partialorder %v6915, 0.0
    %vm7316 = vcmp.ge.f32.partialorder %v6916, 0.0
    %vm7317 = vcmp.ge.f32.partialorder %v6917, 0.0
    %vm7318 = vcmp.ge.f32.partialorder %v6918, 0.0
    %vm7319 = vcmp.ge.f32.partialorder %v6919, 0.0
    %vm7320 = vcmp.ge.f32.partialorder %v6920, 0.0
    %vm7321 = vcmp.ge.f32.partialorder %v6921, 0.0
    %vm7322 = vcmp.ge.f32.partialorder %v6922, 0.0
    %vm7323 = vcmp.ge.f32.partialorder %v6923, 0.0
    %vm7324 = vcmp.ge.f32.partialorder %v6924, 0.0
    %vm7325 = vcmp.ge.f32.partialorder %v6925, 0.0
    %vm7326 = vcmp.ge.f32.partialorder %v6926, 0.0
    %v7327 = vsub.f32 0.0, %v7287
    %v7328 = vsub.f32 0.0, %v7288
    %v7329 = vsub.f32 0.0, %v7289
    %v7330 = vsub.f32 0.0, %v7290
    %v7331 = vsub.f32 0.0, %v7291
    %v7332 = vsub.f32 0.0, %v7292
    %v7333 = vsub.f32 0.0, %v7293
    %v7334 = vsub.f32 0.0, %v7294
    %v7335 = vsub.f32 0.0, %v7295
    %v7336 = vsub.f32 0.0, %v7296
    %v7337 = vsub.f32 0.0, %v7297
    %v7338 = vsub.f32 0.0, %v7298
    %v7339 = vsub.f32 0.0, %v7299
    %v7340 = vsub.f32 0.0, %v7300
    %v7341 = vsub.f32 0.0, %v7301
    %v7342 = vsub.f32 0.0, %v7302
    %v7343 = vsub.f32 0.0, %v7303
    %v7344 = vsub.f32 0.0, %v7304
    %v7345 = vsub.f32 0.0, %v7305
    %v7346 = vsub.f32 0.0, %v7306
    %v7347 = vsel %vm7307, %v7287, %v7327
    %v7348 = vsel %vm7308, %v7288, %v7328
    %v7349 = vsel %vm7309, %v7289, %v7329
    %v7350 = vsel %vm7310, %v7290, %v7330
    %v7351 = vsel %vm7311, %v7291, %v7331
    %v7352 = vsel %vm7312, %v7292, %v7332
    %v7353 = vsel %vm7313, %v7293, %v7333
    %v7354 = vsel %vm7314, %v7294, %v7334
    %v7355 = vsel %vm7315, %v7295, %v7335
    %v7356 = vsel %vm7316, %v7296, %v7336
    %v7357 = vsel %vm7317, %v7297, %v7337
    %v7358 = vsel %vm7318, %v7298, %v7338
    %v7359 = vsel %vm7319, %v7299, %v7339
    %v7360 = vsel %vm7320, %v7300, %v7340
    %v7361 = vsel %vm7321, %v7301, %v7341
    %v7362 = vsel %vm7322, %v7302, %v7342
    %v7363 = vsel %vm7323, %v7303, %v7343
    %v7364 = vsel %vm7324, %v7304, %v7344
    %v7365 = vsel %vm7325, %v7305, %v7345
    %v7366 = vsel %vm7326, %v7306, %v7346
    %v7367 = vadd.f32 %v7347, 1.0
    %v7368 = vadd.f32 %v7348, 1.0
    %v7369 = vadd.f32 %v7349, 1.0
    %v7370 = vadd.f32 %v7350, 1.0
    %v7371 = vadd.f32 %v7351, 1.0
    %v7372 = vadd.f32 %v7352, 1.0
    %v7373 = vadd.f32 %v7353, 1.0
    %v7374 = vadd.f32 %v7354, 1.0
    %v7375 = vadd.f32 %v7355, 1.0
    %v7376 = vadd.f32 %v7356, 1.0
    %v7377 = vadd.f32 %v7357, 1.0
    %v7378 = vadd.f32 %v7358, 1.0
    %v7379 = vadd.f32 %v7359, 1.0
    %v7380 = vadd.f32 %v7360, 1.0
    %v7381 = vadd.f32 %v7361, 1.0
    %v7382 = vadd.f32 %v7362, 1.0
    %v7383 = vadd.f32 %v7363, 1.0
    %v7384 = vadd.f32 %v7364, 1.0
    %v7385 = vadd.f32 %v7365, 1.0
    %v7386 = vadd.f32 %v7366, 1.0
    %v7387 = vmul.f32 %v6887, %v7367
    %v7388 = vmul.f32 %v6888, %v7368
    %v7389 = vmul.f32 %v6889, %v7369
    %v7390 = vmul.f32 %v6890, %v7370
    %v7391 = vmul.f32 %v6891, %v7371
    %v7392 = vmul.f32 %v6892, %v7372
    %v7393 = vmul.f32 %v6893, %v7373
    %v7394 = vmul.f32 %v6894, %v7374
    %v7395 = vmul.f32 %v6895, %v7375
    %v7396 = vmul.f32 %v6896, %v7376
    %v7397 = vmul.f32 %v6897, %v7377
    %v7398 = vmul.f32 %v6898, %v7378
    %v7399 = vmul.f32 %v6899, %v7379
    %v7400 = vmul.f32 %v6900, %v7380
    %v7401 = vmul.f32 %v6901, %v7381
    %v7402 = vmul.f32 %v6902, %v7382
    %v7403 = vmul.f32 %v6903, %v7383
    %v7404 = vmul.f32 %v6904, %v7384
    %v7405 = vmul.f32 %v6905, %v7385
    %v7406 = vmul.f32 %v6906, %v7386
    %v7407 = vpack.c.bf16 %v7391, %v7387
    %v7408 = vpack.c.bf16 %v7392, %v7388
    %v7409 = vpack.c.bf16 %v7393, %v7389
    %v7410 = vpack.c.bf16 %v7394, %v7390
    %v7411 = vpack.c.bf16 %v7399, %v7395
    %v7412 = vpack.c.bf16 %v7400, %v7396
    %v7413 = vpack.c.bf16 %v7401, %v7397
    %v7414 = vpack.c.bf16 %v7402, %v7398
    %v7415 = vpack.c.bf16 %v7403, %v7403
    %v7416 = vpack.c.bf16 %v7404, %v7404
    %v7417 = vpack.c.bf16 %v7405, %v7405
    %v7418 = vpack.c.bf16 %v7406, %v7406
    %s7419 = scalar_lea.vmem %s5, 256
    %v7420 = vld [vmem:[%s7419] sm:$0xf]
    %v7421 = vld [vmem:[%s7419 + $0x4] sm:$0xf]
    %v7422 = vld [vmem:[%s7419 + $0x8] sm:$0xf]
    %v7423 = vld [vmem:[%s7419 + $0xc] sm:$0xf]
    %v7424 = vld [vmem:[%s7419 + $0x10] sm:$0xf]
    %v7425 = vld [vmem:[%s7419 + $0x14] sm:$0xf]
    %v7426 = vld [vmem:[%s7419 + $0x18] sm:$0xf]
    %v7427 = vld [vmem:[%s7419 + $0x1c] sm:$0xf]
    %v7428 = vld [vmem:[%s7419 + $0x20] sm:$0xf]
    %v7429 = vld [vmem:[%s7419 + $0x24] sm:$0xf]
    %v7430 = vld [vmem:[%s7419 + $0x28] sm:$0xf]
    %v7431 = vld [vmem:[%s7419 + $0x2c] sm:$0xf]
    %v7432 = vld [vmem:[%s7419 + $0x30] sm:$0xf]
    %v7433 = vld [vmem:[%s7419 + $0x34] sm:$0xf]
    %v7434 = vld [vmem:[%s7419 + $0x38] sm:$0xf]
    %v7435 = vld [vmem:[%s7419 + $0x3c] sm:$0xf]
    %v7436 = vld [vmem:[%s7419 + $0x40] sm:$0xf]
    %v7437 = vld [vmem:[%s7419 + $0x44] sm:$0xf]
    %v7438 = vld [vmem:[%s7419 + $0x48] sm:$0xf]
    %v7439 = vld [vmem:[%s7419 + $0x4c] sm:$0xf]
    %v7440 = vld [vmem:[%s7419 + $0x50] sm:$0xf]
    %v7441 = vld [vmem:[%s7419 + $0x54] sm:$0xf]
    %v7442 = vld [vmem:[%s7419 + $0x58] sm:$0xf]
    %v7443 = vld [vmem:[%s7419 + $0x5c] sm:$0xf]
    %v7444 = vld [vmem:[%s7419 + $0x60] sm:$0xf]
    %v7445 = vld [vmem:[%s7419 + $0x64] sm:$0xf]
    %v7446 = vld [vmem:[%s7419 + $0x68] sm:$0xf]
    %v7447 = vld [vmem:[%s7419 + $0x6c] sm:$0xf]
    %v7448 = vld [vmem:[%s7419 + $0x70] sm:$0xf]
    %v7449 = vld [vmem:[%s7419 + $0x74] sm:$0xf]
    %v7450 = vld [vmem:[%s7419 + $0x78] sm:$0xf]
    %v7451 = vld [vmem:[%s7419 + $0x7c] sm:$0xf]
    %v7452 = vld [vmem:[%s7419 + $0x80] sm:$0xf]
    %v7453 = vld [vmem:[%s7419 + $0x84] sm:$0xf]
    %v7454 = vld [vmem:[%s7419 + $0x88] sm:$0xf]
    %v7455 = vld [vmem:[%s7419 + $0x8c] sm:$0xf]
    %v7456 = vld [vmem:[%s7419 + $0x90] sm:$0xf]
    %v7457 = vld [vmem:[%s7419 + $0x94] sm:$0xf]
    %v7458 = vld [vmem:[%s7419 + $0x98] sm:$0xf]
    %v7459 = vld [vmem:[%s7419 + $0x9c] sm:$0xf]
    %v7460 = vld [vmem:[%s7419 + $0xa0] sm:$0xf]
    %v7461 = vld [vmem:[%s7419 + $0xa4] sm:$0xf]
    %v7462 = vld [vmem:[%s7419 + $0xa8] sm:$0xf]
    %v7463 = vld [vmem:[%s7419 + $0xac] sm:$0xf]
    %v7464 = vld [vmem:[%s7419 + $0xb0] sm:$0xf]
    %v7465 = vld [vmem:[%s7419 + $0xb4] sm:$0xf]
    %v7466 = vld [vmem:[%s7419 + $0xb8] sm:$0xf]
    %v7467 = vld [vmem:[%s7419 + $0xbc] sm:$0xf]
    %v7468 = vld [vmem:[%s7419 + $0xc0] sm:$0xf]
    %v7469 = vld [vmem:[%s7419 + $0xc4] sm:$0xf]
    %v7470 = vld [vmem:[%s7419 + $0xc8] sm:$0xf]
    %v7471 = vld [vmem:[%s7419 + $0xcc] sm:$0xf]
    %v7472 = vld [vmem:[%s7419 + $0xd0] sm:$0xf]
    %v7473 = vld [vmem:[%s7419 + $0xd4] sm:$0xf]
    %v7474 = vld [vmem:[%s7419 + $0xd8] sm:$0xf]
    %v7475 = vld [vmem:[%s7419 + $0xdc] sm:$0xf]
    %v7476 = vld [vmem:[%s7419 + $0xe0] sm:$0xf]
    %v7477 = vld [vmem:[%s7419 + $0xe4] sm:$0xf]
    %v7478 = vld [vmem:[%s7419 + $0xe8] sm:$0xf]
    %v7479 = vld [vmem:[%s7419 + $0xec] sm:$0xf]
    %v7480 = vld [vmem:[%s7419 + $0xf0] sm:$0xf]
    %v7481 = vld [vmem:[%s7419 + $0xf4] sm:$0xf]
    %v7482 = vld [vmem:[%s7419 + $0xf8] sm:$0xf]
    %v7483 = vld [vmem:[%s7419 + $0xfc] sm:$0xf]
    %v7548 = vunpack.c.l.b16 %v7420
    %v7549 = vunpack.c.l.b16 %v7421
    %v7550 = vunpack.c.l.b16 %v7422
    %v7551 = vunpack.c.l.b16 %v7423
    %v7552 = vunpack.c.l.b16 %v7424
    %v7553 = vunpack.c.l.b16 %v7425
    %v7554 = vunpack.c.l.b16 %v7426
    %v7555 = vunpack.c.l.b16 %v7427
    %v7556 = vunpack.c.l.b16 %v7428
    %v7557 = vunpack.c.l.b16 %v7429
    %v7558 = vunpack.c.l.b16 %v7430
    %v7559 = vunpack.c.l.b16 %v7431
    %v7560 = vunpack.c.l.b16 %v7432
    %v7561 = vunpack.c.l.b16 %v7433
    %v7562 = vunpack.c.l.b16 %v7434
    %v7563 = vunpack.c.l.b16 %v7435
    %v7564 = vunpack.c.l.b16 %v7436
    %v7565 = vunpack.c.l.b16 %v7437
    %v7566 = vunpack.c.l.b16 %v7438
    %v7567 = vunpack.c.l.b16 %v7439
    %v7568 = vunpack.c.l.b16 %v7440
    %v7569 = vunpack.c.l.b16 %v7441
    %v7570 = vunpack.c.l.b16 %v7442
    %v7571 = vunpack.c.l.b16 %v7443
    %v7572 = vunpack.c.l.b16 %v7444
    %v7573 = vunpack.c.l.b16 %v7445
    %v7574 = vunpack.c.l.b16 %v7446
    %v7575 = vunpack.c.l.b16 %v7447
    %v7576 = vunpack.c.l.b16 %v7448
    %v7577 = vunpack.c.l.b16 %v7449
    %v7578 = vunpack.c.l.b16 %v7450
    %v7579 = vunpack.c.l.b16 %v7451
    %v7580 = vunpack.c.l.b16 %v7452
    %v7581 = vunpack.c.l.b16 %v7453
    %v7582 = vunpack.c.l.b16 %v7454
    %v7583 = vunpack.c.l.b16 %v7455
    %v7584 = vunpack.c.l.b16 %v7456
    %v7585 = vunpack.c.l.b16 %v7457
    %v7586 = vunpack.c.l.b16 %v7458
    %v7587 = vunpack.c.l.b16 %v7459
    %v7588 = vunpack.c.l.b16 %v7460
    %v7589 = vunpack.c.l.b16 %v7461
    %v7590 = vunpack.c.l.b16 %v7462
    %v7591 = vunpack.c.l.b16 %v7463
    %v7592 = vunpack.c.l.b16 %v7464
    %v7593 = vunpack.c.l.b16 %v7465
    %v7594 = vunpack.c.l.b16 %v7466
    %v7595 = vunpack.c.l.b16 %v7467
    %v7596 = vunpack.c.l.b16 %v7468
    %v7597 = vunpack.c.l.b16 %v7469
    %v7598 = vunpack.c.l.b16 %v7470
    %v7599 = vunpack.c.l.b16 %v7471
    %v7600 = vunpack.c.l.b16 %v7472
    %v7601 = vunpack.c.l.b16 %v7473
    %v7602 = vunpack.c.l.b16 %v7474
    %v7603 = vunpack.c.l.b16 %v7475
    %v7604 = vunpack.c.l.b16 %v7476
    %v7605 = vunpack.c.l.b16 %v7477
    %v7606 = vunpack.c.l.b16 %v7478
    %v7607 = vunpack.c.l.b16 %v7479
    %v7608 = vunpack.c.l.b16 %v7480
    %v7609 = vunpack.c.l.b16 %v7481
    %v7610 = vunpack.c.l.b16 %v7482
    %v7611 = vunpack.c.l.b16 %v7483
    %v7612 = vpack.c.b16 %v7549, %v7548
    %v7613 = vpack.c.b16 %v7551, %v7550
    %v7614 = vpack.c.b16 %v7553, %v7552
    %v7615 = vpack.c.b16 %v7555, %v7554
    %v7616 = vpack.c.b16 %v7557, %v7556
    %v7617 = vpack.c.b16 %v7559, %v7558
    %v7618 = vpack.c.b16 %v7561, %v7560
    %v7619 = vpack.c.b16 %v7563, %v7562
    %v7620 = vpack.c.b16 %v7565, %v7564
    %v7621 = vpack.c.b16 %v7567, %v7566
    %v7622 = vpack.c.b16 %v7569, %v7568
    %v7623 = vpack.c.b16 %v7571, %v7570
    %v7624 = vpack.c.b16 %v7573, %v7572
    %v7625 = vpack.c.b16 %v7575, %v7574
    %v7626 = vpack.c.b16 %v7577, %v7576
    %v7627 = vpack.c.b16 %v7579, %v7578
    %v7628 = vpack.c.b16 %v7581, %v7580
    %v7629 = vpack.c.b16 %v7583, %v7582
    %v7630 = vpack.c.b16 %v7585, %v7584
    %v7631 = vpack.c.b16 %v7587, %v7586
    %v7632 = vpack.c.b16 %v7589, %v7588
    %v7633 = vpack.c.b16 %v7591, %v7590
    %v7634 = vpack.c.b16 %v7593, %v7592
    %v7635 = vpack.c.b16 %v7595, %v7594
    %v7636 = vpack.c.b16 %v7597, %v7596
    %v7637 = vpack.c.b16 %v7599, %v7598
    %v7638 = vpack.c.b16 %v7601, %v7600
    %v7639 = vpack.c.b16 %v7603, %v7602
    %v7640 = vpack.c.b16 %v7605, %v7604
    %v7641 = vpack.c.b16 %v7607, %v7606
    %v7642 = vpack.c.b16 %v7609, %v7608
    %v7643 = vpack.c.b16 %v7611, %v7610
    %7676 = vmatprep.subr.bf16.mxu0 0
    %7677 = vmatpush1.bf16.msra.mxu0 %v7612
    %7678 = vmatprep.subr.bf16.mxu0 0
    %7679 = vmatpush1.bf16.msra.mxu0 %v7613
    %7680 = vmatprep.subr.bf16.mxu0 0
    %7681 = vmatpush1.bf16.msra.mxu0 %v7614
    %7682 = vmatprep.subr.bf16.mxu0 0
    %7683 = vmatpush1.bf16.msra.mxu0 %v7615
    %7684 = vmatprep.subr.bf16.mxu0 0
    %7685 = vmatpush1.bf16.msra.mxu0 %v7616
    %7686 = vmatprep.subr.bf16.mxu0 0
    %7687 = vmatpush1.bf16.msra.mxu0 %v7617
    %7688 = vmatprep.subr.bf16.mxu0 0
    %7689 = vmatpush1.bf16.msra.mxu0 %v7618
    %7690 = vmatprep.subr.bf16.mxu0 0
    %7691 = vmatpush1.bf16.msra.mxu0 %v7619
    %7692 = vmatprep.subr.bf16.mxu0 0
    %7693 = vmatpush1.bf16.msra.mxu0 %v7620
    %7694 = vmatprep.subr.bf16.mxu0 0
    %7695 = vmatpush1.bf16.msra.mxu0 %v7621
    %7696 = vmatprep.subr.bf16.mxu0 0
    %7697 = vmatpush1.bf16.msra.mxu0 %v7622
    %7698 = vmatprep.subr.bf16.mxu0 0
    %7699 = vmatpush1.bf16.msra.mxu0 %v7623
    %7700 = vmatprep.subr.bf16.mxu0 0
    %7701 = vmatpush1.bf16.msra.mxu0 %v7624
    %7702 = vmatprep.subr.bf16.mxu0 0
    %7703 = vmatpush1.bf16.msra.mxu0 %v7625
    %7704 = vmatprep.subr.bf16.mxu0 0
    %7705 = vmatpush1.bf16.msra.mxu0 %v7626
    %7706 = vmatprep.subr.bf16.mxu0 0
    %7707 = vmatpush1.bf16.msra.mxu0 %v7627
    %7708 = vmatprep.mubr.bf16.mxu0 %v7408
    %7709 = vmatmul.mubr.bf16.gmra.mrb[0].mxu0 %v7407
    %v7710 = vpop.f32.mrb[0].mxu0
    %v7711 = vadd.f32 0.0, %v7710
    %v7712 = vpop.f32.mrb[0].mxu0
    %v7713 = vpop.f32.mrb[0].mxu0
    %v7714 = vpop.f32.mrb[0].mxu0
    %7715 = vmatprep.mubr.bf16.mxu0 %v7412
    %7716 = vmatmul.mubr.bf16.gmra.mrb[0].mxu0 %v7411
    %v7717 = vpop.f32.mrb[0].mxu0
    %v7718 = vadd.f32 0.0, %v7717
    %v7719 = vpop.f32.mrb[0].mxu0
    %v7720 = vpop.f32.mrb[0].mxu0
    %v7721 = vpop.f32.mrb[0].mxu0
    %7722 = vmatprep.mubr.bf16.mxu0 %v7416
    %7723 = vmatmul.mubr.bf16.gmra.mrb[0].mxu0 %v7415
    %v7724 = vpop.f32.mrb[0].mxu0
    %v7725 = vpop.f32.mrb[0].mxu0
    %v7726 = vpop.f32.mrb[0].mxu0
    %v7727 = vpop.f32.mrb[0].mxu0
    %7728 = vdwg.mxu0
    %7729 = vmatprep.subr.bf16.mxu0 0
    %7730 = vmatpush1.bf16.msra.mxu0 %v7628
    %7731 = vmatprep.subr.bf16.mxu0 0
    %7732 = vmatpush1.bf16.msra.mxu0 %v7629
    %7733 = vmatprep.subr.bf16.mxu0 0
    %7734 = vmatpush1.bf16.msra.mxu0 %v7630
    %7735 = vmatprep.subr.bf16.mxu0 0
    %7736 = vmatpush1.bf16.msra.mxu0 %v7631
    %7737 = vmatprep.subr.bf16.mxu0 0
    %7738 = vmatpush1.bf16.msra.mxu0 %v7632
    %7739 = vmatprep.subr.bf16.mxu0 0
    %7740 = vmatpush1.bf16.msra.mxu0 %v7633
    %7741 = vmatprep.subr.bf16.mxu0 0
    %7742 = vmatpush1.bf16.msra.mxu0 %v7634
    %7743 = vmatprep.subr.bf16.mxu0 0
    %7744 = vmatpush1.bf16.msra.mxu0 %v7635
    %7745 = vmatprep.subr.bf16.mxu0 0
    %7746 = vmatpush1.bf16.msra.mxu0 %v7636
    %7747 = vmatprep.subr.bf16.mxu0 0
    %7748 = vmatpush1.bf16.msra.mxu0 %v7637
    %7749 = vmatprep.subr.bf16.mxu0 0
    %7750 = vmatpush1.bf16.msra.mxu0 %v7638
    %7751 = vmatprep.subr.bf16.mxu0 0
    %7752 = vmatpush1.bf16.msra.mxu0 %v7639
    %7753 = vmatprep.subr.bf16.mxu0 0
    %7754 = vmatpush1.bf16.msra.mxu0 %v7640
    %7755 = vmatprep.subr.bf16.mxu0 0
    %7756 = vmatpush1.bf16.msra.mxu0 %v7641
    %7757 = vmatprep.subr.bf16.mxu0 0
    %7758 = vmatpush1.bf16.msra.mxu0 %v7642
    %7759 = vmatprep.subr.bf16.mxu0 0
    %7760 = vmatpush1.bf16.msra.mxu0 %v7643
    %7761 = vmatprep.mubr.bf16.mxu0 %v7410
    %7762 = vmatmul.mubr.bf16.gmra.mrb[0].mxu0 %v7409
    %v7763 = vpop.f32.mrb[0].mxu0
    %v7764 = vadd.f32 %v7711, %v7763
    %v7765 = vpop.f32.mrb[0].mxu0
    %v7766 = vpop.f32.mrb[0].mxu0
    %v7767 = vpop.f32.mrb[0].mxu0
    %7768 = vmatprep.mubr.bf16.mxu0 %v7414
    %7769 = vmatmul.mubr.bf16.gmra.mrb[0].mxu0 %v7413
    %v7770 = vpop.f32.mrb[0].mxu0
    %v7771 = vadd.f32 %v7718, %v7770
    %v7772 = vpop.f32.mrb[0].mxu0
    %v7773 = vpop.f32.mrb[0].mxu0
    %v7774 = vpop.f32.mrb[0].mxu0
    %7775 = vmatprep.mubr.bf16.mxu0 %v7418
    %7776 = vmatmul.mubr.bf16.gmra.mrb[0].mxu0 %v7417
    %v7777 = vpop.f32.mrb[0].mxu0
    %v7778 = vpop.f32.mrb[0].mxu0
    %v7779 = vpop.f32.mrb[0].mxu0
    %v7780 = vpop.f32.mrb[0].mxu0
    %7781 = vdwg.mxu0
    %v7782 = vadd.f32 %v6451, %v7764
    %v7783 = vadd.f32 %v6453, %v7771
    %v7785 = vlaneseq
    %v7786 = vshrl.u32 %v7785, 7
    %v7787 = vsub.s32 0, %v7786
    %v7788 = vrot.slane %v6459, %v7787
    %v7790 = vadd.f32 %v7782, %v7788
    %v7791 = vadd.f32 %v7783, %v7788
    %v7792 = vsel %vm141, %v7790, %v7791
    %v7793 = vsel %vm161, %v7792, 0.0
    %7794 = vadd.xlane.f32.xlu0 %v7793
    %v7795 = vpop.xlane.xlu0 %7794
    %v7796 = vmul.f32 %v7795, %v191
    %v7797 = vmul.f32 %v7792, %v7792
    %v7798 = vsel %vm161, %v7797, 0.0
    %7799 = vadd.xlane.f32.xlu0 %v7798
    %v7800 = vpop.xlane.xlu0 %7799
    %v7801 = vmul.f32 %v7800, %v191
    %v7802 = vmul.f32 %v7796, %v7796
    %v7803 = vsub.f32 %v7801, %v7802
    %v7804 = vsub.f32 %v7792, %v7796
    %v7805 = vadd.f32 %v7803, 1e-05
    %v7806 = vrsqrt.pop %v7805
    %v7807 = vmul.f32 %v7804, %v7806
    %v7809 = vlaneseq
    %v7810 = vshrl.u32 %v7809, 7
    %v7811 = vsub.s32 0, %v7810
    %v7812 = vrot.slane %v40, %v7811
    %v7814 = vmul.f32 %v7807, %v7812
    %v7816 = vlaneseq
    %v7817 = vshrl.u32 %v7816, 7
    %v7818 = vsub.s32 0, %v7817
    %v7819 = vrot.slane %v41, %v7818
    %v7821 = vadd.f32 %v7814, %v7819
    %v7822 = vpack.c.bf16 %v7821, %v7821
    %v7823 = vld [vmem:[%s7] sm:$0xf]
    %v7824 = vld [vmem:[%s7 + $0x4] sm:$0xf]
    %v7825 = vld [vmem:[%s7 + $0x8] sm:$0xf]
    %v7826 = vld [vmem:[%s7 + $0xc] sm:$0xf]
    %v7827 = vld [vmem:[%s7 + $0x10] sm:$0xf]
    %v7828 = vld [vmem:[%s7 + $0x14] sm:$0xf]
    %v7829 = vld [vmem:[%s7 + $0x18] sm:$0xf]
    %v7830 = vld [vmem:[%s7 + $0x1c] sm:$0xf]
    %v7831 = vld [vmem:[%s7 + $0x20] sm:$0xf]
    %v7832 = vld [vmem:[%s7 + $0x24] sm:$0xf]
    %v7833 = vld [vmem:[%s7 + $0x28] sm:$0xf]
    %v7834 = vld [vmem:[%s7 + $0x2c] sm:$0xf]
    %v7835 = vld [vmem:[%s7 + $0x30] sm:$0xf]
    %v7836 = vld [vmem:[%s7 + $0x34] sm:$0xf]
    %v7837 = vld [vmem:[%s7 + $0x38] sm:$0xf]
    %v7838 = vld [vmem:[%s7 + $0x3c] sm:$0xf]
    %v7840 = vlaneseq
    %v7841 = vshrl.u32 %v7840, 7
    %v7842 = vsub.s32 0, %v7841
    %v7843 = vrot.slane %v42, %v7842
    %v7861 = vunpack.c.l.b16 %v7823
    %v7862 = vunpack.c.l.b16 %v7824
    %v7863 = vunpack.c.l.b16 %v7825
    %v7864 = vunpack.c.l.b16 %v7826
    %v7865 = vunpack.c.l.b16 %v7827
    %v7866 = vunpack.c.l.b16 %v7828
    %v7867 = vunpack.c.l.b16 %v7829
    %v7868 = vunpack.c.l.b16 %v7830
    %v7869 = vunpack.c.l.b16 %v7831
    %v7870 = vunpack.c.l.b16 %v7832
    %v7871 = vunpack.c.l.b16 %v7833
    %v7872 = vunpack.c.l.b16 %v7834
    %v7873 = vunpack.c.l.b16 %v7835
    %v7874 = vunpack.c.l.b16 %v7836
    %v7875 = vunpack.c.l.b16 %v7837
    %v7876 = vunpack.c.l.b16 %v7838
    %v7877 = vpack.c.b16 %v7862, %v7861
    %v7878 = vpack.c.b16 %v7864, %v7863
    %v7879 = vpack.c.b16 %v7866, %v7865
    %v7880 = vpack.c.b16 %v7868, %v7867
    %v7881 = vpack.c.b16 %v7870, %v7869
    %v7882 = vpack.c.b16 %v7872, %v7871
    %v7883 = vpack.c.b16 %v7874, %v7873
    %v7884 = vpack.c.b16 %v7876, %v7875
    %7893 = vmatprep.subr.bf16.mxu0 0
    %7894 = vmatpush1.bf16.msra.mxu0 %v7877
    %7895 = vmatprep.subr.bf16.mxu0 0
    %7896 = vmatpush1.bf16.msra.mxu0 %v7878
    %7897 = vmatprep.subr.bf16.mxu0 0
    %7898 = vmatpush1.bf16.msra.mxu0 %v7879
    %7899 = vmatprep.subr.bf16.mxu0 0
    %7900 = vmatpush1.bf16.msra.mxu0 %v7880
    %7901 = vmatprep.subr.bf16.mxu0 0
    %7902 = vmatpush1.bf16.msra.mxu0 %v7881
    %7903 = vmatprep.subr.bf16.mxu0 0
    %7904 = vmatpush1.bf16.msra.mxu0 %v7882
    %7905 = vmatprep.subr.bf16.mxu0 0
    %7906 = vmatpush1.bf16.msra.mxu0 %v7883
    %7907 = vmatprep.subr.bf16.mxu0 0
    %7908 = vmatpush1.bf16.msra.mxu0 %v7884
    %7909 = vmatprep.subr.bf16.mxu0 0
    %7910 = vmatpush1.bf16.msra.mxu0 0
    %7911 = vmatprep.subr.bf16.mxu0 0
    %7912 = vmatpush1.bf16.msra.mxu0 0
    %7913 = vmatprep.subr.bf16.mxu0 0
    %7914 = vmatpush1.bf16.msra.mxu0 0
    %7915 = vmatprep.subr.bf16.mxu0 0
    %7916 = vmatpush1.bf16.msra.mxu0 0
    %7917 = vmatprep.subr.bf16.mxu0 0
    %7918 = vmatpush1.bf16.msra.mxu0 0
    %7919 = vmatprep.subr.bf16.mxu0 0
    %7920 = vmatpush1.bf16.msra.mxu0 0
    %7921 = vmatprep.subr.bf16.mxu0 0
    %7922 = vmatpush1.bf16.msra.mxu0 0
    %7923 = vmatprep.subr.bf16.mxu0 0
    %7924 = vmatpush1.bf16.msra.mxu0 0
    %7925 = vmatprep.mubr.bf16.mxu0 0
    %7926 = vmatmul.mubr.bf16.gmra.mrb[0].mxu0 %v7822
    %v7927 = vpop.f32.mrb[0].mxu0
    %v7928 = vadd.f32 %v7843, %v7927
    %v7929 = vpop.f32.mrb[0].mxu0
    %v7930 = vpop.f32.mrb[0].mxu0
    %v7931 = vpop.f32.mrb[0].mxu0
    %7932 = vdwg.mxu0
    %7933 = vst [vmem:[#allocation2] sm:$0x3] %v7928
    // Predicated region
    $region38: #{vit_forward.1} parent=1 // pred_check
      _
    $region39: #{vit_forward.1} parent=1 // pred_check_branch
      %7935 = sbr.rel (0) target = $region41
    $region40: #{vit_forward.1} parent=1 // pred_region
      %s7937 = ssub.s32 32, 32
      %7938 = vsyncadd [#allocation3], %s7937
      %s7940 = sshll.u32 [#allocation2], 4
      %s7941 = int_to_ptr.vmem [resolvable:$true] %s7940
      %7943 = dma.vmem_to_hbm [thread:$0]  %s7941, 32, %s9, [#allocation3]
    $region41: #{vit_forward.1} parent=1 // pred_fallthru
      _
    // Predicated region
    $region42: #{vit_forward.1} parent=1 // pred_check
      _
    $region43: #{vit_forward.1} parent=1 // pred_check_branch
      %7945 = sbr.rel (0) target = $region45
    $region44: #{vit_forward.1} parent=1 // pred_region
      %7946 = dma.done [#allocation3], 32
    $region45: #{vit_forward.1} parent=1 // pred_fallthru
      _
    %7947 = vsyncpa [#allocation3], 1

</llo_original>
